<compile_context>
chip_gen: v6e
topology: v6e:2x2x1
jax: 0.10.0
libtpu: 0.0.40
codegen_flags: <defaults>
</compile_context>

<pallas_src>
import functools

import jax
import jax.numpy as jnp
from jax import lax
from jax.experimental import pallas as pl
from jax.experimental.pallas import tpu as pltpu

LEAKY_SLOPE = 0.01                       # nn.LeakyReLU default negative_slope
LOG_STD_MIN, LOG_STD_MAX = -20.0, 2.0
_VMEM_LIMIT = 32 * 1024 * 1024           # safe on v5e / v6e / v7x


def _leaky(y):
    return jnp.where(y >= 0.0, y, LEAKY_SLOPE * y)


def _round_up(n, m):
    return ((n + m - 1) // m) * m


# ----------------------------------------------------------------------------
# Conv GEMM kernel (transposed):  out(OC, TM) = W(OC, K) @ P(K, TM) + b, LeakyReLU
# ----------------------------------------------------------------------------
def _convT_gemm_kernel(w_ref, b_ref, p_ref, o_ref):
    y = jnp.dot(w_ref[...], p_ref[...], preferred_element_type=jnp.float32)
    y = _leaky(y + b_ref[...])                       # bias + LeakyReLU in f32
    o_ref[...] = y.astype(o_ref.dtype)               # store bf16


def convT_gemm(w, b, patches, *, tm=1024):
    """w: (OC, K) bf16, b: (OC, 1) f32, patches: (K, M) bf16 -> (OC, M) bf16."""
    OC, K = w.shape
    M = patches.shape[1]
    tm = M if M <= tm else tm                        # full block if small, else 1024-wide tiles
    grid = (pl.cdiv(M, tm),)
    return pl.pallas_call(
        _convT_gemm_kernel,
        out_shape=jax.ShapeDtypeStruct((OC, M), jnp.bfloat16),
        grid_spec=pltpu.PrefetchScalarGridSpec(
            num_scalar_prefetch=0,
            grid=grid,
            in_specs=[
                pl.BlockSpec((OC, K), lambda i: (0, 0)),   # weights resident in VMEM
                pl.BlockSpec((OC, 1), lambda i: (0, 0)),   # bias resident
                pl.BlockSpec((K, tm), lambda i: (0, i)),   # patch tile (lane dim = M)
            ],
            out_specs=pl.BlockSpec((OC, tm), lambda i: (0, i)),
        ),
        compiler_params=pltpu.CompilerParams(
            dimension_semantics=("parallel",),
            vmem_limit_bytes=_VMEM_LIMIT),
    )(w, b, patches)


# ----------------------------------------------------------------------------
# Fused fc1 + fc2 + heads kernel:
#   h1 = leaky(x@W1+b1); h2 = leaky(h1@W2+b2); y = h2@Wh+bh
#   columns [0, A) = mu, [A, 2A) = clamp(log_std, -20, 2), rest zero padding.
# ----------------------------------------------------------------------------
def _mlp_heads_kernel(x_ref, w1_ref, b1_ref, w2_ref, b2_ref, wh_ref, bh_ref,
                      o_ref, *, a_dim):
    h = jnp.dot(x_ref[...], w1_ref[...], preferred_element_type=jnp.float32)
    h = _leaky(h + b1_ref[...]).astype(jnp.bfloat16)
    h = jnp.dot(h, w2_ref[...], preferred_element_type=jnp.float32)
    h = _leaky(h + b2_ref[...]).astype(jnp.bfloat16)
    y = jnp.dot(h, wh_ref[...], preferred_element_type=jnp.float32) + bh_ref[...]
    col = lax.broadcasted_iota(jnp.int32, y.shape, 1)
    o_ref[...] = jnp.where(col >= a_dim,
                           jnp.clip(y, LOG_STD_MIN, LOG_STD_MAX), y)


def mlp_heads(x, w1, b1, w2, b2, wh, bh, a_dim, *, tb=256):
    """x: (B, 2304) bf16 -> (B, HEAD_PAD) f32 [mu | clamped log_std | pad]."""
    B, K = x.shape
    HP = wh.shape[1]
    tb = B if B <= tb else tb
    kern = functools.partial(_mlp_heads_kernel, a_dim=a_dim)
    return pl.pallas_call(
        kern,
        out_shape=jax.ShapeDtypeStruct((B, HP), jnp.float32),
        grid_spec=pltpu.PrefetchScalarGridSpec(
            num_scalar_prefetch=0,
            grid=(pl.cdiv(B, tb),),
            in_specs=[
                pl.BlockSpec((tb, K), lambda i: (i, 0)),
                pl.BlockSpec(w1.shape, lambda i: (0, 0)),
                pl.BlockSpec(b1.shape, lambda i: (0, 0)),
                pl.BlockSpec(w2.shape, lambda i: (0, 0)),
                pl.BlockSpec(b2.shape, lambda i: (0, 0)),
                pl.BlockSpec(wh.shape, lambda i: (0, 0)),
                pl.BlockSpec(bh.shape, lambda i: (0, 0)),
            ],
            out_specs=pl.BlockSpec((tb, HP), lambda i: (i, 0)),
        ),
        compiler_params=pltpu.CompilerParams(
            dimension_semantics=("parallel",),
            vmem_limit_bytes=_VMEM_LIMIT),
    )(x, w1, b1, w2, b2, wh, bh)


# ----------------------------------------------------------------------------
# Conv layer = transpose-free im2col (pure stack+reshape on CNHW) + Pallas GEMM
# ----------------------------------------------------------------------------
def _im2col_cnhw(x, kh, kw, stride):
    """x: (C, B, H, W) -> patches (kh*kw*C, B*oh*ow); K ordered (kh, kw, C)."""
    C, B, H, W = x.shape
    oh = (H - kh) // stride + 1
    ow = (W - kw) // stride + 1
    cols = []
    for i in range(kh):
        for j in range(kw):
            cols.append(x[:, :, i:i + stride * oh:stride, j:j + stride * ow:stride])
    p = jnp.stack(cols, axis=0)                       # (kh*kw, C, B, oh, ow)
    return p.reshape(kh * kw * C, B * oh * ow), oh, ow


def conv2d_leaky(x, w, b, stride):
    """x: (C, B, H, W) bf16; w: (OC, kh, kw, C) bf16; b: (OC, 1) f32 -> (OC, B, oh, ow) bf16."""
    OC, kh, kw, C = w.shape
    B = x.shape[1]
    patches, oh, ow = _im2col_cnhw(x, kh, kw, stride)
    y = convT_gemm(w.reshape(OC, kh * kw * C), b, patches)    # (OC, B*oh*ow)
    return y.reshape(OC, B, oh, ow)                            # free contiguous reshape


# ----------------------------------------------------------------------------
# Full forward pass (== ContGaussianPolicy.forward)
# ----------------------------------------------------------------------------
def cont_gaussian_policy_forward(states, params, action_dim):
    # states: (B, 64, 64, 3) NHWC, pixel values in [0, 255]
    B = states.shape[0]
    # Single layout permute (channels to front); the /255 lives in conv1_w.
    x = states.astype(jnp.bfloat16).transpose(3, 0, 1, 2)             # (3, B, 64, 64)
    x = conv2d_leaky(x, params["conv1_w"], params["conv1_b"], 2)      # (32, B, 30, 30)
    x = conv2d_leaky(x, params["conv2_w"], params["conv2_b"], 2)      # (64, B, 13, 13)
    x = conv2d_leaky(x, params["conv3_w"], params["conv3_b"], 2)      # (64, B, 6, 6)
    # PyTorch nn.Flatten on NCHW is (C, H, W)-major per sample; only this tiny
    # (B*2304-element) permute is needed to match it.
    emb = x.reshape(64, B, 36).transpose(1, 0, 2).reshape(B, 2304)
    out = mlp_heads(emb, params["fc1_w"], params["fc1_b"],
                    params["fc2_w"], params["fc2_b"],
                    params["head_w"], params["head_b"], action_dim)
    mu = out[:, :action_dim]
    log_std = out[:, action_dim:2 * action_dim]
    return mu, log_std
    # TODO(synk): sample() (Normal.rsample / tanh-squashed log-prob) is not part
    # of forward(); it would require RNG plumbing and is left out.


# ----------------------------------------------------------------------------
# Deterministic parameter initialization (shapes from the module __init__).
# A PyTorch checkpoint would be converted with exactly these transforms:
#   conv W (OC, C, kh, kw) -> transpose(0, 2, 3, 1) -> bf16   (conv1 also * 1/255)
#   linear W (out, in)     -> .T  (in, out) -> bf16
#   mu / log_std heads     -> concatenated along out dim, zero-padded to 128 lanes
# ----------------------------------------------------------------------------
def init_params(key, action_dim):
    def uinit(k, shape, fan_in):
        bound = 1.0 / jnp.sqrt(float(fan_in))
        return jax.random.uniform(k, shape, jnp.float32, -bound, bound)

    ks = jax.random.split(key, 14)
    p = {}
    # convs: weights (OC, kh, kw, C) bf16; biases (OC, 1) f32
    c1 = uinit(ks[0], (32, 3, 5, 5), 3 * 5 * 5).transpose(0, 2, 3, 1)
    p["conv1_w"] = (c1 * (1.0 / 255.0)).astype(jnp.bfloat16)   # fold input /255
    p["conv1_b"] = uinit(ks[1], (32, 1), 3 * 5 * 5)
    p["conv2_w"] = uinit(ks[2], (64, 32, 5, 5), 32 * 5 * 5
                         ).transpose(0, 2, 3, 1).astype(jnp.bfloat16)
    p["conv2_b"] = uinit(ks[3], (64, 1), 32 * 5 * 5)
    p["conv3_w"] = uinit(ks[4], (64, 64, 3, 3), 64 * 3 * 3
                         ).transpose(0, 2, 3, 1).astype(jnp.bfloat16)
    p["conv3_b"] = uinit(ks[5], (64, 1), 64 * 3 * 3)
    # fully-connected stack: weights (in, out) bf16, biases (1, out) f32
    p["fc1_w"] = uinit(ks[6], (2304, 512), 2304).astype(jnp.bfloat16)
    p["fc1_b"] = uinit(ks[7], (1, 512), 2304)
    p["fc2_w"] = uinit(ks[8], (512, 256), 512).astype(jnp.bfloat16)
    p["fc2_b"] = uinit(ks[9], (1, 256), 512)
    # heads: mu in cols [0, A), log_std in cols [A, 2A), zero-padded to 128 lanes
    hp = max(128, _round_up(2 * action_dim, 128))
    mu_w = uinit(ks[10], (256, action_dim), 256)
    mu_b = uinit(ks[11], (1, action_dim), 256)
    ls_w = uinit(ks[12], (256, action_dim), 256)
    ls_b = uinit(ks[13], (1, action_dim), 256)
    head_w = jnp.zeros((256, hp), jnp.float32)
    head_w = head_w.at[:, :action_dim].set(mu_w)
    head_w = head_w.at[:, action_dim:2 * action_dim].set(ls_w)
    head_b = jnp.zeros((1, hp), jnp.float32)
    head_b = head_b.at[:, :action_dim].set(mu_b)
    head_b = head_b.at[:, action_dim:2 * action_dim].set(ls_b)
    p["head_w"] = head_w.astype(jnp.bfloat16)
    p["head_b"] = head_b
    return p


if __name__ == "__main__":
    key = jax.random.PRNGKey(0)
    k_states, k_params = jax.random.split(key)

    batch = 2
    action_dim = 4
    # Linear(2304, 512) after the three convs forces 64x64x3 input images.
    states = jax.random.uniform(k_states, (batch, 64, 64, 3),
                                jnp.float32, 0.0, 255.0)
    params = init_params(k_params, action_dim)

    fwd = jax.jit(cont_gaussian_policy_forward, static_argnames="action_dim")
    mu, log_std = fwd(states, params, action_dim=action_dim)
    jax.block_until_ready((mu, log_std))

    assert mu.shape == (batch, action_dim)
    assert log_std.shape == (batch, action_dim)
    assert bool(jnp.all(jnp.isfinite(mu)))
    assert bool(jnp.all(log_std >= LOG_STD_MIN)) and bool(jnp.all(log_std <= LOG_STD_MAX))
    print("KERNEL_OK")
</pallas_src>

<mosaic_0001>
module attributes {stable_mosaic.version = 11 : i64} {
  func.func @_convT_gemm_kernel(%arg0: i32, %arg1: memref<32x75xbf16, #tpu.memory_space<vmem>>, %arg2: memref<32x1xf32, #tpu.memory_space<vmem>>, %arg3: memref<75x1024xbf16, #tpu.memory_space<vmem>>, %arg4: memref<32x1024xbf16, #tpu.memory_space<vmem>>) attributes {dimension_semantics = [#tpu.dimension_semantics<parallel>], iteration_bounds = array<i64: 2>, scalar_prefetch = 0 : i64, scratch_operands = 0 : i64, tpu.core_type = #tpu.core_type<tc>, window_params = [{pipeline_mode = #tpu.pipeline_mode<synchronous>, transform_indices = @transform_0, window_bounds = array<i64: 32, 75>}, {pipeline_mode = #tpu.pipeline_mode<synchronous>, transform_indices = @transform_1, window_bounds = array<i64: 32, 1>}, {transform_indices = @transform_2, window_bounds = array<i64: 75, 1024>}, {transform_indices = @transform_3, window_bounds = array<i64: 32, 1024>}]} {
    %c0 = arith.constant 0 : index
    %c0_0 = arith.constant 0 : index
    %0 = vector.load %arg1[%c0, %c0_0] : memref<32x75xbf16, #tpu.memory_space<vmem>>, vector<32x75xbf16>
    %c0_1 = arith.constant 0 : index
    %c0_2 = arith.constant 0 : index
    %1 = vector.load %arg3[%c0_1, %c0_2] : memref<75x1024xbf16, #tpu.memory_space<vmem>>, vector<75x1024xbf16>
    %cst = arith.constant dense<0.000000e+00> : vector<32x1024xf32>
    %2 = tpu.matmul %0, %1, %cst {dimension_numbers = #tpu.dot_dimension_numbers<[1], [0], [0], [1], [0, 0, 1, 1], [], []>} : vector<32x75xbf16>, vector<75x1024xbf16>, vector<32x1024xf32> -> vector<32x1024xf32>
    %c0_3 = arith.constant 0 : index
    %c0_4 = arith.constant 0 : index
    %3 = vector.load %arg2[%c0_3, %c0_4] : memref<32x1xf32, #tpu.memory_space<vmem>>, vector<32x1xf32>
    %4 = vector.broadcast %3 : vector<32x1xf32> to vector<32x1024xf32>
    %5 = arith.addf %2, %4 : vector<32x1024xf32>
    %cst_5 = arith.constant 0.000000e+00 : f32
    %6 = vector.broadcast %cst_5 : f32 to vector<32x1024xf32>
    %7 = arith.cmpf oge, %5, %6 : vector<32x1024xf32>
    %cst_6 = arith.constant 0.00999999977 : f32
    %8 = vector.broadcast %cst_6 : f32 to vector<32x1024xf32>
    %9 = arith.mulf %8, %5 : vector<32x1024xf32>
    %10 = arith.select %7, %5, %9 : vector<32x1024xi1>, vector<32x1024xf32>
    %11 = arith.truncf %10 : vector<32x1024xf32> to vector<32x1024xbf16>
    %c0_7 = arith.constant 0 : index
    %c0_8 = arith.constant 0 : index
    %12 = vector.load %arg4[%c0_7, %c0_8] : memref<32x1024xbf16, #tpu.memory_space<vmem>>, vector<32x1024xbf16>
    tpu.vector_store %arg4[%c0_7, %c0_8], %11 {strides = array<i32>} : memref<32x1024xbf16, #tpu.memory_space<vmem>>, vector<32x1024xbf16>,
    return
  }
  func.func @transform_0(%arg0: i32) -> (i32, i32) {
    %c0_i32 = arith.constant 0 : i32
    %c0_i32_0 = arith.constant 0 : i32
    %c0_i32_1 = arith.constant 0 : i32
    return %c0_i32, %c0_i32_0 : i32, i32
  }
  func.func @transform_1(%arg0: i32) -> (i32, i32) {
    %c0_i32 = arith.constant 0 : i32
    %c0_i32_0 = arith.constant 0 : i32
    %c0_i32_1 = arith.constant 0 : i32
    return %c0_i32, %c0_i32_0 : i32, i32
  }
  func.func @transform_2(%arg0: i32) -> (i32, i32) {
    %c0_i32 = arith.constant 0 : i32
    %c0_i32_0 = arith.constant 0 : i32
    return %c0_i32, %arg0 : i32, i32
  }
  func.func @transform_3(%arg0: i32) -> (i32, i32) {
    %c0_i32 = arith.constant 0 : i32
    %c0_i32_0 = arith.constant 0 : i32
    return %c0_i32, %arg0 : i32, i32
  }
}

module attributes {stable_mosaic.version = 11 : i64} {
  func.func @_convT_gemm_kernel(%arg0: i32, %arg1: memref<64x800xbf16, #tpu.memory_space<vmem>>, %arg2: memref<64x1xf32, #tpu.memory_space<vmem>>, %arg3: memref<800x338xbf16, #tpu.memory_space<vmem>>, %arg4: memref<64x338xbf16, #tpu.memory_space<vmem>>) attributes {dimension_semantics = [#tpu.dimension_semantics<parallel>], iteration_bounds = array<i64: 1>, scalar_prefetch = 0 : i64, scratch_operands = 0 : i64, tpu.core_type = #tpu.core_type<tc>, window_params = [{pipeline_mode = #tpu.pipeline_mode<synchronous>, transform_indices = @transform_0, window_bounds = array<i64: 64, 800>}, {pipeline_mode = #tpu.pipeline_mode<synchronous>, transform_indices = @transform_1, window_bounds = array<i64: 64, 1>}, {transform_indices = @transform_2, window_bounds = array<i64: 800, 338>}, {transform_indices = @transform_3, window_bounds = array<i64: 64, 338>}]} {
    %c0 = arith.constant 0 : index
    %c0_0 = arith.constant 0 : index
    %0 = vector.load %arg1[%c0, %c0_0] : memref<64x800xbf16, #tpu.memory_space<vmem>>, vector<64x800xbf16>
    %c0_1 = arith.constant 0 : index
    %c0_2 = arith.constant 0 : index
    %1 = vector.load %arg3[%c0_1, %c0_2] : memref<800x338xbf16, #tpu.memory_space<vmem>>, vector<800x338xbf16>
    %cst = arith.constant dense<0.000000e+00> : vector<64x338xf32>
    %2 = tpu.matmul %0, %1, %cst {dimension_numbers = #tpu.dot_dimension_numbers<[1], [0], [0], [1], [0, 0, 1, 1], [], []>} : vector<64x800xbf16>, vector<800x338xbf16>, vector<64x338xf32> -> vector<64x338xf32>
    %c0_3 = arith.constant 0 : index
    %c0_4 = arith.constant 0 : index
    %3 = vector.load %arg2[%c0_3, %c0_4] : memref<64x1xf32, #tpu.memory_space<vmem>>, vector<64x1xf32>
    %4 = vector.broadcast %3 : vector<64x1xf32> to vector<64x338xf32>
    %5 = arith.addf %2, %4 : vector<64x338xf32>
    %cst_5 = arith.constant 0.000000e+00 : f32
    %6 = vector.broadcast %cst_5 : f32 to vector<64x338xf32>
    %7 = arith.cmpf oge, %5, %6 : vector<64x338xf32>
    %cst_6 = arith.constant 0.00999999977 : f32
    %8 = vector.broadcast %cst_6 : f32 to vector<64x338xf32>
    %9 = arith.mulf %8, %5 : vector<64x338xf32>
    %10 = arith.select %7, %5, %9 : vector<64x338xi1>, vector<64x338xf32>
    %11 = arith.truncf %10 : vector<64x338xf32> to vector<64x338xbf16>
    %c0_7 = arith.constant 0 : index
    %c0_8 = arith.constant 0 : index
    %12 = vector.load %arg4[%c0_7, %c0_8] : memref<64x338xbf16, #tpu.memory_space<vmem>>, vector<64x338xbf16>
    tpu.vector_store %arg4[%c0_7, %c0_8], %11 {strides = array<i32>} : memref<64x338xbf16, #tpu.memory_space<vmem>>, vector<64x338xbf16>,
    return
  }
  func.func @transform_0(%arg0: i32) -> (i32, i32) {
    %c0_i32 = arith.constant 0 : i32
    %c0_i32_0 = arith.constant 0 : i32
    %c0_i32_1 = arith.constant 0 : i32
    return %c0_i32, %c0_i32_0 : i32, i32
  }
  func.func @transform_1(%arg0: i32) -> (i32, i32) {
    %c0_i32 = arith.constant 0 : i32
    %c0_i32_0 = arith.constant 0 : i32
    %c0_i32_1 = arith.constant 0 : i32
    return %c0_i32, %c0_i32_0 : i32, i32
  }
  func.func @transform_2(%arg0: i32) -> (i32, i32) {
    %c0_i32 = arith.constant 0 : i32
    %c0_i32_0 = arith.constant 0 : i32
    return %c0_i32, %arg0 : i32, i32
  }
  func.func @transform_3(%arg0: i32) -> (i32, i32) {
    %c0_i32 = arith.constant 0 : i32
    %c0_i32_0 = arith.constant 0 : i32
    return %c0_i32, %arg0 : i32, i32
  }
}

module attributes {stable_mosaic.version = 11 : i64} {
  func.func @_convT_gemm_kernel(%arg0: i32, %arg1: memref<64x576xbf16, #tpu.memory_space<vmem>>, %arg2: memref<64x1xf32, #tpu.memory_space<vmem>>, %arg3: memref<576x72xbf16, #tpu.memory_space<vmem>>, %arg4: memref<64x72xbf16, #tpu.memory_space<vmem>>) attributes {dimension_semantics = [#tpu.dimension_semantics<parallel>], iteration_bounds = array<i64: 1>, scalar_prefetch = 0 : i64, scratch_operands = 0 : i64, tpu.core_type = #tpu.core_type<tc>, window_params = [{pipeline_mode = #tpu.pipeline_mode<synchronous>, transform_indices = @transform_0, window_bounds = array<i64: 64, 576>}, {pipeline_mode = #tpu.pipeline_mode<synchronous>, transform_indices = @transform_1, window_bounds = array<i64: 64, 1>}, {transform_indices = @transform_2, window_bounds = array<i64: 576, 72>}, {transform_indices = @transform_3, window_bounds = array<i64: 64, 72>}]} {
    %c0 = arith.constant 0 : index
    %c0_0 = arith.constant 0 : index
    %0 = vector.load %arg1[%c0, %c0_0] : memref<64x576xbf16, #tpu.memory_space<vmem>>, vector<64x576xbf16>
    %c0_1 = arith.constant 0 : index
    %c0_2 = arith.constant 0 : index
    %1 = vector.load %arg3[%c0_1, %c0_2] : memref<576x72xbf16, #tpu.memory_space<vmem>>, vector<576x72xbf16>
    %cst = arith.constant dense<0.000000e+00> : vector<64x72xf32>
    %2 = tpu.matmul %0, %1, %cst {dimension_numbers = #tpu.dot_dimension_numbers<[1], [0], [0], [1], [0, 0, 1, 1], [], []>} : vector<64x576xbf16>, vector<576x72xbf16>, vector<64x72xf32> -> vector<64x72xf32>
    %c0_3 = arith.constant 0 : index
    %c0_4 = arith.constant 0 : index
    %3 = vector.load %arg2[%c0_3, %c0_4] : memref<64x1xf32, #tpu.memory_space<vmem>>, vector<64x1xf32>
    %4 = vector.broadcast %3 : vector<64x1xf32> to vector<64x72xf32>
    %5 = arith.addf %2, %4 : vector<64x72xf32>
    %cst_5 = arith.constant 0.000000e+00 : f32
    %6 = vector.broadcast %cst_5 : f32 to vector<64x72xf32>
    %7 = arith.cmpf oge, %5, %6 : vector<64x72xf32>
    %cst_6 = arith.constant 0.00999999977 : f32
    %8 = vector.broadcast %cst_6 : f32 to vector<64x72xf32>
    %9 = arith.mulf %8, %5 : vector<64x72xf32>
    %10 = arith.select %7, %5, %9 : vector<64x72xi1>, vector<64x72xf32>
    %11 = arith.truncf %10 : vector<64x72xf32> to vector<64x72xbf16>
    %c0_7 = arith.constant 0 : index
    %c0_8 = arith.constant 0 : index
    %12 = vector.load %arg4[%c0_7, %c0_8] : memref<64x72xbf16, #tpu.memory_space<vmem>>, vector<64x72xbf16>
    tpu.vector_store %arg4[%c0_7, %c0_8], %11 {strides = array<i32>} : memref<64x72xbf16, #tpu.memory_space<vmem>>, vector<64x72xbf16>,
    return
  }
  func.func @transform_0(%arg0: i32) -> (i32, i32) {
    %c0_i32 = arith.constant 0 : i32
    %c0_i32_0 = arith.constant 0 : i32
    %c0_i32_1 = arith.constant 0 : i32
    return %c0_i32, %c0_i32_0 : i32, i32
  }
  func.func @transform_1(%arg0: i32) -> (i32, i32) {
    %c0_i32 = arith.constant 0 : i32
    %c0_i32_0 = arith.constant 0 : i32
    %c0_i32_1 = arith.constant 0 : i32
    return %c0_i32, %c0_i32_0 : i32, i32
  }
  func.func @transform_2(%arg0: i32) -> (i32, i32) {
    %c0_i32 = arith.constant 0 : i32
    %c0_i32_0 = arith.constant 0 : i32
    return %c0_i32, %arg0 : i32, i32
  }
  func.func @transform_3(%arg0: i32) -> (i32, i32) {
    %c0_i32 = arith.constant 0 : i32
    %c0_i32_0 = arith.constant 0 : i32
    return %c0_i32, %arg0 : i32, i32
  }
}

module attributes {stable_mosaic.version = 11 : i64} {
  func.func @_mlp_heads_kernel(%arg0: i32, %arg1: memref<2x2304xbf16, #tpu.memory_space<vmem>>, %arg2: memref<2304x512xbf16, #tpu.memory_space<vmem>>, %arg3: memref<1x512xf32, #tpu.memory_space<vmem>>, %arg4: memref<512x256xbf16, #tpu.memory_space<vmem>>, %arg5: memref<1x256xf32, #tpu.memory_space<vmem>>, %arg6: memref<256x128xbf16, #tpu.memory_space<vmem>>, %arg7: memref<1x128xf32, #tpu.memory_space<vmem>>, %arg8: memref<2x128xf32, #tpu.memory_space<vmem>>) attributes {dimension_semantics = [#tpu.dimension_semantics<parallel>], iteration_bounds = array<i64: 1>, scalar_prefetch = 0 : i64, scratch_operands = 0 : i64, tpu.core_type = #tpu.core_type<tc>, window_params = [{transform_indices = @transform_0, window_bounds = array<i64: 2, 2304>}, {pipeline_mode = #tpu.pipeline_mode<synchronous>, transform_indices = @transform_1, window_bounds = array<i64: 2304, 512>}, {pipeline_mode = #tpu.pipeline_mode<synchronous>, transform_indices = @transform_2, window_bounds = array<i64: 1, 512>}, {pipeline_mode = #tpu.pipeline_mode<synchronous>, transform_indices = @transform_3, window_bounds = array<i64: 512, 256>}, {pipeline_mode = #tpu.pipeline_mode<synchronous>, transform_indices = @transform_4, window_bounds = array<i64: 1, 256>}, {pipeline_mode = #tpu.pipeline_mode<synchronous>, transform_indices = @transform_5, window_bounds = array<i64: 256, 128>}, {pipeline_mode = #tpu.pipeline_mode<synchronous>, transform_indices = @transform_6, window_bounds = array<i64: 1, 128>}, {transform_indices = @transform_7, window_bounds = array<i64: 2, 128>}]} {
    %c0 = arith.constant 0 : index
    %c0_0 = arith.constant 0 : index
    %0 = vector.load %arg1[%c0, %c0_0] : memref<2x2304xbf16, #tpu.memory_space<vmem>>, vector<2x2304xbf16>
    %c0_1 = arith.constant 0 : index
    %c0_2 = arith.constant 0 : index
    %1 = vector.load %arg2[%c0_1, %c0_2] : memref<2304x512xbf16, #tpu.memory_space<vmem>>, vector<2304x512xbf16>
    %cst = arith.constant dense<0.000000e+00> : vector<2x512xf32>
    %2 = tpu.matmul %0, %1, %cst {dimension_numbers = #tpu.dot_dimension_numbers<[1], [0], [0], [1], [0, 0, 1, 1], [], []>} : vector<2x2304xbf16>, vector<2304x512xbf16>, vector<2x512xf32> -> vector<2x512xf32>
    %c0_3 = arith.constant 0 : index
    %c0_4 = arith.constant 0 : index
    %3 = vector.load %arg3[%c0_3, %c0_4] : memref<1x512xf32, #tpu.memory_space<vmem>>, vector<1x512xf32>
    %4 = vector.broadcast %3 : vector<1x512xf32> to vector<2x512xf32>
    %5 = arith.addf %2, %4 : vector<2x512xf32>
    %cst_5 = arith.constant 0.000000e+00 : f32
    %6 = vector.broadcast %cst_5 : f32 to vector<2x512xf32>
    %7 = arith.cmpf oge, %5, %6 : vector<2x512xf32>
    %cst_6 = arith.constant 0.00999999977 : f32
    %8 = vector.broadcast %cst_6 : f32 to vector<2x512xf32>
    %9 = arith.mulf %8, %5 : vector<2x512xf32>
    %10 = arith.select %7, %5, %9 : vector<2x512xi1>, vector<2x512xf32>
    %11 = arith.truncf %10 : vector<2x512xf32> to vector<2x512xbf16>
    %c0_7 = arith.constant 0 : index
    %c0_8 = arith.constant 0 : index
    %12 = vector.load %arg4[%c0_7, %c0_8] : memref<512x256xbf16, #tpu.memory_space<vmem>>, vector<512x256xbf16>
    %cst_9 = arith.constant dense<0.000000e+00> : vector<2x256xf32>
    %13 = tpu.matmul %11, %12, %cst_9 {dimension_numbers = #tpu.dot_dimension_numbers<[1], [0], [0], [1], [0, 0, 1, 1], [], []>} : vector<2x512xbf16>, vector<512x256xbf16>, vector<2x256xf32> -> vector<2x256xf32>
    %c0_10 = arith.constant 0 : index
    %c0_11 = arith.constant 0 : index
    %14 = vector.load %arg5[%c0_10, %c0_11] : memref<1x256xf32, #tpu.memory_space<vmem>>, vector<1x256xf32>
    %15 = vector.broadcast %14 : vector<1x256xf32> to vector<2x256xf32>
    %16 = arith.addf %13, %15 : vector<2x256xf32>
    %cst_12 = arith.constant 0.000000e+00 : f32
    %17 = vector.broadcast %cst_12 : f32 to vector<2x256xf32>
    %18 = arith.cmpf oge, %16, %17 : vector<2x256xf32>
    %cst_13 = arith.constant 0.00999999977 : f32
    %19 = vector.broadcast %cst_13 : f32 to vector<2x256xf32>
    %20 = arith.mulf %19, %16 : vector<2x256xf32>
    %21 = arith.select %18, %16, %20 : vector<2x256xi1>, vector<2x256xf32>
    %22 = arith.truncf %21 : vector<2x256xf32> to vector<2x256xbf16>
    %c0_14 = arith.constant 0 : index
    %c0_15 = arith.constant 0 : index
    %23 = vector.load %arg6[%c0_14, %c0_15] : memref<256x128xbf16, #tpu.memory_space<vmem>>, vector<256x128xbf16>
    %cst_16 = arith.constant dense<0.000000e+00> : vector<2x128xf32>
    %24 = tpu.matmul %22, %23, %cst_16 {dimension_numbers = #tpu.dot_dimension_numbers<[1], [0], [0], [1], [0, 0, 1, 1], [], []>} : vector<2x256xbf16>, vector<256x128xbf16>, vector<2x128xf32> -> vector<2x128xf32>
    %c0_17 = arith.constant 0 : index
    %c0_18 = arith.constant 0 : index
    %25 = vector.load %arg7[%c0_17, %c0_18] : memref<1x128xf32, #tpu.memory_space<vmem>>, vector<1x128xf32>
    %26 = vector.broadcast %25 : vector<1x128xf32> to vector<2x128xf32>
    %27 = arith.addf %24, %26 : vector<2x128xf32>
    %28 = tpu.iota {dimensions = array<i32: 1>} : vector<2x128xi32>
    %c4_i32 = arith.constant 4 : i32
    %29 = vector.broadcast %c4_i32 : i32 to vector<2x128xi32>
    %30 = arith.cmpi sge, %28, %29 : vector<2x128xi32>
    %cst_19 = arith.constant -2.000000e+01 : f32
    %cst_20 = arith.constant 2.000000e+00 : f32
    %31 = vector.broadcast %cst_19 : f32 to vector<2x128xf32>
    %32 = arith.maximumf %31, %27 : vector<2x128xf32>
    %33 = vector.broadcast %cst_20 : f32 to vector<2x128xf32>
    %34 = arith.minimumf %33, %32 : vector<2x128xf32>
    %35 = arith.select %30, %34, %27 : vector<2x128xi1>, vector<2x128xf32>
    %c0_21 = arith.constant 0 : index
    %c0_22 = arith.constant 0 : index
    %36 = vector.load %arg8[%c0_21, %c0_22] : memref<2x128xf32, #tpu.memory_space<vmem>>, vector<2x128xf32>
    tpu.vector_store %arg8[%c0_21, %c0_22], %35 {strides = array<i32>} : memref<2x128xf32, #tpu.memory_space<vmem>>, vector<2x128xf32>,
    return
  }
  func.func @transform_0(%arg0: i32) -> (i32, i32) {
    %c0_i32 = arith.constant 0 : i32
    %c0_i32_0 = arith.constant 0 : i32
    return %arg0, %c0_i32 : i32, i32
  }
  func.func @transform_1(%arg0: i32) -> (i32, i32) {
    %c0_i32 = arith.constant 0 : i32
    %c0_i32_0 = arith.constant 0 : i32
    %c0_i32_1 = arith.constant 0 : i32
    return %c0_i32, %c0_i32_0 : i32, i32
  }
  func.func @transform_2(%arg0: i32) -> (i32, i32) {
    %c0_i32 = arith.constant 0 : i32
    %c0_i32_0 = arith.constant 0 : i32
    %c0_i32_1 = arith.constant 0 : i32
    return %c0_i32, %c0_i32_0 : i32, i32
  }
  func.func @transform_3(%arg0: i32) -> (i32, i32) {
    %c0_i32 = arith.constant 0 : i32
    %c0_i32_0 = arith.constant 0 : i32
    %c0_i32_1 = arith.constant 0 : i32
    return %c0_i32, %c0_i32_0 : i32, i32
  }
  func.func @transform_4(%arg0: i32) -> (i32, i32) {
    %c0_i32 = arith.constant 0 : i32
    %c0_i32_0 = arith.constant 0 : i32
    %c0_i32_1 = arith.constant 0 : i32
    return %c0_i32, %c0_i32_0 : i32, i32
  }
  func.func @transform_5(%arg0: i32) -> (i32, i32) {
    %c0_i32 = arith.constant 0 : i32
    %c0_i32_0 = arith.constant 0 : i32
    %c0_i32_1 = arith.constant 0 : i32
    return %c0_i32, %c0_i32_0 : i32, i32
  }
  func.func @transform_6(%arg0: i32) -> (i32, i32) {
    %c0_i32 = arith.constant 0 : i32
    %c0_i32_0 = arith.constant 0 : i32
    %c0_i32_1 = arith.constant 0 : i32
    return %c0_i32, %c0_i32_0 : i32, i32
  }
  func.func @transform_7(%arg0: i32) -> (i32, i32) {
    %c0_i32 = arith.constant 0 : i32
    %c0_i32_0 = arith.constant 0 : i32
    return %arg0, %c0_i32 : i32, i32
  }
}

</mosaic_0001>

<llo_original>
// kernel: cont_gaussian_policy_forward.4
$region0: #{cont_gaussian_policy_forward.4}
  #allocation0 [shape = 'u32[]', space=smem, size = 0x4, offset = 0x4, fixed_abs, tag = 'smem constant byte address 0x4 - core index']
  #allocation1 [shape = 'u32[144,128]{1,0:T(1,128)}', space=vmem, size = 0x12000, scoped, tag = 'internal scratch']
  %s0 = inlined_call_operand.vmem [shape: bf16[32,75], index: 0, kind: input, shape index: {}]
  %s1 = inlined_call_operand.vmem [shape: f32[32,1], index: 1, kind: input, shape index: {}]
  %s2 = inlined_call_operand.vmem [shape: bf16[75,1800], index: 2, kind: input, shape index: {}]
  %s3 = inlined_call_operand.vmem [shape: bf16[32,1800], index: 3, kind: output, shape index: {}]
  %s4 = sld [smem:[#allocation0]]
  $region173: #{cont_gaussian_policy_forward.4} parent=0
    _
  %s6 = ssub.s32 1, %s4
  %s7 = scalar_select 0, %s6, %s4
  $region1: #{cont_gaussian_policy_forward.4} parent=0
    #allocation2 [shape = 'u8[327680]{0}', space=vmem, size = 0x50000, scoped, tag = 'input window, operand 2']
    #allocation3 [shape = 'u8[131072]{0}', space=vmem, size = 0x20000, scoped, tag = 'output window, operand 0']
    loop: start=0, step=1, limit=4
    $region2: #{cont_gaussian_policy_forward.4} parent=1 // loop_pre_header
      _
    $region3: #{cont_gaussian_policy_forward.4} parent=1 // loop_header
      %s9 = sphi 0, %s13
      %p10 = scmp.ge.s32.totalorder %s9, 4
      %s17 = sphi 0, %s17
      %s19 = sphi 0, %s17
      %s20 = sphi 0, %s19
      %s34 = sphi 0, %s20
      %s38 = sphi 0, %s38
      %s40 = sphi 0, %s38
      %s41 = sphi 0, %s40
      %s55 = sphi 0, %s41
      %s61 = sphi 0, %s63
      %s64 = sphi 0, %s61
      %s65 = sphi 0, %s64
      %s81 = sphi 0, %s65
      %s87 = sphi 0, %s89
      %s90 = sphi 0, %s87
      %s91 = sphi 0, %s90
      %s107 = sphi 0, %s91
    $region4: #{cont_gaussian_policy_forward.4} parent=1 // loop_header_branch
      %12 = sbr.rel (%p10) target = $region8
    $region5: #{cont_gaussian_policy_forward.4} parent=1 // loop_body
      %s14 = ssub.s32 %s9, 1
      %s15 = ssub.s32 %s9, 2
      %s16 = sadd.s32 %s9, 1
      %s18 = sadd.s32 %s17, 1
      %p21 = scmp.eq.s32.totalorder %s9, 1
      %p22 = scmp.ne.s32.totalorder %s17, %s19
      %p23 = scmp.eq.s32.totalorder %s9, 0
      %p24 = por %p22, %p23
      %p25 = scmp.ne.s32.totalorder %s17, %s19
      %p26 = scmp.eq.s32.totalorder %s14, 1
      %p27 = por %p25, %p26
      %p28 = scmp.ne.s32.totalorder %s19, %s20
      %p29 = scmp.eq.s32.totalorder %s14, 0
      %p30 = por %p28, %p29
      %p31 = scmp.ne.s32.totalorder %s19, %s20
      %p32 = scmp.eq.s32.totalorder %s15, 1
      %p33 = por %p31, %p32
      %p35 = scmp.ne.s32.totalorder %s20, %s34
      %p36 = scmp.eq.s32.totalorder %s15, 0
      %p37 = por %p35, %p36
      %s39 = sadd.s32 %s38, 1
      %p42 = scmp.eq.s32.totalorder %s9, 1
      %p43 = scmp.ne.s32.totalorder %s38, %s40
      %p44 = scmp.eq.s32.totalorder %s9, 0
      %p45 = por %p43, %p44
      %p46 = scmp.ne.s32.totalorder %s38, %s40
      %p47 = scmp.eq.s32.totalorder %s14, 1
      %p48 = por %p46, %p47
      %p49 = scmp.ne.s32.totalorder %s40, %s41
      %p50 = scmp.eq.s32.totalorder %s14, 0
      %p51 = por %p49, %p50
      %p52 = scmp.ne.s32.totalorder %s40, %s41
      %p53 = scmp.eq.s32.totalorder %s15, 1
      %p54 = por %p52, %p53
      %p56 = scmp.ne.s32.totalorder %s41, %s55
      %p57 = scmp.eq.s32.totalorder %s15, 0
      %p58 = por %p56, %p57
      %s59 = ssub.s32 %s9, %s16
      %p60 = scmp.eq.s32.totalorder %s59, 0
      %s62 = sadd.s32 %s61, 1
      %s63 = scalar_select %p60, %s61, %s62
      %p66 = pneg %p60
      %p67 = scmp.eq.s32.totalorder %s9, 1
      %p68 = por %p66, %p67
      %p69 = scmp.ne.s32.totalorder %s61, %s64
      %p70 = scmp.eq.s32.totalorder %s9, 0
      %p71 = por %p69, %p70
      %p72 = scmp.ne.s32.totalorder %s61, %s64
      %p73 = scmp.eq.s32.totalorder %s14, 1
      %p74 = por %p72, %p73
      %p75 = scmp.ne.s32.totalorder %s64, %s65
      %p76 = scmp.eq.s32.totalorder %s14, 0
      %p77 = por %p75, %p76
      %p78 = scmp.ne.s32.totalorder %s64, %s65
      %p79 = scmp.eq.s32.totalorder %s15, 1
      %p80 = por %p78, %p79
      %p82 = scmp.ne.s32.totalorder %s65, %s81
      %p83 = scmp.eq.s32.totalorder %s15, 0
      %p84 = por %p82, %p83
      %s85 = ssub.s32 %s9, %s16
      %p86 = scmp.eq.s32.totalorder %s85, 0
      %s88 = sadd.s32 %s87, 1
      %s89 = scalar_select %p86, %s87, %s88
      %p92 = pneg %p86
      %p93 = scmp.eq.s32.totalorder %s9, 1
      %p94 = por %p92, %p93
      %p95 = scmp.ne.s32.totalorder %s87, %s90
      %p96 = scmp.eq.s32.totalorder %s9, 0
      %p97 = por %p95, %p96
      %p98 = scmp.ne.s32.totalorder %s87, %s90
      %p99 = scmp.eq.s32.totalorder %s14, 1
      %p100 = por %p98, %p99
      %p101 = scmp.ne.s32.totalorder %s90, %s91
      %p102 = scmp.eq.s32.totalorder %s14, 0
      %p103 = por %p101, %p102
      %p104 = scmp.ne.s32.totalorder %s90, %s91
      %p105 = scmp.eq.s32.totalorder %s15, 1
      %p106 = por %p104, %p105
      %p108 = scmp.ne.s32.totalorder %s91, %s107
      %p109 = scmp.eq.s32.totalorder %s15, 0
      %p110 = por %p108, %p109
      %p111 = scmp.le.s32.totalorder 1, %s9
      %p112 = scmp.lt.s32.totalorder %s9, 3
      %p113 = pnand %p111, %p112
      %p114 = pneg %p113
      // Predicated region
      $region9: #{cont_gaussian_policy_forward.4} parent=5 // pred_check
        _
      $region10: #{cont_gaussian_policy_forward.4} parent=5 // pred_check_branch
        %116 = sbr.rel (%p113) target = $region12
      $region11: #{cont_gaussian_policy_forward.4} parent=5 // pred_region
        %s117 = ssub.s32 %s9, 1
        // Predicated region
        $region13: #{cont_gaussian_policy_forward.4} parent=11 // pred_check
          %p118 = pneg %p30
        $region14: #{cont_gaussian_policy_forward.4} parent=11 // pred_check_branch
          %120 = sbr.rel (%p118) target = $region16
        $region15: #{cont_gaussian_policy_forward.4} parent=11 // pred_region
          _
        $region16: #{cont_gaussian_policy_forward.4} parent=11 // pred_fallthru
          _
        // Predicated region
        $region17: #{cont_gaussian_policy_forward.4} parent=11 // pred_check
          %p121 = pneg %p51
        $region18: #{cont_gaussian_policy_forward.4} parent=11 // pred_check_branch
          %123 = sbr.rel (%p121) target = $region20
        $region19: #{cont_gaussian_policy_forward.4} parent=11 // pred_region
          _
        $region20: #{cont_gaussian_policy_forward.4} parent=11 // pred_fallthru
          _
      $region12: #{cont_gaussian_policy_forward.4} parent=5 // pred_fallthru
        _
      %p124 = scmp.lt.s32.totalorder %s9, 2
      // Predicated region
      $region21: #{cont_gaussian_policy_forward.4} parent=5 // pred_check
        %p125 = pneg %p124
      $region22: #{cont_gaussian_policy_forward.4} parent=5 // pred_check_branch
        %127 = sbr.rel (%p125) target = $region24
      $region23: #{cont_gaussian_policy_forward.4} parent=5 // pred_region
        // Predicated region
        $region25: #{cont_gaussian_policy_forward.4} parent=23 // pred_check
          %p128 = pneg %p71
        $region26: #{cont_gaussian_policy_forward.4} parent=23 // pred_check_branch
          %130 = sbr.rel (%p128) target = $region28
        $region27: #{cont_gaussian_policy_forward.4} parent=23 // pred_region
          %s131 = sand.u32 %s61, 1
          %s132 = sand.u32 %s61, 1
          %s133 = smul.addr %s132, 320
          %s134 = scalar_lea.vmem [#allocation2], %s133
          %s135 = smul.u32 8, %s9
          %s136 = ssub.s32 15, %s135
          %p137 = scmp.lt.s32.totalorder %s136, 8
          %s138 = scalar_select %p137, %s136, 8
          %s139 = smul.u32 640, %s138
          %p140 = scmp.ne.s32.totalorder 0, %s139
          %s141 = smul.addr %s135, 4
          %s142 = scalar_lea.vmem %s2, %s141
          %s143 = smul.u32 %s138, 4
          // Predicated region
          $region29: #{cont_gaussian_policy_forward.4} parent=27 // pred_check
            %p144 = pneg %p140
          $region30: #{cont_gaussian_policy_forward.4} parent=27 // pred_check_branch
            %146 = sbr.rel (%p144) target = $region32
          $region31: #{cont_gaussian_policy_forward.4} parent=27 // pred_region
            %p147 = scmp.lt.u32.totalorder %s143, 8
            %p148 = pneg %p147
            // Predicated region
            $region33: #{cont_gaussian_policy_forward.4} parent=31 // pred_check
              _
            $region34: #{cont_gaussian_policy_forward.4} parent=31 // pred_check_branch
              %150 = sbr.rel (%p147) target = $region36
            $region35: #{cont_gaussian_policy_forward.4} parent=31 // pred_region
              %s184 = sand.u32 %s143, 7
              %p185 = scmp.eq.s32.totalorder %s184, 0
              // Predicated region
              $region48: #{cont_gaussian_policy_forward.4} parent=35 // pred_check
                %p186 = pneg %p185
              $region49: #{cont_gaussian_policy_forward.4} parent=35 // pred_check_branch
                %188 = sbr.rel (%p186) target = $region51
              $region50: #{cont_gaussian_policy_forward.4} parent=35 // pred_region
                %s189 = sshrl.u32 %s143, 3
                %s190 = sshrl.u32 %s189, 3
                // While loop
                $region52: #{cont_gaussian_policy_forward.4} parent=50 // loop_pre_header
                  _
                $region53: #{cont_gaussian_policy_forward.4} parent=50 // loop_header
                  %s194 = sphi 0, %s196
                  %p195 = scmp.ge.s32.totalorder %s194, %s190
                  %s199 = sphi 0, %s364
                  %s200 = sphi %s142, %s367
                  %s201 = sphi %s134, %s368
                $region54: #{cont_gaussian_policy_forward.4} parent=50 // loop_header_branch
                  %198 = sbr.rel (%p195) target = $region58
                $region55: #{cont_gaussian_policy_forward.4} parent=50 // loop_body
                  %v202 = vld [vmem:[%s200] sm:$0xff]
                  %203 = vst [vmem:[%s201] sm:$0xff] %v202
                  %v204 = vld [vmem:[%s200 + $0x8] sm:$0xff]
                  %205 = vst [vmem:[%s201 + $0x8] sm:$0xff] %v204
                  %v206 = vld [vmem:[%s200 + $0x10] sm:$0xff]
                  %207 = vst [vmem:[%s201 + $0x10] sm:$0xff] %v206
                  %v208 = vld [vmem:[%s200 + $0x18] sm:$0xff]
                  %209 = vst [vmem:[%s201 + $0x18] sm:$0xff] %v208
                  %v210 = vld [vmem:[%s200 + $0x20] sm:$0xff]
                  %211 = vst [vmem:[%s201 + $0x20] sm:$0xff] %v210
                  %v212 = vld [vmem:[%s200 + $0x28] sm:$0xff]
                  %213 = vst [vmem:[%s201 + $0x28] sm:$0xff] %v212
                  %v214 = vld [vmem:[%s200 + $0x30] sm:$0xff]
                  %215 = vst [vmem:[%s201 + $0x30] sm:$0xff] %v214
                  %v216 = vld [vmem:[%s200 + $0x38] sm:$0xff]
                  %217 = vst [vmem:[%s201 + $0x38] sm:$0xff] %v216
                  %v218 = vld [vmem:[%s200 + $0x3c] sm:$0xff]
                  %219 = vst [vmem:[%s201 + $0x20] sm:$0xff] %v218
                  %v220 = vld [vmem:[%s200 + $0x44] sm:$0xff]
                  %221 = vst [vmem:[%s201 + $0x28] sm:$0xff] %v220
                  %v222 = vld [vmem:[%s200 + $0x4c] sm:$0xff]
                  %223 = vst [vmem:[%s201 + $0x30] sm:$0xff] %v222
                  %v224 = vld [vmem:[%s200 + $0x54] sm:$0xff]
                  %225 = vst [vmem:[%s201 + $0x38] sm:$0xff] %v224
                  %v226 = vld [vmem:[%s200 + $0x5c] sm:$0xff]
                  %227 = vst [vmem:[%s201 + $0x40] sm:$0xff] %v226
                  %v228 = vld [vmem:[%s200 + $0x64] sm:$0xff]
                  %229 = vst [vmem:[%s201 + $0x48] sm:$0xff] %v228
                  %v230 = vld [vmem:[%s200 + $0x6c] sm:$0xff]
                  %231 = vst [vmem:[%s201 + $0x50] sm:$0xff] %v230
                  %v232 = vld [vmem:[%s200 + $0x74] sm:$0xff]
                  %233 = vst [vmem:[%s201 + $0x58] sm:$0xff] %v232
                  %v234 = vld [vmem:[%s200 + $0x78] sm:$0xff]
                  %235 = vst [vmem:[%s201 + $0x40] sm:$0xff] %v234
                  %v236 = vld [vmem:[%s200 + $0x80] sm:$0xff]
                  %237 = vst [vmem:[%s201 + $0x48] sm:$0xff] %v236
                  %v238 = vld [vmem:[%s200 + $0x88] sm:$0xff]
                  %239 = vst [vmem:[%s201 + $0x50] sm:$0xff] %v238
                  %v240 = vld [vmem:[%s200 + $0x90] sm:$0xff]
                  %241 = vst [vmem:[%s201 + $0x58] sm:$0xff] %v240
                  %v242 = vld [vmem:[%s200 + $0x98] sm:$0xff]
                  %243 = vst [vmem:[%s201 + $0x60] sm:$0xff] %v242
                  %v244 = vld [vmem:[%s200 + $0xa0] sm:$0xff]
                  %245 = vst [vmem:[%s201 + $0x68] sm:$0xff] %v244
                  %v246 = vld [vmem:[%s200 + $0xa8] sm:$0xff]
                  %247 = vst [vmem:[%s201 + $0x70] sm:$0xff] %v246
                  %v248 = vld [vmem:[%s200 + $0xb0] sm:$0xff]
                  %249 = vst [vmem:[%s201 + $0x78] sm:$0xff] %v248
                  %v250 = vld [vmem:[%s200 + $0xb4] sm:$0xff]
                  %251 = vst [vmem:[%s201 + $0x60] sm:$0xff] %v250
                  %v252 = vld [vmem:[%s200 + $0xbc] sm:$0xff]
                  %253 = vst [vmem:[%s201 + $0x68] sm:$0xff] %v252
                  %v254 = vld [vmem:[%s200 + $0xc4] sm:$0xff]
                  %255 = vst [vmem:[%s201 + $0x70] sm:$0xff] %v254
                  %v256 = vld [vmem:[%s200 + $0xcc] sm:$0xff]
                  %257 = vst [vmem:[%s201 + $0x78] sm:$0xff] %v256
                  %v258 = vld [vmem:[%s200 + $0xd4] sm:$0xff]
                  %259 = vst [vmem:[%s201 + $0x80] sm:$0xff] %v258
                  %v260 = vld [vmem:[%s200 + $0xdc] sm:$0xff]
                  %261 = vst [vmem:[%s201 + $0x88] sm:$0xff] %v260
                  %v262 = vld [vmem:[%s200 + $0xe4] sm:$0xff]
                  %263 = vst [vmem:[%s201 + $0x90] sm:$0xff] %v262
                  %v264 = vld [vmem:[%s200 + $0xec] sm:$0xff]
                  %265 = vst [vmem:[%s201 + $0x98] sm:$0xff] %v264
                  %v266 = vld [vmem:[%s200 + $0xf0] sm:$0xff]
                  %267 = vst [vmem:[%s201 + $0x80] sm:$0xff] %v266
                  %v268 = vld [vmem:[%s200 + $0xf8] sm:$0xff]
                  %269 = vst [vmem:[%s201 + $0x88] sm:$0xff] %v268
                  %v270 = vld [vmem:[%s200 + $0x100] sm:$0xff]
                  %271 = vst [vmem:[%s201 + $0x90] sm:$0xff] %v270
                  %v272 = vld [vmem:[%s200 + $0x108] sm:$0xff]
                  %273 = vst [vmem:[%s201 + $0x98] sm:$0xff] %v272
                  %v274 = vld [vmem:[%s200 + $0x110] sm:$0xff]
                  %275 = vst [vmem:[%s201 + $0xa0] sm:$0xff] %v274
                  %v276 = vld [vmem:[%s200 + $0x118] sm:$0xff]
                  %277 = vst [vmem:[%s201 + $0xa8] sm:$0xff] %v276
                  %v278 = vld [vmem:[%s200 + $0x120] sm:$0xff]
                  %279 = vst [vmem:[%s201 + $0xb0] sm:$0xff] %v278
                  %v280 = vld [vmem:[%s200 + $0x128] sm:$0xff]
                  %281 = vst [vmem:[%s201 + $0xb8] sm:$0xff] %v280
                  %v282 = vld [vmem:[%s200 + $0x12c] sm:$0xff]
                  %283 = vst [vmem:[%s201 + $0xa0] sm:$0xff] %v282
                  %v284 = vld [vmem:[%s200 + $0x134] sm:$0xff]
                  %285 = vst [vmem:[%s201 + $0xa8] sm:$0xff] %v284
                  %v286 = vld [vmem:[%s200 + $0x13c] sm:$0xff]
                  %287 = vst [vmem:[%s201 + $0xb0] sm:$0xff] %v286
                  %v288 = vld [vmem:[%s200 + $0x144] sm:$0xff]
                  %289 = vst [vmem:[%s201 + $0xb8] sm:$0xff] %v288
                  %v290 = vld [vmem:[%s200 + $0x14c] sm:$0xff]
                  %291 = vst [vmem:[%s201 + $0xc0] sm:$0xff] %v290
                  %v292 = vld [vmem:[%s200 + $0x154] sm:$0xff]
                  %293 = vst [vmem:[%s201 + $0xc8] sm:$0xff] %v292
                  %v294 = vld [vmem:[%s200 + $0x15c] sm:$0xff]
                  %295 = vst [vmem:[%s201 + $0xd0] sm:$0xff] %v294
                  %v296 = vld [vmem:[%s200 + $0x164] sm:$0xff]
                  %297 = vst [vmem:[%s201 + $0xd8] sm:$0xff] %v296
                  %v298 = vld [vmem:[%s200 + $0x168] sm:$0xff]
                  %299 = vst [vmem:[%s201 + $0xc0] sm:$0xff] %v298
                  %v300 = vld [vmem:[%s200 + $0x170] sm:$0xff]
                  %301 = vst [vmem:[%s201 + $0xc8] sm:$0xff] %v300
                  %v302 = vld [vmem:[%s200 + $0x178] sm:$0xff]
                  %303 = vst [vmem:[%s201 + $0xd0] sm:$0xff] %v302
                  %v304 = vld [vmem:[%s200 + $0x180] sm:$0xff]
                  %305 = vst [vmem:[%s201 + $0xd8] sm:$0xff] %v304
                  %v306 = vld [vmem:[%s200 + $0x188] sm:$0xff]
                  %307 = vst [vmem:[%s201 + $0xe0] sm:$0xff] %v306
                  %v308 = vld [vmem:[%s200 + $0x190] sm:$0xff]
                  %309 = vst [vmem:[%s201 + $0xe8] sm:$0xff] %v308
                  %v310 = vld [vmem:[%s200 + $0x198] sm:$0xff]
                  %311 = vst [vmem:[%s201 + $0xf0] sm:$0xff] %v310
                  %v312 = vld [vmem:[%s200 + $0x1a0] sm:$0xff]
                  %313 = vst [vmem:[%s201 + $0xf8] sm:$0xff] %v312
                  %v314 = vld [vmem:[%s200 + $0x1a4] sm:$0xff]
                  %315 = vst [vmem:[%s201 + $0xe0] sm:$0xff] %v314
                  %v316 = vld [vmem:[%s200 + $0x1ac] sm:$0xff]
                  %317 = vst [vmem:[%s201 + $0xe8] sm:$0xff] %v316
                  %v318 = vld [vmem:[%s200 + $0x1b4] sm:$0xff]
                  %319 = vst [vmem:[%s201 + $0xf0] sm:$0xff] %v318
                  %v320 = vld [vmem:[%s200 + $0x1bc] sm:$0xff]
                  %321 = vst [vmem:[%s201 + $0xf8] sm:$0xff] %v320
                  %v322 = vld [vmem:[%s200 + $0x1c4] sm:$0xff]
                  %323 = vst [vmem:[%s201 + $0x100] sm:$0xff] %v322
                  %v324 = vld [vmem:[%s200 + $0x1cc] sm:$0xff]
                  %325 = vst [vmem:[%s201 + $0x108] sm:$0xff] %v324
                  %v326 = vld [vmem:[%s200 + $0x1d4] sm:$0xff]
                  %327 = vst [vmem:[%s201 + $0x110] sm:$0xff] %v326
                  %v328 = vld [vmem:[%s200 + $0x1dc] sm:$0xff]
                  %329 = vst [vmem:[%s201 + $0x118] sm:$0xff] %v328
                  %v330 = vld [vmem:[%s200 + $0x1e0] sm:$0xff]
                  %331 = vst [vmem:[%s201 + $0x100] sm:$0xff] %v330
                  %v332 = vld [vmem:[%s200 + $0x1e8] sm:$0xff]
                  %333 = vst [vmem:[%s201 + $0x108] sm:$0xff] %v332
                  %v334 = vld [vmem:[%s200 + $0x1f0] sm:$0xff]
                  %335 = vst [vmem:[%s201 + $0x110] sm:$0xff] %v334
                  %v336 = vld [vmem:[%s200 + $0x1f8] sm:$0xff]
                  %337 = vst [vmem:[%s201 + $0x118] sm:$0xff] %v336
                  %v338 = vld [vmem:[%s200 + $0x200] sm:$0xff]
                  %339 = vst [vmem:[%s201 + $0x120] sm:$0xff] %v338
                  %v340 = vld [vmem:[%s200 + $0x208] sm:$0xff]
                  %341 = vst [vmem:[%s201 + $0x128] sm:$0xff] %v340
                  %v342 = vld [vmem:[%s200 + $0x210] sm:$0xff]
                  %343 = vst [vmem:[%s201 + $0x130] sm:$0xff] %v342
                  %v344 = vld [vmem:[%s200 + $0x218] sm:$0xff]
                  %345 = vst [vmem:[%s201 + $0x138] sm:$0xff] %v344
                  %v346 = vld [vmem:[%s200 + $0x21c] sm:$0xff]
                  %347 = vst [vmem:[%s201 + $0x120] sm:$0xff] %v346
                  %v348 = vld [vmem:[%s200 + $0x224] sm:$0xff]
                  %349 = vst [vmem:[%s201 + $0x128] sm:$0xff] %v348
                  %v350 = vld [vmem:[%s200 + $0x22c] sm:$0xff]
                  %351 = vst [vmem:[%s201 + $0x130] sm:$0xff] %v350
                  %v352 = vld [vmem:[%s200 + $0x234] sm:$0xff]
                  %353 = vst [vmem:[%s201 + $0x138] sm:$0xff] %v352
                  %v354 = vld [vmem:[%s200 + $0x23c] sm:$0xff]
                  %355 = vst [vmem:[%s201 + $0x140] sm:$0xff] %v354
                  %v356 = vld [vmem:[%s200 + $0x244] sm:$0xff]
                  %357 = vst [vmem:[%s201 + $0x148] sm:$0xff] %v356
                  %v358 = vld [vmem:[%s200 + $0x24c] sm:$0xff]
                  %359 = vst [vmem:[%s201 + $0x150] sm:$0xff] %v358
                  %v360 = vld [vmem:[%s200 + $0x254] sm:$0xff]
                  %361 = vst [vmem:[%s201 + $0x158] sm:$0xff] %v360
                  %s362 = sadd.s32 1, %s199
                  %p363 = scmp.ge.s32.totalorder %s362, %s190
                  %s364 = scalar_select %p363, 0, %s362
                  %s365 = smul.u32 %s364, 64
                  %s366 = smul.u32 %s364, 64
                  %s367 = scalar_lea.vmem %s142, %s365
                  %s368 = scalar_lea.vmem %s134, %s366 [#allocation2]
                $region56: #{cont_gaussian_policy_forward.4} parent=50 // loop_footer
                  %s196 = sadd.s32 %s194, 1
                $region57: #{cont_gaussian_policy_forward.4} parent=50 // loop_footer_branch
                  %193 = sbr.rel target = $region53
                $region58: #{cont_gaussian_policy_forward.4} parent=50 // loop_exit
                  _
                %s369 = sshrl.u32 %s189, 3
                %s370 = sand.u32 %s189, 7
                %s371 = smul.u32 %s369, 8
                %s372 = smul.u32 128, %s371
                %s373 = sshra.s32 %s372, 4
                %s374 = scalar_lea.vmem %s142, %s373
                %s375 = smul.u32 128, %s371
                %s376 = sshra.s32 %s375, 4
                %s377 = scalar_lea.vmem %s134, %s376 [#allocation2]
                // While loop
                $region59: #{cont_gaussian_policy_forward.4} parent=50 // loop_pre_header
                  _
                $region60: #{cont_gaussian_policy_forward.4} parent=50 // loop_header
                  %s381 = sphi 0, %s383
                  %p382 = scmp.ge.s32.totalorder %s381, %s370
                  %s386 = sphi 0, %s411
                  %s387 = sphi %s374, %s414
                  %s388 = sphi %s377, %s415
                $region61: #{cont_gaussian_policy_forward.4} parent=50 // loop_header_branch
                  %385 = sbr.rel (%p382) target = $region65
                $region62: #{cont_gaussian_policy_forward.4} parent=50 // loop_body
                  %v389 = vld [vmem:[%s387] sm:$0xff]
                  %390 = vst [vmem:[%s388] sm:$0xff] %v389
                  %v391 = vld [vmem:[%s387 + $0x3c] sm:$0xff]
                  %392 = vst [vmem:[%s388 + $0x20] sm:$0xff] %v391
                  %v393 = vld [vmem:[%s387 + $0x78] sm:$0xff]
                  %394 = vst [vmem:[%s388 + $0x40] sm:$0xff] %v393
                  %v395 = vld [vmem:[%s387 + $0xb4] sm:$0xff]
                  %396 = vst [vmem:[%s388 + $0x60] sm:$0xff] %v395
                  %v397 = vld [vmem:[%s387 + $0xf0] sm:$0xff]
                  %398 = vst [vmem:[%s388 + $0x80] sm:$0xff] %v397
                  %v399 = vld [vmem:[%s387 + $0x12c] sm:$0xff]
                  %400 = vst [vmem:[%s388 + $0xa0] sm:$0xff] %v399
                  %v401 = vld [vmem:[%s387 + $0x168] sm:$0xff]
                  %402 = vst [vmem:[%s388 + $0xc0] sm:$0xff] %v401
                  %v403 = vld [vmem:[%s387 + $0x1a4] sm:$0xff]
                  %404 = vst [vmem:[%s388 + $0xe0] sm:$0xff] %v403
                  %v405 = vld [vmem:[%s387 + $0x1e0] sm:$0xff]
                  %406 = vst [vmem:[%s388 + $0x100] sm:$0xff] %v405
                  %v407 = vld [vmem:[%s387 + $0x21c] sm:$0xff]
                  %408 = vst [vmem:[%s388 + $0x120] sm:$0xff] %v407
                  %s409 = sadd.s32 1, %s386
                  %p410 = scmp.ge.s32.totalorder %s409, %s370
                  %s411 = scalar_select %p410, 0, %s409
                  %s412 = smul.u32 %s411, 8
                  %s413 = smul.u32 %s411, 8
                  %s414 = scalar_lea.vmem %s374, %s412
                  %s415 = scalar_lea.vmem %s377, %s413 [#allocation2]
                $region63: #{cont_gaussian_policy_forward.4} parent=50 // loop_footer
                  %s383 = sadd.s32 %s381, 1
                $region64: #{cont_gaussian_policy_forward.4} parent=50 // loop_footer_branch
                  %380 = sbr.rel target = $region60
                $region65: #{cont_gaussian_policy_forward.4} parent=50 // loop_exit
                  _
              $region51: #{cont_gaussian_policy_forward.4} parent=35 // pred_fallthru
                _
              %p416 = pneg %p185
              // Predicated region
              $region66: #{cont_gaussian_policy_forward.4} parent=35 // pred_check
                _
              $region67: #{cont_gaussian_policy_forward.4} parent=35 // pred_check_branch
                %418 = sbr.rel (%p185) target = $region69
              $region68: #{cont_gaussian_policy_forward.4} parent=35 // pred_region
                %s419 = sand.u32 %s143, 7
                %s420 = ssub.s32 %s143, %s419
                %s421 = scalar_lea.vmem %s142, %s420
                %s422 = ssub.s32 %s143, %s419
                %s423 = scalar_lea.vmem %s134, %s422 [#allocation2]
                %s424 = sshrl.u32 %s143, 3
                %s425 = sshrl.u32 %s424, 3
                // While loop
                $region70: #{cont_gaussian_policy_forward.4} parent=68 // loop_pre_header
                  _
                $region71: #{cont_gaussian_policy_forward.4} parent=68 // loop_header
                  %s429 = sphi 0, %s431
                  %p430 = scmp.ge.s32.totalorder %s429, %s425
                  %s434 = sphi 0, %s599
                  %s435 = sphi %s142, %s602
                  %s436 = sphi %s134, %s603
                $region72: #{cont_gaussian_policy_forward.4} parent=68 // loop_header_branch
                  %433 = sbr.rel (%p430) target = $region76
                $region73: #{cont_gaussian_policy_forward.4} parent=68 // loop_body
                  %v437 = vld [vmem:[%s435] sm:$0xff]
                  %438 = vst [vmem:[%s436] sm:$0xff] %v437
                  %v439 = vld [vmem:[%s435 + $0x8] sm:$0xff]
                  %440 = vst [vmem:[%s436 + $0x8] sm:$0xff] %v439
                  %v441 = vld [vmem:[%s435 + $0x10] sm:$0xff]
                  %442 = vst [vmem:[%s436 + $0x10] sm:$0xff] %v441
                  %v443 = vld [vmem:[%s435 + $0x18] sm:$0xff]
                  %444 = vst [vmem:[%s436 + $0x18] sm:$0xff] %v443
                  %v445 = vld [vmem:[%s435 + $0x20] sm:$0xff]
                  %446 = vst [vmem:[%s436 + $0x20] sm:$0xff] %v445
                  %v447 = vld [vmem:[%s435 + $0x28] sm:$0xff]
                  %448 = vst [vmem:[%s436 + $0x28] sm:$0xff] %v447
                  %v449 = vld [vmem:[%s435 + $0x30] sm:$0xff]
                  %450 = vst [vmem:[%s436 + $0x30] sm:$0xff] %v449
                  %v451 = vld [vmem:[%s435 + $0x38] sm:$0xff]
                  %452 = vst [vmem:[%s436 + $0x38] sm:$0xff] %v451
                  %v453 = vld [vmem:[%s435 + $0x3c] sm:$0xff]
                  %454 = vst [vmem:[%s436 + $0x20] sm:$0xff] %v453
                  %v455 = vld [vmem:[%s435 + $0x44] sm:$0xff]
                  %456 = vst [vmem:[%s436 + $0x28] sm:$0xff] %v455
                  %v457 = vld [vmem:[%s435 + $0x4c] sm:$0xff]
                  %458 = vst [vmem:[%s436 + $0x30] sm:$0xff] %v457
                  %v459 = vld [vmem:[%s435 + $0x54] sm:$0xff]
                  %460 = vst [vmem:[%s436 + $0x38] sm:$0xff] %v459
                  %v461 = vld [vmem:[%s435 + $0x5c] sm:$0xff]
                  %462 = vst [vmem:[%s436 + $0x40] sm:$0xff] %v461
                  %v463 = vld [vmem:[%s435 + $0x64] sm:$0xff]
                  %464 = vst [vmem:[%s436 + $0x48] sm:$0xff] %v463
                  %v465 = vld [vmem:[%s435 + $0x6c] sm:$0xff]
                  %466 = vst [vmem:[%s436 + $0x50] sm:$0xff] %v465
                  %v467 = vld [vmem:[%s435 + $0x74] sm:$0xff]
                  %468 = vst [vmem:[%s436 + $0x58] sm:$0xff] %v467
                  %v469 = vld [vmem:[%s435 + $0x78] sm:$0xff]
                  %470 = vst [vmem:[%s436 + $0x40] sm:$0xff] %v469
                  %v471 = vld [vmem:[%s435 + $0x80] sm:$0xff]
                  %472 = vst [vmem:[%s436 + $0x48] sm:$0xff] %v471
                  %v473 = vld [vmem:[%s435 + $0x88] sm:$0xff]
                  %474 = vst [vmem:[%s436 + $0x50] sm:$0xff] %v473
                  %v475 = vld [vmem:[%s435 + $0x90] sm:$0xff]
                  %476 = vst [vmem:[%s436 + $0x58] sm:$0xff] %v475
                  %v477 = vld [vmem:[%s435 + $0x98] sm:$0xff]
                  %478 = vst [vmem:[%s436 + $0x60] sm:$0xff] %v477
                  %v479 = vld [vmem:[%s435 + $0xa0] sm:$0xff]
                  %480 = vst [vmem:[%s436 + $0x68] sm:$0xff] %v479
                  %v481 = vld [vmem:[%s435 + $0xa8] sm:$0xff]
                  %482 = vst [vmem:[%s436 + $0x70] sm:$0xff] %v481
                  %v483 = vld [vmem:[%s435 + $0xb0] sm:$0xff]
                  %484 = vst [vmem:[%s436 + $0x78] sm:$0xff] %v483
                  %v485 = vld [vmem:[%s435 + $0xb4] sm:$0xff]
                  %486 = vst [vmem:[%s436 + $0x60] sm:$0xff] %v485
                  %v487 = vld [vmem:[%s435 + $0xbc] sm:$0xff]
                  %488 = vst [vmem:[%s436 + $0x68] sm:$0xff] %v487
                  %v489 = vld [vmem:[%s435 + $0xc4] sm:$0xff]
                  %490 = vst [vmem:[%s436 + $0x70] sm:$0xff] %v489
                  %v491 = vld [vmem:[%s435 + $0xcc] sm:$0xff]
                  %492 = vst [vmem:[%s436 + $0x78] sm:$0xff] %v491
                  %v493 = vld [vmem:[%s435 + $0xd4] sm:$0xff]
                  %494 = vst [vmem:[%s436 + $0x80] sm:$0xff] %v493
                  %v495 = vld [vmem:[%s435 + $0xdc] sm:$0xff]
                  %496 = vst [vmem:[%s436 + $0x88] sm:$0xff] %v495
                  %v497 = vld [vmem:[%s435 + $0xe4] sm:$0xff]
                  %498 = vst [vmem:[%s436 + $0x90] sm:$0xff] %v497
                  %v499 = vld [vmem:[%s435 + $0xec] sm:$0xff]
                  %500 = vst [vmem:[%s436 + $0x98] sm:$0xff] %v499
                  %v501 = vld [vmem:[%s435 + $0xf0] sm:$0xff]
                  %502 = vst [vmem:[%s436 + $0x80] sm:$0xff] %v501
                  %v503 = vld [vmem:[%s435 + $0xf8] sm:$0xff]
                  %504 = vst [vmem:[%s436 + $0x88] sm:$0xff] %v503
                  %v505 = vld [vmem:[%s435 + $0x100] sm:$0xff]
                  %506 = vst [vmem:[%s436 + $0x90] sm:$0xff] %v505
                  %v507 = vld [vmem:[%s435 + $0x108] sm:$0xff]
                  %508 = vst [vmem:[%s436 + $0x98] sm:$0xff] %v507
                  %v509 = vld [vmem:[%s435 + $0x110] sm:$0xff]
                  %510 = vst [vmem:[%s436 + $0xa0] sm:$0xff] %v509
                  %v511 = vld [vmem:[%s435 + $0x118] sm:$0xff]
                  %512 = vst [vmem:[%s436 + $0xa8] sm:$0xff] %v511
                  %v513 = vld [vmem:[%s435 + $0x120] sm:$0xff]
                  %514 = vst [vmem:[%s436 + $0xb0] sm:$0xff] %v513
                  %v515 = vld [vmem:[%s435 + $0x128] sm:$0xff]
                  %516 = vst [vmem:[%s436 + $0xb8] sm:$0xff] %v515
                  %v517 = vld [vmem:[%s435 + $0x12c] sm:$0xff]
                  %518 = vst [vmem:[%s436 + $0xa0] sm:$0xff] %v517
                  %v519 = vld [vmem:[%s435 + $0x134] sm:$0xff]
                  %520 = vst [vmem:[%s436 + $0xa8] sm:$0xff] %v519
                  %v521 = vld [vmem:[%s435 + $0x13c] sm:$0xff]
                  %522 = vst [vmem:[%s436 + $0xb0] sm:$0xff] %v521
                  %v523 = vld [vmem:[%s435 + $0x144] sm:$0xff]
                  %524 = vst [vmem:[%s436 + $0xb8] sm:$0xff] %v523
                  %v525 = vld [vmem:[%s435 + $0x14c] sm:$0xff]
                  %526 = vst [vmem:[%s436 + $0xc0] sm:$0xff] %v525
                  %v527 = vld [vmem:[%s435 + $0x154] sm:$0xff]
                  %528 = vst [vmem:[%s436 + $0xc8] sm:$0xff] %v527
                  %v529 = vld [vmem:[%s435 + $0x15c] sm:$0xff]
                  %530 = vst [vmem:[%s436 + $0xd0] sm:$0xff] %v529
                  %v531 = vld [vmem:[%s435 + $0x164] sm:$0xff]
                  %532 = vst [vmem:[%s436 + $0xd8] sm:$0xff] %v531
                  %v533 = vld [vmem:[%s435 + $0x168] sm:$0xff]
                  %534 = vst [vmem:[%s436 + $0xc0] sm:$0xff] %v533
                  %v535 = vld [vmem:[%s435 + $0x170] sm:$0xff]
                  %536 = vst [vmem:[%s436 + $0xc8] sm:$0xff] %v535
                  %v537 = vld [vmem:[%s435 + $0x178] sm:$0xff]
                  %538 = vst [vmem:[%s436 + $0xd0] sm:$0xff] %v537
                  %v539 = vld [vmem:[%s435 + $0x180] sm:$0xff]
                  %540 = vst [vmem:[%s436 + $0xd8] sm:$0xff] %v539
                  %v541 = vld [vmem:[%s435 + $0x188] sm:$0xff]
                  %542 = vst [vmem:[%s436 + $0xe0] sm:$0xff] %v541
                  %v543 = vld [vmem:[%s435 + $0x190] sm:$0xff]
                  %544 = vst [vmem:[%s436 + $0xe8] sm:$0xff] %v543
                  %v545 = vld [vmem:[%s435 + $0x198] sm:$0xff]
                  %546 = vst [vmem:[%s436 + $0xf0] sm:$0xff] %v545
                  %v547 = vld [vmem:[%s435 + $0x1a0] sm:$0xff]
                  %548 = vst [vmem:[%s436 + $0xf8] sm:$0xff] %v547
                  %v549 = vld [vmem:[%s435 + $0x1a4] sm:$0xff]
                  %550 = vst [vmem:[%s436 + $0xe0] sm:$0xff] %v549
                  %v551 = vld [vmem:[%s435 + $0x1ac] sm:$0xff]
                  %552 = vst [vmem:[%s436 + $0xe8] sm:$0xff] %v551
                  %v553 = vld [vmem:[%s435 + $0x1b4] sm:$0xff]
                  %554 = vst [vmem:[%s436 + $0xf0] sm:$0xff] %v553
                  %v555 = vld [vmem:[%s435 + $0x1bc] sm:$0xff]
                  %556 = vst [vmem:[%s436 + $0xf8] sm:$0xff] %v555
                  %v557 = vld [vmem:[%s435 + $0x1c4] sm:$0xff]
                  %558 = vst [vmem:[%s436 + $0x100] sm:$0xff] %v557
                  %v559 = vld [vmem:[%s435 + $0x1cc] sm:$0xff]
                  %560 = vst [vmem:[%s436 + $0x108] sm:$0xff] %v559
                  %v561 = vld [vmem:[%s435 + $0x1d4] sm:$0xff]
                  %562 = vst [vmem:[%s436 + $0x110] sm:$0xff] %v561
                  %v563 = vld [vmem:[%s435 + $0x1dc] sm:$0xff]
                  %564 = vst [vmem:[%s436 + $0x118] sm:$0xff] %v563
                  %v565 = vld [vmem:[%s435 + $0x1e0] sm:$0xff]
                  %566 = vst [vmem:[%s436 + $0x100] sm:$0xff] %v565
                  %v567 = vld [vmem:[%s435 + $0x1e8] sm:$0xff]
                  %568 = vst [vmem:[%s436 + $0x108] sm:$0xff] %v567
                  %v569 = vld [vmem:[%s435 + $0x1f0] sm:$0xff]
                  %570 = vst [vmem:[%s436 + $0x110] sm:$0xff] %v569
                  %v571 = vld [vmem:[%s435 + $0x1f8] sm:$0xff]
                  %572 = vst [vmem:[%s436 + $0x118] sm:$0xff] %v571
                  %v573 = vld [vmem:[%s435 + $0x200] sm:$0xff]
                  %574 = vst [vmem:[%s436 + $0x120] sm:$0xff] %v573
                  %v575 = vld [vmem:[%s435 + $0x208] sm:$0xff]
                  %576 = vst [vmem:[%s436 + $0x128] sm:$0xff] %v575
                  %v577 = vld [vmem:[%s435 + $0x210] sm:$0xff]
                  %578 = vst [vmem:[%s436 + $0x130] sm:$0xff] %v577
                  %v579 = vld [vmem:[%s435 + $0x218] sm:$0xff]
                  %580 = vst [vmem:[%s436 + $0x138] sm:$0xff] %v579
                  %v581 = vld [vmem:[%s435 + $0x21c] sm:$0xff]
                  %582 = vst [vmem:[%s436 + $0x120] sm:$0xff] %v581
                  %v583 = vld [vmem:[%s435 + $0x224] sm:$0xff]
                  %584 = vst [vmem:[%s436 + $0x128] sm:$0xff] %v583
                  %v585 = vld [vmem:[%s435 + $0x22c] sm:$0xff]
                  %586 = vst [vmem:[%s436 + $0x130] sm:$0xff] %v585
                  %v587 = vld [vmem:[%s435 + $0x234] sm:$0xff]
                  %588 = vst [vmem:[%s436 + $0x138] sm:$0xff] %v587
                  %v589 = vld [vmem:[%s435 + $0x23c] sm:$0xff]
                  %590 = vst [vmem:[%s436 + $0x140] sm:$0xff] %v589
                  %v591 = vld [vmem:[%s435 + $0x244] sm:$0xff]
                  %592 = vst [vmem:[%s436 + $0x148] sm:$0xff] %v591
                  %v593 = vld [vmem:[%s435 + $0x24c] sm:$0xff]
                  %594 = vst [vmem:[%s436 + $0x150] sm:$0xff] %v593
                  %v595 = vld [vmem:[%s435 + $0x254] sm:$0xff]
                  %596 = vst [vmem:[%s436 + $0x158] sm:$0xff] %v595
                  %s597 = sadd.s32 1, %s434
                  %p598 = scmp.ge.s32.totalorder %s597, %s425
                  %s599 = scalar_select %p598, 0, %s597
                  %s600 = smul.u32 %s599, 64
                  %s601 = smul.u32 %s599, 64
                  %s602 = scalar_lea.vmem %s142, %s600
                  %s603 = scalar_lea.vmem %s134, %s601 [#allocation2]
                $region74: #{cont_gaussian_policy_forward.4} parent=68 // loop_footer
                  %s431 = sadd.s32 %s429, 1
                $region75: #{cont_gaussian_policy_forward.4} parent=68 // loop_footer_branch
                  %428 = sbr.rel target = $region71
                $region76: #{cont_gaussian_policy_forward.4} parent=68 // loop_exit
                  _
                %s604 = sshrl.u32 %s424, 3
                %s605 = sand.u32 %s424, 7
                %s606 = smul.u32 %s604, 8
                %s607 = smul.u32 128, %s606
                %s608 = sshra.s32 %s607, 4
                %s609 = scalar_lea.vmem %s142, %s608
                %s610 = smul.u32 128, %s606
                %s611 = sshra.s32 %s610, 4
                %s612 = scalar_lea.vmem %s134, %s611 [#allocation2]
                // While loop
                $region77: #{cont_gaussian_policy_forward.4} parent=68 // loop_pre_header
                  _
                $region78: #{cont_gaussian_policy_forward.4} parent=68 // loop_header
                  %s616 = sphi 0, %s618
                  %p617 = scmp.ge.s32.totalorder %s616, %s605
                  %s621 = sphi 0, %s646
                  %s622 = sphi %s609, %s649
                  %s623 = sphi %s612, %s650
                $region79: #{cont_gaussian_policy_forward.4} parent=68 // loop_header_branch
                  %620 = sbr.rel (%p617) target = $region83
                $region80: #{cont_gaussian_policy_forward.4} parent=68 // loop_body
                  %v624 = vld [vmem:[%s622] sm:$0xff]
                  %625 = vst [vmem:[%s623] sm:$0xff] %v624
                  %v626 = vld [vmem:[%s622 + $0x3c] sm:$0xff]
                  %627 = vst [vmem:[%s623 + $0x20] sm:$0xff] %v626
                  %v628 = vld [vmem:[%s622 + $0x78] sm:$0xff]
                  %629 = vst [vmem:[%s623 + $0x40] sm:$0xff] %v628
                  %v630 = vld [vmem:[%s622 + $0xb4] sm:$0xff]
                  %631 = vst [vmem:[%s623 + $0x60] sm:$0xff] %v630
                  %v632 = vld [vmem:[%s622 + $0xf0] sm:$0xff]
                  %633 = vst [vmem:[%s623 + $0x80] sm:$0xff] %v632
                  %v634 = vld [vmem:[%s622 + $0x12c] sm:$0xff]
                  %635 = vst [vmem:[%s623 + $0xa0] sm:$0xff] %v634
                  %v636 = vld [vmem:[%s622 + $0x168] sm:$0xff]
                  %637 = vst [vmem:[%s623 + $0xc0] sm:$0xff] %v636
                  %v638 = vld [vmem:[%s622 + $0x1a4] sm:$0xff]
                  %639 = vst [vmem:[%s623 + $0xe0] sm:$0xff] %v638
                  %v640 = vld [vmem:[%s622 + $0x1e0] sm:$0xff]
                  %641 = vst [vmem:[%s623 + $0x100] sm:$0xff] %v640
                  %v642 = vld [vmem:[%s622 + $0x21c] sm:$0xff]
                  %643 = vst [vmem:[%s623 + $0x120] sm:$0xff] %v642
                  %s644 = sadd.s32 1, %s621
                  %p645 = scmp.ge.s32.totalorder %s644, %s605
                  %s646 = scalar_select %p645, 0, %s644
                  %s647 = smul.u32 %s646, 8
                  %s648 = smul.u32 %s646, 8
                  %s649 = scalar_lea.vmem %s609, %s647
                  %s650 = scalar_lea.vmem %s612, %s648 [#allocation2]
                $region81: #{cont_gaussian_policy_forward.4} parent=68 // loop_footer
                  %s618 = sadd.s32 %s616, 1
                $region82: #{cont_gaussian_policy_forward.4} parent=68 // loop_footer_branch
                  %615 = sbr.rel target = $region78
                $region83: #{cont_gaussian_policy_forward.4} parent=68 // loop_exit
                  _
                %s651 = sshll.u32 1, %s419
                %s652 = ssub.s32 %s651, 1
                loop: start=0, step=1, limit=1
                $region84: #{cont_gaussian_policy_forward.4} parent=68 // loop_pre_header
                  _
                $region85: #{cont_gaussian_policy_forward.4} parent=68 // loop_header
                  %s654 = sphi 0, %s658
                  %p655 = scmp.ge.s32.totalorder %s654, 1
                  %s659 = sphi %s421, %s421
                  %s660 = sphi %s423, %s423
                $region86: #{cont_gaussian_policy_forward.4} parent=68 // loop_header_branch
                  %657 = sbr.rel (%p655) target = $region90
                $region87: #{cont_gaussian_policy_forward.4} parent=68 // loop_body
                  %v661 = vld [vmem:[%s659] sm:%s652]
                  %662 = vst [vmem:[%s660] sm:%s652] %v661
                  %v663 = vld [vmem:[%s659 + $0x3c] sm:%s652]
                  %664 = vst [vmem:[%s660 + $0x20] sm:%s652] %v663
                  %v665 = vld [vmem:[%s659 + $0x78] sm:%s652]
                  %666 = vst [vmem:[%s660 + $0x40] sm:%s652] %v665
                  %v667 = vld [vmem:[%s659 + $0xb4] sm:%s652]
                  %668 = vst [vmem:[%s660 + $0x60] sm:%s652] %v667
                  %v669 = vld [vmem:[%s659 + $0xf0] sm:%s652]
                  %670 = vst [vmem:[%s660 + $0x80] sm:%s652] %v669
                  %v671 = vld [vmem:[%s659 + $0x12c] sm:%s652]
                  %672 = vst [vmem:[%s660 + $0xa0] sm:%s652] %v671
                  %v673 = vld [vmem:[%s659 + $0x168] sm:%s652]
                  %674 = vst [vmem:[%s660 + $0xc0] sm:%s652] %v673
                  %v675 = vld [vmem:[%s659 + $0x1a4] sm:%s652]
                  %676 = vst [vmem:[%s660 + $0xe0] sm:%s652] %v675
                  %v677 = vld [vmem:[%s659 + $0x1e0] sm:%s652]
                  %678 = vst [vmem:[%s660 + $0x100] sm:%s652] %v677
                  %v679 = vld [vmem:[%s659 + $0x21c] sm:%s652]
                  %680 = vst [vmem:[%s660 + $0x120] sm:%s652] %v679
                $region88: #{cont_gaussian_policy_forward.4} parent=68 // loop_footer
                  %s658 = sadd.s32 1, %s654
                $region89: #{cont_gaussian_policy_forward.4} parent=68 // loop_footer_branch
                  %653 = sbr.rel target = $region85
                $region90: #{cont_gaussian_policy_forward.4} parent=68 // loop_exit
                  _
              $region69: #{cont_gaussian_policy_forward.4} parent=35 // pred_fallthru
                _
            $region36: #{cont_gaussian_policy_forward.4} parent=31 // pred_fallthru
              _
            // Predicated region
            $region37: #{cont_gaussian_policy_forward.4} parent=31 // pred_check
              %p151 = pneg %p147
            $region38: #{cont_gaussian_policy_forward.4} parent=31 // pred_check_branch
              %153 = sbr.rel (%p151) target = $region40
            $region39: #{cont_gaussian_policy_forward.4} parent=31 // pred_region
              %s154 = sshll.u32 1, %s143
              %s155 = ssub.s32 %s154, 1
              loop: start=0, step=1, limit=1
              $region41: #{cont_gaussian_policy_forward.4} parent=39 // loop_pre_header
                _
              $region42: #{cont_gaussian_policy_forward.4} parent=39 // loop_header
                %s157 = sphi 0, %s161
                %p158 = scmp.ge.s32.totalorder %s157, 1
                %s162 = sphi %s142, %s142
                %s163 = sphi %s134, %s134
              $region43: #{cont_gaussian_policy_forward.4} parent=39 // loop_header_branch
                %160 = sbr.rel (%p158) target = $region47
              $region44: #{cont_gaussian_policy_forward.4} parent=39 // loop_body
                %v164 = vld [vmem:[%s162] sm:%s155]
                %165 = vst [vmem:[%s163] sm:%s155] %v164
                %v166 = vld [vmem:[%s162 + $0x3c] sm:%s155]
                %167 = vst [vmem:[%s163 + $0x20] sm:%s155] %v166
                %v168 = vld [vmem:[%s162 + $0x78] sm:%s155]
                %169 = vst [vmem:[%s163 + $0x40] sm:%s155] %v168
                %v170 = vld [vmem:[%s162 + $0xb4] sm:%s155]
                %171 = vst [vmem:[%s163 + $0x60] sm:%s155] %v170
                %v172 = vld [vmem:[%s162 + $0xf0] sm:%s155]
                %173 = vst [vmem:[%s163 + $0x80] sm:%s155] %v172
                %v174 = vld [vmem:[%s162 + $0x12c] sm:%s155]
                %175 = vst [vmem:[%s163 + $0xa0] sm:%s155] %v174
                %v176 = vld [vmem:[%s162 + $0x168] sm:%s155]
                %177 = vst [vmem:[%s163 + $0xc0] sm:%s155] %v176
                %v178 = vld [vmem:[%s162 + $0x1a4] sm:%s155]
                %179 = vst [vmem:[%s163 + $0xe0] sm:%s155] %v178
                %v180 = vld [vmem:[%s162 + $0x1e0] sm:%s155]
                %181 = vst [vmem:[%s163 + $0x100] sm:%s155] %v180
                %v182 = vld [vmem:[%s162 + $0x21c] sm:%s155]
                %183 = vst [vmem:[%s163 + $0x120] sm:%s155] %v182
              $region45: #{cont_gaussian_policy_forward.4} parent=39 // loop_footer
                %s161 = sadd.s32 1, %s157
              $region46: #{cont_gaussian_policy_forward.4} parent=39 // loop_footer_branch
                %156 = sbr.rel target = $region42
              $region47: #{cont_gaussian_policy_forward.4} parent=39 // loop_exit
                _
            $region40: #{cont_gaussian_policy_forward.4} parent=31 // pred_fallthru
              _
          $region32: #{cont_gaussian_policy_forward.4} parent=27 // pred_fallthru
            _
          %681 = vnop
        $region28: #{cont_gaussian_policy_forward.4} parent=23 // pred_fallthru
          _
      $region24: #{cont_gaussian_policy_forward.4} parent=5 // pred_fallthru
        _
      %p682 = scmp.le.s32.totalorder 1, %s9
      %p683 = scmp.lt.s32.totalorder %s9, 3
      %p684 = pnand %p682, %p683
      %p685 = pneg %p684
      // Predicated region
      $region91: #{cont_gaussian_policy_forward.4} parent=5 // pred_check
        _
      $region92: #{cont_gaussian_policy_forward.4} parent=5 // pred_check_branch
        %687 = sbr.rel (%p684) target = $region94
      $region93: #{cont_gaussian_policy_forward.4} parent=5 // pred_region
        %s688 = ssub.s32 %s9, 1
        %s689 = sand.u32 %s64, 1
        %s690 = sand.u32 %s64, 1
        %s691 = smul.addr %s690, 320
        %s692 = scalar_lea.vmem [#allocation2], %s691
        // Predicated region
        $region95: #{cont_gaussian_policy_forward.4} parent=93 // pred_check
          %p693 = pneg %p77
        $region96: #{cont_gaussian_policy_forward.4} parent=93 // pred_check_branch
          %695 = sbr.rel (%p693) target = $region98
        $region97: #{cont_gaussian_policy_forward.4} parent=93 // pred_region
          _
        $region98: #{cont_gaussian_policy_forward.4} parent=93 // pred_fallthru
          _
        %p696 = pneg %p30
        %p697 = pneg %p27
        %p698 = pneg %p51
        %p699 = pneg %p48
        %s700 = sand.u32 %s64, 1
        %s701 = sand.u32 %s64, 1
        %s702 = smul.addr %s701, 320
        %s703 = scalar_lea.vmem [#allocation2], %s702
        %p704 = pneg %p77
        %p705 = pneg %p74
        %p706 = pneg %p103
        %p707 = pneg %p100
        %s708 = sand.u32 %s90, 1
        %s709 = sand.u32 %s90, 1
        %s710 = smul.addr %s709, 128
        %s711 = scalar_lea.vmem [#allocation3], %s710
        %s712 = smul.u32 8, %s14
        %s713 = ssub.s32 15, %s712
        %p714 = scmp.lt.s32.totalorder %s713, 8
        %s715 = scalar_select %p714, %s713, 8
        %s716 = smul.u32 640, %s715
        %s717 = smul.u32 8, %s14
        %s718 = ssub.s32 15, %s717
        %p719 = scmp.lt.s32.totalorder %s718, 8
        %s720 = scalar_select %p719, %s718, 8
        %s721 = smul.u32 256, %s720
        %v723 = vld [vmem:[%s0] sm:$0xf]
        %v724 = vld [vmem:[%s0 + $0x4] sm:$0xf]
        %v725 = vld [vmem:[%s0 + $0x8] sm:$0xf]
        %v726 = vld [vmem:[%s0 + $0xc] sm:$0xf]
        %v727 = vld [vmem:[%s692] sm:$0xff]
        %v728 = vld [vmem:[%s692 + $0x8] sm:$0xff]
        %v729 = vld [vmem:[%s692 + $0x10] sm:$0xff]
        %v730 = vld [vmem:[%s692 + $0x18] sm:$0xff]
        %v731 = vld [vmem:[%s692 + $0x20] sm:$0xff]
        %v732 = vld [vmem:[%s692 + $0x28] sm:$0xff]
        %v733 = vld [vmem:[%s692 + $0x30] sm:$0xff]
        %v734 = vld [vmem:[%s692 + $0x38] sm:$0xff]
        %v735 = vld [vmem:[%s692 + $0x40] sm:$0xff]
        %v736 = vld [vmem:[%s692 + $0x48] sm:$0xff]
        %v737 = vld [vmem:[%s692 + $0x50] sm:$0xff]
        %v738 = vld [vmem:[%s692 + $0x58] sm:$0xff]
        %v739 = vld [vmem:[%s692 + $0x60] sm:$0xff]
        %v740 = vld [vmem:[%s692 + $0x68] sm:$0xff]
        %v741 = vld [vmem:[%s692 + $0x70] sm:$0xff]
        %v742 = vld [vmem:[%s692 + $0x78] sm:$0xff]
        %v743 = vld [vmem:[%s692 + $0x80] sm:$0xff]
        %v744 = vld [vmem:[%s692 + $0x88] sm:$0xff]
        %v745 = vld [vmem:[%s692 + $0x90] sm:$0xff]
        %v746 = vld [vmem:[%s692 + $0x98] sm:$0xff]
        %v747 = vld [vmem:[%s692 + $0xa0] sm:$0xff]
        %v748 = vld [vmem:[%s692 + $0xa8] sm:$0xff]
        %v749 = vld [vmem:[%s692 + $0xb0] sm:$0xff]
        %v750 = vld [vmem:[%s692 + $0xb8] sm:$0xff]
        %v751 = vld [vmem:[%s692 + $0xc0] sm:$0xff]
        %v752 = vld [vmem:[%s692 + $0xc8] sm:$0xff]
        %v753 = vld [vmem:[%s692 + $0xd0] sm:$0xff]
        %v754 = vld [vmem:[%s692 + $0xd8] sm:$0xff]
        %v755 = vld [vmem:[%s692 + $0xe0] sm:$0xff]
        %v756 = vld [vmem:[%s692 + $0xe8] sm:$0xff]
        %v757 = vld [vmem:[%s692 + $0xf0] sm:$0xff]
        %v758 = vld [vmem:[%s692 + $0xf8] sm:$0xff]
        %v759 = vld [vmem:[%s692 + $0x100] sm:$0xff]
        %v760 = vld [vmem:[%s692 + $0x108] sm:$0xff]
        %v761 = vld [vmem:[%s692 + $0x110] sm:$0xff]
        %v762 = vld [vmem:[%s692 + $0x118] sm:$0xff]
        %v763 = vld [vmem:[%s692 + $0x120] sm:$0x33]
        %v764 = vld [vmem:[%s692 + $0x128] sm:$0x33]
        %v765 = vld [vmem:[%s692 + $0x130] sm:$0x33]
        %v766 = vld [vmem:[%s692 + $0x138] sm:$0x33]
        %v767 = vld [vmem:[%s1] sm:$0xff]
        %v768 = vld [vmem:[%s1 + $0x8] sm:$0xff]
        %v769 = vld [vmem:[%s1 + $0x10] sm:$0xff]
        %v770 = vld [vmem:[%s1 + $0x18] sm:$0xff]
        %772 = vset.pattern.permute.xlu0 0
        %773 = vperm.xlu0 %772, %v767
        %v774 = vpop.permute.xlu0 %773
        %777 = vset.pattern.permute.xlu0 0
        %778 = vperm.xlu0 %777, %v768
        %v779 = vpop.permute.xlu0 %778
        %782 = vset.pattern.permute.xlu0 0
        %783 = vperm.xlu0 %782, %v769
        %v784 = vpop.permute.xlu0 %783
        %787 = vset.pattern.permute.xlu0 0
        %788 = vperm.xlu0 %787, %v770
        %v789 = vpop.permute.xlu0 %788
        %v795 = vunpack.c.l.b16 %v723
        %v796 = vunpack.c.l.b16 %v724
        %v797 = vunpack.c.l.b16 %v725
        %v798 = vunpack.c.l.b16 %v726
        %v799 = vpack.c.b16 %v796, %v795
        %v800 = vpack.c.b16 %v798, %v797
        %v841 = vunpack.c.l.b16 %v727
        %v842 = vunpack.c.h.b16 %v727
        %v843 = vunpack.c.l.b16 %v728
        %v844 = vunpack.c.h.b16 %v728
        %v845 = vunpack.c.l.b16 %v729
        %v846 = vunpack.c.h.b16 %v729
        %v847 = vunpack.c.l.b16 %v730
        %v848 = vunpack.c.h.b16 %v730
        %v849 = vunpack.c.l.b16 %v731
        %v850 = vunpack.c.h.b16 %v731
        %v851 = vunpack.c.l.b16 %v732
        %v852 = vunpack.c.h.b16 %v732
        %v853 = vunpack.c.l.b16 %v733
        %v854 = vunpack.c.h.b16 %v733
        %v855 = vunpack.c.l.b16 %v734
        %v856 = vunpack.c.h.b16 %v734
        %v857 = vunpack.c.l.b16 %v735
        %v858 = vunpack.c.h.b16 %v735
        %v859 = vunpack.c.l.b16 %v736
        %v860 = vunpack.c.h.b16 %v736
        %v861 = vunpack.c.l.b16 %v737
        %v862 = vunpack.c.h.b16 %v737
        %v863 = vunpack.c.l.b16 %v738
        %v864 = vunpack.c.h.b16 %v738
        %v865 = vunpack.c.l.b16 %v739
        %v866 = vunpack.c.h.b16 %v739
        %v867 = vunpack.c.l.b16 %v740
        %v868 = vunpack.c.h.b16 %v740
        %v869 = vunpack.c.l.b16 %v741
        %v870 = vunpack.c.h.b16 %v741
        %v871 = vunpack.c.l.b16 %v742
        %v872 = vunpack.c.h.b16 %v742
        %v873 = vunpack.c.l.b16 %v743
        %v874 = vunpack.c.h.b16 %v743
        %v875 = vunpack.c.l.b16 %v744
        %v876 = vunpack.c.h.b16 %v744
        %v877 = vunpack.c.l.b16 %v745
        %v878 = vunpack.c.h.b16 %v745
        %v879 = vunpack.c.l.b16 %v746
        %v880 = vunpack.c.h.b16 %v746
        %v881 = vunpack.c.l.b16 %v747
        %v882 = vunpack.c.h.b16 %v747
        %v883 = vunpack.c.l.b16 %v748
        %v884 = vunpack.c.h.b16 %v748
        %v885 = vunpack.c.l.b16 %v749
        %v886 = vunpack.c.h.b16 %v749
        %v887 = vunpack.c.l.b16 %v750
        %v888 = vunpack.c.h.b16 %v750
        %v889 = vunpack.c.l.b16 %v751
        %v890 = vunpack.c.h.b16 %v751
        %v891 = vunpack.c.l.b16 %v752
        %v892 = vunpack.c.h.b16 %v752
        %v893 = vunpack.c.l.b16 %v753
        %v894 = vunpack.c.h.b16 %v753
        %v895 = vunpack.c.l.b16 %v754
        %v896 = vunpack.c.h.b16 %v754
        %v897 = vunpack.c.l.b16 %v755
        %v898 = vunpack.c.h.b16 %v755
        %v899 = vunpack.c.l.b16 %v756
        %v900 = vunpack.c.h.b16 %v756
        %v901 = vunpack.c.l.b16 %v757
        %v902 = vunpack.c.h.b16 %v757
        %v903 = vunpack.c.l.b16 %v758
        %v904 = vunpack.c.h.b16 %v758
        %v905 = vunpack.c.l.b16 %v759
        %v906 = vunpack.c.h.b16 %v759
        %v907 = vunpack.c.l.b16 %v760
        %v908 = vunpack.c.h.b16 %v760
        %v909 = vunpack.c.l.b16 %v761
        %v910 = vunpack.c.h.b16 %v761
        %v911 = vunpack.c.l.b16 %v762
        %v912 = vunpack.c.h.b16 %v762
        %v913 = vunpack.c.l.b16 %v763
        %v914 = vunpack.c.h.b16 %v763
        %v915 = vunpack.c.l.b16 %v764
        %v916 = vunpack.c.h.b16 %v764
        %v917 = vunpack.c.l.b16 %v765
        %v918 = vunpack.c.h.b16 %v765
        %v919 = vunpack.c.l.b16 %v766
        %v920 = vunpack.c.h.b16 %v766
        %v921 = vpack.c.b16 %v849, %v841
        %v922 = vpack.c.b16 %v850, %v842
        %v923 = vpack.c.b16 %v851, %v843
        %v924 = vpack.c.b16 %v852, %v844
        %v925 = vpack.c.b16 %v853, %v845
        %v926 = vpack.c.b16 %v854, %v846
        %v927 = vpack.c.b16 %v855, %v847
        %v928 = vpack.c.b16 %v856, %v848
        %v929 = vpack.c.b16 %v865, %v857
        %v930 = vpack.c.b16 %v866, %v858
        %v931 = vpack.c.b16 %v867, %v859
        %v932 = vpack.c.b16 %v868, %v860
        %v933 = vpack.c.b16 %v869, %v861
        %v934 = vpack.c.b16 %v870, %v862
        %v935 = vpack.c.b16 %v871, %v863
        %v936 = vpack.c.b16 %v872, %v864
        %v937 = vpack.c.b16 %v881, %v873
        %v938 = vpack.c.b16 %v882, %v874
        %v939 = vpack.c.b16 %v883, %v875
        %v940 = vpack.c.b16 %v884, %v876
        %v941 = vpack.c.b16 %v885, %v877
        %v942 = vpack.c.b16 %v886, %v878
        %v943 = vpack.c.b16 %v887, %v879
        %v944 = vpack.c.b16 %v888, %v880
        %v945 = vpack.c.b16 %v897, %v889
        %v946 = vpack.c.b16 %v898, %v890
        %v947 = vpack.c.b16 %v899, %v891
        %v948 = vpack.c.b16 %v900, %v892
        %v949 = vpack.c.b16 %v901, %v893
        %v950 = vpack.c.b16 %v902, %v894
        %v951 = vpack.c.b16 %v903, %v895
        %v952 = vpack.c.b16 %v904, %v896
        %v953 = vpack.c.b16 %v913, %v905
        %v954 = vpack.c.b16 %v914, %v906
        %v955 = vpack.c.b16 %v915, %v907
        %v956 = vpack.c.b16 %v916, %v908
        %v957 = vpack.c.b16 %v917, %v909
        %v958 = vpack.c.b16 %v918, %v910
        %v959 = vpack.c.b16 %v919, %v911
        %v960 = vpack.c.b16 %v920, %v912
        %vm993 = vcmask 613376
        %v995 = vsel %vm993, %v799, 0
        %v998 = vsel %vm993, %v800, 0
        %vm1000 = vcmask 1044480
        %vm1001 = vcmask 1045504
        %v1002 = vsel %vm1000, 4294967295, 65535
        %v1003 = vsel %vm1001, %v1002, 0
        %v1005 = vand.u32 %v953, %v1003
        %v1008 = vand.u32 %v954, %v1003
        %v1011 = vand.u32 %v955, %v1003
        %v1014 = vand.u32 %v956, %v1003
        %v1017 = vand.u32 %v957, %v1003
        %v1020 = vand.u32 %v958, %v1003
        %v1023 = vand.u32 %v959, %v1003
        %v1026 = vand.u32 %v960, %v1003
        %1028 = vmatprep.subr.bf16.mxu0 0
        %1029 = vmatpush1.bf16.msra.mxu0 0
        %1030 = vmatprep.subr.bf16.mxu0 0
        %1031 = vmatpush1.bf16.msra.mxu0 0
        %1032 = vmatprep.subr.bf16.mxu0 0
        %1033 = vmatpush1.bf16.msra.mxu0 0
        %1034 = vmatprep.subr.bf16.mxu0 %v1008
        %1035 = vmatpush1.bf16.msra.mxu0 %v1005
        %1036 = vmatprep.subr.bf16.mxu0 %v946
        %1037 = vmatpush1.bf16.msra.mxu0 %v945
        %1038 = vmatprep.subr.bf16.mxu0 %v938
        %1039 = vmatpush1.bf16.msra.mxu0 %v937
        %1040 = vmatprep.subr.bf16.mxu0 %v930
        %1041 = vmatpush1.bf16.msra.mxu0 %v929
        %1042 = vmatprep.subr.bf16.mxu0 %v922
        %1043 = vmatpush1.bf16.msra.mxu0 %v921
        %1044 = vmatprep.subr.bf16.mxu0 0
        %1045 = vmatpush2.bf16.msra.mxu0 0
        %1046 = vmatprep.subr.bf16.mxu0 0
        %1047 = vmatpush2.bf16.msra.mxu0 0
        %1048 = vmatprep.subr.bf16.mxu0 0
        %1049 = vmatpush2.bf16.msra.mxu0 0
        %1050 = vmatprep.subr.bf16.mxu0 0
        %1051 = vmatpush2.bf16.msra.mxu0 0
        %1052 = vmatprep.subr.bf16.mxu0 0
        %1053 = vmatpush2.bf16.msra.mxu0 0
        %1054 = vmatprep.subr.bf16.mxu0 0
        %1055 = vmatpush2.bf16.msra.mxu0 0
        %1056 = vmatprep.subr.bf16.mxu0 0
        %1057 = vmatpush2.bf16.msra.mxu0 0
        %1058 = vmatprep.subr.bf16.mxu0 0
        %1059 = vmatpush2.bf16.msra.mxu0 0
        %1060 = vmatprep.mubr.bf16.mxu0 0
        %1061 = vmatmul.mubr.bf16.gmra.mxu0 %v995
        %v1062 = vpop.f32.mrf.mxu0
        %v1063 = vadd.f32 %v774, %v1062
        %v1064 = vpop.f32.mrf.mxu0
        %v1065 = vadd.f32 %v774, %v1064
        %v1066 = vpop.f32.mrf.mxu0
        %v1067 = vadd.f32 %v779, %v1066
        %v1068 = vpop.f32.mrf.mxu0
        %v1069 = vadd.f32 %v779, %v1068
        %1070 = vmatprep.mubr.bf16.mxu0 0
        %1071 = vmatmul.mubr.bf16.gmra.mxu0 %v998
        %v1072 = vpop.f32.mrf.mxu0
        %v1073 = vadd.f32 %v784, %v1072
        %v1074 = vpop.f32.mrf.mxu0
        %v1075 = vadd.f32 %v784, %v1074
        %v1076 = vpop.f32.mrf.mxu0
        %v1077 = vadd.f32 %v789, %v1076
        %v1078 = vpop.f32.mrf.mxu0
        %v1079 = vadd.f32 %v789, %v1078
        %1080 = vdwg.mxu0
        %1081 = vmatprep.subr.bf16.mxu0 0
        %1082 = vmatpush1.bf16.msra.mxu0 0
        %1083 = vmatprep.subr.bf16.mxu0 0
        %1084 = vmatpush1.bf16.msra.mxu0 0
        %1085 = vmatprep.subr.bf16.mxu0 0
        %1086 = vmatpush1.bf16.msra.mxu0 0
        %1087 = vmatprep.subr.bf16.mxu0 %v1014
        %1088 = vmatpush1.bf16.msra.mxu0 %v1011
        %1089 = vmatprep.subr.bf16.mxu0 %v948
        %1090 = vmatpush1.bf16.msra.mxu0 %v947
        %1091 = vmatprep.subr.bf16.mxu0 %v940
        %1092 = vmatpush1.bf16.msra.mxu0 %v939
        %1093 = vmatprep.subr.bf16.mxu0 %v932
        %1094 = vmatpush1.bf16.msra.mxu0 %v931
        %1095 = vmatprep.subr.bf16.mxu0 %v924
        %1096 = vmatpush1.bf16.msra.mxu0 %v923
        %1097 = vmatprep.subr.bf16.mxu0 0
        %1098 = vmatpush2.bf16.msra.mxu0 0
        %1099 = vmatprep.subr.bf16.mxu0 0
        %1100 = vmatpush2.bf16.msra.mxu0 0
        %1101 = vmatprep.subr.bf16.mxu0 0
        %1102 = vmatpush2.bf16.msra.mxu0 0
        %1103 = vmatprep.subr.bf16.mxu0 0
        %1104 = vmatpush2.bf16.msra.mxu0 0
        %1105 = vmatprep.subr.bf16.mxu0 0
        %1106 = vmatpush2.bf16.msra.mxu0 0
        %1107 = vmatprep.subr.bf16.mxu0 0
        %1108 = vmatpush2.bf16.msra.mxu0 0
        %1109 = vmatprep.subr.bf16.mxu0 0
        %1110 = vmatpush2.bf16.msra.mxu0 0
        %1111 = vmatprep.subr.bf16.mxu0 0
        %1112 = vmatpush2.bf16.msra.mxu0 0
        %1113 = vmatprep.mubr.bf16.mxu0 0
        %1114 = vmatmul.mubr.bf16.gmra.mxu0 %v995
        %v1115 = vpop.f32.mrf.mxu0
        %v1116 = vadd.f32 %v774, %v1115
        %v1117 = vpop.f32.mrf.mxu0
        %v1118 = vadd.f32 %v774, %v1117
        %v1119 = vpop.f32.mrf.mxu0
        %v1120 = vadd.f32 %v779, %v1119
        %v1121 = vpop.f32.mrf.mxu0
        %v1122 = vadd.f32 %v779, %v1121
        %1123 = vmatprep.mubr.bf16.mxu0 0
        %1124 = vmatmul.mubr.bf16.gmra.mxu0 %v998
        %v1125 = vpop.f32.mrf.mxu0
        %v1126 = vadd.f32 %v784, %v1125
        %v1127 = vpop.f32.mrf.mxu0
        %v1128 = vadd.f32 %v784, %v1127
        %v1129 = vpop.f32.mrf.mxu0
        %v1130 = vadd.f32 %v789, %v1129
        %v1131 = vpop.f32.mrf.mxu0
        %v1132 = vadd.f32 %v789, %v1131
        %1133 = vdwg.mxu0
        %1134 = vmatprep.subr.bf16.mxu0 0
        %1135 = vmatpush1.bf16.msra.mxu0 0
        %1136 = vmatprep.subr.bf16.mxu0 0
        %1137 = vmatpush1.bf16.msra.mxu0 0
        %1138 = vmatprep.subr.bf16.mxu0 0
        %1139 = vmatpush1.bf16.msra.mxu0 0
        %1140 = vmatprep.subr.bf16.mxu0 %v1020
        %1141 = vmatpush1.bf16.msra.mxu0 %v1017
        %1142 = vmatprep.subr.bf16.mxu0 %v950
        %1143 = vmatpush1.bf16.msra.mxu0 %v949
        %1144 = vmatprep.subr.bf16.mxu0 %v942
        %1145 = vmatpush1.bf16.msra.mxu0 %v941
        %1146 = vmatprep.subr.bf16.mxu0 %v934
        %1147 = vmatpush1.bf16.msra.mxu0 %v933
        %1148 = vmatprep.subr.bf16.mxu0 %v926
        %1149 = vmatpush1.bf16.msra.mxu0 %v925
        %1150 = vmatprep.subr.bf16.mxu0 0
        %1151 = vmatpush2.bf16.msra.mxu0 0
        %1152 = vmatprep.subr.bf16.mxu0 0
        %1153 = vmatpush2.bf16.msra.mxu0 0
        %1154 = vmatprep.subr.bf16.mxu0 0
        %1155 = vmatpush2.bf16.msra.mxu0 0
        %1156 = vmatprep.subr.bf16.mxu0 0
        %1157 = vmatpush2.bf16.msra.mxu0 0
        %1158 = vmatprep.subr.bf16.mxu0 0
        %1159 = vmatpush2.bf16.msra.mxu0 0
        %1160 = vmatprep.subr.bf16.mxu0 0
        %1161 = vmatpush2.bf16.msra.mxu0 0
        %1162 = vmatprep.subr.bf16.mxu0 0
        %1163 = vmatpush2.bf16.msra.mxu0 0
        %1164 = vmatprep.subr.bf16.mxu0 0
        %1165 = vmatpush2.bf16.msra.mxu0 0
        %1166 = vmatprep.mubr.bf16.mxu0 0
        %1167 = vmatmul.mubr.bf16.gmra.mxu0 %v995
        %v1168 = vpop.f32.mrf.mxu0
        %v1169 = vadd.f32 %v774, %v1168
        %v1170 = vpop.f32.mrf.mxu0
        %v1171 = vadd.f32 %v774, %v1170
        %v1172 = vpop.f32.mrf.mxu0
        %v1173 = vadd.f32 %v779, %v1172
        %v1174 = vpop.f32.mrf.mxu0
        %v1175 = vadd.f32 %v779, %v1174
        %1176 = vmatprep.mubr.bf16.mxu0 0
        %1177 = vmatmul.mubr.bf16.gmra.mxu0 %v998
        %v1178 = vpop.f32.mrf.mxu0
        %v1179 = vadd.f32 %v784, %v1178
        %v1180 = vpop.f32.mrf.mxu0
        %v1181 = vadd.f32 %v784, %v1180
        %v1182 = vpop.f32.mrf.mxu0
        %v1183 = vadd.f32 %v789, %v1182
        %v1184 = vpop.f32.mrf.mxu0
        %v1185 = vadd.f32 %v789, %v1184
        %1186 = vdwg.mxu0
        %1187 = vmatprep.subr.bf16.mxu0 0
        %1188 = vmatpush1.bf16.msra.mxu0 0
        %1189 = vmatprep.subr.bf16.mxu0 0
        %1190 = vmatpush1.bf16.msra.mxu0 0
        %1191 = vmatprep.subr.bf16.mxu0 0
        %1192 = vmatpush1.bf16.msra.mxu0 0
        %1193 = vmatprep.subr.bf16.mxu0 %v1026
        %1194 = vmatpush1.bf16.msra.mxu0 %v1023
        %1195 = vmatprep.subr.bf16.mxu0 %v952
        %1196 = vmatpush1.bf16.msra.mxu0 %v951
        %1197 = vmatprep.subr.bf16.mxu0 %v944
        %1198 = vmatpush1.bf16.msra.mxu0 %v943
        %1199 = vmatprep.subr.bf16.mxu0 %v936
        %1200 = vmatpush1.bf16.msra.mxu0 %v935
        %1201 = vmatprep.subr.bf16.mxu0 %v928
        %1202 = vmatpush1.bf16.msra.mxu0 %v927
        %1203 = vmatprep.subr.bf16.mxu0 0
        %1204 = vmatpush2.bf16.msra.mxu0 0
        %1205 = vmatprep.subr.bf16.mxu0 0
        %1206 = vmatpush2.bf16.msra.mxu0 0
        %1207 = vmatprep.subr.bf16.mxu0 0
        %1208 = vmatpush2.bf16.msra.mxu0 0
        %1209 = vmatprep.subr.bf16.mxu0 0
        %1210 = vmatpush2.bf16.msra.mxu0 0
        %1211 = vmatprep.subr.bf16.mxu0 0
        %1212 = vmatpush2.bf16.msra.mxu0 0
        %1213 = vmatprep.subr.bf16.mxu0 0
        %1214 = vmatpush2.bf16.msra.mxu0 0
        %1215 = vmatprep.subr.bf16.mxu0 0
        %1216 = vmatpush2.bf16.msra.mxu0 0
        %1217 = vmatprep.subr.bf16.mxu0 0
        %1218 = vmatpush2.bf16.msra.mxu0 0
        %1219 = vmatprep.mubr.bf16.mxu0 0
        %1220 = vmatmul.mubr.bf16.gmra.mxu0 %v995
        %v1221 = vpop.f32.mrf.mxu0
        %v1222 = vadd.f32 %v774, %v1221
        %v1223 = vpop.f32.mrf.mxu0
        %v1224 = vadd.f32 %v774, %v1223
        %v1225 = vpop.f32.mrf.mxu0
        %v1226 = vadd.f32 %v779, %v1225
        %v1227 = vpop.f32.mrf.mxu0
        %v1228 = vadd.f32 %v779, %v1227
        %1229 = vmatprep.mubr.bf16.mxu0 0
        %1230 = vmatmul.mubr.bf16.gmra.mxu0 %v998
        %v1231 = vpop.f32.mrf.mxu0
        %v1232 = vadd.f32 %v784, %v1231
        %v1233 = vpop.f32.mrf.mxu0
        %v1234 = vadd.f32 %v784, %v1233
        %v1235 = vpop.f32.mrf.mxu0
        %v1236 = vadd.f32 %v789, %v1235
        %v1237 = vpop.f32.mrf.mxu0
        %v1238 = vadd.f32 %v789, %v1237
        %1239 = vdwg.mxu0
        %vm1240 = vcmp.ge.f32.partialorder %v1063, 0.0
        %vm1241 = vcmp.ge.f32.partialorder %v1065, 0.0
        %vm1242 = vcmp.ge.f32.partialorder %v1116, 0.0
        %vm1243 = vcmp.ge.f32.partialorder %v1118, 0.0
        %vm1244 = vcmp.ge.f32.partialorder %v1169, 0.0
        %vm1245 = vcmp.ge.f32.partialorder %v1171, 0.0
        %vm1246 = vcmp.ge.f32.partialorder %v1222, 0.0
        %vm1247 = vcmp.ge.f32.partialorder %v1224, 0.0
        %vm1248 = vcmp.ge.f32.partialorder %v1067, 0.0
        %vm1249 = vcmp.ge.f32.partialorder %v1069, 0.0
        %vm1250 = vcmp.ge.f32.partialorder %v1120, 0.0
        %vm1251 = vcmp.ge.f32.partialorder %v1122, 0.0
        %vm1252 = vcmp.ge.f32.partialorder %v1173, 0.0
        %vm1253 = vcmp.ge.f32.partialorder %v1175, 0.0
        %vm1254 = vcmp.ge.f32.partialorder %v1226, 0.0
        %vm1255 = vcmp.ge.f32.partialorder %v1228, 0.0
        %vm1256 = vcmp.ge.f32.partialorder %v1073, 0.0
        %vm1257 = vcmp.ge.f32.partialorder %v1075, 0.0
        %vm1258 = vcmp.ge.f32.partialorder %v1126, 0.0
        %vm1259 = vcmp.ge.f32.partialorder %v1128, 0.0
        %vm1260 = vcmp.ge.f32.partialorder %v1179, 0.0
        %vm1261 = vcmp.ge.f32.partialorder %v1181, 0.0
        %vm1262 = vcmp.ge.f32.partialorder %v1232, 0.0
        %vm1263 = vcmp.ge.f32.partialorder %v1234, 0.0
        %vm1264 = vcmp.ge.f32.partialorder %v1077, 0.0
        %vm1265 = vcmp.ge.f32.partialorder %v1079, 0.0
        %vm1266 = vcmp.ge.f32.partialorder %v1130, 0.0
        %vm1267 = vcmp.ge.f32.partialorder %v1132, 0.0
        %vm1268 = vcmp.ge.f32.partialorder %v1183, 0.0
        %vm1269 = vcmp.ge.f32.partialorder %v1185, 0.0
        %vm1270 = vcmp.ge.f32.partialorder %v1236, 0.0
        %vm1271 = vcmp.ge.f32.partialorder %v1238, 0.0
        %v1272 = vmul.f32 %v1063, 0.01
        %v1273 = vmul.f32 %v1065, 0.01
        %v1274 = vmul.f32 %v1116, 0.01
        %v1275 = vmul.f32 %v1118, 0.01
        %v1276 = vmul.f32 %v1169, 0.01
        %v1277 = vmul.f32 %v1171, 0.01
        %v1278 = vmul.f32 %v1222, 0.01
        %v1279 = vmul.f32 %v1224, 0.01
        %v1280 = vmul.f32 %v1067, 0.01
        %v1281 = vmul.f32 %v1069, 0.01
        %v1282 = vmul.f32 %v1120, 0.01
        %v1283 = vmul.f32 %v1122, 0.01
        %v1284 = vmul.f32 %v1173, 0.01
        %v1285 = vmul.f32 %v1175, 0.01
        %v1286 = vmul.f32 %v1226, 0.01
        %v1287 = vmul.f32 %v1228, 0.01
        %v1288 = vmul.f32 %v1073, 0.01
        %v1289 = vmul.f32 %v1075, 0.01
        %v1290 = vmul.f32 %v1126, 0.01
        %v1291 = vmul.f32 %v1128, 0.01
        %v1292 = vmul.f32 %v1179, 0.01
        %v1293 = vmul.f32 %v1181, 0.01
        %v1294 = vmul.f32 %v1232, 0.01
        %v1295 = vmul.f32 %v1234, 0.01
        %v1296 = vmul.f32 %v1077, 0.01
        %v1297 = vmul.f32 %v1079, 0.01
        %v1298 = vmul.f32 %v1130, 0.01
        %v1299 = vmul.f32 %v1132, 0.01
        %v1300 = vmul.f32 %v1183, 0.01
        %v1301 = vmul.f32 %v1185, 0.01
        %v1302 = vmul.f32 %v1236, 0.01
        %v1303 = vmul.f32 %v1238, 0.01
        %v1304 = vsel %vm1240, %v1063, %v1272
        %v1305 = vsel %vm1241, %v1065, %v1273
        %v1306 = vsel %vm1242, %v1116, %v1274
        %v1307 = vsel %vm1243, %v1118, %v1275
        %v1308 = vsel %vm1244, %v1169, %v1276
        %v1309 = vsel %vm1245, %v1171, %v1277
        %v1310 = vsel %vm1246, %v1222, %v1278
        %v1311 = vsel %vm1247, %v1224, %v1279
        %v1312 = vsel %vm1248, %v1067, %v1280
        %v1313 = vsel %vm1249, %v1069, %v1281
        %v1314 = vsel %vm1250, %v1120, %v1282
        %v1315 = vsel %vm1251, %v1122, %v1283
        %v1316 = vsel %vm1252, %v1173, %v1284
        %v1317 = vsel %vm1253, %v1175, %v1285
        %v1318 = vsel %vm1254, %v1226, %v1286
        %v1319 = vsel %vm1255, %v1228, %v1287
        %v1320 = vsel %vm1256, %v1073, %v1288
        %v1321 = vsel %vm1257, %v1075, %v1289
        %v1322 = vsel %vm1258, %v1126, %v1290
        %v1323 = vsel %vm1259, %v1128, %v1291
        %v1324 = vsel %vm1260, %v1179, %v1292
        %v1325 = vsel %vm1261, %v1181, %v1293
        %v1326 = vsel %vm1262, %v1232, %v1294
        %v1327 = vsel %vm1263, %v1234, %v1295
        %v1328 = vsel %vm1264, %v1077, %v1296
        %v1329 = vsel %vm1265, %v1079, %v1297
        %v1330 = vsel %vm1266, %v1130, %v1298
        %v1331 = vsel %vm1267, %v1132, %v1299
        %v1332 = vsel %vm1268, %v1183, %v1300
        %v1333 = vsel %vm1269, %v1185, %v1301
        %v1334 = vsel %vm1270, %v1236, %v1302
        %v1335 = vsel %vm1271, %v1238, %v1303
        %v1336 = vpack.c.bf16 %v1312, %v1304
        %v1337 = vpack.c.bf16 %v1313, %v1305
        %v1338 = vpack.c.bf16 %v1314, %v1306
        %v1339 = vpack.c.bf16 %v1315, %v1307
        %v1340 = vpack.c.bf16 %v1316, %v1308
        %v1341 = vpack.c.bf16 %v1317, %v1309
        %v1342 = vpack.c.bf16 %v1318, %v1310
        %v1343 = vpack.c.bf16 %v1319, %v1311
        %v1344 = vpack.c.bf16 %v1328, %v1320
        %v1345 = vpack.c.bf16 %v1329, %v1321
        %v1346 = vpack.c.bf16 %v1330, %v1322
        %v1347 = vpack.c.bf16 %v1331, %v1323
        %v1348 = vpack.c.bf16 %v1332, %v1324
        %v1349 = vpack.c.bf16 %v1333, %v1325
        %v1350 = vpack.c.bf16 %v1334, %v1326
        %v1351 = vpack.c.bf16 %v1335, %v1327
        %v1368 = vunpack.c.l.b16 %v1336
        %v1369 = vunpack.c.l.b16 %v1337
        %v1370 = vunpack.c.l.b16 %v1338
        %v1371 = vunpack.c.l.b16 %v1339
        %v1372 = vunpack.c.l.b16 %v1340
        %v1373 = vunpack.c.l.b16 %v1341
        %v1374 = vunpack.c.l.b16 %v1342
        %v1375 = vunpack.c.l.b16 %v1343
        %v1376 = vunpack.c.h.b16 %v1336
        %v1377 = vunpack.c.h.b16 %v1337
        %v1378 = vunpack.c.h.b16 %v1338
        %v1379 = vunpack.c.h.b16 %v1339
        %v1380 = vunpack.c.h.b16 %v1340
        %v1381 = vunpack.c.h.b16 %v1341
        %v1382 = vunpack.c.h.b16 %v1342
        %v1383 = vunpack.c.h.b16 %v1343
        %v1384 = vunpack.c.l.b16 %v1344
        %v1385 = vunpack.c.l.b16 %v1345
        %v1386 = vunpack.c.l.b16 %v1346
        %v1387 = vunpack.c.l.b16 %v1347
        %v1388 = vunpack.c.l.b16 %v1348
        %v1389 = vunpack.c.l.b16 %v1349
        %v1390 = vunpack.c.l.b16 %v1350
        %v1391 = vunpack.c.l.b16 %v1351
        %v1392 = vunpack.c.h.b16 %v1344
        %v1393 = vunpack.c.h.b16 %v1345
        %v1394 = vunpack.c.h.b16 %v1346
        %v1395 = vunpack.c.h.b16 %v1347
        %v1396 = vunpack.c.h.b16 %v1348
        %v1397 = vunpack.c.h.b16 %v1349
        %v1398 = vunpack.c.h.b16 %v1350
        %v1399 = vunpack.c.h.b16 %v1351
        %v1400 = vpack.c.b16 %v1369, %v1368
        %v1401 = vpack.c.b16 %v1371, %v1370
        %v1402 = vpack.c.b16 %v1373, %v1372
        %v1403 = vpack.c.b16 %v1375, %v1374
        %v1404 = vpack.c.b16 %v1377, %v1376
        %v1405 = vpack.c.b16 %v1379, %v1378
        %v1406 = vpack.c.b16 %v1381, %v1380
        %v1407 = vpack.c.b16 %v1383, %v1382
        %v1408 = vpack.c.b16 %v1385, %v1384
        %v1409 = vpack.c.b16 %v1387, %v1386
        %v1410 = vpack.c.b16 %v1389, %v1388
        %v1411 = vpack.c.b16 %v1391, %v1390
        %v1412 = vpack.c.b16 %v1393, %v1392
        %v1413 = vpack.c.b16 %v1395, %v1394
        %v1414 = vpack.c.b16 %v1397, %v1396
        %v1415 = vpack.c.b16 %v1399, %v1398
        %1432 = vst [vmem:[%s711] sm:$0xff] %v1400
        %1433 = vst [vmem:[%s711 + $0x8] sm:$0xff] %v1401
        %1434 = vst [vmem:[%s711 + $0x10] sm:$0xff] %v1402
        %1435 = vst [vmem:[%s711 + $0x18] sm:$0xff] %v1403
        %1436 = vst [vmem:[%s711 + $0x20] sm:$0xff] %v1404
        %1437 = vst [vmem:[%s711 + $0x28] sm:$0xff] %v1405
        %1438 = vst [vmem:[%s711 + $0x30] sm:$0xff] %v1406
        %1439 = vst [vmem:[%s711 + $0x38] sm:$0xff] %v1407
        %1440 = vst [vmem:[%s711 + $0x40] sm:$0xff] %v1408
        %1441 = vst [vmem:[%s711 + $0x48] sm:$0xff] %v1409
        %1442 = vst [vmem:[%s711 + $0x50] sm:$0xff] %v1410
        %1443 = vst [vmem:[%s711 + $0x58] sm:$0xff] %v1411
        %1444 = vst [vmem:[%s711 + $0x60] sm:$0xff] %v1412
        %1445 = vst [vmem:[%s711 + $0x68] sm:$0xff] %v1413
        %1446 = vst [vmem:[%s711 + $0x70] sm:$0xff] %v1414
        %1447 = vst [vmem:[%s711 + $0x78] sm:$0xff] %v1415
        %s1448 = sand.u32 %s90, 1
        %s1449 = sand.u32 %s90, 1
        %s1450 = smul.addr %s1449, 128
        %s1451 = scalar_lea.vmem [#allocation3], %s1450
        // Predicated region
        $region99: #{cont_gaussian_policy_forward.4} parent=93 // pred_check
          %p1452 = pneg %p100
        $region100: #{cont_gaussian_policy_forward.4} parent=93 // pred_check_branch
          %1454 = sbr.rel (%p1452) target = $region102
        $region101: #{cont_gaussian_policy_forward.4} parent=93 // pred_region
          %s1455 = smul.u32 8, %s14
          %s1456 = ssub.s32 15, %s1455
          %p1457 = scmp.lt.s32.totalorder %s1456, 8
          %s1458 = scalar_select %p1457, %s1456, 8
          %s1459 = smul.u32 256, %s1458
          %p1460 = scmp.ne.s32.totalorder 0, %s1459
          %s1461 = smul.addr %s1455, 4
          %s1462 = scalar_lea.vmem %s3, %s1461
          %s1463 = smul.u32 %s1458, 4
          // Predicated region
          $region103: #{cont_gaussian_policy_forward.4} parent=101 // pred_check
            %p1464 = pneg %p1460
          $region104: #{cont_gaussian_policy_forward.4} parent=101 // pred_check_branch
            %1466 = sbr.rel (%p1464) target = $region106
          $region105: #{cont_gaussian_policy_forward.4} parent=101 // pred_region
            %p1467 = scmp.lt.u32.totalorder %s1463, 8
            %p1468 = pneg %p1467
            // Predicated region
            $region107: #{cont_gaussian_policy_forward.4} parent=105 // pred_check
              _
            $region108: #{cont_gaussian_policy_forward.4} parent=105 // pred_check_branch
              %1470 = sbr.rel (%p1467) target = $region110
            $region109: #{cont_gaussian_policy_forward.4} parent=105 // pred_region
              %s1492 = sand.u32 %s1463, 7
              %p1493 = scmp.eq.s32.totalorder %s1492, 0
              // Predicated region
              $region122: #{cont_gaussian_policy_forward.4} parent=109 // pred_check
                %p1494 = pneg %p1493
              $region123: #{cont_gaussian_policy_forward.4} parent=109 // pred_check_branch
                %1496 = sbr.rel (%p1494) target = $region125
              $region124: #{cont_gaussian_policy_forward.4} parent=109 // pred_region
                %s1497 = sshrl.u32 %s1463, 3
                %s1498 = sshrl.u32 %s1497, 4
                // While loop
                $region126: #{cont_gaussian_policy_forward.4} parent=124 // loop_pre_header
                  _
                $region127: #{cont_gaussian_policy_forward.4} parent=124 // loop_header
                  %s1502 = sphi 0, %s1504
                  %p1503 = scmp.ge.s32.totalorder %s1502, %s1498
                  %s1507 = sphi 0, %s1640
                  %s1508 = sphi %s1451, %s1643
                  %s1509 = sphi %s1462, %s1644
                $region128: #{cont_gaussian_policy_forward.4} parent=124 // loop_header_branch
                  %1506 = sbr.rel (%p1503) target = $region132
                $region129: #{cont_gaussian_policy_forward.4} parent=124 // loop_body
                  %v1510 = vld [vmem:[%s1508] sm:$0xff]
                  %1511 = vst [vmem:[%s1509] sm:$0xff] %v1510
                  %v1512 = vld [vmem:[%s1508 + $0x8] sm:$0xff]
                  %1513 = vst [vmem:[%s1509 + $0x8] sm:$0xff] %v1512
                  %v1514 = vld [vmem:[%s1508 + $0x10] sm:$0xff]
                  %1515 = vst [vmem:[%s1509 + $0x10] sm:$0xff] %v1514
                  %v1516 = vld [vmem:[%s1508 + $0x18] sm:$0xff]
                  %1517 = vst [vmem:[%s1509 + $0x18] sm:$0xff] %v1516
                  %v1518 = vld [vmem:[%s1508 + $0x20] sm:$0xff]
                  %1519 = vst [vmem:[%s1509 + $0x20] sm:$0xff] %v1518
                  %v1520 = vld [vmem:[%s1508 + $0x28] sm:$0xff]
                  %1521 = vst [vmem:[%s1509 + $0x28] sm:$0xff] %v1520
                  %v1522 = vld [vmem:[%s1508 + $0x30] sm:$0xff]
                  %1523 = vst [vmem:[%s1509 + $0x30] sm:$0xff] %v1522
                  %v1524 = vld [vmem:[%s1508 + $0x38] sm:$0xff]
                  %1525 = vst [vmem:[%s1509 + $0x38] sm:$0xff] %v1524
                  %v1526 = vld [vmem:[%s1508 + $0x40] sm:$0xff]
                  %1527 = vst [vmem:[%s1509 + $0x40] sm:$0xff] %v1526
                  %v1528 = vld [vmem:[%s1508 + $0x48] sm:$0xff]
                  %1529 = vst [vmem:[%s1509 + $0x48] sm:$0xff] %v1528
                  %v1530 = vld [vmem:[%s1508 + $0x50] sm:$0xff]
                  %1531 = vst [vmem:[%s1509 + $0x50] sm:$0xff] %v1530
                  %v1532 = vld [vmem:[%s1508 + $0x58] sm:$0xff]
                  %1533 = vst [vmem:[%s1509 + $0x58] sm:$0xff] %v1532
                  %v1534 = vld [vmem:[%s1508 + $0x60] sm:$0xff]
                  %1535 = vst [vmem:[%s1509 + $0x60] sm:$0xff] %v1534
                  %v1536 = vld [vmem:[%s1508 + $0x68] sm:$0xff]
                  %1537 = vst [vmem:[%s1509 + $0x68] sm:$0xff] %v1536
                  %v1538 = vld [vmem:[%s1508 + $0x70] sm:$0xff]
                  %1539 = vst [vmem:[%s1509 + $0x70] sm:$0xff] %v1538
                  %v1540 = vld [vmem:[%s1508 + $0x78] sm:$0xff]
                  %1541 = vst [vmem:[%s1509 + $0x78] sm:$0xff] %v1540
                  %v1542 = vld [vmem:[%s1508 + $0x20] sm:$0xff]
                  %1543 = vst [vmem:[%s1509 + $0x3c] sm:$0xff] %v1542
                  %v1544 = vld [vmem:[%s1508 + $0x28] sm:$0xff]
                  %1545 = vst [vmem:[%s1509 + $0x44] sm:$0xff] %v1544
                  %v1546 = vld [vmem:[%s1508 + $0x30] sm:$0xff]
                  %1547 = vst [vmem:[%s1509 + $0x4c] sm:$0xff] %v1546
                  %v1548 = vld [vmem:[%s1508 + $0x38] sm:$0xff]
                  %1549 = vst [vmem:[%s1509 + $0x54] sm:$0xff] %v1548
                  %v1550 = vld [vmem:[%s1508 + $0x40] sm:$0xff]
                  %1551 = vst [vmem:[%s1509 + $0x5c] sm:$0xff] %v1550
                  %v1552 = vld [vmem:[%s1508 + $0x48] sm:$0xff]
                  %1553 = vst [vmem:[%s1509 + $0x64] sm:$0xff] %v1552
                  %v1554 = vld [vmem:[%s1508 + $0x50] sm:$0xff]
                  %1555 = vst [vmem:[%s1509 + $0x6c] sm:$0xff] %v1554
                  %v1556 = vld [vmem:[%s1508 + $0x58] sm:$0xff]
                  %1557 = vst [vmem:[%s1509 + $0x74] sm:$0xff] %v1556
                  %v1558 = vld [vmem:[%s1508 + $0x60] sm:$0xff]
                  %1559 = vst [vmem:[%s1509 + $0x7c] sm:$0xff] %v1558
                  %v1560 = vld [vmem:[%s1508 + $0x68] sm:$0xff]
                  %1561 = vst [vmem:[%s1509 + $0x84] sm:$0xff] %v1560
                  %v1562 = vld [vmem:[%s1508 + $0x70] sm:$0xff]
                  %1563 = vst [vmem:[%s1509 + $0x8c] sm:$0xff] %v1562
                  %v1564 = vld [vmem:[%s1508 + $0x78] sm:$0xff]
                  %1565 = vst [vmem:[%s1509 + $0x94] sm:$0xff] %v1564
                  %v1566 = vld [vmem:[%s1508 + $0x80] sm:$0xff]
                  %1567 = vst [vmem:[%s1509 + $0x9c] sm:$0xff] %v1566
                  %v1568 = vld [vmem:[%s1508 + $0x88] sm:$0xff]
                  %1569 = vst [vmem:[%s1509 + $0xa4] sm:$0xff] %v1568
                  %v1570 = vld [vmem:[%s1508 + $0x90] sm:$0xff]
                  %1571 = vst [vmem:[%s1509 + $0xac] sm:$0xff] %v1570
                  %v1572 = vld [vmem:[%s1508 + $0x98] sm:$0xff]
                  %1573 = vst [vmem:[%s1509 + $0xb4] sm:$0xff] %v1572
                  %v1574 = vld [vmem:[%s1508 + $0x40] sm:$0xff]
                  %1575 = vst [vmem:[%s1509 + $0x78] sm:$0xff] %v1574
                  %v1576 = vld [vmem:[%s1508 + $0x48] sm:$0xff]
                  %1577 = vst [vmem:[%s1509 + $0x80] sm:$0xff] %v1576
                  %v1578 = vld [vmem:[%s1508 + $0x50] sm:$0xff]
                  %1579 = vst [vmem:[%s1509 + $0x88] sm:$0xff] %v1578
                  %v1580 = vld [vmem:[%s1508 + $0x58] sm:$0xff]
                  %1581 = vst [vmem:[%s1509 + $0x90] sm:$0xff] %v1580
                  %v1582 = vld [vmem:[%s1508 + $0x60] sm:$0xff]
                  %1583 = vst [vmem:[%s1509 + $0x98] sm:$0xff] %v1582
                  %v1584 = vld [vmem:[%s1508 + $0x68] sm:$0xff]
                  %1585 = vst [vmem:[%s1509 + $0xa0] sm:$0xff] %v1584
                  %v1586 = vld [vmem:[%s1508 + $0x70] sm:$0xff]
                  %1587 = vst [vmem:[%s1509 + $0xa8] sm:$0xff] %v1586
                  %v1588 = vld [vmem:[%s1508 + $0x78] sm:$0xff]
                  %1589 = vst [vmem:[%s1509 + $0xb0] sm:$0xff] %v1588
                  %v1590 = vld [vmem:[%s1508 + $0x80] sm:$0xff]
                  %1591 = vst [vmem:[%s1509 + $0xb8] sm:$0xff] %v1590
                  %v1592 = vld [vmem:[%s1508 + $0x88] sm:$0xff]
                  %1593 = vst [vmem:[%s1509 + $0xc0] sm:$0xff] %v1592
                  %v1594 = vld [vmem:[%s1508 + $0x90] sm:$0xff]
                  %1595 = vst [vmem:[%s1509 + $0xc8] sm:$0xff] %v1594
                  %v1596 = vld [vmem:[%s1508 + $0x98] sm:$0xff]
                  %1597 = vst [vmem:[%s1509 + $0xd0] sm:$0xff] %v1596
                  %v1598 = vld [vmem:[%s1508 + $0xa0] sm:$0xff]
                  %1599 = vst [vmem:[%s1509 + $0xd8] sm:$0xff] %v1598
                  %v1600 = vld [vmem:[%s1508 + $0xa8] sm:$0xff]
                  %1601 = vst [vmem:[%s1509 + $0xe0] sm:$0xff] %v1600
                  %v1602 = vld [vmem:[%s1508 + $0xb0] sm:$0xff]
                  %1603 = vst [vmem:[%s1509 + $0xe8] sm:$0xff] %v1602
                  %v1604 = vld [vmem:[%s1508 + $0xb8] sm:$0xff]
                  %1605 = vst [vmem:[%s1509 + $0xf0] sm:$0xff] %v1604
                  %v1606 = vld [vmem:[%s1508 + $0x60] sm:$0xff]
                  %1607 = vst [vmem:[%s1509 + $0xb4] sm:$0xff] %v1606
                  %v1608 = vld [vmem:[%s1508 + $0x68] sm:$0xff]
                  %1609 = vst [vmem:[%s1509 + $0xbc] sm:$0xff] %v1608
                  %v1610 = vld [vmem:[%s1508 + $0x70] sm:$0xff]
                  %1611 = vst [vmem:[%s1509 + $0xc4] sm:$0xff] %v1610
                  %v1612 = vld [vmem:[%s1508 + $0x78] sm:$0xff]
                  %1613 = vst [vmem:[%s1509 + $0xcc] sm:$0xff] %v1612
                  %v1614 = vld [vmem:[%s1508 + $0x80] sm:$0xff]
                  %1615 = vst [vmem:[%s1509 + $0xd4] sm:$0xff] %v1614
                  %v1616 = vld [vmem:[%s1508 + $0x88] sm:$0xff]
                  %1617 = vst [vmem:[%s1509 + $0xdc] sm:$0xff] %v1616
                  %v1618 = vld [vmem:[%s1508 + $0x90] sm:$0xff]
                  %1619 = vst [vmem:[%s1509 + $0xe4] sm:$0xff] %v1618
                  %v1620 = vld [vmem:[%s1508 + $0x98] sm:$0xff]
                  %1621 = vst [vmem:[%s1509 + $0xec] sm:$0xff] %v1620
                  %v1622 = vld [vmem:[%s1508 + $0xa0] sm:$0xff]
                  %1623 = vst [vmem:[%s1509 + $0xf4] sm:$0xff] %v1622
                  %v1624 = vld [vmem:[%s1508 + $0xa8] sm:$0xff]
                  %1625 = vst [vmem:[%s1509 + $0xfc] sm:$0xff] %v1624
                  %v1626 = vld [vmem:[%s1508 + $0xb0] sm:$0xff]
                  %1627 = vst [vmem:[%s1509 + $0x104] sm:$0xff] %v1626
                  %v1628 = vld [vmem:[%s1508 + $0xb8] sm:$0xff]
                  %1629 = vst [vmem:[%s1509 + $0x10c] sm:$0xff] %v1628
                  %v1630 = vld [vmem:[%s1508 + $0xc0] sm:$0xff]
                  %1631 = vst [vmem:[%s1509 + $0x114] sm:$0xff] %v1630
                  %v1632 = vld [vmem:[%s1508 + $0xc8] sm:$0xff]
                  %1633 = vst [vmem:[%s1509 + $0x11c] sm:$0xff] %v1632
                  %v1634 = vld [vmem:[%s1508 + $0xd0] sm:$0xff]
                  %1635 = vst [vmem:[%s1509 + $0x124] sm:$0xff] %v1634
                  %v1636 = vld [vmem:[%s1508 + $0xd8] sm:$0xff]
                  %1637 = vst [vmem:[%s1509 + $0x12c] sm:$0xff] %v1636
                  %s1638 = sadd.s32 1, %s1507
                  %p1639 = scmp.ge.s32.totalorder %s1638, %s1498
                  %s1640 = scalar_select %p1639, 0, %s1638
                  %s1641 = smul.u32 %s1640, 128
                  %s1642 = smul.u32 %s1640, 128
                  %s1643 = scalar_lea.vmem %s1451, %s1641 [#allocation3]
                  %s1644 = scalar_lea.vmem %s1462, %s1642
                $region130: #{cont_gaussian_policy_forward.4} parent=124 // loop_footer
                  %s1504 = sadd.s32 %s1502, 1
                $region131: #{cont_gaussian_policy_forward.4} parent=124 // loop_footer_branch
                  %1501 = sbr.rel target = $region127
                $region132: #{cont_gaussian_policy_forward.4} parent=124 // loop_exit
                  _
                %s1645 = sshrl.u32 %s1497, 4
                %s1646 = sand.u32 %s1497, 15
                %s1647 = smul.u32 %s1645, 16
                %s1648 = smul.u32 128, %s1647
                %s1649 = sshra.s32 %s1648, 4
                %s1650 = scalar_lea.vmem %s1451, %s1649 [#allocation3]
                %s1651 = smul.u32 128, %s1647
                %s1652 = sshra.s32 %s1651, 4
                %s1653 = scalar_lea.vmem %s1462, %s1652
                // While loop
                $region133: #{cont_gaussian_policy_forward.4} parent=124 // loop_pre_header
                  _
                $region134: #{cont_gaussian_policy_forward.4} parent=124 // loop_header
                  %s1657 = sphi 0, %s1659
                  %p1658 = scmp.ge.s32.totalorder %s1657, %s1646
                  %s1662 = sphi 0, %s1675
                  %s1663 = sphi %s1650, %s1678
                  %s1664 = sphi %s1653, %s1679
                $region135: #{cont_gaussian_policy_forward.4} parent=124 // loop_header_branch
                  %1661 = sbr.rel (%p1658) target = $region139
                $region136: #{cont_gaussian_policy_forward.4} parent=124 // loop_body
                  %v1665 = vld [vmem:[%s1663] sm:$0xff]
                  %1666 = vst [vmem:[%s1664] sm:$0xff] %v1665
                  %v1667 = vld [vmem:[%s1663 + $0x20] sm:$0xff]
                  %1668 = vst [vmem:[%s1664 + $0x3c] sm:$0xff] %v1667
                  %v1669 = vld [vmem:[%s1663 + $0x40] sm:$0xff]
                  %1670 = vst [vmem:[%s1664 + $0x78] sm:$0xff] %v1669
                  %v1671 = vld [vmem:[%s1663 + $0x60] sm:$0xff]
                  %1672 = vst [vmem:[%s1664 + $0xb4] sm:$0xff] %v1671
                  %s1673 = sadd.s32 1, %s1662
                  %p1674 = scmp.ge.s32.totalorder %s1673, %s1646
                  %s1675 = scalar_select %p1674, 0, %s1673
                  %s1676 = smul.u32 %s1675, 8
                  %s1677 = smul.u32 %s1675, 8
                  %s1678 = scalar_lea.vmem %s1650, %s1676 [#allocation3]
                  %s1679 = scalar_lea.vmem %s1653, %s1677
                $region137: #{cont_gaussian_policy_forward.4} parent=124 // loop_footer
                  %s1659 = sadd.s32 %s1657, 1
                $region138: #{cont_gaussian_policy_forward.4} parent=124 // loop_footer_branch
                  %1656 = sbr.rel target = $region134
                $region139: #{cont_gaussian_policy_forward.4} parent=124 // loop_exit
                  _
              $region125: #{cont_gaussian_policy_forward.4} parent=109 // pred_fallthru
                _
              %p1680 = pneg %p1493
              // Predicated region
              $region140: #{cont_gaussian_policy_forward.4} parent=109 // pred_check
                _
              $region141: #{cont_gaussian_policy_forward.4} parent=109 // pred_check_branch
                %1682 = sbr.rel (%p1493) target = $region143
              $region142: #{cont_gaussian_policy_forward.4} parent=109 // pred_region
                %s1683 = sand.u32 %s1463, 7
                %s1684 = ssub.s32 %s1463, %s1683
                %s1685 = scalar_lea.vmem %s1451, %s1684 [#allocation3]
                %s1686 = ssub.s32 %s1463, %s1683
                %s1687 = scalar_lea.vmem %s1462, %s1686
                %s1688 = sshrl.u32 %s1463, 3
                %s1689 = sshrl.u32 %s1688, 4
                // While loop
                $region144: #{cont_gaussian_policy_forward.4} parent=142 // loop_pre_header
                  _
                $region145: #{cont_gaussian_policy_forward.4} parent=142 // loop_header
                  %s1693 = sphi 0, %s1695
                  %p1694 = scmp.ge.s32.totalorder %s1693, %s1689
                  %s1698 = sphi 0, %s1831
                  %s1699 = sphi %s1451, %s1834
                  %s1700 = sphi %s1462, %s1835
                $region146: #{cont_gaussian_policy_forward.4} parent=142 // loop_header_branch
                  %1697 = sbr.rel (%p1694) target = $region150
                $region147: #{cont_gaussian_policy_forward.4} parent=142 // loop_body
                  %v1701 = vld [vmem:[%s1699] sm:$0xff]
                  %1702 = vst [vmem:[%s1700] sm:$0xff] %v1701
                  %v1703 = vld [vmem:[%s1699 + $0x8] sm:$0xff]
                  %1704 = vst [vmem:[%s1700 + $0x8] sm:$0xff] %v1703
                  %v1705 = vld [vmem:[%s1699 + $0x10] sm:$0xff]
                  %1706 = vst [vmem:[%s1700 + $0x10] sm:$0xff] %v1705
                  %v1707 = vld [vmem:[%s1699 + $0x18] sm:$0xff]
                  %1708 = vst [vmem:[%s1700 + $0x18] sm:$0xff] %v1707
                  %v1709 = vld [vmem:[%s1699 + $0x20] sm:$0xff]
                  %1710 = vst [vmem:[%s1700 + $0x20] sm:$0xff] %v1709
                  %v1711 = vld [vmem:[%s1699 + $0x28] sm:$0xff]
                  %1712 = vst [vmem:[%s1700 + $0x28] sm:$0xff] %v1711
                  %v1713 = vld [vmem:[%s1699 + $0x30] sm:$0xff]
                  %1714 = vst [vmem:[%s1700 + $0x30] sm:$0xff] %v1713
                  %v1715 = vld [vmem:[%s1699 + $0x38] sm:$0xff]
                  %1716 = vst [vmem:[%s1700 + $0x38] sm:$0xff] %v1715
                  %v1717 = vld [vmem:[%s1699 + $0x40] sm:$0xff]
                  %1718 = vst [vmem:[%s1700 + $0x40] sm:$0xff] %v1717
                  %v1719 = vld [vmem:[%s1699 + $0x48] sm:$0xff]
                  %1720 = vst [vmem:[%s1700 + $0x48] sm:$0xff] %v1719
                  %v1721 = vld [vmem:[%s1699 + $0x50] sm:$0xff]
                  %1722 = vst [vmem:[%s1700 + $0x50] sm:$0xff] %v1721
                  %v1723 = vld [vmem:[%s1699 + $0x58] sm:$0xff]
                  %1724 = vst [vmem:[%s1700 + $0x58] sm:$0xff] %v1723
                  %v1725 = vld [vmem:[%s1699 + $0x60] sm:$0xff]
                  %1726 = vst [vmem:[%s1700 + $0x60] sm:$0xff] %v1725
                  %v1727 = vld [vmem:[%s1699 + $0x68] sm:$0xff]
                  %1728 = vst [vmem:[%s1700 + $0x68] sm:$0xff] %v1727
                  %v1729 = vld [vmem:[%s1699 + $0x70] sm:$0xff]
                  %1730 = vst [vmem:[%s1700 + $0x70] sm:$0xff] %v1729
                  %v1731 = vld [vmem:[%s1699 + $0x78] sm:$0xff]
                  %1732 = vst [vmem:[%s1700 + $0x78] sm:$0xff] %v1731
                  %v1733 = vld [vmem:[%s1699 + $0x20] sm:$0xff]
                  %1734 = vst [vmem:[%s1700 + $0x3c] sm:$0xff] %v1733
                  %v1735 = vld [vmem:[%s1699 + $0x28] sm:$0xff]
                  %1736 = vst [vmem:[%s1700 + $0x44] sm:$0xff] %v1735
                  %v1737 = vld [vmem:[%s1699 + $0x30] sm:$0xff]
                  %1738 = vst [vmem:[%s1700 + $0x4c] sm:$0xff] %v1737
                  %v1739 = vld [vmem:[%s1699 + $0x38] sm:$0xff]
                  %1740 = vst [vmem:[%s1700 + $0x54] sm:$0xff] %v1739
                  %v1741 = vld [vmem:[%s1699 + $0x40] sm:$0xff]
                  %1742 = vst [vmem:[%s1700 + $0x5c] sm:$0xff] %v1741
                  %v1743 = vld [vmem:[%s1699 + $0x48] sm:$0xff]
                  %1744 = vst [vmem:[%s1700 + $0x64] sm:$0xff] %v1743
                  %v1745 = vld [vmem:[%s1699 + $0x50] sm:$0xff]
                  %1746 = vst [vmem:[%s1700 + $0x6c] sm:$0xff] %v1745
                  %v1747 = vld [vmem:[%s1699 + $0x58] sm:$0xff]
                  %1748 = vst [vmem:[%s1700 + $0x74] sm:$0xff] %v1747
                  %v1749 = vld [vmem:[%s1699 + $0x60] sm:$0xff]
                  %1750 = vst [vmem:[%s1700 + $0x7c] sm:$0xff] %v1749
                  %v1751 = vld [vmem:[%s1699 + $0x68] sm:$0xff]
                  %1752 = vst [vmem:[%s1700 + $0x84] sm:$0xff] %v1751
                  %v1753 = vld [vmem:[%s1699 + $0x70] sm:$0xff]
                  %1754 = vst [vmem:[%s1700 + $0x8c] sm:$0xff] %v1753
                  %v1755 = vld [vmem:[%s1699 + $0x78] sm:$0xff]
                  %1756 = vst [vmem:[%s1700 + $0x94] sm:$0xff] %v1755
                  %v1757 = vld [vmem:[%s1699 + $0x80] sm:$0xff]
                  %1758 = vst [vmem:[%s1700 + $0x9c] sm:$0xff] %v1757
                  %v1759 = vld [vmem:[%s1699 + $0x88] sm:$0xff]
                  %1760 = vst [vmem:[%s1700 + $0xa4] sm:$0xff] %v1759
                  %v1761 = vld [vmem:[%s1699 + $0x90] sm:$0xff]
                  %1762 = vst [vmem:[%s1700 + $0xac] sm:$0xff] %v1761
                  %v1763 = vld [vmem:[%s1699 + $0x98] sm:$0xff]
                  %1764 = vst [vmem:[%s1700 + $0xb4] sm:$0xff] %v1763
                  %v1765 = vld [vmem:[%s1699 + $0x40] sm:$0xff]
                  %1766 = vst [vmem:[%s1700 + $0x78] sm:$0xff] %v1765
                  %v1767 = vld [vmem:[%s1699 + $0x48] sm:$0xff]
                  %1768 = vst [vmem:[%s1700 + $0x80] sm:$0xff] %v1767
                  %v1769 = vld [vmem:[%s1699 + $0x50] sm:$0xff]
                  %1770 = vst [vmem:[%s1700 + $0x88] sm:$0xff] %v1769
                  %v1771 = vld [vmem:[%s1699 + $0x58] sm:$0xff]
                  %1772 = vst [vmem:[%s1700 + $0x90] sm:$0xff] %v1771
                  %v1773 = vld [vmem:[%s1699 + $0x60] sm:$0xff]
                  %1774 = vst [vmem:[%s1700 + $0x98] sm:$0xff] %v1773
                  %v1775 = vld [vmem:[%s1699 + $0x68] sm:$0xff]
                  %1776 = vst [vmem:[%s1700 + $0xa0] sm:$0xff] %v1775
                  %v1777 = vld [vmem:[%s1699 + $0x70] sm:$0xff]
                  %1778 = vst [vmem:[%s1700 + $0xa8] sm:$0xff] %v1777
                  %v1779 = vld [vmem:[%s1699 + $0x78] sm:$0xff]
                  %1780 = vst [vmem:[%s1700 + $0xb0] sm:$0xff] %v1779
                  %v1781 = vld [vmem:[%s1699 + $0x80] sm:$0xff]
                  %1782 = vst [vmem:[%s1700 + $0xb8] sm:$0xff] %v1781
                  %v1783 = vld [vmem:[%s1699 + $0x88] sm:$0xff]
                  %1784 = vst [vmem:[%s1700 + $0xc0] sm:$0xff] %v1783
                  %v1785 = vld [vmem:[%s1699 + $0x90] sm:$0xff]
                  %1786 = vst [vmem:[%s1700 + $0xc8] sm:$0xff] %v1785
                  %v1787 = vld [vmem:[%s1699 + $0x98] sm:$0xff]
                  %1788 = vst [vmem:[%s1700 + $0xd0] sm:$0xff] %v1787
                  %v1789 = vld [vmem:[%s1699 + $0xa0] sm:$0xff]
                  %1790 = vst [vmem:[%s1700 + $0xd8] sm:$0xff] %v1789
                  %v1791 = vld [vmem:[%s1699 + $0xa8] sm:$0xff]
                  %1792 = vst [vmem:[%s1700 + $0xe0] sm:$0xff] %v1791
                  %v1793 = vld [vmem:[%s1699 + $0xb0] sm:$0xff]
                  %1794 = vst [vmem:[%s1700 + $0xe8] sm:$0xff] %v1793
                  %v1795 = vld [vmem:[%s1699 + $0xb8] sm:$0xff]
                  %1796 = vst [vmem:[%s1700 + $0xf0] sm:$0xff] %v1795
                  %v1797 = vld [vmem:[%s1699 + $0x60] sm:$0xff]
                  %1798 = vst [vmem:[%s1700 + $0xb4] sm:$0xff] %v1797
                  %v1799 = vld [vmem:[%s1699 + $0x68] sm:$0xff]
                  %1800 = vst [vmem:[%s1700 + $0xbc] sm:$0xff] %v1799
                  %v1801 = vld [vmem:[%s1699 + $0x70] sm:$0xff]
                  %1802 = vst [vmem:[%s1700 + $0xc4] sm:$0xff] %v1801
                  %v1803 = vld [vmem:[%s1699 + $0x78] sm:$0xff]
                  %1804 = vst [vmem:[%s1700 + $0xcc] sm:$0xff] %v1803
                  %v1805 = vld [vmem:[%s1699 + $0x80] sm:$0xff]
                  %1806 = vst [vmem:[%s1700 + $0xd4] sm:$0xff] %v1805
                  %v1807 = vld [vmem:[%s1699 + $0x88] sm:$0xff]
                  %1808 = vst [vmem:[%s1700 + $0xdc] sm:$0xff] %v1807
                  %v1809 = vld [vmem:[%s1699 + $0x90] sm:$0xff]
                  %1810 = vst [vmem:[%s1700 + $0xe4] sm:$0xff] %v1809
                  %v1811 = vld [vmem:[%s1699 + $0x98] sm:$0xff]
                  %1812 = vst [vmem:[%s1700 + $0xec] sm:$0xff] %v1811
                  %v1813 = vld [vmem:[%s1699 + $0xa0] sm:$0xff]
                  %1814 = vst [vmem:[%s1700 + $0xf4] sm:$0xff] %v1813
                  %v1815 = vld [vmem:[%s1699 + $0xa8] sm:$0xff]
                  %1816 = vst [vmem:[%s1700 + $0xfc] sm:$0xff] %v1815
                  %v1817 = vld [vmem:[%s1699 + $0xb0] sm:$0xff]
                  %1818 = vst [vmem:[%s1700 + $0x104] sm:$0xff] %v1817
                  %v1819 = vld [vmem:[%s1699 + $0xb8] sm:$0xff]
                  %1820 = vst [vmem:[%s1700 + $0x10c] sm:$0xff] %v1819
                  %v1821 = vld [vmem:[%s1699 + $0xc0] sm:$0xff]
                  %1822 = vst [vmem:[%s1700 + $0x114] sm:$0xff] %v1821
                  %v1823 = vld [vmem:[%s1699 + $0xc8] sm:$0xff]
                  %1824 = vst [vmem:[%s1700 + $0x11c] sm:$0xff] %v1823
                  %v1825 = vld [vmem:[%s1699 + $0xd0] sm:$0xff]
                  %1826 = vst [vmem:[%s1700 + $0x124] sm:$0xff] %v1825
                  %v1827 = vld [vmem:[%s1699 + $0xd8] sm:$0xff]
                  %1828 = vst [vmem:[%s1700 + $0x12c] sm:$0xff] %v1827
                  %s1829 = sadd.s32 1, %s1698
                  %p1830 = scmp.ge.s32.totalorder %s1829, %s1689
                  %s1831 = scalar_select %p1830, 0, %s1829
                  %s1832 = smul.u32 %s1831, 128
                  %s1833 = smul.u32 %s1831, 128
                  %s1834 = scalar_lea.vmem %s1451, %s1832 [#allocation3]
                  %s1835 = scalar_lea.vmem %s1462, %s1833
                $region148: #{cont_gaussian_policy_forward.4} parent=142 // loop_footer
                  %s1695 = sadd.s32 %s1693, 1
                $region149: #{cont_gaussian_policy_forward.4} parent=142 // loop_footer_branch
                  %1692 = sbr.rel target = $region145
                $region150: #{cont_gaussian_policy_forward.4} parent=142 // loop_exit
                  _
                %s1836 = sshrl.u32 %s1688, 4
                %s1837 = sand.u32 %s1688, 15
                %s1838 = smul.u32 %s1836, 16
                %s1839 = smul.u32 128, %s1838
                %s1840 = sshra.s32 %s1839, 4
                %s1841 = scalar_lea.vmem %s1451, %s1840 [#allocation3]
                %s1842 = smul.u32 128, %s1838
                %s1843 = sshra.s32 %s1842, 4
                %s1844 = scalar_lea.vmem %s1462, %s1843
                // While loop
                $region151: #{cont_gaussian_policy_forward.4} parent=142 // loop_pre_header
                  _
                $region152: #{cont_gaussian_policy_forward.4} parent=142 // loop_header
                  %s1848 = sphi 0, %s1850
                  %p1849 = scmp.ge.s32.totalorder %s1848, %s1837
                  %s1853 = sphi 0, %s1866
                  %s1854 = sphi %s1841, %s1869
                  %s1855 = sphi %s1844, %s1870
                $region153: #{cont_gaussian_policy_forward.4} parent=142 // loop_header_branch
                  %1852 = sbr.rel (%p1849) target = $region157
                $region154: #{cont_gaussian_policy_forward.4} parent=142 // loop_body
                  %v1856 = vld [vmem:[%s1854] sm:$0xff]
                  %1857 = vst [vmem:[%s1855] sm:$0xff] %v1856
                  %v1858 = vld [vmem:[%s1854 + $0x20] sm:$0xff]
                  %1859 = vst [vmem:[%s1855 + $0x3c] sm:$0xff] %v1858
                  %v1860 = vld [vmem:[%s1854 + $0x40] sm:$0xff]
                  %1861 = vst [vmem:[%s1855 + $0x78] sm:$0xff] %v1860
                  %v1862 = vld [vmem:[%s1854 + $0x60] sm:$0xff]
                  %1863 = vst [vmem:[%s1855 + $0xb4] sm:$0xff] %v1862
                  %s1864 = sadd.s32 1, %s1853
                  %p1865 = scmp.ge.s32.totalorder %s1864, %s1837
                  %s1866 = scalar_select %p1865, 0, %s1864
                  %s1867 = smul.u32 %s1866, 8
                  %s1868 = smul.u32 %s1866, 8
                  %s1869 = scalar_lea.vmem %s1841, %s1867 [#allocation3]
                  %s1870 = scalar_lea.vmem %s1844, %s1868
                $region155: #{cont_gaussian_policy_forward.4} parent=142 // loop_footer
                  %s1850 = sadd.s32 %s1848, 1
                $region156: #{cont_gaussian_policy_forward.4} parent=142 // loop_footer_branch
                  %1847 = sbr.rel target = $region152
                $region157: #{cont_gaussian_policy_forward.4} parent=142 // loop_exit
                  _
                %s1871 = sshll.u32 1, %s1683
                %s1872 = ssub.s32 %s1871, 1
                loop: start=0, step=1, limit=1
                $region158: #{cont_gaussian_policy_forward.4} parent=142 // loop_pre_header
                  _
                $region159: #{cont_gaussian_policy_forward.4} parent=142 // loop_header
                  %s1874 = sphi 0, %s1878
                  %p1875 = scmp.ge.s32.totalorder %s1874, 1
                  %s1879 = sphi %s1685, %s1685
                  %s1880 = sphi %s1687, %s1687
                $region160: #{cont_gaussian_policy_forward.4} parent=142 // loop_header_branch
                  %1877 = sbr.rel (%p1875) target = $region164
                $region161: #{cont_gaussian_policy_forward.4} parent=142 // loop_body
                  %v1881 = vld [vmem:[%s1879] sm:%s1872]
                  %1882 = vst [vmem:[%s1880] sm:%s1872] %v1881
                  %v1883 = vld [vmem:[%s1879 + $0x20] sm:%s1872]
                  %1884 = vst [vmem:[%s1880 + $0x3c] sm:%s1872] %v1883
                  %v1885 = vld [vmem:[%s1879 + $0x40] sm:%s1872]
                  %1886 = vst [vmem:[%s1880 + $0x78] sm:%s1872] %v1885
                  %v1887 = vld [vmem:[%s1879 + $0x60] sm:%s1872]
                  %1888 = vst [vmem:[%s1880 + $0xb4] sm:%s1872] %v1887
                $region162: #{cont_gaussian_policy_forward.4} parent=142 // loop_footer
                  %s1878 = sadd.s32 1, %s1874
                $region163: #{cont_gaussian_policy_forward.4} parent=142 // loop_footer_branch
                  %1873 = sbr.rel target = $region159
                $region164: #{cont_gaussian_policy_forward.4} parent=142 // loop_exit
                  _
              $region143: #{cont_gaussian_policy_forward.4} parent=109 // pred_fallthru
                _
            $region110: #{cont_gaussian_policy_forward.4} parent=105 // pred_fallthru
              _
            // Predicated region
            $region111: #{cont_gaussian_policy_forward.4} parent=105 // pred_check
              %p1471 = pneg %p1467
            $region112: #{cont_gaussian_policy_forward.4} parent=105 // pred_check_branch
              %1473 = sbr.rel (%p1471) target = $region114
            $region113: #{cont_gaussian_policy_forward.4} parent=105 // pred_region
              %s1474 = sshll.u32 1, %s1463
              %s1475 = ssub.s32 %s1474, 1
              loop: start=0, step=1, limit=1
              $region115: #{cont_gaussian_policy_forward.4} parent=113 // loop_pre_header
                _
              $region116: #{cont_gaussian_policy_forward.4} parent=113 // loop_header
                %s1477 = sphi 0, %s1481
                %p1478 = scmp.ge.s32.totalorder %s1477, 1
                %s1482 = sphi %s1451, %s1451
                %s1483 = sphi %s1462, %s1462
              $region117: #{cont_gaussian_policy_forward.4} parent=113 // loop_header_branch
                %1480 = sbr.rel (%p1478) target = $region121
              $region118: #{cont_gaussian_policy_forward.4} parent=113 // loop_body
                %v1484 = vld [vmem:[%s1482] sm:%s1475]
                %1485 = vst [vmem:[%s1483] sm:%s1475] %v1484
                %v1486 = vld [vmem:[%s1482 + $0x20] sm:%s1475]
                %1487 = vst [vmem:[%s1483 + $0x3c] sm:%s1475] %v1486
                %v1488 = vld [vmem:[%s1482 + $0x40] sm:%s1475]
                %1489 = vst [vmem:[%s1483 + $0x78] sm:%s1475] %v1488
                %v1490 = vld [vmem:[%s1482 + $0x60] sm:%s1475]
                %1491 = vst [vmem:[%s1483 + $0xb4] sm:%s1475] %v1490
              $region119: #{cont_gaussian_policy_forward.4} parent=113 // loop_footer
                %s1481 = sadd.s32 1, %s1477
              $region120: #{cont_gaussian_policy_forward.4} parent=113 // loop_footer_branch
                %1476 = sbr.rel target = $region116
              $region121: #{cont_gaussian_policy_forward.4} parent=113 // loop_exit
                _
            $region114: #{cont_gaussian_policy_forward.4} parent=105 // pred_fallthru
              _
          $region106: #{cont_gaussian_policy_forward.4} parent=101 // pred_fallthru
            _
          %1889 = vnop
        $region102: #{cont_gaussian_policy_forward.4} parent=93 // pred_fallthru
          _
      $region94: #{cont_gaussian_policy_forward.4} parent=5 // pred_fallthru
        _
      %p1890 = scmp.le.s32.totalorder 2, %s9
      // Predicated region
      $region165: #{cont_gaussian_policy_forward.4} parent=5 // pred_check
        %p1891 = pneg %p1890
      $region166: #{cont_gaussian_policy_forward.4} parent=5 // pred_check_branch
        %1893 = sbr.rel (%p1891) target = $region168
      $region167: #{cont_gaussian_policy_forward.4} parent=5 // pred_region
        %s1894 = ssub.s32 %s9, 2
        // Predicated region
        $region169: #{cont_gaussian_policy_forward.4} parent=167 // pred_check
          %p1895 = pneg %p106
        $region170: #{cont_gaussian_policy_forward.4} parent=167 // pred_check_branch
          %1897 = sbr.rel (%p1895) target = $region172
        $region171: #{cont_gaussian_policy_forward.4} parent=167 // pred_region
          %s1898 = sand.u32 %s91, 1
          %s1899 = sand.u32 %s91, 1
          %s1900 = smul.addr %s1899, 128
          %s1901 = scalar_lea.vmem [#allocation3], %s1900
        $region172: #{cont_gaussian_policy_forward.4} parent=167 // pred_fallthru
          _
      $region168: #{cont_gaussian_policy_forward.4} parent=5 // pred_fallthru
        _
    $region6: #{cont_gaussian_policy_forward.4} parent=1 // loop_footer
      %s13 = sadd.s32 1, %s9
    $region7: #{cont_gaussian_policy_forward.4} parent=1 // loop_footer_branch
      %8 = sbr.rel target = $region3
    $region8: #{cont_gaussian_policy_forward.4} parent=1 // loop_exit
      _

// kernel: cont_gaussian_policy_forward.5
$region0: #{cont_gaussian_policy_forward.5}
  #allocation0 [shape = 'u32[]', space=smem, size = 0x4, offset = 0x4, fixed_abs, tag = 'smem constant byte address 0x4 - core index']
  #allocation1 [shape = 'u32[144,128]{1,0:T(1,128)}', space=vmem, size = 0x12000, scoped, tag = 'internal scratch']
  %s0 = inlined_call_operand.vmem [shape: bf16[64,800], index: 0, kind: input, shape index: {}]
  %s1 = inlined_call_operand.vmem [shape: f32[64,1], index: 1, kind: input, shape index: {}]
  %s2 = inlined_call_operand.vmem [shape: bf16[800,338], index: 2, kind: input, shape index: {}]
  %s3 = inlined_call_operand.vmem [shape: bf16[64,338], index: 3, kind: output, shape index: {}]
  %s4 = sld [smem:[#allocation0]]
  $region22: #{cont_gaussian_policy_forward.5} parent=0
    _
  %s6 = ssub.s32 1, %s4
  %s7 = scalar_select 0, %s6, %s4
  // Predicated region
  $region2: #{cont_gaussian_policy_forward.5} parent=0 // pred_check
    _
  $region3: #{cont_gaussian_policy_forward.5} parent=0 // pred_check_branch
    %9 = sbr.rel (0) target = $region5
  $region4: #{cont_gaussian_policy_forward.5} parent=0 // pred_region
    _
  $region5: #{cont_gaussian_policy_forward.5} parent=0 // pred_fallthru
    _
  // Predicated region
  $region6: #{cont_gaussian_policy_forward.5} parent=0 // pred_check
    _
  $region7: #{cont_gaussian_policy_forward.5} parent=0 // pred_check_branch
    %11 = sbr.rel (0) target = $region9
  $region8: #{cont_gaussian_policy_forward.5} parent=0 // pred_region
    _
  $region9: #{cont_gaussian_policy_forward.5} parent=0 // pred_fallthru
    _
  // Predicated region
  $region10: #{cont_gaussian_policy_forward.5} parent=0 // pred_check
    _
  $region11: #{cont_gaussian_policy_forward.5} parent=0 // pred_check_branch
    %13 = sbr.rel (0) target = $region13
  $region12: #{cont_gaussian_policy_forward.5} parent=0 // pred_region
    _
  $region13: #{cont_gaussian_policy_forward.5} parent=0 // pred_fallthru
    _
  %v15 = vld [vmem:[%s0] sm:$0xff]
  %v16 = vld [vmem:[%s0 + $0x8] sm:$0xff]
  %v17 = vld [vmem:[%s0 + $0x10] sm:$0xff]
  %v18 = vld [vmem:[%s0 + $0x18] sm:$0xf]
  %v19 = vld [vmem:[%s0 + $0x1c] sm:$0xff]
  %v20 = vld [vmem:[%s0 + $0x24] sm:$0xff]
  %v21 = vld [vmem:[%s0 + $0x2c] sm:$0xff]
  %v22 = vld [vmem:[%s0 + $0x34] sm:$0xf]
  %v23 = vld [vmem:[%s0 + $0x38] sm:$0xff]
  %v24 = vld [vmem:[%s0 + $0x40] sm:$0xff]
  %v25 = vld [vmem:[%s0 + $0x48] sm:$0xff]
  %v26 = vld [vmem:[%s0 + $0x50] sm:$0xf]
  %v27 = vld [vmem:[%s0 + $0x54] sm:$0xff]
  %v28 = vld [vmem:[%s0 + $0x5c] sm:$0xff]
  %v29 = vld [vmem:[%s0 + $0x64] sm:$0xff]
  %v30 = vld [vmem:[%s0 + $0x6c] sm:$0xf]
  %v31 = vld [vmem:[%s0 + $0x70] sm:$0xff]
  %v32 = vld [vmem:[%s0 + $0x78] sm:$0xff]
  %v33 = vld [vmem:[%s0 + $0x80] sm:$0xff]
  %v34 = vld [vmem:[%s0 + $0x88] sm:$0xf]
  %v35 = vld [vmem:[%s0 + $0x8c] sm:$0xff]
  %v36 = vld [vmem:[%s0 + $0x94] sm:$0xff]
  %v37 = vld [vmem:[%s0 + $0x9c] sm:$0xff]
  %v38 = vld [vmem:[%s0 + $0xa4] sm:$0xf]
  %v39 = vld [vmem:[%s0 + $0xa8] sm:$0xff]
  %v40 = vld [vmem:[%s0 + $0xb0] sm:$0xff]
  %v41 = vld [vmem:[%s0 + $0xb8] sm:$0xff]
  %v42 = vld [vmem:[%s0 + $0xc0] sm:$0xf]
  %v43 = vld [vmem:[%s0 + $0xc4] sm:$0xff]
  %v44 = vld [vmem:[%s0 + $0xcc] sm:$0xff]
  %v45 = vld [vmem:[%s0 + $0xd4] sm:$0xff]
  %v46 = vld [vmem:[%s0 + $0xdc] sm:$0xf]
  %v47 = vld [vmem:[%s2] sm:$0xff]
  %v48 = vld [vmem:[%s2 + $0x8] sm:$0xf]
  %v49 = vld [vmem:[%s2 + $0xc] sm:$0xff]
  %v50 = vld [vmem:[%s2 + $0x14] sm:$0xf]
  %v51 = vld [vmem:[%s2 + $0x18] sm:$0xff]
  %v52 = vld [vmem:[%s2 + $0x20] sm:$0xf]
  %v53 = vld [vmem:[%s2 + $0x24] sm:$0xff]
  %v54 = vld [vmem:[%s2 + $0x2c] sm:$0xf]
  %v55 = vld [vmem:[%s2 + $0x30] sm:$0xff]
  %v56 = vld [vmem:[%s2 + $0x38] sm:$0xf]
  %v57 = vld [vmem:[%s2 + $0x3c] sm:$0xff]
  %v58 = vld [vmem:[%s2 + $0x44] sm:$0xf]
  %v59 = vld [vmem:[%s2 + $0x48] sm:$0xff]
  %v60 = vld [vmem:[%s2 + $0x50] sm:$0xf]
  %v61 = vld [vmem:[%s2 + $0x54] sm:$0xff]
  %v62 = vld [vmem:[%s2 + $0x5c] sm:$0xf]
  %v63 = vld [vmem:[%s2 + $0x60] sm:$0xff]
  %v64 = vld [vmem:[%s2 + $0x68] sm:$0xf]
  %v65 = vld [vmem:[%s2 + $0x6c] sm:$0xff]
  %v66 = vld [vmem:[%s2 + $0x74] sm:$0xf]
  %v67 = vld [vmem:[%s2 + $0x78] sm:$0xff]
  %v68 = vld [vmem:[%s2 + $0x80] sm:$0xf]
  %v69 = vld [vmem:[%s2 + $0x84] sm:$0xff]
  %v70 = vld [vmem:[%s2 + $0x8c] sm:$0xf]
  %v71 = vld [vmem:[%s2 + $0x90] sm:$0xff]
  %v72 = vld [vmem:[%s2 + $0x98] sm:$0xf]
  %v73 = vld [vmem:[%s2 + $0x9c] sm:$0xff]
  %v74 = vld [vmem:[%s2 + $0xa4] sm:$0xf]
  %v75 = vld [vmem:[%s2 + $0xa8] sm:$0xff]
  %v76 = vld [vmem:[%s2 + $0xb0] sm:$0xf]
  %v77 = vld [vmem:[%s2 + $0xb4] sm:$0xff]
  %v78 = vld [vmem:[%s2 + $0xbc] sm:$0xf]
  %v79 = vld [vmem:[%s2 + $0xc0] sm:$0xff]
  %v80 = vld [vmem:[%s2 + $0xc8] sm:$0xf]
  %v81 = vld [vmem:[%s2 + $0xcc] sm:$0xff]
  %v82 = vld [vmem:[%s2 + $0xd4] sm:$0xf]
  %v83 = vld [vmem:[%s2 + $0xd8] sm:$0xff]
  %v84 = vld [vmem:[%s2 + $0xe0] sm:$0xf]
  %v85 = vld [vmem:[%s2 + $0xe4] sm:$0xff]
  %v86 = vld [vmem:[%s2 + $0xec] sm:$0xf]
  %v87 = vld [vmem:[%s2 + $0xf0] sm:$0xff]
  %v88 = vld [vmem:[%s2 + $0xf8] sm:$0xf]
  %v89 = vld [vmem:[%s2 + $0xfc] sm:$0xff]
  %v90 = vld [vmem:[%s2 + $0x104] sm:$0xf]
  %v91 = vld [vmem:[%s2 + $0x108] sm:$0xff]
  %v92 = vld [vmem:[%s2 + $0x110] sm:$0xf]
  %v93 = vld [vmem:[%s2 + $0x114] sm:$0xff]
  %v94 = vld [vmem:[%s2 + $0x11c] sm:$0xf]
  %v95 = vld [vmem:[%s2 + $0x120] sm:$0xff]
  %v96 = vld [vmem:[%s2 + $0x128] sm:$0xf]
  %v97 = vld [vmem:[%s2 + $0x12c] sm:$0xff]
  %v98 = vld [vmem:[%s2 + $0x134] sm:$0xf]
  %v99 = vld [vmem:[%s2 + $0x138] sm:$0xff]
  %v100 = vld [vmem:[%s2 + $0x140] sm:$0xf]
  %v101 = vld [vmem:[%s2 + $0x144] sm:$0xff]
  %v102 = vld [vmem:[%s2 + $0x14c] sm:$0xf]
  %v103 = vld [vmem:[%s2 + $0x150] sm:$0xff]
  %v104 = vld [vmem:[%s2 + $0x158] sm:$0xf]
  %v105 = vld [vmem:[%s2 + $0x15c] sm:$0xff]
  %v106 = vld [vmem:[%s2 + $0x164] sm:$0xf]
  %v107 = vld [vmem:[%s2 + $0x168] sm:$0xff]
  %v108 = vld [vmem:[%s2 + $0x170] sm:$0xf]
  %v109 = vld [vmem:[%s2 + $0x174] sm:$0xff]
  %v110 = vld [vmem:[%s2 + $0x17c] sm:$0xf]
  %v111 = vld [vmem:[%s2 + $0x180] sm:$0xff]
  %v112 = vld [vmem:[%s2 + $0x188] sm:$0xf]
  %v113 = vld [vmem:[%s2 + $0x18c] sm:$0xff]
  %v114 = vld [vmem:[%s2 + $0x194] sm:$0xf]
  %v115 = vld [vmem:[%s2 + $0x198] sm:$0xff]
  %v116 = vld [vmem:[%s2 + $0x1a0] sm:$0xf]
  %v117 = vld [vmem:[%s2 + $0x1a4] sm:$0xff]
  %v118 = vld [vmem:[%s2 + $0x1ac] sm:$0xf]
  %v119 = vld [vmem:[%s2 + $0x1b0] sm:$0xff]
  %v120 = vld [vmem:[%s2 + $0x1b8] sm:$0xf]
  %v121 = vld [vmem:[%s2 + $0x1bc] sm:$0xff]
  %v122 = vld [vmem:[%s2 + $0x1c4] sm:$0xf]
  %v123 = vld [vmem:[%s2 + $0x1c8] sm:$0xff]
  %v124 = vld [vmem:[%s2 + $0x1d0] sm:$0xf]
  %v125 = vld [vmem:[%s2 + $0x1d4] sm:$0xff]
  %v126 = vld [vmem:[%s2 + $0x1dc] sm:$0xf]
  %v127 = vld [vmem:[%s2 + $0x1e0] sm:$0xff]
  %v128 = vld [vmem:[%s2 + $0x1e8] sm:$0xf]
  %v129 = vld [vmem:[%s2 + $0x1ec] sm:$0xff]
  %v130 = vld [vmem:[%s2 + $0x1f4] sm:$0xf]
  %v131 = vld [vmem:[%s2 + $0x1f8] sm:$0xff]
  %v132 = vld [vmem:[%s2 + $0x200] sm:$0xf]
  %v133 = vld [vmem:[%s2 + $0x204] sm:$0xff]
  %v134 = vld [vmem:[%s2 + $0x20c] sm:$0xf]
  %v135 = vld [vmem:[%s2 + $0x210] sm:$0xff]
  %v136 = vld [vmem:[%s2 + $0x218] sm:$0xf]
  %v137 = vld [vmem:[%s2 + $0x21c] sm:$0xff]
  %v138 = vld [vmem:[%s2 + $0x224] sm:$0xf]
  %v139 = vld [vmem:[%s2 + $0x228] sm:$0xff]
  %v140 = vld [vmem:[%s2 + $0x230] sm:$0xf]
  %v141 = vld [vmem:[%s2 + $0x234] sm:$0xff]
  %v142 = vld [vmem:[%s2 + $0x23c] sm:$0xf]
  %v143 = vld [vmem:[%s2 + $0x240] sm:$0xff]
  %v144 = vld [vmem:[%s2 + $0x248] sm:$0xf]
  %v145 = vld [vmem:[%s2 + $0x24c] sm:$0xff]
  %v146 = vld [vmem:[%s2 + $0x254] sm:$0xf]
  %v147 = vld [vmem:[%s2 + $0x258] sm:$0xff]
  %v148 = vld [vmem:[%s2 + $0x260] sm:$0xf]
  %v149 = vld [vmem:[%s2 + $0x264] sm:$0xff]
  %v150 = vld [vmem:[%s2 + $0x26c] sm:$0xf]
  %v151 = vld [vmem:[%s2 + $0x270] sm:$0xff]
  %v152 = vld [vmem:[%s2 + $0x278] sm:$0xf]
  %v153 = vld [vmem:[%s2 + $0x27c] sm:$0xff]
  %v154 = vld [vmem:[%s2 + $0x284] sm:$0xf]
  %v155 = vld [vmem:[%s2 + $0x288] sm:$0xff]
  %v156 = vld [vmem:[%s2 + $0x290] sm:$0xf]
  %v157 = vld [vmem:[%s2 + $0x294] sm:$0xff]
  %v158 = vld [vmem:[%s2 + $0x29c] sm:$0xf]
  %v159 = vld [vmem:[%s2 + $0x2a0] sm:$0xff]
  %v160 = vld [vmem:[%s2 + $0x2a8] sm:$0xf]
  %v161 = vld [vmem:[%s2 + $0x2ac] sm:$0xff]
  %v162 = vld [vmem:[%s2 + $0x2b4] sm:$0xf]
  %v163 = vld [vmem:[%s2 + $0x2b8] sm:$0xff]
  %v164 = vld [vmem:[%s2 + $0x2c0] sm:$0xf]
  %v165 = vld [vmem:[%s2 + $0x2c4] sm:$0xff]
  %v166 = vld [vmem:[%s2 + $0x2cc] sm:$0xf]
  %v167 = vld [vmem:[%s2 + $0x2d0] sm:$0xff]
  %v168 = vld [vmem:[%s2 + $0x2d8] sm:$0xf]
  %v169 = vld [vmem:[%s2 + $0x2dc] sm:$0xff]
  %v170 = vld [vmem:[%s2 + $0x2e4] sm:$0xf]
  %v171 = vld [vmem:[%s2 + $0x2e8] sm:$0xff]
  %v172 = vld [vmem:[%s2 + $0x2f0] sm:$0xf]
  %v173 = vld [vmem:[%s2 + $0x2f4] sm:$0xff]
  %v174 = vld [vmem:[%s2 + $0x2fc] sm:$0xf]
  %v175 = vld [vmem:[%s2 + $0x300] sm:$0xff]
  %v176 = vld [vmem:[%s2 + $0x308] sm:$0xf]
  %v177 = vld [vmem:[%s2 + $0x30c] sm:$0xff]
  %v178 = vld [vmem:[%s2 + $0x314] sm:$0xf]
  %v179 = vld [vmem:[%s2 + $0x318] sm:$0xff]
  %v180 = vld [vmem:[%s2 + $0x320] sm:$0xf]
  %v181 = vld [vmem:[%s2 + $0x324] sm:$0xff]
  %v182 = vld [vmem:[%s2 + $0x32c] sm:$0xf]
  %v183 = vld [vmem:[%s2 + $0x330] sm:$0xff]
  %v184 = vld [vmem:[%s2 + $0x338] sm:$0xf]
  %v185 = vld [vmem:[%s2 + $0x33c] sm:$0xff]
  %v186 = vld [vmem:[%s2 + $0x344] sm:$0xf]
  %v187 = vld [vmem:[%s2 + $0x348] sm:$0xff]
  %v188 = vld [vmem:[%s2 + $0x350] sm:$0xf]
  %v189 = vld [vmem:[%s2 + $0x354] sm:$0xff]
  %v190 = vld [vmem:[%s2 + $0x35c] sm:$0xf]
  %v191 = vld [vmem:[%s2 + $0x360] sm:$0xff]
  %v192 = vld [vmem:[%s2 + $0x368] sm:$0xf]
  %v193 = vld [vmem:[%s2 + $0x36c] sm:$0xff]
  %v194 = vld [vmem:[%s2 + $0x374] sm:$0xf]
  %v195 = vld [vmem:[%s2 + $0x378] sm:$0xff]
  %v196 = vld [vmem:[%s2 + $0x380] sm:$0xf]
  %v197 = vld [vmem:[%s2 + $0x384] sm:$0xff]
  %v198 = vld [vmem:[%s2 + $0x38c] sm:$0xf]
  %v199 = vld [vmem:[%s2 + $0x390] sm:$0xff]
  %v200 = vld [vmem:[%s2 + $0x398] sm:$0xf]
  %v201 = vld [vmem:[%s2 + $0x39c] sm:$0xff]
  %v202 = vld [vmem:[%s2 + $0x3a4] sm:$0xf]
  %v203 = vld [vmem:[%s2 + $0x3a8] sm:$0xff]
  %v204 = vld [vmem:[%s2 + $0x3b0] sm:$0xf]
  %v205 = vld [vmem:[%s2 + $0x3b4] sm:$0xff]
  %v206 = vld [vmem:[%s2 + $0x3bc] sm:$0xf]
  %v207 = vld [vmem:[%s2 + $0x3c0] sm:$0xff]
  %v208 = vld [vmem:[%s2 + $0x3c8] sm:$0xf]
  %v209 = vld [vmem:[%s2 + $0x3cc] sm:$0xff]
  %v210 = vld [vmem:[%s2 + $0x3d4] sm:$0xf]
  %v211 = vld [vmem:[%s2 + $0x3d8] sm:$0xff]
  %v212 = vld [vmem:[%s2 + $0x3e0] sm:$0xf]
  %v213 = vld [vmem:[%s2 + $0x3e4] sm:$0xff]
  %v214 = vld [vmem:[%s2 + $0x3ec] sm:$0xf]
  %v215 = vld [vmem:[%s2 + $0x3f0] sm:$0xff]
  %v216 = vld [vmem:[%s2 + $0x3f8] sm:$0xf]
  %v217 = vld [vmem:[%s2 + $0x3fc] sm:$0xff]
  %v218 = vld [vmem:[%s2 + $0x404] sm:$0xf]
  %v219 = vld [vmem:[%s2 + $0x408] sm:$0xff]
  %v220 = vld [vmem:[%s2 + $0x410] sm:$0xf]
  %v221 = vld [vmem:[%s2 + $0x414] sm:$0xff]
  %v222 = vld [vmem:[%s2 + $0x41c] sm:$0xf]
  %v223 = vld [vmem:[%s2 + $0x420] sm:$0xff]
  %v224 = vld [vmem:[%s2 + $0x428] sm:$0xf]
  %v225 = vld [vmem:[%s2 + $0x42c] sm:$0xff]
  %v226 = vld [vmem:[%s2 + $0x434] sm:$0xf]
  %v227 = vld [vmem:[%s2 + $0x438] sm:$0xff]
  %v228 = vld [vmem:[%s2 + $0x440] sm:$0xf]
  %v229 = vld [vmem:[%s2 + $0x444] sm:$0xff]
  %v230 = vld [vmem:[%s2 + $0x44c] sm:$0xf]
  %v231 = vld [vmem:[%s2 + $0x450] sm:$0xff]
  %v232 = vld [vmem:[%s2 + $0x458] sm:$0xf]
  %v233 = vld [vmem:[%s2 + $0x45c] sm:$0xff]
  %v234 = vld [vmem:[%s2 + $0x464] sm:$0xf]
  %v235 = vld [vmem:[%s2 + $0x468] sm:$0xff]
  %v236 = vld [vmem:[%s2 + $0x470] sm:$0xf]
  %v237 = vld [vmem:[%s2 + $0x474] sm:$0xff]
  %v238 = vld [vmem:[%s2 + $0x47c] sm:$0xf]
  %v239 = vld [vmem:[%s2 + $0x480] sm:$0xff]
  %v240 = vld [vmem:[%s2 + $0x488] sm:$0xf]
  %v241 = vld [vmem:[%s2 + $0x48c] sm:$0xff]
  %v242 = vld [vmem:[%s2 + $0x494] sm:$0xf]
  %v243 = vld [vmem:[%s2 + $0x498] sm:$0xff]
  %v244 = vld [vmem:[%s2 + $0x4a0] sm:$0xf]
  %v245 = vld [vmem:[%s2 + $0x4a4] sm:$0xff]
  %v246 = vld [vmem:[%s2 + $0x4ac] sm:$0xf]
  %v247 = vld [vmem:[%s1] sm:$0xff]
  %v248 = vld [vmem:[%s1 + $0x8] sm:$0xff]
  %v249 = vld [vmem:[%s1 + $0x10] sm:$0xff]
  %v250 = vld [vmem:[%s1 + $0x18] sm:$0xff]
  %v251 = vld [vmem:[%s1 + $0x20] sm:$0xff]
  %v252 = vld [vmem:[%s1 + $0x28] sm:$0xff]
  %v253 = vld [vmem:[%s1 + $0x30] sm:$0xff]
  %v254 = vld [vmem:[%s1 + $0x38] sm:$0xff]
  %256 = vset.pattern.permute.xlu0 0
  %257 = vperm.xlu0 %256, %v247
  %v258 = vpop.permute.xlu0 %257
  %261 = vset.pattern.permute.xlu0 0
  %262 = vperm.xlu0 %261, %v248
  %v263 = vpop.permute.xlu0 %262
  %266 = vset.pattern.permute.xlu0 0
  %267 = vperm.xlu0 %266, %v249
  %v268 = vpop.permute.xlu0 %267
  %271 = vset.pattern.permute.xlu0 0
  %272 = vperm.xlu0 %271, %v250
  %v273 = vpop.permute.xlu0 %272
  %276 = vset.pattern.permute.xlu0 0
  %277 = vperm.xlu0 %276, %v251
  %v278 = vpop.permute.xlu0 %277
  %281 = vset.pattern.permute.xlu0 0
  %282 = vperm.xlu0 %281, %v252
  %v283 = vpop.permute.xlu0 %282
  %286 = vset.pattern.permute.xlu0 0
  %287 = vperm.xlu0 %286, %v253
  %v288 = vpop.permute.xlu0 %287
  %291 = vset.pattern.permute.xlu0 0
  %292 = vperm.xlu0 %291, %v254
  %v293 = vpop.permute.xlu0 %292
  %v327 = vunpack.c.l.b16 %v15
  %v328 = vunpack.c.h.b16 %v15
  %v329 = vunpack.c.l.b16 %v16
  %v330 = vunpack.c.h.b16 %v16
  %v331 = vunpack.c.l.b16 %v17
  %v332 = vunpack.c.h.b16 %v17
  %v333 = vunpack.c.l.b16 %v18
  %v334 = vunpack.c.l.b16 %v19
  %v335 = vunpack.c.h.b16 %v19
  %v336 = vunpack.c.l.b16 %v20
  %v337 = vunpack.c.h.b16 %v20
  %v338 = vunpack.c.l.b16 %v21
  %v339 = vunpack.c.h.b16 %v21
  %v340 = vunpack.c.l.b16 %v22
  %v341 = vunpack.c.l.b16 %v23
  %v342 = vunpack.c.h.b16 %v23
  %v343 = vunpack.c.l.b16 %v24
  %v344 = vunpack.c.h.b16 %v24
  %v345 = vunpack.c.l.b16 %v25
  %v346 = vunpack.c.h.b16 %v25
  %v347 = vunpack.c.l.b16 %v26
  %v348 = vunpack.c.l.b16 %v27
  %v349 = vunpack.c.h.b16 %v27
  %v350 = vunpack.c.l.b16 %v28
  %v351 = vunpack.c.h.b16 %v28
  %v352 = vunpack.c.l.b16 %v29
  %v353 = vunpack.c.h.b16 %v29
  %v354 = vunpack.c.l.b16 %v30
  %v355 = vunpack.c.l.b16 %v31
  %v356 = vunpack.c.h.b16 %v31
  %v357 = vunpack.c.l.b16 %v32
  %v358 = vunpack.c.h.b16 %v32
  %v359 = vunpack.c.l.b16 %v33
  %v360 = vunpack.c.h.b16 %v33
  %v361 = vunpack.c.l.b16 %v34
  %v362 = vunpack.c.l.b16 %v35
  %v363 = vunpack.c.h.b16 %v35
  %v364 = vunpack.c.l.b16 %v36
  %v365 = vunpack.c.h.b16 %v36
  %v366 = vunpack.c.l.b16 %v37
  %v367 = vunpack.c.h.b16 %v37
  %v368 = vunpack.c.l.b16 %v38
  %v369 = vunpack.c.l.b16 %v39
  %v370 = vunpack.c.h.b16 %v39
  %v371 = vunpack.c.l.b16 %v40
  %v372 = vunpack.c.h.b16 %v40
  %v373 = vunpack.c.l.b16 %v41
  %v374 = vunpack.c.h.b16 %v41
  %v375 = vunpack.c.l.b16 %v42
  %v376 = vunpack.c.l.b16 %v43
  %v377 = vunpack.c.h.b16 %v43
  %v378 = vunpack.c.l.b16 %v44
  %v379 = vunpack.c.h.b16 %v44
  %v380 = vunpack.c.l.b16 %v45
  %v381 = vunpack.c.h.b16 %v45
  %v382 = vunpack.c.l.b16 %v46
  %v383 = vpack.c.b16 %v334, %v327
  %v384 = vpack.c.b16 %v335, %v328
  %v385 = vpack.c.b16 %v336, %v329
  %v386 = vpack.c.b16 %v337, %v330
  %v387 = vpack.c.b16 %v338, %v331
  %v388 = vpack.c.b16 %v339, %v332
  %v389 = vpack.c.b16 %v340, %v333
  %v390 = vpack.c.b16 %v348, %v341
  %v391 = vpack.c.b16 %v349, %v342
  %v392 = vpack.c.b16 %v350, %v343
  %v393 = vpack.c.b16 %v351, %v344
  %v394 = vpack.c.b16 %v352, %v345
  %v395 = vpack.c.b16 %v353, %v346
  %v396 = vpack.c.b16 %v354, %v347
  %v397 = vpack.c.b16 %v362, %v355
  %v398 = vpack.c.b16 %v363, %v356
  %v399 = vpack.c.b16 %v364, %v357
  %v400 = vpack.c.b16 %v365, %v358
  %v401 = vpack.c.b16 %v366, %v359
  %v402 = vpack.c.b16 %v367, %v360
  %v403 = vpack.c.b16 %v368, %v361
  %v404 = vpack.c.b16 %v376, %v369
  %v405 = vpack.c.b16 %v377, %v370
  %v406 = vpack.c.b16 %v378, %v371
  %v407 = vpack.c.b16 %v379, %v372
  %v408 = vpack.c.b16 %v380, %v373
  %v409 = vpack.c.b16 %v381, %v374
  %v410 = vpack.c.b16 %v382, %v375
  %v635 = vunpack.c.l.b16 %v47
  %v636 = vunpack.c.h.b16 %v47
  %v637 = vunpack.c.l.b16 %v48
  %v638 = vunpack.c.l.b16 %v49
  %v639 = vunpack.c.h.b16 %v49
  %v640 = vunpack.c.l.b16 %v50
  %v641 = vunpack.c.l.b16 %v51
  %v642 = vunpack.c.h.b16 %v51
  %v643 = vunpack.c.l.b16 %v52
  %v644 = vunpack.c.l.b16 %v53
  %v645 = vunpack.c.h.b16 %v53
  %v646 = vunpack.c.l.b16 %v54
  %v647 = vunpack.c.l.b16 %v55
  %v648 = vunpack.c.h.b16 %v55
  %v649 = vunpack.c.l.b16 %v56
  %v650 = vunpack.c.l.b16 %v57
  %v651 = vunpack.c.h.b16 %v57
  %v652 = vunpack.c.l.b16 %v58
  %v653 = vunpack.c.l.b16 %v59
  %v654 = vunpack.c.h.b16 %v59
  %v655 = vunpack.c.l.b16 %v60
  %v656 = vunpack.c.l.b16 %v61
  %v657 = vunpack.c.h.b16 %v61
  %v658 = vunpack.c.l.b16 %v62
  %v659 = vunpack.c.l.b16 %v63
  %v660 = vunpack.c.h.b16 %v63
  %v661 = vunpack.c.l.b16 %v64
  %v662 = vunpack.c.l.b16 %v65
  %v663 = vunpack.c.h.b16 %v65
  %v664 = vunpack.c.l.b16 %v66
  %v665 = vunpack.c.l.b16 %v67
  %v666 = vunpack.c.h.b16 %v67
  %v667 = vunpack.c.l.b16 %v68
  %v668 = vunpack.c.l.b16 %v69
  %v669 = vunpack.c.h.b16 %v69
  %v670 = vunpack.c.l.b16 %v70
  %v671 = vunpack.c.l.b16 %v71
  %v672 = vunpack.c.h.b16 %v71
  %v673 = vunpack.c.l.b16 %v72
  %v674 = vunpack.c.l.b16 %v73
  %v675 = vunpack.c.h.b16 %v73
  %v676 = vunpack.c.l.b16 %v74
  %v677 = vunpack.c.l.b16 %v75
  %v678 = vunpack.c.h.b16 %v75
  %v679 = vunpack.c.l.b16 %v76
  %v680 = vunpack.c.l.b16 %v77
  %v681 = vunpack.c.h.b16 %v77
  %v682 = vunpack.c.l.b16 %v78
  %v683 = vunpack.c.l.b16 %v79
  %v684 = vunpack.c.h.b16 %v79
  %v685 = vunpack.c.l.b16 %v80
  %v686 = vunpack.c.l.b16 %v81
  %v687 = vunpack.c.h.b16 %v81
  %v688 = vunpack.c.l.b16 %v82
  %v689 = vunpack.c.l.b16 %v83
  %v690 = vunpack.c.h.b16 %v83
  %v691 = vunpack.c.l.b16 %v84
  %v692 = vunpack.c.l.b16 %v85
  %v693 = vunpack.c.h.b16 %v85
  %v694 = vunpack.c.l.b16 %v86
  %v695 = vunpack.c.l.b16 %v87
  %v696 = vunpack.c.h.b16 %v87
  %v697 = vunpack.c.l.b16 %v88
  %v698 = vunpack.c.l.b16 %v89
  %v699 = vunpack.c.h.b16 %v89
  %v700 = vunpack.c.l.b16 %v90
  %v701 = vunpack.c.l.b16 %v91
  %v702 = vunpack.c.h.b16 %v91
  %v703 = vunpack.c.l.b16 %v92
  %v704 = vunpack.c.l.b16 %v93
  %v705 = vunpack.c.h.b16 %v93
  %v706 = vunpack.c.l.b16 %v94
  %v707 = vunpack.c.l.b16 %v95
  %v708 = vunpack.c.h.b16 %v95
  %v709 = vunpack.c.l.b16 %v96
  %v710 = vunpack.c.l.b16 %v97
  %v711 = vunpack.c.h.b16 %v97
  %v712 = vunpack.c.l.b16 %v98
  %v713 = vunpack.c.l.b16 %v99
  %v714 = vunpack.c.h.b16 %v99
  %v715 = vunpack.c.l.b16 %v100
  %v716 = vunpack.c.l.b16 %v101
  %v717 = vunpack.c.h.b16 %v101
  %v718 = vunpack.c.l.b16 %v102
  %v719 = vunpack.c.l.b16 %v103
  %v720 = vunpack.c.h.b16 %v103
  %v721 = vunpack.c.l.b16 %v104
  %v722 = vunpack.c.l.b16 %v105
  %v723 = vunpack.c.h.b16 %v105
  %v724 = vunpack.c.l.b16 %v106
  %v725 = vunpack.c.l.b16 %v107
  %v726 = vunpack.c.h.b16 %v107
  %v727 = vunpack.c.l.b16 %v108
  %v728 = vunpack.c.l.b16 %v109
  %v729 = vunpack.c.h.b16 %v109
  %v730 = vunpack.c.l.b16 %v110
  %v731 = vunpack.c.l.b16 %v111
  %v732 = vunpack.c.h.b16 %v111
  %v733 = vunpack.c.l.b16 %v112
  %v734 = vunpack.c.l.b16 %v113
  %v735 = vunpack.c.h.b16 %v113
  %v736 = vunpack.c.l.b16 %v114
  %v737 = vunpack.c.l.b16 %v115
  %v738 = vunpack.c.h.b16 %v115
  %v739 = vunpack.c.l.b16 %v116
  %v740 = vunpack.c.l.b16 %v117
  %v741 = vunpack.c.h.b16 %v117
  %v742 = vunpack.c.l.b16 %v118
  %v743 = vunpack.c.l.b16 %v119
  %v744 = vunpack.c.h.b16 %v119
  %v745 = vunpack.c.l.b16 %v120
  %v746 = vunpack.c.l.b16 %v121
  %v747 = vunpack.c.h.b16 %v121
  %v748 = vunpack.c.l.b16 %v122
  %v749 = vunpack.c.l.b16 %v123
  %v750 = vunpack.c.h.b16 %v123
  %v751 = vunpack.c.l.b16 %v124
  %v752 = vunpack.c.l.b16 %v125
  %v753 = vunpack.c.h.b16 %v125
  %v754 = vunpack.c.l.b16 %v126
  %v755 = vunpack.c.l.b16 %v127
  %v756 = vunpack.c.h.b16 %v127
  %v757 = vunpack.c.l.b16 %v128
  %v758 = vunpack.c.l.b16 %v129
  %v759 = vunpack.c.h.b16 %v129
  %v760 = vunpack.c.l.b16 %v130
  %v761 = vunpack.c.l.b16 %v131
  %v762 = vunpack.c.h.b16 %v131
  %v763 = vunpack.c.l.b16 %v132
  %v764 = vunpack.c.l.b16 %v133
  %v765 = vunpack.c.h.b16 %v133
  %v766 = vunpack.c.l.b16 %v134
  %v767 = vunpack.c.l.b16 %v135
  %v768 = vunpack.c.h.b16 %v135
  %v769 = vunpack.c.l.b16 %v136
  %v770 = vunpack.c.l.b16 %v137
  %v771 = vunpack.c.h.b16 %v137
  %v772 = vunpack.c.l.b16 %v138
  %v773 = vunpack.c.l.b16 %v139
  %v774 = vunpack.c.h.b16 %v139
  %v775 = vunpack.c.l.b16 %v140
  %v776 = vunpack.c.l.b16 %v141
  %v777 = vunpack.c.h.b16 %v141
  %v778 = vunpack.c.l.b16 %v142
  %v779 = vunpack.c.l.b16 %v143
  %v780 = vunpack.c.h.b16 %v143
  %v781 = vunpack.c.l.b16 %v144
  %v782 = vunpack.c.l.b16 %v145
  %v783 = vunpack.c.h.b16 %v145
  %v784 = vunpack.c.l.b16 %v146
  %v785 = vunpack.c.l.b16 %v147
  %v786 = vunpack.c.h.b16 %v147
  %v787 = vunpack.c.l.b16 %v148
  %v788 = vunpack.c.l.b16 %v149
  %v789 = vunpack.c.h.b16 %v149
  %v790 = vunpack.c.l.b16 %v150
  %v791 = vunpack.c.l.b16 %v151
  %v792 = vunpack.c.h.b16 %v151
  %v793 = vunpack.c.l.b16 %v152
  %v794 = vunpack.c.l.b16 %v153
  %v795 = vunpack.c.h.b16 %v153
  %v796 = vunpack.c.l.b16 %v154
  %v797 = vunpack.c.l.b16 %v155
  %v798 = vunpack.c.h.b16 %v155
  %v799 = vunpack.c.l.b16 %v156
  %v800 = vunpack.c.l.b16 %v157
  %v801 = vunpack.c.h.b16 %v157
  %v802 = vunpack.c.l.b16 %v158
  %v803 = vunpack.c.l.b16 %v159
  %v804 = vunpack.c.h.b16 %v159
  %v805 = vunpack.c.l.b16 %v160
  %v806 = vunpack.c.l.b16 %v161
  %v807 = vunpack.c.h.b16 %v161
  %v808 = vunpack.c.l.b16 %v162
  %v809 = vunpack.c.l.b16 %v163
  %v810 = vunpack.c.h.b16 %v163
  %v811 = vunpack.c.l.b16 %v164
  %v812 = vunpack.c.l.b16 %v165
  %v813 = vunpack.c.h.b16 %v165
  %v814 = vunpack.c.l.b16 %v166
  %v815 = vunpack.c.l.b16 %v167
  %v816 = vunpack.c.h.b16 %v167
  %v817 = vunpack.c.l.b16 %v168
  %v818 = vunpack.c.l.b16 %v169
  %v819 = vunpack.c.h.b16 %v169
  %v820 = vunpack.c.l.b16 %v170
  %v821 = vunpack.c.l.b16 %v171
  %v822 = vunpack.c.h.b16 %v171
  %v823 = vunpack.c.l.b16 %v172
  %v824 = vunpack.c.l.b16 %v173
  %v825 = vunpack.c.h.b16 %v173
  %v826 = vunpack.c.l.b16 %v174
  %v827 = vunpack.c.l.b16 %v175
  %v828 = vunpack.c.h.b16 %v175
  %v829 = vunpack.c.l.b16 %v176
  %v830 = vunpack.c.l.b16 %v177
  %v831 = vunpack.c.h.b16 %v177
  %v832 = vunpack.c.l.b16 %v178
  %v833 = vunpack.c.l.b16 %v179
  %v834 = vunpack.c.h.b16 %v179
  %v835 = vunpack.c.l.b16 %v180
  %v836 = vunpack.c.l.b16 %v181
  %v837 = vunpack.c.h.b16 %v181
  %v838 = vunpack.c.l.b16 %v182
  %v839 = vunpack.c.l.b16 %v183
  %v840 = vunpack.c.h.b16 %v183
  %v841 = vunpack.c.l.b16 %v184
  %v842 = vunpack.c.l.b16 %v185
  %v843 = vunpack.c.h.b16 %v185
  %v844 = vunpack.c.l.b16 %v186
  %v845 = vunpack.c.l.b16 %v187
  %v846 = vunpack.c.h.b16 %v187
  %v847 = vunpack.c.l.b16 %v188
  %v848 = vunpack.c.l.b16 %v189
  %v849 = vunpack.c.h.b16 %v189
  %v850 = vunpack.c.l.b16 %v190
  %v851 = vunpack.c.l.b16 %v191
  %v852 = vunpack.c.h.b16 %v191
  %v853 = vunpack.c.l.b16 %v192
  %v854 = vunpack.c.l.b16 %v193
  %v855 = vunpack.c.h.b16 %v193
  %v856 = vunpack.c.l.b16 %v194
  %v857 = vunpack.c.l.b16 %v195
  %v858 = vunpack.c.h.b16 %v195
  %v859 = vunpack.c.l.b16 %v196
  %v860 = vunpack.c.l.b16 %v197
  %v861 = vunpack.c.h.b16 %v197
  %v862 = vunpack.c.l.b16 %v198
  %v863 = vunpack.c.l.b16 %v199
  %v864 = vunpack.c.h.b16 %v199
  %v865 = vunpack.c.l.b16 %v200
  %v866 = vunpack.c.l.b16 %v201
  %v867 = vunpack.c.h.b16 %v201
  %v868 = vunpack.c.l.b16 %v202
  %v869 = vunpack.c.l.b16 %v203
  %v870 = vunpack.c.h.b16 %v203
  %v871 = vunpack.c.l.b16 %v204
  %v872 = vunpack.c.l.b16 %v205
  %v873 = vunpack.c.h.b16 %v205
  %v874 = vunpack.c.l.b16 %v206
  %v875 = vunpack.c.l.b16 %v207
  %v876 = vunpack.c.h.b16 %v207
  %v877 = vunpack.c.l.b16 %v208
  %v878 = vunpack.c.l.b16 %v209
  %v879 = vunpack.c.h.b16 %v209
  %v880 = vunpack.c.l.b16 %v210
  %v881 = vunpack.c.l.b16 %v211
  %v882 = vunpack.c.h.b16 %v211
  %v883 = vunpack.c.l.b16 %v212
  %v884 = vunpack.c.l.b16 %v213
  %v885 = vunpack.c.h.b16 %v213
  %v886 = vunpack.c.l.b16 %v214
  %v887 = vunpack.c.l.b16 %v215
  %v888 = vunpack.c.h.b16 %v215
  %v889 = vunpack.c.l.b16 %v216
  %v890 = vunpack.c.l.b16 %v217
  %v891 = vunpack.c.h.b16 %v217
  %v892 = vunpack.c.l.b16 %v218
  %v893 = vunpack.c.l.b16 %v219
  %v894 = vunpack.c.h.b16 %v219
  %v895 = vunpack.c.l.b16 %v220
  %v896 = vunpack.c.l.b16 %v221
  %v897 = vunpack.c.h.b16 %v221
  %v898 = vunpack.c.l.b16 %v222
  %v899 = vunpack.c.l.b16 %v223
  %v900 = vunpack.c.h.b16 %v223
  %v901 = vunpack.c.l.b16 %v224
  %v902 = vunpack.c.l.b16 %v225
  %v903 = vunpack.c.h.b16 %v225
  %v904 = vunpack.c.l.b16 %v226
  %v905 = vunpack.c.l.b16 %v227
  %v906 = vunpack.c.h.b16 %v227
  %v907 = vunpack.c.l.b16 %v228
  %v908 = vunpack.c.l.b16 %v229
  %v909 = vunpack.c.h.b16 %v229
  %v910 = vunpack.c.l.b16 %v230
  %v911 = vunpack.c.l.b16 %v231
  %v912 = vunpack.c.h.b16 %v231
  %v913 = vunpack.c.l.b16 %v232
  %v914 = vunpack.c.l.b16 %v233
  %v915 = vunpack.c.h.b16 %v233
  %v916 = vunpack.c.l.b16 %v234
  %v917 = vunpack.c.l.b16 %v235
  %v918 = vunpack.c.h.b16 %v235
  %v919 = vunpack.c.l.b16 %v236
  %v920 = vunpack.c.l.b16 %v237
  %v921 = vunpack.c.h.b16 %v237
  %v922 = vunpack.c.l.b16 %v238
  %v923 = vunpack.c.l.b16 %v239
  %v924 = vunpack.c.h.b16 %v239
  %v925 = vunpack.c.l.b16 %v240
  %v926 = vunpack.c.l.b16 %v241
  %v927 = vunpack.c.h.b16 %v241
  %v928 = vunpack.c.l.b16 %v242
  %v929 = vunpack.c.l.b16 %v243
  %v930 = vunpack.c.h.b16 %v243
  %v931 = vunpack.c.l.b16 %v244
  %v932 = vunpack.c.l.b16 %v245
  %v933 = vunpack.c.h.b16 %v245
  %v934 = vunpack.c.l.b16 %v246
  %v935 = vpack.c.b16 %v638, %v635
  %v936 = vpack.c.b16 %v639, %v636
  %v937 = vpack.c.b16 %v640, %v637
  %v938 = vpack.c.b16 %v644, %v641
  %v939 = vpack.c.b16 %v645, %v642
  %v940 = vpack.c.b16 %v646, %v643
  %v941 = vpack.c.b16 %v650, %v647
  %v942 = vpack.c.b16 %v651, %v648
  %v943 = vpack.c.b16 %v652, %v649
  %v944 = vpack.c.b16 %v656, %v653
  %v945 = vpack.c.b16 %v657, %v654
  %v946 = vpack.c.b16 %v658, %v655
  %v947 = vpack.c.b16 %v662, %v659
  %v948 = vpack.c.b16 %v663, %v660
  %v949 = vpack.c.b16 %v664, %v661
  %v950 = vpack.c.b16 %v668, %v665
  %v951 = vpack.c.b16 %v669, %v666
  %v952 = vpack.c.b16 %v670, %v667
  %v953 = vpack.c.b16 %v674, %v671
  %v954 = vpack.c.b16 %v675, %v672
  %v955 = vpack.c.b16 %v676, %v673
  %v956 = vpack.c.b16 %v680, %v677
  %v957 = vpack.c.b16 %v681, %v678
  %v958 = vpack.c.b16 %v682, %v679
  %v959 = vpack.c.b16 %v686, %v683
  %v960 = vpack.c.b16 %v687, %v684
  %v961 = vpack.c.b16 %v688, %v685
  %v962 = vpack.c.b16 %v692, %v689
  %v963 = vpack.c.b16 %v693, %v690
  %v964 = vpack.c.b16 %v694, %v691
  %v965 = vpack.c.b16 %v698, %v695
  %v966 = vpack.c.b16 %v699, %v696
  %v967 = vpack.c.b16 %v700, %v697
  %v968 = vpack.c.b16 %v704, %v701
  %v969 = vpack.c.b16 %v705, %v702
  %v970 = vpack.c.b16 %v706, %v703
  %v971 = vpack.c.b16 %v710, %v707
  %v972 = vpack.c.b16 %v711, %v708
  %v973 = vpack.c.b16 %v712, %v709
  %v974 = vpack.c.b16 %v716, %v713
  %v975 = vpack.c.b16 %v717, %v714
  %v976 = vpack.c.b16 %v718, %v715
  %v977 = vpack.c.b16 %v722, %v719
  %v978 = vpack.c.b16 %v723, %v720
  %v979 = vpack.c.b16 %v724, %v721
  %v980 = vpack.c.b16 %v728, %v725
  %v981 = vpack.c.b16 %v729, %v726
  %v982 = vpack.c.b16 %v730, %v727
  %v983 = vpack.c.b16 %v734, %v731
  %v984 = vpack.c.b16 %v735, %v732
  %v985 = vpack.c.b16 %v736, %v733
  %v986 = vpack.c.b16 %v740, %v737
  %v987 = vpack.c.b16 %v741, %v738
  %v988 = vpack.c.b16 %v742, %v739
  %v989 = vpack.c.b16 %v746, %v743
  %v990 = vpack.c.b16 %v747, %v744
  %v991 = vpack.c.b16 %v748, %v745
  %v992 = vpack.c.b16 %v752, %v749
  %v993 = vpack.c.b16 %v753, %v750
  %v994 = vpack.c.b16 %v754, %v751
  %v995 = vpack.c.b16 %v758, %v755
  %v996 = vpack.c.b16 %v759, %v756
  %v997 = vpack.c.b16 %v760, %v757
  %v998 = vpack.c.b16 %v764, %v761
  %v999 = vpack.c.b16 %v765, %v762
  %v1000 = vpack.c.b16 %v766, %v763
  %v1001 = vpack.c.b16 %v770, %v767
  %v1002 = vpack.c.b16 %v771, %v768
  %v1003 = vpack.c.b16 %v772, %v769
  %v1004 = vpack.c.b16 %v776, %v773
  %v1005 = vpack.c.b16 %v777, %v774
  %v1006 = vpack.c.b16 %v778, %v775
  %v1007 = vpack.c.b16 %v782, %v779
  %v1008 = vpack.c.b16 %v783, %v780
  %v1009 = vpack.c.b16 %v784, %v781
  %v1010 = vpack.c.b16 %v788, %v785
  %v1011 = vpack.c.b16 %v789, %v786
  %v1012 = vpack.c.b16 %v790, %v787
  %v1013 = vpack.c.b16 %v794, %v791
  %v1014 = vpack.c.b16 %v795, %v792
  %v1015 = vpack.c.b16 %v796, %v793
  %v1016 = vpack.c.b16 %v800, %v797
  %v1017 = vpack.c.b16 %v801, %v798
  %v1018 = vpack.c.b16 %v802, %v799
  %v1019 = vpack.c.b16 %v806, %v803
  %v1020 = vpack.c.b16 %v807, %v804
  %v1021 = vpack.c.b16 %v808, %v805
  %v1022 = vpack.c.b16 %v812, %v809
  %v1023 = vpack.c.b16 %v813, %v810
  %v1024 = vpack.c.b16 %v814, %v811
  %v1025 = vpack.c.b16 %v818, %v815
  %v1026 = vpack.c.b16 %v819, %v816
  %v1027 = vpack.c.b16 %v820, %v817
  %v1028 = vpack.c.b16 %v824, %v821
  %v1029 = vpack.c.b16 %v825, %v822
  %v1030 = vpack.c.b16 %v826, %v823
  %v1031 = vpack.c.b16 %v830, %v827
  %v1032 = vpack.c.b16 %v831, %v828
  %v1033 = vpack.c.b16 %v832, %v829
  %v1034 = vpack.c.b16 %v836, %v833
  %v1035 = vpack.c.b16 %v837, %v834
  %v1036 = vpack.c.b16 %v838, %v835
  %v1037 = vpack.c.b16 %v842, %v839
  %v1038 = vpack.c.b16 %v843, %v840
  %v1039 = vpack.c.b16 %v844, %v841
  %v1040 = vpack.c.b16 %v848, %v845
  %v1041 = vpack.c.b16 %v849, %v846
  %v1042 = vpack.c.b16 %v850, %v847
  %v1043 = vpack.c.b16 %v854, %v851
  %v1044 = vpack.c.b16 %v855, %v852
  %v1045 = vpack.c.b16 %v856, %v853
  %v1046 = vpack.c.b16 %v860, %v857
  %v1047 = vpack.c.b16 %v861, %v858
  %v1048 = vpack.c.b16 %v862, %v859
  %v1049 = vpack.c.b16 %v866, %v863
  %v1050 = vpack.c.b16 %v867, %v864
  %v1051 = vpack.c.b16 %v868, %v865
  %v1052 = vpack.c.b16 %v872, %v869
  %v1053 = vpack.c.b16 %v873, %v870
  %v1054 = vpack.c.b16 %v874, %v871
  %v1055 = vpack.c.b16 %v878, %v875
  %v1056 = vpack.c.b16 %v879, %v876
  %v1057 = vpack.c.b16 %v880, %v877
  %v1058 = vpack.c.b16 %v884, %v881
  %v1059 = vpack.c.b16 %v885, %v882
  %v1060 = vpack.c.b16 %v886, %v883
  %v1061 = vpack.c.b16 %v890, %v887
  %v1062 = vpack.c.b16 %v891, %v888
  %v1063 = vpack.c.b16 %v892, %v889
  %v1064 = vpack.c.b16 %v896, %v893
  %v1065 = vpack.c.b16 %v897, %v894
  %v1066 = vpack.c.b16 %v898, %v895
  %v1067 = vpack.c.b16 %v902, %v899
  %v1068 = vpack.c.b16 %v903, %v900
  %v1069 = vpack.c.b16 %v904, %v901
  %v1070 = vpack.c.b16 %v908, %v905
  %v1071 = vpack.c.b16 %v909, %v906
  %v1072 = vpack.c.b16 %v910, %v907
  %v1073 = vpack.c.b16 %v914, %v911
  %v1074 = vpack.c.b16 %v915, %v912
  %v1075 = vpack.c.b16 %v916, %v913
  %v1076 = vpack.c.b16 %v920, %v917
  %v1077 = vpack.c.b16 %v921, %v918
  %v1078 = vpack.c.b16 %v922, %v919
  %v1079 = vpack.c.b16 %v926, %v923
  %v1080 = vpack.c.b16 %v927, %v924
  %v1081 = vpack.c.b16 %v928, %v925
  %v1082 = vpack.c.b16 %v932, %v929
  %v1083 = vpack.c.b16 %v933, %v930
  %v1084 = vpack.c.b16 %v934, %v931
  %vm1235 = vcmask 261120
  %v1237 = vsel %vm1235, %v389, 0
  %v1240 = vsel %vm1235, %v396, 0
  %v1243 = vsel %vm1235, %v403, 0
  %v1246 = vsel %vm1235, %v410, 0
  %1248 = vmatprep.subr.bf16.mxu0 %v957
  %1249 = vmatpush1.bf16.msra.mxu0 %v956
  %1250 = vmatprep.subr.bf16.mxu0 %v954
  %1251 = vmatpush1.bf16.msra.mxu0 %v953
  %1252 = vmatprep.subr.bf16.mxu0 %v951
  %1253 = vmatpush1.bf16.msra.mxu0 %v950
  %1254 = vmatprep.subr.bf16.mxu0 %v948
  %1255 = vmatpush1.bf16.msra.mxu0 %v947
  %1256 = vmatprep.subr.bf16.mxu0 %v945
  %1257 = vmatpush1.bf16.msra.mxu0 %v944
  %1258 = vmatprep.subr.bf16.mxu0 %v942
  %1259 = vmatpush1.bf16.msra.mxu0 %v941
  %1260 = vmatprep.subr.bf16.mxu0 %v939
  %1261 = vmatpush1.bf16.msra.mxu0 %v938
  %1262 = vmatprep.subr.bf16.mxu0 %v936
  %1263 = vmatpush1.bf16.msra.mxu0 %v935
  %1264 = vmatprep.subr.bf16.mxu0 %v981
  %1265 = vmatpush2.bf16.msra.mxu0 %v980
  %1266 = vmatprep.subr.bf16.mxu0 %v978
  %1267 = vmatpush2.bf16.msra.mxu0 %v977
  %1268 = vmatprep.subr.bf16.mxu0 %v975
  %1269 = vmatpush2.bf16.msra.mxu0 %v974
  %1270 = vmatprep.subr.bf16.mxu0 %v972
  %1271 = vmatpush2.bf16.msra.mxu0 %v971
  %1272 = vmatprep.subr.bf16.mxu0 %v969
  %1273 = vmatpush2.bf16.msra.mxu0 %v968
  %1274 = vmatprep.subr.bf16.mxu0 %v966
  %1275 = vmatpush2.bf16.msra.mxu0 %v965
  %1276 = vmatprep.subr.bf16.mxu0 %v963
  %1277 = vmatpush2.bf16.msra.mxu0 %v962
  %1278 = vmatprep.subr.bf16.mxu0 %v960
  %1279 = vmatpush2.bf16.msra.mxu0 %v959
  %1280 = vmatprep.mubr.bf16.mxu0 %v384
  %1281 = vmatmul.mubr.bf16.gmra.mxu0 %v383
  %v1282 = vpop.f32.mrf.mxu0
  %v1283 = vadd.f32 %v258, %v1282
  %v1284 = vpop.f32.mrf.mxu0
  %v1285 = vadd.f32 %v258, %v1284
  %v1286 = vpop.f32.mrf.mxu0
  %v1287 = vadd.f32 %v263, %v1286
  %v1288 = vpop.f32.mrf.mxu0
  %v1289 = vadd.f32 %v263, %v1288
  %1290 = vmatprep.mubr.bf16.mxu0 %v391
  %1291 = vmatmul.mubr.bf16.gmra.mxu0 %v390
  %v1292 = vpop.f32.mrf.mxu0
  %v1293 = vadd.f32 %v268, %v1292
  %v1294 = vpop.f32.mrf.mxu0
  %v1295 = vadd.f32 %v268, %v1294
  %v1296 = vpop.f32.mrf.mxu0
  %v1297 = vadd.f32 %v273, %v1296
  %v1298 = vpop.f32.mrf.mxu0
  %v1299 = vadd.f32 %v273, %v1298
  %1300 = vmatprep.mubr.bf16.mxu0 %v398
  %1301 = vmatmul.mubr.bf16.gmra.mxu0 %v397
  %v1302 = vpop.f32.mrf.mxu0
  %v1303 = vadd.f32 %v278, %v1302
  %v1304 = vpop.f32.mrf.mxu0
  %v1305 = vadd.f32 %v278, %v1304
  %v1306 = vpop.f32.mrf.mxu0
  %v1307 = vadd.f32 %v283, %v1306
  %v1308 = vpop.f32.mrf.mxu0
  %v1309 = vadd.f32 %v283, %v1308
  %1310 = vmatprep.mubr.bf16.mxu0 %v405
  %1311 = vmatmul.mubr.bf16.gmra.mxu0 %v404
  %v1312 = vpop.f32.mrf.mxu0
  %v1313 = vadd.f32 %v288, %v1312
  %v1314 = vpop.f32.mrf.mxu0
  %v1315 = vadd.f32 %v288, %v1314
  %v1316 = vpop.f32.mrf.mxu0
  %v1317 = vadd.f32 %v293, %v1316
  %v1318 = vpop.f32.mrf.mxu0
  %v1319 = vadd.f32 %v293, %v1318
  %1320 = vdwg.mxu0
  %1321 = vmatprep.subr.bf16.mxu0 %v1005
  %1322 = vmatpush1.bf16.msra.mxu0 %v1004
  %1323 = vmatprep.subr.bf16.mxu0 %v1002
  %1324 = vmatpush1.bf16.msra.mxu0 %v1001
  %1325 = vmatprep.subr.bf16.mxu0 %v999
  %1326 = vmatpush1.bf16.msra.mxu0 %v998
  %1327 = vmatprep.subr.bf16.mxu0 %v996
  %1328 = vmatpush1.bf16.msra.mxu0 %v995
  %1329 = vmatprep.subr.bf16.mxu0 %v993
  %1330 = vmatpush1.bf16.msra.mxu0 %v992
  %1331 = vmatprep.subr.bf16.mxu0 %v990
  %1332 = vmatpush1.bf16.msra.mxu0 %v989
  %1333 = vmatprep.subr.bf16.mxu0 %v987
  %1334 = vmatpush1.bf16.msra.mxu0 %v986
  %1335 = vmatprep.subr.bf16.mxu0 %v984
  %1336 = vmatpush1.bf16.msra.mxu0 %v983
  %1337 = vmatprep.subr.bf16.mxu0 %v1029
  %1338 = vmatpush2.bf16.msra.mxu0 %v1028
  %1339 = vmatprep.subr.bf16.mxu0 %v1026
  %1340 = vmatpush2.bf16.msra.mxu0 %v1025
  %1341 = vmatprep.subr.bf16.mxu0 %v1023
  %1342 = vmatpush2.bf16.msra.mxu0 %v1022
  %1343 = vmatprep.subr.bf16.mxu0 %v1020
  %1344 = vmatpush2.bf16.msra.mxu0 %v1019
  %1345 = vmatprep.subr.bf16.mxu0 %v1017
  %1346 = vmatpush2.bf16.msra.mxu0 %v1016
  %1347 = vmatprep.subr.bf16.mxu0 %v1014
  %1348 = vmatpush2.bf16.msra.mxu0 %v1013
  %1349 = vmatprep.subr.bf16.mxu0 %v1011
  %1350 = vmatpush2.bf16.msra.mxu0 %v1010
  %1351 = vmatprep.subr.bf16.mxu0 %v1008
  %1352 = vmatpush2.bf16.msra.mxu0 %v1007
  %1353 = vmatprep.mubr.bf16.mxu0 %v386
  %1354 = vmatmul.mubr.bf16.gmra.mxu0 %v385
  %v1355 = vpop.f32.mrf.mxu0
  %v1356 = vadd.f32 %v1283, %v1355
  %v1357 = vpop.f32.mrf.mxu0
  %v1358 = vadd.f32 %v1285, %v1357
  %v1359 = vpop.f32.mrf.mxu0
  %v1360 = vadd.f32 %v1287, %v1359
  %v1361 = vpop.f32.mrf.mxu0
  %v1362 = vadd.f32 %v1289, %v1361
  %1363 = vmatprep.mubr.bf16.mxu0 %v393
  %1364 = vmatmul.mubr.bf16.gmra.mxu0 %v392
  %v1365 = vpop.f32.mrf.mxu0
  %v1366 = vadd.f32 %v1293, %v1365
  %v1367 = vpop.f32.mrf.mxu0
  %v1368 = vadd.f32 %v1295, %v1367
  %v1369 = vpop.f32.mrf.mxu0
  %v1370 = vadd.f32 %v1297, %v1369
  %v1371 = vpop.f32.mrf.mxu0
  %v1372 = vadd.f32 %v1299, %v1371
  %1373 = vmatprep.mubr.bf16.mxu0 %v400
  %1374 = vmatmul.mubr.bf16.gmra.mxu0 %v399
  %v1375 = vpop.f32.mrf.mxu0
  %v1376 = vadd.f32 %v1303, %v1375
  %v1377 = vpop.f32.mrf.mxu0
  %v1378 = vadd.f32 %v1305, %v1377
  %v1379 = vpop.f32.mrf.mxu0
  %v1380 = vadd.f32 %v1307, %v1379
  %v1381 = vpop.f32.mrf.mxu0
  %v1382 = vadd.f32 %v1309, %v1381
  %1383 = vmatprep.mubr.bf16.mxu0 %v407
  %1384 = vmatmul.mubr.bf16.gmra.mxu0 %v406
  %v1385 = vpop.f32.mrf.mxu0
  %v1386 = vadd.f32 %v1313, %v1385
  %v1387 = vpop.f32.mrf.mxu0
  %v1388 = vadd.f32 %v1315, %v1387
  %v1389 = vpop.f32.mrf.mxu0
  %v1390 = vadd.f32 %v1317, %v1389
  %v1391 = vpop.f32.mrf.mxu0
  %v1392 = vadd.f32 %v1319, %v1391
  %1393 = vdwg.mxu0
  %1394 = vmatprep.subr.bf16.mxu0 %v1053
  %1395 = vmatpush1.bf16.msra.mxu0 %v1052
  %1396 = vmatprep.subr.bf16.mxu0 %v1050
  %1397 = vmatpush1.bf16.msra.mxu0 %v1049
  %1398 = vmatprep.subr.bf16.mxu0 %v1047
  %1399 = vmatpush1.bf16.msra.mxu0 %v1046
  %1400 = vmatprep.subr.bf16.mxu0 %v1044
  %1401 = vmatpush1.bf16.msra.mxu0 %v1043
  %1402 = vmatprep.subr.bf16.mxu0 %v1041
  %1403 = vmatpush1.bf16.msra.mxu0 %v1040
  %1404 = vmatprep.subr.bf16.mxu0 %v1038
  %1405 = vmatpush1.bf16.msra.mxu0 %v1037
  %1406 = vmatprep.subr.bf16.mxu0 %v1035
  %1407 = vmatpush1.bf16.msra.mxu0 %v1034
  %1408 = vmatprep.subr.bf16.mxu0 %v1032
  %1409 = vmatpush1.bf16.msra.mxu0 %v1031
  %1410 = vmatprep.subr.bf16.mxu0 %v1077
  %1411 = vmatpush2.bf16.msra.mxu0 %v1076
  %1412 = vmatprep.subr.bf16.mxu0 %v1074
  %1413 = vmatpush2.bf16.msra.mxu0 %v1073
  %1414 = vmatprep.subr.bf16.mxu0 %v1071
  %1415 = vmatpush2.bf16.msra.mxu0 %v1070
  %1416 = vmatprep.subr.bf16.mxu0 %v1068
  %1417 = vmatpush2.bf16.msra.mxu0 %v1067
  %1418 = vmatprep.subr.bf16.mxu0 %v1065
  %1419 = vmatpush2.bf16.msra.mxu0 %v1064
  %1420 = vmatprep.subr.bf16.mxu0 %v1062
  %1421 = vmatpush2.bf16.msra.mxu0 %v1061
  %1422 = vmatprep.subr.bf16.mxu0 %v1059
  %1423 = vmatpush2.bf16.msra.mxu0 %v1058
  %1424 = vmatprep.subr.bf16.mxu0 %v1056
  %1425 = vmatpush2.bf16.msra.mxu0 %v1055
  %1426 = vmatprep.mubr.bf16.mxu0 %v388
  %1427 = vmatmul.mubr.bf16.gmra.mxu0 %v387
  %v1428 = vpop.f32.mrf.mxu0
  %v1429 = vadd.f32 %v1356, %v1428
  %v1430 = vpop.f32.mrf.mxu0
  %v1431 = vadd.f32 %v1358, %v1430
  %v1432 = vpop.f32.mrf.mxu0
  %v1433 = vadd.f32 %v1360, %v1432
  %v1434 = vpop.f32.mrf.mxu0
  %v1435 = vadd.f32 %v1362, %v1434
  %1436 = vmatprep.mubr.bf16.mxu0 %v395
  %1437 = vmatmul.mubr.bf16.gmra.mxu0 %v394
  %v1438 = vpop.f32.mrf.mxu0
  %v1439 = vadd.f32 %v1366, %v1438
  %v1440 = vpop.f32.mrf.mxu0
  %v1441 = vadd.f32 %v1368, %v1440
  %v1442 = vpop.f32.mrf.mxu0
  %v1443 = vadd.f32 %v1370, %v1442
  %v1444 = vpop.f32.mrf.mxu0
  %v1445 = vadd.f32 %v1372, %v1444
  %1446 = vmatprep.mubr.bf16.mxu0 %v402
  %1447 = vmatmul.mubr.bf16.gmra.mxu0 %v401
  %v1448 = vpop.f32.mrf.mxu0
  %v1449 = vadd.f32 %v1376, %v1448
  %v1450 = vpop.f32.mrf.mxu0
  %v1451 = vadd.f32 %v1378, %v1450
  %v1452 = vpop.f32.mrf.mxu0
  %v1453 = vadd.f32 %v1380, %v1452
  %v1454 = vpop.f32.mrf.mxu0
  %v1455 = vadd.f32 %v1382, %v1454
  %1456 = vmatprep.mubr.bf16.mxu0 %v409
  %1457 = vmatmul.mubr.bf16.gmra.mxu0 %v408
  %v1458 = vpop.f32.mrf.mxu0
  %v1459 = vadd.f32 %v1386, %v1458
  %v1460 = vpop.f32.mrf.mxu0
  %v1461 = vadd.f32 %v1388, %v1460
  %v1462 = vpop.f32.mrf.mxu0
  %v1463 = vadd.f32 %v1390, %v1462
  %v1464 = vpop.f32.mrf.mxu0
  %v1465 = vadd.f32 %v1392, %v1464
  %1466 = vdwg.mxu0
  %1467 = vmatprep.subr.bf16.mxu0 0
  %1468 = vmatpush1.bf16.msra.mxu0 0
  %1469 = vmatprep.subr.bf16.mxu0 0
  %1470 = vmatpush1.bf16.msra.mxu0 0
  %1471 = vmatprep.subr.bf16.mxu0 0
  %1472 = vmatpush1.bf16.msra.mxu0 0
  %1473 = vmatprep.subr.bf16.mxu0 0
  %1474 = vmatpush1.bf16.msra.mxu0 0
  %1475 = vmatprep.subr.bf16.mxu0 0
  %1476 = vmatpush1.bf16.msra.mxu0 0
  %1477 = vmatprep.subr.bf16.mxu0 0
  %1478 = vmatpush1.bf16.msra.mxu0 0
  %1479 = vmatprep.subr.bf16.mxu0 %v1083
  %1480 = vmatpush1.bf16.msra.mxu0 %v1082
  %1481 = vmatprep.subr.bf16.mxu0 %v1080
  %1482 = vmatpush1.bf16.msra.mxu0 %v1079
  %1483 = vmatprep.subr.bf16.mxu0 0
  %1484 = vmatpush2.bf16.msra.mxu0 0
  %1485 = vmatprep.subr.bf16.mxu0 0
  %1486 = vmatpush2.bf16.msra.mxu0 0
  %1487 = vmatprep.subr.bf16.mxu0 0
  %1488 = vmatpush2.bf16.msra.mxu0 0
  %1489 = vmatprep.subr.bf16.mxu0 0
  %1490 = vmatpush2.bf16.msra.mxu0 0
  %1491 = vmatprep.subr.bf16.mxu0 0
  %1492 = vmatpush2.bf16.msra.mxu0 0
  %1493 = vmatprep.subr.bf16.mxu0 0
  %1494 = vmatpush2.bf16.msra.mxu0 0
  %1495 = vmatprep.subr.bf16.mxu0 0
  %1496 = vmatpush2.bf16.msra.mxu0 0
  %1497 = vmatprep.subr.bf16.mxu0 0
  %1498 = vmatpush2.bf16.msra.mxu0 0
  %1499 = vmatprep.mubr.bf16.mxu0 0
  %1500 = vmatmul.mubr.bf16.gmra.mxu0 %v1237
  %v1501 = vpop.f32.mrf.mxu0
  %v1502 = vadd.f32 %v1429, %v1501
  %v1503 = vpop.f32.mrf.mxu0
  %v1504 = vadd.f32 %v1431, %v1503
  %v1505 = vpop.f32.mrf.mxu0
  %v1506 = vadd.f32 %v1433, %v1505
  %v1507 = vpop.f32.mrf.mxu0
  %v1508 = vadd.f32 %v1435, %v1507
  %1509 = vmatprep.mubr.bf16.mxu0 0
  %1510 = vmatmul.mubr.bf16.gmra.mxu0 %v1240
  %v1511 = vpop.f32.mrf.mxu0
  %v1512 = vadd.f32 %v1439, %v1511
  %v1513 = vpop.f32.mrf.mxu0
  %v1514 = vadd.f32 %v1441, %v1513
  %v1515 = vpop.f32.mrf.mxu0
  %v1516 = vadd.f32 %v1443, %v1515
  %v1517 = vpop.f32.mrf.mxu0
  %v1518 = vadd.f32 %v1445, %v1517
  %1519 = vmatprep.mubr.bf16.mxu0 0
  %1520 = vmatmul.mubr.bf16.gmra.mxu0 %v1243
  %v1521 = vpop.f32.mrf.mxu0
  %v1522 = vadd.f32 %v1449, %v1521
  %v1523 = vpop.f32.mrf.mxu0
  %v1524 = vadd.f32 %v1451, %v1523
  %v1525 = vpop.f32.mrf.mxu0
  %v1526 = vadd.f32 %v1453, %v1525
  %v1527 = vpop.f32.mrf.mxu0
  %v1528 = vadd.f32 %v1455, %v1527
  %1529 = vmatprep.mubr.bf16.mxu0 0
  %1530 = vmatmul.mubr.bf16.gmra.mxu0 %v1246
  %v1531 = vpop.f32.mrf.mxu0
  %v1532 = vadd.f32 %v1459, %v1531
  %v1533 = vpop.f32.mrf.mxu0
  %v1534 = vadd.f32 %v1461, %v1533
  %v1535 = vpop.f32.mrf.mxu0
  %v1536 = vadd.f32 %v1463, %v1535
  %v1537 = vpop.f32.mrf.mxu0
  %v1538 = vadd.f32 %v1465, %v1537
  %1539 = vdwg.mxu0
  %1540 = vmatprep.subr.bf16.mxu0 0
  %1541 = vmatpush1.bf16.msra.mxu0 %v958
  %1542 = vmatprep.subr.bf16.mxu0 0
  %1543 = vmatpush1.bf16.msra.mxu0 %v955
  %1544 = vmatprep.subr.bf16.mxu0 0
  %1545 = vmatpush1.bf16.msra.mxu0 %v952
  %1546 = vmatprep.subr.bf16.mxu0 0
  %1547 = vmatpush1.bf16.msra.mxu0 %v949
  %1548 = vmatprep.subr.bf16.mxu0 0
  %1549 = vmatpush1.bf16.msra.mxu0 %v946
  %1550 = vmatprep.subr.bf16.mxu0 0
  %1551 = vmatpush1.bf16.msra.mxu0 %v943
  %1552 = vmatprep.subr.bf16.mxu0 0
  %1553 = vmatpush1.bf16.msra.mxu0 %v940
  %1554 = vmatprep.subr.bf16.mxu0 0
  %1555 = vmatpush1.bf16.msra.mxu0 %v937
  %1556 = vmatprep.subr.bf16.mxu0 0
  %1557 = vmatpush2.bf16.msra.mxu0 %v982
  %1558 = vmatprep.subr.bf16.mxu0 0
  %1559 = vmatpush2.bf16.msra.mxu0 %v979
  %1560 = vmatprep.subr.bf16.mxu0 0
  %1561 = vmatpush2.bf16.msra.mxu0 %v976
  %1562 = vmatprep.subr.bf16.mxu0 0
  %1563 = vmatpush2.bf16.msra.mxu0 %v973
  %1564 = vmatprep.subr.bf16.mxu0 0
  %1565 = vmatpush2.bf16.msra.mxu0 %v970
  %1566 = vmatprep.subr.bf16.mxu0 0
  %1567 = vmatpush2.bf16.msra.mxu0 %v967
  %1568 = vmatprep.subr.bf16.mxu0 0
  %1569 = vmatpush2.bf16.msra.mxu0 %v964
  %1570 = vmatprep.subr.bf16.mxu0 0
  %1571 = vmatpush2.bf16.msra.mxu0 %v961
  %1572 = vmatprep.mubr.bf16.mxu0 %v384
  %1573 = vmatmul.mubr.bf16.gmra.mxu0 %v383
  %v1574 = vpop.f32.mrf.mxu0
  %v1575 = vadd.f32 %v258, %v1574
  %v1576 = vpop.f32.mrf.mxu0
  %v1577 = vpop.f32.mrf.mxu0
  %v1578 = vadd.f32 %v263, %v1577
  %v1579 = vpop.f32.mrf.mxu0
  %1580 = vmatprep.mubr.bf16.mxu0 %v391
  %1581 = vmatmul.mubr.bf16.gmra.mxu0 %v390
  %v1582 = vpop.f32.mrf.mxu0
  %v1583 = vadd.f32 %v268, %v1582
  %v1584 = vpop.f32.mrf.mxu0
  %v1585 = vpop.f32.mrf.mxu0
  %v1586 = vadd.f32 %v273, %v1585
  %v1587 = vpop.f32.mrf.mxu0
  %1588 = vmatprep.mubr.bf16.mxu0 %v398
  %1589 = vmatmul.mubr.bf16.gmra.mxu0 %v397
  %v1590 = vpop.f32.mrf.mxu0
  %v1591 = vadd.f32 %v278, %v1590
  %v1592 = vpop.f32.mrf.mxu0
  %v1593 = vpop.f32.mrf.mxu0
  %v1594 = vadd.f32 %v283, %v1593
  %v1595 = vpop.f32.mrf.mxu0
  %1596 = vmatprep.mubr.bf16.mxu0 %v405
  %1597 = vmatmul.mubr.bf16.gmra.mxu0 %v404
  %v1598 = vpop.f32.mrf.mxu0
  %v1599 = vadd.f32 %v288, %v1598
  %v1600 = vpop.f32.mrf.mxu0
  %v1601 = vpop.f32.mrf.mxu0
  %v1602 = vadd.f32 %v293, %v1601
  %v1603 = vpop.f32.mrf.mxu0
  %1604 = vdwg.mxu0
  %1605 = vmatprep.subr.bf16.mxu0 0
  %1606 = vmatpush1.bf16.msra.mxu0 %v1006
  %1607 = vmatprep.subr.bf16.mxu0 0
  %1608 = vmatpush1.bf16.msra.mxu0 %v1003
  %1609 = vmatprep.subr.bf16.mxu0 0
  %1610 = vmatpush1.bf16.msra.mxu0 %v1000
  %1611 = vmatprep.subr.bf16.mxu0 0
  %1612 = vmatpush1.bf16.msra.mxu0 %v997
  %1613 = vmatprep.subr.bf16.mxu0 0
  %1614 = vmatpush1.bf16.msra.mxu0 %v994
  %1615 = vmatprep.subr.bf16.mxu0 0
  %1616 = vmatpush1.bf16.msra.mxu0 %v991
  %1617 = vmatprep.subr.bf16.mxu0 0
  %1618 = vmatpush1.bf16.msra.mxu0 %v988
  %1619 = vmatprep.subr.bf16.mxu0 0
  %1620 = vmatpush1.bf16.msra.mxu0 %v985
  %1621 = vmatprep.subr.bf16.mxu0 0
  %1622 = vmatpush2.bf16.msra.mxu0 %v1030
  %1623 = vmatprep.subr.bf16.mxu0 0
  %1624 = vmatpush2.bf16.msra.mxu0 %v1027
  %1625 = vmatprep.subr.bf16.mxu0 0
  %1626 = vmatpush2.bf16.msra.mxu0 %v1024
  %1627 = vmatprep.subr.bf16.mxu0 0
  %1628 = vmatpush2.bf16.msra.mxu0 %v1021
  %1629 = vmatprep.subr.bf16.mxu0 0
  %1630 = vmatpush2.bf16.msra.mxu0 %v1018
  %1631 = vmatprep.subr.bf16.mxu0 0
  %1632 = vmatpush2.bf16.msra.mxu0 %v1015
  %1633 = vmatprep.subr.bf16.mxu0 0
  %1634 = vmatpush2.bf16.msra.mxu0 %v1012
  %1635 = vmatprep.subr.bf16.mxu0 0
  %1636 = vmatpush2.bf16.msra.mxu0 %v1009
  %1637 = vmatprep.mubr.bf16.mxu0 %v386
  %1638 = vmatmul.mubr.bf16.gmra.mxu0 %v385
  %v1639 = vpop.f32.mrf.mxu0
  %v1640 = vadd.f32 %v1575, %v1639
  %v1641 = vpop.f32.mrf.mxu0
  %v1642 = vpop.f32.mrf.mxu0
  %v1643 = vadd.f32 %v1578, %v1642
  %v1644 = vpop.f32.mrf.mxu0
  %1645 = vmatprep.mubr.bf16.mxu0 %v393
  %1646 = vmatmul.mubr.bf16.gmra.mxu0 %v392
  %v1647 = vpop.f32.mrf.mxu0
  %v1648 = vadd.f32 %v1583, %v1647
  %v1649 = vpop.f32.mrf.mxu0
  %v1650 = vpop.f32.mrf.mxu0
  %v1651 = vadd.f32 %v1586, %v1650
  %v1652 = vpop.f32.mrf.mxu0
  %1653 = vmatprep.mubr.bf16.mxu0 %v400
  %1654 = vmatmul.mubr.bf16.gmra.mxu0 %v399
  %v1655 = vpop.f32.mrf.mxu0
  %v1656 = vadd.f32 %v1591, %v1655
  %v1657 = vpop.f32.mrf.mxu0
  %v1658 = vpop.f32.mrf.mxu0
  %v1659 = vadd.f32 %v1594, %v1658
  %v1660 = vpop.f32.mrf.mxu0
  %1661 = vmatprep.mubr.bf16.mxu0 %v407
  %1662 = vmatmul.mubr.bf16.gmra.mxu0 %v406
  %v1663 = vpop.f32.mrf.mxu0
  %v1664 = vadd.f32 %v1599, %v1663
  %v1665 = vpop.f32.mrf.mxu0
  %v1666 = vpop.f32.mrf.mxu0
  %v1667 = vadd.f32 %v1602, %v1666
  %v1668 = vpop.f32.mrf.mxu0
  %1669 = vdwg.mxu0
  %1670 = vmatprep.subr.bf16.mxu0 0
  %1671 = vmatpush1.bf16.msra.mxu0 %v1054
  %1672 = vmatprep.subr.bf16.mxu0 0
  %1673 = vmatpush1.bf16.msra.mxu0 %v1051
  %1674 = vmatprep.subr.bf16.mxu0 0
  %1675 = vmatpush1.bf16.msra.mxu0 %v1048
  %1676 = vmatprep.subr.bf16.mxu0 0
  %1677 = vmatpush1.bf16.msra.mxu0 %v1045
  %1678 = vmatprep.subr.bf16.mxu0 0
  %1679 = vmatpush1.bf16.msra.mxu0 %v1042
  %1680 = vmatprep.subr.bf16.mxu0 0
  %1681 = vmatpush1.bf16.msra.mxu0 %v1039
  %1682 = vmatprep.subr.bf16.mxu0 0
  %1683 = vmatpush1.bf16.msra.mxu0 %v1036
  %1684 = vmatprep.subr.bf16.mxu0 0
  %1685 = vmatpush1.bf16.msra.mxu0 %v1033
  %1686 = vmatprep.subr.bf16.mxu0 0
  %1687 = vmatpush2.bf16.msra.mxu0 %v1078
  %1688 = vmatprep.subr.bf16.mxu0 0
  %1689 = vmatpush2.bf16.msra.mxu0 %v1075
  %1690 = vmatprep.subr.bf16.mxu0 0
  %1691 = vmatpush2.bf16.msra.mxu0 %v1072
  %1692 = vmatprep.subr.bf16.mxu0 0
  %1693 = vmatpush2.bf16.msra.mxu0 %v1069
  %1694 = vmatprep.subr.bf16.mxu0 0
  %1695 = vmatpush2.bf16.msra.mxu0 %v1066
  %1696 = vmatprep.subr.bf16.mxu0 0
  %1697 = vmatpush2.bf16.msra.mxu0 %v1063
  %1698 = vmatprep.subr.bf16.mxu0 0
  %1699 = vmatpush2.bf16.msra.mxu0 %v1060
  %1700 = vmatprep.subr.bf16.mxu0 0
  %1701 = vmatpush2.bf16.msra.mxu0 %v1057
  %1702 = vmatprep.mubr.bf16.mxu0 %v388
  %1703 = vmatmul.mubr.bf16.gmra.mxu0 %v387
  %v1704 = vpop.f32.mrf.mxu0
  %v1705 = vadd.f32 %v1640, %v1704
  %v1706 = vpop.f32.mrf.mxu0
  %v1707 = vpop.f32.mrf.mxu0
  %v1708 = vadd.f32 %v1643, %v1707
  %v1709 = vpop.f32.mrf.mxu0
  %1710 = vmatprep.mubr.bf16.mxu0 %v395
  %1711 = vmatmul.mubr.bf16.gmra.mxu0 %v394
  %v1712 = vpop.f32.mrf.mxu0
  %v1713 = vadd.f32 %v1648, %v1712
  %v1714 = vpop.f32.mrf.mxu0
  %v1715 = vpop.f32.mrf.mxu0
  %v1716 = vadd.f32 %v1651, %v1715
  %v1717 = vpop.f32.mrf.mxu0
  %1718 = vmatprep.mubr.bf16.mxu0 %v402
  %1719 = vmatmul.mubr.bf16.gmra.mxu0 %v401
  %v1720 = vpop.f32.mrf.mxu0
  %v1721 = vadd.f32 %v1656, %v1720
  %v1722 = vpop.f32.mrf.mxu0
  %v1723 = vpop.f32.mrf.mxu0
  %v1724 = vadd.f32 %v1659, %v1723
  %v1725 = vpop.f32.mrf.mxu0
  %1726 = vmatprep.mubr.bf16.mxu0 %v409
  %1727 = vmatmul.mubr.bf16.gmra.mxu0 %v408
  %v1728 = vpop.f32.mrf.mxu0
  %v1729 = vadd.f32 %v1664, %v1728
  %v1730 = vpop.f32.mrf.mxu0
  %v1731 = vpop.f32.mrf.mxu0
  %v1732 = vadd.f32 %v1667, %v1731
  %v1733 = vpop.f32.mrf.mxu0
  %1734 = vdwg.mxu0
  %1735 = vmatprep.subr.bf16.mxu0 0
  %1736 = vmatpush1.bf16.msra.mxu0 0
  %1737 = vmatprep.subr.bf16.mxu0 0
  %1738 = vmatpush1.bf16.msra.mxu0 0
  %1739 = vmatprep.subr.bf16.mxu0 0
  %1740 = vmatpush1.bf16.msra.mxu0 0
  %1741 = vmatprep.subr.bf16.mxu0 0
  %1742 = vmatpush1.bf16.msra.mxu0 0
  %1743 = vmatprep.subr.bf16.mxu0 0
  %1744 = vmatpush1.bf16.msra.mxu0 0
  %1745 = vmatprep.subr.bf16.mxu0 0
  %1746 = vmatpush1.bf16.msra.mxu0 0
  %1747 = vmatprep.subr.bf16.mxu0 0
  %1748 = vmatpush1.bf16.msra.mxu0 %v1084
  %1749 = vmatprep.subr.bf16.mxu0 0
  %1750 = vmatpush1.bf16.msra.mxu0 %v1081
  %1751 = vmatprep.subr.bf16.mxu0 0
  %1752 = vmatpush2.bf16.msra.mxu0 0
  %1753 = vmatprep.subr.bf16.mxu0 0
  %1754 = vmatpush2.bf16.msra.mxu0 0
  %1755 = vmatprep.subr.bf16.mxu0 0
  %1756 = vmatpush2.bf16.msra.mxu0 0
  %1757 = vmatprep.subr.bf16.mxu0 0
  %1758 = vmatpush2.bf16.msra.mxu0 0
  %1759 = vmatprep.subr.bf16.mxu0 0
  %1760 = vmatpush2.bf16.msra.mxu0 0
  %1761 = vmatprep.subr.bf16.mxu0 0
  %1762 = vmatpush2.bf16.msra.mxu0 0
  %1763 = vmatprep.subr.bf16.mxu0 0
  %1764 = vmatpush2.bf16.msra.mxu0 0
  %1765 = vmatprep.subr.bf16.mxu0 0
  %1766 = vmatpush2.bf16.msra.mxu0 0
  %1767 = vmatprep.mubr.bf16.mxu0 0
  %1768 = vmatmul.mubr.bf16.gmra.mxu0 %v1237
  %v1769 = vpop.f32.mrf.mxu0
  %v1770 = vadd.f32 %v1705, %v1769
  %v1771 = vpop.f32.mrf.mxu0
  %v1772 = vpop.f32.mrf.mxu0
  %v1773 = vadd.f32 %v1708, %v1772
  %v1774 = vpop.f32.mrf.mxu0
  %1775 = vmatprep.mubr.bf16.mxu0 0
  %1776 = vmatmul.mubr.bf16.gmra.mxu0 %v1240
  %v1777 = vpop.f32.mrf.mxu0
  %v1778 = vadd.f32 %v1713, %v1777
  %v1779 = vpop.f32.mrf.mxu0
  %v1780 = vpop.f32.mrf.mxu0
  %v1781 = vadd.f32 %v1716, %v1780
  %v1782 = vpop.f32.mrf.mxu0
  %1783 = vmatprep.mubr.bf16.mxu0 0
  %1784 = vmatmul.mubr.bf16.gmra.mxu0 %v1243
  %v1785 = vpop.f32.mrf.mxu0
  %v1786 = vadd.f32 %v1721, %v1785
  %v1787 = vpop.f32.mrf.mxu0
  %v1788 = vpop.f32.mrf.mxu0
  %v1789 = vadd.f32 %v1724, %v1788
  %v1790 = vpop.f32.mrf.mxu0
  %1791 = vmatprep.mubr.bf16.mxu0 0
  %1792 = vmatmul.mubr.bf16.gmra.mxu0 %v1246
  %v1793 = vpop.f32.mrf.mxu0
  %v1794 = vadd.f32 %v1729, %v1793
  %v1795 = vpop.f32.mrf.mxu0
  %v1796 = vpop.f32.mrf.mxu0
  %v1797 = vadd.f32 %v1732, %v1796
  %v1798 = vpop.f32.mrf.mxu0
  %1799 = vdwg.mxu0
  %vm1800 = vcmp.ge.f32.partialorder %v1502, 0.0
  %vm1801 = vcmp.ge.f32.partialorder %v1504, 0.0
  %vm1802 = vcmp.ge.f32.partialorder %v1770, 0.0
  %vm1803 = vcmp.ge.f32.partialorder %v1506, 0.0
  %vm1804 = vcmp.ge.f32.partialorder %v1508, 0.0
  %vm1805 = vcmp.ge.f32.partialorder %v1773, 0.0
  %vm1806 = vcmp.ge.f32.partialorder %v1512, 0.0
  %vm1807 = vcmp.ge.f32.partialorder %v1514, 0.0
  %vm1808 = vcmp.ge.f32.partialorder %v1778, 0.0
  %vm1809 = vcmp.ge.f32.partialorder %v1516, 0.0
  %vm1810 = vcmp.ge.f32.partialorder %v1518, 0.0
  %vm1811 = vcmp.ge.f32.partialorder %v1781, 0.0
  %vm1812 = vcmp.ge.f32.partialorder %v1522, 0.0
  %vm1813 = vcmp.ge.f32.partialorder %v1524, 0.0
  %vm1814 = vcmp.ge.f32.partialorder %v1786, 0.0
  %vm1815 = vcmp.ge.f32.partialorder %v1526, 0.0
  %vm1816 = vcmp.ge.f32.partialorder %v1528, 0.0
  %vm1817 = vcmp.ge.f32.partialorder %v1789, 0.0
  %vm1818 = vcmp.ge.f32.partialorder %v1532, 0.0
  %vm1819 = vcmp.ge.f32.partialorder %v1534, 0.0
  %vm1820 = vcmp.ge.f32.partialorder %v1794, 0.0
  %vm1821 = vcmp.ge.f32.partialorder %v1536, 0.0
  %vm1822 = vcmp.ge.f32.partialorder %v1538, 0.0
  %vm1823 = vcmp.ge.f32.partialorder %v1797, 0.0
  %v1824 = vmul.f32 %v1502, 0.01
  %v1825 = vmul.f32 %v1504, 0.01
  %v1826 = vmul.f32 %v1770, 0.01
  %v1827 = vmul.f32 %v1506, 0.01
  %v1828 = vmul.f32 %v1508, 0.01
  %v1829 = vmul.f32 %v1773, 0.01
  %v1830 = vmul.f32 %v1512, 0.01
  %v1831 = vmul.f32 %v1514, 0.01
  %v1832 = vmul.f32 %v1778, 0.01
  %v1833 = vmul.f32 %v1516, 0.01
  %v1834 = vmul.f32 %v1518, 0.01
  %v1835 = vmul.f32 %v1781, 0.01
  %v1836 = vmul.f32 %v1522, 0.01
  %v1837 = vmul.f32 %v1524, 0.01
  %v1838 = vmul.f32 %v1786, 0.01
  %v1839 = vmul.f32 %v1526, 0.01
  %v1840 = vmul.f32 %v1528, 0.01
  %v1841 = vmul.f32 %v1789, 0.01
  %v1842 = vmul.f32 %v1532, 0.01
  %v1843 = vmul.f32 %v1534, 0.01
  %v1844 = vmul.f32 %v1794, 0.01
  %v1845 = vmul.f32 %v1536, 0.01
  %v1846 = vmul.f32 %v1538, 0.01
  %v1847 = vmul.f32 %v1797, 0.01
  %v1848 = vsel %vm1800, %v1502, %v1824
  %v1849 = vsel %vm1801, %v1504, %v1825
  %v1850 = vsel %vm1802, %v1770, %v1826
  %v1851 = vsel %vm1803, %v1506, %v1827
  %v1852 = vsel %vm1804, %v1508, %v1828
  %v1853 = vsel %vm1805, %v1773, %v1829
  %v1854 = vsel %vm1806, %v1512, %v1830
  %v1855 = vsel %vm1807, %v1514, %v1831
  %v1856 = vsel %vm1808, %v1778, %v1832
  %v1857 = vsel %vm1809, %v1516, %v1833
  %v1858 = vsel %vm1810, %v1518, %v1834
  %v1859 = vsel %vm1811, %v1781, %v1835
  %v1860 = vsel %vm1812, %v1522, %v1836
  %v1861 = vsel %vm1813, %v1524, %v1837
  %v1862 = vsel %vm1814, %v1786, %v1838
  %v1863 = vsel %vm1815, %v1526, %v1839
  %v1864 = vsel %vm1816, %v1528, %v1840
  %v1865 = vsel %vm1817, %v1789, %v1841
  %v1866 = vsel %vm1818, %v1532, %v1842
  %v1867 = vsel %vm1819, %v1534, %v1843
  %v1868 = vsel %vm1820, %v1794, %v1844
  %v1869 = vsel %vm1821, %v1536, %v1845
  %v1870 = vsel %vm1822, %v1538, %v1846
  %v1871 = vsel %vm1823, %v1797, %v1847
  %v1872 = vpack.c.bf16 %v1851, %v1848
  %v1873 = vpack.c.bf16 %v1852, %v1849
  %v1874 = vpack.c.bf16 %v1853, %v1850
  %v1875 = vpack.c.bf16 %v1857, %v1854
  %v1876 = vpack.c.bf16 %v1858, %v1855
  %v1877 = vpack.c.bf16 %v1859, %v1856
  %v1878 = vpack.c.bf16 %v1863, %v1860
  %v1879 = vpack.c.bf16 %v1864, %v1861
  %v1880 = vpack.c.bf16 %v1865, %v1862
  %v1881 = vpack.c.bf16 %v1869, %v1866
  %v1882 = vpack.c.bf16 %v1870, %v1867
  %v1883 = vpack.c.bf16 %v1871, %v1868
  %v1896 = vunpack.c.l.b16 %v1872
  %v1897 = vunpack.c.l.b16 %v1873
  %v1898 = vunpack.c.l.b16 %v1874
  %v1899 = vunpack.c.h.b16 %v1872
  %v1900 = vunpack.c.h.b16 %v1873
  %v1901 = vunpack.c.h.b16 %v1874
  %v1902 = vunpack.c.l.b16 %v1875
  %v1903 = vunpack.c.l.b16 %v1876
  %v1904 = vunpack.c.l.b16 %v1877
  %v1905 = vunpack.c.h.b16 %v1875
  %v1906 = vunpack.c.h.b16 %v1876
  %v1907 = vunpack.c.h.b16 %v1877
  %v1908 = vunpack.c.l.b16 %v1878
  %v1909 = vunpack.c.l.b16 %v1879
  %v1910 = vunpack.c.l.b16 %v1880
  %v1911 = vunpack.c.h.b16 %v1878
  %v1912 = vunpack.c.h.b16 %v1879
  %v1913 = vunpack.c.h.b16 %v1880
  %v1914 = vunpack.c.l.b16 %v1881
  %v1915 = vunpack.c.l.b16 %v1882
  %v1916 = vunpack.c.l.b16 %v1883
  %v1917 = vunpack.c.h.b16 %v1881
  %v1918 = vunpack.c.h.b16 %v1882
  %v1919 = vunpack.c.h.b16 %v1883
  %v1920 = vpack.c.b16 %v1897, %v1896
  %v1921 = vpack.c.b16 %v1898, %v1898
  %v1922 = vpack.c.b16 %v1900, %v1899
  %v1923 = vpack.c.b16 %v1901, %v1901
  %v1924 = vpack.c.b16 %v1903, %v1902
  %v1925 = vpack.c.b16 %v1904, %v1904
  %v1926 = vpack.c.b16 %v1906, %v1905
  %v1927 = vpack.c.b16 %v1907, %v1907
  %v1928 = vpack.c.b16 %v1909, %v1908
  %v1929 = vpack.c.b16 %v1910, %v1910
  %v1930 = vpack.c.b16 %v1912, %v1911
  %v1931 = vpack.c.b16 %v1913, %v1913
  %v1932 = vpack.c.b16 %v1915, %v1914
  %v1933 = vpack.c.b16 %v1916, %v1916
  %v1934 = vpack.c.b16 %v1918, %v1917
  %v1935 = vpack.c.b16 %v1919, %v1919
  %1952 = vst [vmem:[%s3] sm:$0xff] %v1920
  %vm1953 = vcmask 666624
  %1954 = vst.msk [vmem:[%s3 + $0x8] sm:$0xf] %vm1953, %v1921
  %1955 = vst [vmem:[%s3 + $0xc] sm:$0xff] %v1922
  %1956 = vst.msk [vmem:[%s3 + $0x14] sm:$0xf] %vm1953, %v1923
  %1957 = vst [vmem:[%s3 + $0x18] sm:$0xff] %v1924
  %1958 = vst.msk [vmem:[%s3 + $0x20] sm:$0xf] %vm1953, %v1925
  %1959 = vst [vmem:[%s3 + $0x24] sm:$0xff] %v1926
  %1960 = vst.msk [vmem:[%s3 + $0x2c] sm:$0xf] %vm1953, %v1927
  %1961 = vst [vmem:[%s3 + $0x30] sm:$0xff] %v1928
  %1962 = vst.msk [vmem:[%s3 + $0x38] sm:$0xf] %vm1953, %v1929
  %1963 = vst [vmem:[%s3 + $0x3c] sm:$0xff] %v1930
  %1964 = vst.msk [vmem:[%s3 + $0x44] sm:$0xf] %vm1953, %v1931
  %1965 = vst [vmem:[%s3 + $0x48] sm:$0xff] %v1932
  %1966 = vst.msk [vmem:[%s3 + $0x50] sm:$0xf] %vm1953, %v1933
  %1967 = vst [vmem:[%s3 + $0x54] sm:$0xff] %v1934
  %1968 = vst.msk [vmem:[%s3 + $0x5c] sm:$0xf] %vm1953, %v1935
  // Predicated region
  $region14: #{cont_gaussian_policy_forward.5} parent=0 // pred_check
    _
  $region15: #{cont_gaussian_policy_forward.5} parent=0 // pred_check_branch
    %1970 = sbr.rel (0) target = $region17
  $region16: #{cont_gaussian_policy_forward.5} parent=0 // pred_region
    _
  $region17: #{cont_gaussian_policy_forward.5} parent=0 // pred_fallthru
    _
  // Predicated region
  $region18: #{cont_gaussian_policy_forward.5} parent=0 // pred_check
    _
  $region19: #{cont_gaussian_policy_forward.5} parent=0 // pred_check_branch
    %1972 = sbr.rel (0) target = $region21
  $region20: #{cont_gaussian_policy_forward.5} parent=0 // pred_region
    _
  $region21: #{cont_gaussian_policy_forward.5} parent=0 // pred_fallthru
    _

// kernel: cont_gaussian_policy_forward.6
$region0: #{cont_gaussian_policy_forward.6}
  #allocation0 [shape = 'u32[]', space=smem, size = 0x4, offset = 0x4, fixed_abs, tag = 'smem constant byte address 0x4 - core index']
  #allocation1 [shape = 'u32[144,128]{1,0:T(1,128)}', space=vmem, size = 0x12000, scoped, tag = 'internal scratch']
  %s0 = inlined_call_operand.vmem [shape: bf16[64,576], index: 0, kind: input, shape index: {}]
  %s1 = inlined_call_operand.vmem [shape: f32[64,1], index: 1, kind: input, shape index: {}]
  %s2 = inlined_call_operand.vmem [shape: bf16[576,72], index: 2, kind: input, shape index: {}]
  %s3 = inlined_call_operand.vmem [shape: bf16[64,72], index: 3, kind: output, shape index: {}]
  %s4 = sld [smem:[#allocation0]]
  $region22: #{cont_gaussian_policy_forward.6} parent=0
    _
  %s6 = ssub.s32 1, %s4
  %s7 = scalar_select 0, %s6, %s4
  // Predicated region
  $region2: #{cont_gaussian_policy_forward.6} parent=0 // pred_check
    _
  $region3: #{cont_gaussian_policy_forward.6} parent=0 // pred_check_branch
    %9 = sbr.rel (0) target = $region5
  $region4: #{cont_gaussian_policy_forward.6} parent=0 // pred_region
    _
  $region5: #{cont_gaussian_policy_forward.6} parent=0 // pred_fallthru
    _
  // Predicated region
  $region6: #{cont_gaussian_policy_forward.6} parent=0 // pred_check
    _
  $region7: #{cont_gaussian_policy_forward.6} parent=0 // pred_check_branch
    %11 = sbr.rel (0) target = $region9
  $region8: #{cont_gaussian_policy_forward.6} parent=0 // pred_region
    _
  $region9: #{cont_gaussian_policy_forward.6} parent=0 // pred_fallthru
    _
  // Predicated region
  $region10: #{cont_gaussian_policy_forward.6} parent=0 // pred_check
    _
  $region11: #{cont_gaussian_policy_forward.6} parent=0 // pred_check_branch
    %13 = sbr.rel (0) target = $region13
  $region12: #{cont_gaussian_policy_forward.6} parent=0 // pred_region
    _
  $region13: #{cont_gaussian_policy_forward.6} parent=0 // pred_fallthru
    _
  %v15 = vld [vmem:[%s0] sm:$0xff]
  %v16 = vld [vmem:[%s0 + $0x8] sm:$0xff]
  %v17 = vld [vmem:[%s0 + $0x10] sm:$0xf]
  %v18 = vld [vmem:[%s0 + $0x14] sm:$0xff]
  %v19 = vld [vmem:[%s0 + $0x1c] sm:$0xff]
  %v20 = vld [vmem:[%s0 + $0x24] sm:$0xf]
  %v21 = vld [vmem:[%s0 + $0x28] sm:$0xff]
  %v22 = vld [vmem:[%s0 + $0x30] sm:$0xff]
  %v23 = vld [vmem:[%s0 + $0x38] sm:$0xf]
  %v24 = vld [vmem:[%s0 + $0x3c] sm:$0xff]
  %v25 = vld [vmem:[%s0 + $0x44] sm:$0xff]
  %v26 = vld [vmem:[%s0 + $0x4c] sm:$0xf]
  %v27 = vld [vmem:[%s0 + $0x50] sm:$0xff]
  %v28 = vld [vmem:[%s0 + $0x58] sm:$0xff]
  %v29 = vld [vmem:[%s0 + $0x60] sm:$0xf]
  %v30 = vld [vmem:[%s0 + $0x64] sm:$0xff]
  %v31 = vld [vmem:[%s0 + $0x6c] sm:$0xff]
  %v32 = vld [vmem:[%s0 + $0x74] sm:$0xf]
  %v33 = vld [vmem:[%s0 + $0x78] sm:$0xff]
  %v34 = vld [vmem:[%s0 + $0x80] sm:$0xff]
  %v35 = vld [vmem:[%s0 + $0x88] sm:$0xf]
  %v36 = vld [vmem:[%s0 + $0x8c] sm:$0xff]
  %v37 = vld [vmem:[%s0 + $0x94] sm:$0xff]
  %v38 = vld [vmem:[%s0 + $0x9c] sm:$0xf]
  %v39 = vld [vmem:[%s2] sm:$0xf]
  %v40 = vld [vmem:[%s2 + $0x4] sm:$0xf]
  %v41 = vld [vmem:[%s2 + $0x8] sm:$0xf]
  %v42 = vld [vmem:[%s2 + $0xc] sm:$0xf]
  %v43 = vld [vmem:[%s2 + $0x10] sm:$0xf]
  %v44 = vld [vmem:[%s2 + $0x14] sm:$0xf]
  %v45 = vld [vmem:[%s2 + $0x18] sm:$0xf]
  %v46 = vld [vmem:[%s2 + $0x1c] sm:$0xf]
  %v47 = vld [vmem:[%s2 + $0x20] sm:$0xf]
  %v48 = vld [vmem:[%s2 + $0x24] sm:$0xf]
  %v49 = vld [vmem:[%s2 + $0x28] sm:$0xf]
  %v50 = vld [vmem:[%s2 + $0x2c] sm:$0xf]
  %v51 = vld [vmem:[%s2 + $0x30] sm:$0xf]
  %v52 = vld [vmem:[%s2 + $0x34] sm:$0xf]
  %v53 = vld [vmem:[%s2 + $0x38] sm:$0xf]
  %v54 = vld [vmem:[%s2 + $0x3c] sm:$0xf]
  %v55 = vld [vmem:[%s2 + $0x40] sm:$0xf]
  %v56 = vld [vmem:[%s2 + $0x44] sm:$0xf]
  %v57 = vld [vmem:[%s2 + $0x48] sm:$0xf]
  %v58 = vld [vmem:[%s2 + $0x4c] sm:$0xf]
  %v59 = vld [vmem:[%s2 + $0x50] sm:$0xf]
  %v60 = vld [vmem:[%s2 + $0x54] sm:$0xf]
  %v61 = vld [vmem:[%s2 + $0x58] sm:$0xf]
  %v62 = vld [vmem:[%s2 + $0x5c] sm:$0xf]
  %v63 = vld [vmem:[%s2 + $0x60] sm:$0xf]
  %v64 = vld [vmem:[%s2 + $0x64] sm:$0xf]
  %v65 = vld [vmem:[%s2 + $0x68] sm:$0xf]
  %v66 = vld [vmem:[%s2 + $0x6c] sm:$0xf]
  %v67 = vld [vmem:[%s2 + $0x70] sm:$0xf]
  %v68 = vld [vmem:[%s2 + $0x74] sm:$0xf]
  %v69 = vld [vmem:[%s2 + $0x78] sm:$0xf]
  %v70 = vld [vmem:[%s2 + $0x7c] sm:$0xf]
  %v71 = vld [vmem:[%s2 + $0x80] sm:$0xf]
  %v72 = vld [vmem:[%s2 + $0x84] sm:$0xf]
  %v73 = vld [vmem:[%s2 + $0x88] sm:$0xf]
  %v74 = vld [vmem:[%s2 + $0x8c] sm:$0xf]
  %v75 = vld [vmem:[%s2 + $0x90] sm:$0xf]
  %v76 = vld [vmem:[%s2 + $0x94] sm:$0xf]
  %v77 = vld [vmem:[%s2 + $0x98] sm:$0xf]
  %v78 = vld [vmem:[%s2 + $0x9c] sm:$0xf]
  %v79 = vld [vmem:[%s2 + $0xa0] sm:$0xf]
  %v80 = vld [vmem:[%s2 + $0xa4] sm:$0xf]
  %v81 = vld [vmem:[%s2 + $0xa8] sm:$0xf]
  %v82 = vld [vmem:[%s2 + $0xac] sm:$0xf]
  %v83 = vld [vmem:[%s2 + $0xb0] sm:$0xf]
  %v84 = vld [vmem:[%s2 + $0xb4] sm:$0xf]
  %v85 = vld [vmem:[%s2 + $0xb8] sm:$0xf]
  %v86 = vld [vmem:[%s2 + $0xbc] sm:$0xf]
  %v87 = vld [vmem:[%s2 + $0xc0] sm:$0xf]
  %v88 = vld [vmem:[%s2 + $0xc4] sm:$0xf]
  %v89 = vld [vmem:[%s2 + $0xc8] sm:$0xf]
  %v90 = vld [vmem:[%s2 + $0xcc] sm:$0xf]
  %v91 = vld [vmem:[%s2 + $0xd0] sm:$0xf]
  %v92 = vld [vmem:[%s2 + $0xd4] sm:$0xf]
  %v93 = vld [vmem:[%s2 + $0xd8] sm:$0xf]
  %v94 = vld [vmem:[%s2 + $0xdc] sm:$0xf]
  %v95 = vld [vmem:[%s2 + $0xe0] sm:$0xf]
  %v96 = vld [vmem:[%s2 + $0xe4] sm:$0xf]
  %v97 = vld [vmem:[%s2 + $0xe8] sm:$0xf]
  %v98 = vld [vmem:[%s2 + $0xec] sm:$0xf]
  %v99 = vld [vmem:[%s2 + $0xf0] sm:$0xf]
  %v100 = vld [vmem:[%s2 + $0xf4] sm:$0xf]
  %v101 = vld [vmem:[%s2 + $0xf8] sm:$0xf]
  %v102 = vld [vmem:[%s2 + $0xfc] sm:$0xf]
  %v103 = vld [vmem:[%s2 + $0x100] sm:$0xf]
  %v104 = vld [vmem:[%s2 + $0x104] sm:$0xf]
  %v105 = vld [vmem:[%s2 + $0x108] sm:$0xf]
  %v106 = vld [vmem:[%s2 + $0x10c] sm:$0xf]
  %v107 = vld [vmem:[%s2 + $0x110] sm:$0xf]
  %v108 = vld [vmem:[%s2 + $0x114] sm:$0xf]
  %v109 = vld [vmem:[%s2 + $0x118] sm:$0xf]
  %v110 = vld [vmem:[%s2 + $0x11c] sm:$0xf]
  %v111 = vld [vmem:[%s1] sm:$0xff]
  %v112 = vld [vmem:[%s1 + $0x8] sm:$0xff]
  %v113 = vld [vmem:[%s1 + $0x10] sm:$0xff]
  %v114 = vld [vmem:[%s1 + $0x18] sm:$0xff]
  %v115 = vld [vmem:[%s1 + $0x20] sm:$0xff]
  %v116 = vld [vmem:[%s1 + $0x28] sm:$0xff]
  %v117 = vld [vmem:[%s1 + $0x30] sm:$0xff]
  %v118 = vld [vmem:[%s1 + $0x38] sm:$0xff]
  %120 = vset.pattern.permute.xlu0 0
  %121 = vperm.xlu0 %120, %v111
  %v122 = vpop.permute.xlu0 %121
  %125 = vset.pattern.permute.xlu0 0
  %126 = vperm.xlu0 %125, %v112
  %v127 = vpop.permute.xlu0 %126
  %130 = vset.pattern.permute.xlu0 0
  %131 = vperm.xlu0 %130, %v113
  %v132 = vpop.permute.xlu0 %131
  %135 = vset.pattern.permute.xlu0 0
  %136 = vperm.xlu0 %135, %v114
  %v137 = vpop.permute.xlu0 %136
  %140 = vset.pattern.permute.xlu0 0
  %141 = vperm.xlu0 %140, %v115
  %v142 = vpop.permute.xlu0 %141
  %145 = vset.pattern.permute.xlu0 0
  %146 = vperm.xlu0 %145, %v116
  %v147 = vpop.permute.xlu0 %146
  %150 = vset.pattern.permute.xlu0 0
  %151 = vperm.xlu0 %150, %v117
  %v152 = vpop.permute.xlu0 %151
  %155 = vset.pattern.permute.xlu0 0
  %156 = vperm.xlu0 %155, %v118
  %v157 = vpop.permute.xlu0 %156
  %v183 = vunpack.c.l.b16 %v15
  %v184 = vunpack.c.h.b16 %v15
  %v185 = vunpack.c.l.b16 %v16
  %v186 = vunpack.c.h.b16 %v16
  %v187 = vunpack.c.l.b16 %v17
  %v188 = vunpack.c.l.b16 %v18
  %v189 = vunpack.c.h.b16 %v18
  %v190 = vunpack.c.l.b16 %v19
  %v191 = vunpack.c.h.b16 %v19
  %v192 = vunpack.c.l.b16 %v20
  %v193 = vunpack.c.l.b16 %v21
  %v194 = vunpack.c.h.b16 %v21
  %v195 = vunpack.c.l.b16 %v22
  %v196 = vunpack.c.h.b16 %v22
  %v197 = vunpack.c.l.b16 %v23
  %v198 = vunpack.c.l.b16 %v24
  %v199 = vunpack.c.h.b16 %v24
  %v200 = vunpack.c.l.b16 %v25
  %v201 = vunpack.c.h.b16 %v25
  %v202 = vunpack.c.l.b16 %v26
  %v203 = vunpack.c.l.b16 %v27
  %v204 = vunpack.c.h.b16 %v27
  %v205 = vunpack.c.l.b16 %v28
  %v206 = vunpack.c.h.b16 %v28
  %v207 = vunpack.c.l.b16 %v29
  %v208 = vunpack.c.l.b16 %v30
  %v209 = vunpack.c.h.b16 %v30
  %v210 = vunpack.c.l.b16 %v31
  %v211 = vunpack.c.h.b16 %v31
  %v212 = vunpack.c.l.b16 %v32
  %v213 = vunpack.c.l.b16 %v33
  %v214 = vunpack.c.h.b16 %v33
  %v215 = vunpack.c.l.b16 %v34
  %v216 = vunpack.c.h.b16 %v34
  %v217 = vunpack.c.l.b16 %v35
  %v218 = vunpack.c.l.b16 %v36
  %v219 = vunpack.c.h.b16 %v36
  %v220 = vunpack.c.l.b16 %v37
  %v221 = vunpack.c.h.b16 %v37
  %v222 = vunpack.c.l.b16 %v38
  %v223 = vpack.c.b16 %v188, %v183
  %v224 = vpack.c.b16 %v189, %v184
  %v225 = vpack.c.b16 %v190, %v185
  %v226 = vpack.c.b16 %v191, %v186
  %v227 = vpack.c.b16 %v192, %v187
  %v228 = vpack.c.b16 %v198, %v193
  %v229 = vpack.c.b16 %v199, %v194
  %v230 = vpack.c.b16 %v200, %v195
  %v231 = vpack.c.b16 %v201, %v196
  %v232 = vpack.c.b16 %v202, %v197
  %v233 = vpack.c.b16 %v208, %v203
  %v234 = vpack.c.b16 %v209, %v204
  %v235 = vpack.c.b16 %v210, %v205
  %v236 = vpack.c.b16 %v211, %v206
  %v237 = vpack.c.b16 %v212, %v207
  %v238 = vpack.c.b16 %v218, %v213
  %v239 = vpack.c.b16 %v219, %v214
  %v240 = vpack.c.b16 %v220, %v215
  %v241 = vpack.c.b16 %v221, %v216
  %v242 = vpack.c.b16 %v222, %v217
  %v331 = vunpack.c.l.b16 %v39
  %v332 = vunpack.c.l.b16 %v40
  %v333 = vunpack.c.l.b16 %v41
  %v334 = vunpack.c.l.b16 %v42
  %v335 = vunpack.c.l.b16 %v43
  %v336 = vunpack.c.l.b16 %v44
  %v337 = vunpack.c.l.b16 %v45
  %v338 = vunpack.c.l.b16 %v46
  %v339 = vunpack.c.l.b16 %v47
  %v340 = vunpack.c.l.b16 %v48
  %v341 = vunpack.c.l.b16 %v49
  %v342 = vunpack.c.l.b16 %v50
  %v343 = vunpack.c.l.b16 %v51
  %v344 = vunpack.c.l.b16 %v52
  %v345 = vunpack.c.l.b16 %v53
  %v346 = vunpack.c.l.b16 %v54
  %v347 = vunpack.c.l.b16 %v55
  %v348 = vunpack.c.l.b16 %v56
  %v349 = vunpack.c.l.b16 %v57
  %v350 = vunpack.c.l.b16 %v58
  %v351 = vunpack.c.l.b16 %v59
  %v352 = vunpack.c.l.b16 %v60
  %v353 = vunpack.c.l.b16 %v61
  %v354 = vunpack.c.l.b16 %v62
  %v355 = vunpack.c.l.b16 %v63
  %v356 = vunpack.c.l.b16 %v64
  %v357 = vunpack.c.l.b16 %v65
  %v358 = vunpack.c.l.b16 %v66
  %v359 = vunpack.c.l.b16 %v67
  %v360 = vunpack.c.l.b16 %v68
  %v361 = vunpack.c.l.b16 %v69
  %v362 = vunpack.c.l.b16 %v70
  %v363 = vunpack.c.l.b16 %v71
  %v364 = vunpack.c.l.b16 %v72
  %v365 = vunpack.c.l.b16 %v73
  %v366 = vunpack.c.l.b16 %v74
  %v367 = vunpack.c.l.b16 %v75
  %v368 = vunpack.c.l.b16 %v76
  %v369 = vunpack.c.l.b16 %v77
  %v370 = vunpack.c.l.b16 %v78
  %v371 = vunpack.c.l.b16 %v79
  %v372 = vunpack.c.l.b16 %v80
  %v373 = vunpack.c.l.b16 %v81
  %v374 = vunpack.c.l.b16 %v82
  %v375 = vunpack.c.l.b16 %v83
  %v376 = vunpack.c.l.b16 %v84
  %v377 = vunpack.c.l.b16 %v85
  %v378 = vunpack.c.l.b16 %v86
  %v379 = vunpack.c.l.b16 %v87
  %v380 = vunpack.c.l.b16 %v88
  %v381 = vunpack.c.l.b16 %v89
  %v382 = vunpack.c.l.b16 %v90
  %v383 = vunpack.c.l.b16 %v91
  %v384 = vunpack.c.l.b16 %v92
  %v385 = vunpack.c.l.b16 %v93
  %v386 = vunpack.c.l.b16 %v94
  %v387 = vunpack.c.l.b16 %v95
  %v388 = vunpack.c.l.b16 %v96
  %v389 = vunpack.c.l.b16 %v97
  %v390 = vunpack.c.l.b16 %v98
  %v391 = vunpack.c.l.b16 %v99
  %v392 = vunpack.c.l.b16 %v100
  %v393 = vunpack.c.l.b16 %v101
  %v394 = vunpack.c.l.b16 %v102
  %v395 = vunpack.c.l.b16 %v103
  %v396 = vunpack.c.l.b16 %v104
  %v397 = vunpack.c.l.b16 %v105
  %v398 = vunpack.c.l.b16 %v106
  %v399 = vunpack.c.l.b16 %v107
  %v400 = vunpack.c.l.b16 %v108
  %v401 = vunpack.c.l.b16 %v109
  %v402 = vunpack.c.l.b16 %v110
  %v403 = vpack.c.b16 %v332, %v331
  %v404 = vpack.c.b16 %v334, %v333
  %v405 = vpack.c.b16 %v336, %v335
  %v406 = vpack.c.b16 %v338, %v337
  %v407 = vpack.c.b16 %v340, %v339
  %v408 = vpack.c.b16 %v342, %v341
  %v409 = vpack.c.b16 %v344, %v343
  %v410 = vpack.c.b16 %v346, %v345
  %v411 = vpack.c.b16 %v348, %v347
  %v412 = vpack.c.b16 %v350, %v349
  %v413 = vpack.c.b16 %v352, %v351
  %v414 = vpack.c.b16 %v354, %v353
  %v415 = vpack.c.b16 %v356, %v355
  %v416 = vpack.c.b16 %v358, %v357
  %v417 = vpack.c.b16 %v360, %v359
  %v418 = vpack.c.b16 %v362, %v361
  %v419 = vpack.c.b16 %v364, %v363
  %v420 = vpack.c.b16 %v366, %v365
  %v421 = vpack.c.b16 %v368, %v367
  %v422 = vpack.c.b16 %v370, %v369
  %v423 = vpack.c.b16 %v372, %v371
  %v424 = vpack.c.b16 %v374, %v373
  %v425 = vpack.c.b16 %v376, %v375
  %v426 = vpack.c.b16 %v378, %v377
  %v427 = vpack.c.b16 %v380, %v379
  %v428 = vpack.c.b16 %v382, %v381
  %v429 = vpack.c.b16 %v384, %v383
  %v430 = vpack.c.b16 %v386, %v385
  %v431 = vpack.c.b16 %v388, %v387
  %v432 = vpack.c.b16 %v390, %v389
  %v433 = vpack.c.b16 %v392, %v391
  %v434 = vpack.c.b16 %v394, %v393
  %v435 = vpack.c.b16 %v396, %v395
  %v436 = vpack.c.b16 %v398, %v397
  %v437 = vpack.c.b16 %v400, %v399
  %v438 = vpack.c.b16 %v402, %v401
  %vm475 = vcmask 523264
  %v477 = vsel %vm475, %v227, 0
  %v480 = vsel %vm475, %v232, 0
  %v483 = vsel %vm475, %v237, 0
  %v486 = vsel %vm475, %v242, 0
  %488 = vmatprep.subr.bf16.mxu0 0
  %489 = vmatpush1.bf16.msra.mxu0 %v410
  %490 = vmatprep.subr.bf16.mxu0 0
  %491 = vmatpush1.bf16.msra.mxu0 %v409
  %492 = vmatprep.subr.bf16.mxu0 0
  %493 = vmatpush1.bf16.msra.mxu0 %v408
  %494 = vmatprep.subr.bf16.mxu0 0
  %495 = vmatpush1.bf16.msra.mxu0 %v407
  %496 = vmatprep.subr.bf16.mxu0 0
  %497 = vmatpush1.bf16.msra.mxu0 %v406
  %498 = vmatprep.subr.bf16.mxu0 0
  %499 = vmatpush1.bf16.msra.mxu0 %v405
  %500 = vmatprep.subr.bf16.mxu0 0
  %501 = vmatpush1.bf16.msra.mxu0 %v404
  %502 = vmatprep.subr.bf16.mxu0 0
  %503 = vmatpush1.bf16.msra.mxu0 %v403
  %504 = vmatprep.subr.bf16.mxu0 0
  %505 = vmatpush2.bf16.msra.mxu0 %v418
  %506 = vmatprep.subr.bf16.mxu0 0
  %507 = vmatpush2.bf16.msra.mxu0 %v417
  %508 = vmatprep.subr.bf16.mxu0 0
  %509 = vmatpush2.bf16.msra.mxu0 %v416
  %510 = vmatprep.subr.bf16.mxu0 0
  %511 = vmatpush2.bf16.msra.mxu0 %v415
  %512 = vmatprep.subr.bf16.mxu0 0
  %513 = vmatpush2.bf16.msra.mxu0 %v414
  %514 = vmatprep.subr.bf16.mxu0 0
  %515 = vmatpush2.bf16.msra.mxu0 %v413
  %516 = vmatprep.subr.bf16.mxu0 0
  %517 = vmatpush2.bf16.msra.mxu0 %v412
  %518 = vmatprep.subr.bf16.mxu0 0
  %519 = vmatpush2.bf16.msra.mxu0 %v411
  %520 = vmatprep.mubr.bf16.mxu0 %v224
  %521 = vmatmul.mubr.bf16.gmra.mxu0 %v223
  %v522 = vpop.f32.mrf.mxu0
  %v523 = vadd.f32 %v122, %v522
  %v524 = vpop.f32.mrf.mxu0
  %v525 = vpop.f32.mrf.mxu0
  %v526 = vadd.f32 %v127, %v525
  %v527 = vpop.f32.mrf.mxu0
  %528 = vmatprep.mubr.bf16.mxu0 %v229
  %529 = vmatmul.mubr.bf16.gmra.mxu0 %v228
  %v530 = vpop.f32.mrf.mxu0
  %v531 = vadd.f32 %v132, %v530
  %v532 = vpop.f32.mrf.mxu0
  %v533 = vpop.f32.mrf.mxu0
  %v534 = vadd.f32 %v137, %v533
  %v535 = vpop.f32.mrf.mxu0
  %536 = vmatprep.mubr.bf16.mxu0 %v234
  %537 = vmatmul.mubr.bf16.gmra.mxu0 %v233
  %v538 = vpop.f32.mrf.mxu0
  %v539 = vadd.f32 %v142, %v538
  %v540 = vpop.f32.mrf.mxu0
  %v541 = vpop.f32.mrf.mxu0
  %v542 = vadd.f32 %v147, %v541
  %v543 = vpop.f32.mrf.mxu0
  %544 = vmatprep.mubr.bf16.mxu0 %v239
  %545 = vmatmul.mubr.bf16.gmra.mxu0 %v238
  %v546 = vpop.f32.mrf.mxu0
  %v547 = vadd.f32 %v152, %v546
  %v548 = vpop.f32.mrf.mxu0
  %v549 = vpop.f32.mrf.mxu0
  %v550 = vadd.f32 %v157, %v549
  %v551 = vpop.f32.mrf.mxu0
  %552 = vdwg.mxu0
  %553 = vmatprep.subr.bf16.mxu0 0
  %554 = vmatpush1.bf16.msra.mxu0 %v426
  %555 = vmatprep.subr.bf16.mxu0 0
  %556 = vmatpush1.bf16.msra.mxu0 %v425
  %557 = vmatprep.subr.bf16.mxu0 0
  %558 = vmatpush1.bf16.msra.mxu0 %v424
  %559 = vmatprep.subr.bf16.mxu0 0
  %560 = vmatpush1.bf16.msra.mxu0 %v423
  %561 = vmatprep.subr.bf16.mxu0 0
  %562 = vmatpush1.bf16.msra.mxu0 %v422
  %563 = vmatprep.subr.bf16.mxu0 0
  %564 = vmatpush1.bf16.msra.mxu0 %v421
  %565 = vmatprep.subr.bf16.mxu0 0
  %566 = vmatpush1.bf16.msra.mxu0 %v420
  %567 = vmatprep.subr.bf16.mxu0 0
  %568 = vmatpush1.bf16.msra.mxu0 %v419
  %569 = vmatprep.subr.bf16.mxu0 0
  %570 = vmatpush2.bf16.msra.mxu0 %v434
  %571 = vmatprep.subr.bf16.mxu0 0
  %572 = vmatpush2.bf16.msra.mxu0 %v433
  %573 = vmatprep.subr.bf16.mxu0 0
  %574 = vmatpush2.bf16.msra.mxu0 %v432
  %575 = vmatprep.subr.bf16.mxu0 0
  %576 = vmatpush2.bf16.msra.mxu0 %v431
  %577 = vmatprep.subr.bf16.mxu0 0
  %578 = vmatpush2.bf16.msra.mxu0 %v430
  %579 = vmatprep.subr.bf16.mxu0 0
  %580 = vmatpush2.bf16.msra.mxu0 %v429
  %581 = vmatprep.subr.bf16.mxu0 0
  %582 = vmatpush2.bf16.msra.mxu0 %v428
  %583 = vmatprep.subr.bf16.mxu0 0
  %584 = vmatpush2.bf16.msra.mxu0 %v427
  %585 = vmatprep.mubr.bf16.mxu0 %v226
  %586 = vmatmul.mubr.bf16.gmra.mxu0 %v225
  %v587 = vpop.f32.mrf.mxu0
  %v588 = vadd.f32 %v523, %v587
  %v589 = vpop.f32.mrf.mxu0
  %v590 = vpop.f32.mrf.mxu0
  %v591 = vadd.f32 %v526, %v590
  %v592 = vpop.f32.mrf.mxu0
  %593 = vmatprep.mubr.bf16.mxu0 %v231
  %594 = vmatmul.mubr.bf16.gmra.mxu0 %v230
  %v595 = vpop.f32.mrf.mxu0
  %v596 = vadd.f32 %v531, %v595
  %v597 = vpop.f32.mrf.mxu0
  %v598 = vpop.f32.mrf.mxu0
  %v599 = vadd.f32 %v534, %v598
  %v600 = vpop.f32.mrf.mxu0
  %601 = vmatprep.mubr.bf16.mxu0 %v236
  %602 = vmatmul.mubr.bf16.gmra.mxu0 %v235
  %v603 = vpop.f32.mrf.mxu0
  %v604 = vadd.f32 %v539, %v603
  %v605 = vpop.f32.mrf.mxu0
  %v606 = vpop.f32.mrf.mxu0
  %v607 = vadd.f32 %v542, %v606
  %v608 = vpop.f32.mrf.mxu0
  %609 = vmatprep.mubr.bf16.mxu0 %v241
  %610 = vmatmul.mubr.bf16.gmra.mxu0 %v240
  %v611 = vpop.f32.mrf.mxu0
  %v612 = vadd.f32 %v547, %v611
  %v613 = vpop.f32.mrf.mxu0
  %v614 = vpop.f32.mrf.mxu0
  %v615 = vadd.f32 %v550, %v614
  %v616 = vpop.f32.mrf.mxu0
  %617 = vdwg.mxu0
  %618 = vmatprep.subr.bf16.mxu0 0
  %619 = vmatpush1.bf16.msra.mxu0 0
  %620 = vmatprep.subr.bf16.mxu0 0
  %621 = vmatpush1.bf16.msra.mxu0 0
  %622 = vmatprep.subr.bf16.mxu0 0
  %623 = vmatpush1.bf16.msra.mxu0 0
  %624 = vmatprep.subr.bf16.mxu0 0
  %625 = vmatpush1.bf16.msra.mxu0 0
  %626 = vmatprep.subr.bf16.mxu0 0
  %627 = vmatpush1.bf16.msra.mxu0 %v438
  %628 = vmatprep.subr.bf16.mxu0 0
  %629 = vmatpush1.bf16.msra.mxu0 %v437
  %630 = vmatprep.subr.bf16.mxu0 0
  %631 = vmatpush1.bf16.msra.mxu0 %v436
  %632 = vmatprep.subr.bf16.mxu0 0
  %633 = vmatpush1.bf16.msra.mxu0 %v435
  %634 = vmatprep.subr.bf16.mxu0 0
  %635 = vmatpush2.bf16.msra.mxu0 0
  %636 = vmatprep.subr.bf16.mxu0 0
  %637 = vmatpush2.bf16.msra.mxu0 0
  %638 = vmatprep.subr.bf16.mxu0 0
  %639 = vmatpush2.bf16.msra.mxu0 0
  %640 = vmatprep.subr.bf16.mxu0 0
  %641 = vmatpush2.bf16.msra.mxu0 0
  %642 = vmatprep.subr.bf16.mxu0 0
  %643 = vmatpush2.bf16.msra.mxu0 0
  %644 = vmatprep.subr.bf16.mxu0 0
  %645 = vmatpush2.bf16.msra.mxu0 0
  %646 = vmatprep.subr.bf16.mxu0 0
  %647 = vmatpush2.bf16.msra.mxu0 0
  %648 = vmatprep.subr.bf16.mxu0 0
  %649 = vmatpush2.bf16.msra.mxu0 0
  %650 = vmatprep.mubr.bf16.mxu0 0
  %651 = vmatmul.mubr.bf16.gmra.mxu0 %v477
  %v652 = vpop.f32.mrf.mxu0
  %v653 = vadd.f32 %v588, %v652
  %v654 = vpop.f32.mrf.mxu0
  %v655 = vpop.f32.mrf.mxu0
  %v656 = vadd.f32 %v591, %v655
  %v657 = vpop.f32.mrf.mxu0
  %658 = vmatprep.mubr.bf16.mxu0 0
  %659 = vmatmul.mubr.bf16.gmra.mxu0 %v480
  %v660 = vpop.f32.mrf.mxu0
  %v661 = vadd.f32 %v596, %v660
  %v662 = vpop.f32.mrf.mxu0
  %v663 = vpop.f32.mrf.mxu0
  %v664 = vadd.f32 %v599, %v663
  %v665 = vpop.f32.mrf.mxu0
  %666 = vmatprep.mubr.bf16.mxu0 0
  %667 = vmatmul.mubr.bf16.gmra.mxu0 %v483
  %v668 = vpop.f32.mrf.mxu0
  %v669 = vadd.f32 %v604, %v668
  %v670 = vpop.f32.mrf.mxu0
  %v671 = vpop.f32.mrf.mxu0
  %v672 = vadd.f32 %v607, %v671
  %v673 = vpop.f32.mrf.mxu0
  %674 = vmatprep.mubr.bf16.mxu0 0
  %675 = vmatmul.mubr.bf16.gmra.mxu0 %v486
  %v676 = vpop.f32.mrf.mxu0
  %v677 = vadd.f32 %v612, %v676
  %v678 = vpop.f32.mrf.mxu0
  %v679 = vpop.f32.mrf.mxu0
  %v680 = vadd.f32 %v615, %v679
  %v681 = vpop.f32.mrf.mxu0
  %682 = vdwg.mxu0
  %vm683 = vcmp.ge.f32.partialorder %v653, 0.0
  %vm684 = vcmp.ge.f32.partialorder %v656, 0.0
  %vm685 = vcmp.ge.f32.partialorder %v661, 0.0
  %vm686 = vcmp.ge.f32.partialorder %v664, 0.0
  %vm687 = vcmp.ge.f32.partialorder %v669, 0.0
  %vm688 = vcmp.ge.f32.partialorder %v672, 0.0
  %vm689 = vcmp.ge.f32.partialorder %v677, 0.0
  %vm690 = vcmp.ge.f32.partialorder %v680, 0.0
  %v691 = vmul.f32 %v653, 0.01
  %v692 = vmul.f32 %v656, 0.01
  %v693 = vmul.f32 %v661, 0.01
  %v694 = vmul.f32 %v664, 0.01
  %v695 = vmul.f32 %v669, 0.01
  %v696 = vmul.f32 %v672, 0.01
  %v697 = vmul.f32 %v677, 0.01
  %v698 = vmul.f32 %v680, 0.01
  %v699 = vsel %vm683, %v653, %v691
  %v700 = vsel %vm684, %v656, %v692
  %v701 = vsel %vm685, %v661, %v693
  %v702 = vsel %vm686, %v664, %v694
  %v703 = vsel %vm687, %v669, %v695
  %v704 = vsel %vm688, %v672, %v696
  %v705 = vsel %vm689, %v677, %v697
  %v706 = vsel %vm690, %v680, %v698
  %v707 = vpack.c.bf16 %v700, %v699
  %v708 = vpack.c.bf16 %v702, %v701
  %v709 = vpack.c.bf16 %v704, %v703
  %v710 = vpack.c.bf16 %v706, %v705
  %v715 = vunpack.c.l.b16 %v707
  %v716 = vunpack.c.h.b16 %v707
  %v717 = vunpack.c.l.b16 %v708
  %v718 = vunpack.c.h.b16 %v708
  %v719 = vunpack.c.l.b16 %v709
  %v720 = vunpack.c.h.b16 %v709
  %v721 = vunpack.c.l.b16 %v710
  %v722 = vunpack.c.h.b16 %v710
  %v723 = vpack.c.b16 %v715, %v715
  %v724 = vpack.c.b16 %v716, %v716
  %v725 = vpack.c.b16 %v717, %v717
  %v726 = vpack.c.b16 %v718, %v718
  %v727 = vpack.c.b16 %v719, %v719
  %v728 = vpack.c.b16 %v720, %v720
  %v729 = vpack.c.b16 %v721, %v721
  %v730 = vpack.c.b16 %v722, %v722
  %vm739 = vcmask 584704
  %740 = vst.msk [vmem:[%s3] sm:$0xf] %vm739, %v723
  %741 = vst.msk [vmem:[%s3 + $0x4] sm:$0xf] %vm739, %v724
  %742 = vst.msk [vmem:[%s3 + $0x8] sm:$0xf] %vm739, %v725
  %743 = vst.msk [vmem:[%s3 + $0xc] sm:$0xf] %vm739, %v726
  %744 = vst.msk [vmem:[%s3 + $0x10] sm:$0xf] %vm739, %v727
  %745 = vst.msk [vmem:[%s3 + $0x14] sm:$0xf] %vm739, %v728
  %746 = vst.msk [vmem:[%s3 + $0x18] sm:$0xf] %vm739, %v729
  %747 = vst.msk [vmem:[%s3 + $0x1c] sm:$0xf] %vm739, %v730
  // Predicated region
  $region14: #{cont_gaussian_policy_forward.6} parent=0 // pred_check
    _
  $region15: #{cont_gaussian_policy_forward.6} parent=0 // pred_check_branch
    %749 = sbr.rel (0) target = $region17
  $region16: #{cont_gaussian_policy_forward.6} parent=0 // pred_region
    _
  $region17: #{cont_gaussian_policy_forward.6} parent=0 // pred_fallthru
    _
  // Predicated region
  $region18: #{cont_gaussian_policy_forward.6} parent=0 // pred_check
    _
  $region19: #{cont_gaussian_policy_forward.6} parent=0 // pred_check_branch
    %751 = sbr.rel (0) target = $region21
  $region20: #{cont_gaussian_policy_forward.6} parent=0 // pred_region
    _
  $region21: #{cont_gaussian_policy_forward.6} parent=0 // pred_fallthru
    _

// kernel: cont_gaussian_policy_forward.7
$region0: #{cont_gaussian_policy_forward.7}
  #allocation0 [shape = 'u32[]', space=smem, size = 0x4, offset = 0x4, fixed_abs, tag = 'smem constant byte address 0x4 - core index']
  #allocation1 [shape = 'u32[144,128]{1,0:T(1,128)}', space=vmem, size = 0x12000, scoped, tag = 'internal scratch']
  %s0 = inlined_call_operand.vmem [shape: bf16[2,2304], index: 0, kind: input, shape index: {}]
  %s1 = inlined_call_operand.vmem [shape: bf16[2304,512], index: 1, kind: input, shape index: {}]
  %s2 = inlined_call_operand.vmem [shape: f32[1,512], index: 2, kind: input, shape index: {}]
  %s3 = inlined_call_operand.vmem [shape: bf16[512,256], index: 3, kind: input, shape index: {}]
  %s4 = inlined_call_operand.vmem [shape: f32[1,256], index: 4, kind: input, shape index: {}]
  %s5 = inlined_call_operand.vmem [shape: bf16[256,128], index: 5, kind: input, shape index: {}]
  %s6 = inlined_call_operand.vmem [shape: f32[1,128], index: 6, kind: input, shape index: {}]
  %s7 = inlined_call_operand.vmem [shape: f32[2,128], index: 7, kind: output, shape index: {}]
  %s8 = sld [smem:[#allocation0]]
  $region38: #{cont_gaussian_policy_forward.7} parent=0
    _
  %s10 = ssub.s32 1, %s8
  %s11 = scalar_select 0, %s10, %s8
  // Predicated region
  $region2: #{cont_gaussian_policy_forward.7} parent=0 // pred_check
    _
  $region3: #{cont_gaussian_policy_forward.7} parent=0 // pred_check_branch
    %13 = sbr.rel (0) target = $region5
  $region4: #{cont_gaussian_policy_forward.7} parent=0 // pred_region
    _
  $region5: #{cont_gaussian_policy_forward.7} parent=0 // pred_fallthru
    _
  // Predicated region
  $region6: #{cont_gaussian_policy_forward.7} parent=0 // pred_check
    _
  $region7: #{cont_gaussian_policy_forward.7} parent=0 // pred_check_branch
    %15 = sbr.rel (0) target = $region9
  $region8: #{cont_gaussian_policy_forward.7} parent=0 // pred_region
    _
  $region9: #{cont_gaussian_policy_forward.7} parent=0 // pred_fallthru
    _
  // Predicated region
  $region10: #{cont_gaussian_policy_forward.7} parent=0 // pred_check
    _
  $region11: #{cont_gaussian_policy_forward.7} parent=0 // pred_check_branch
    %17 = sbr.rel (0) target = $region13
  $region12: #{cont_gaussian_policy_forward.7} parent=0 // pred_region
    _
  $region13: #{cont_gaussian_policy_forward.7} parent=0 // pred_fallthru
    _
  // Predicated region
  $region14: #{cont_gaussian_policy_forward.7} parent=0 // pred_check
    _
  $region15: #{cont_gaussian_policy_forward.7} parent=0 // pred_check_branch
    %19 = sbr.rel (0) target = $region17
  $region16: #{cont_gaussian_policy_forward.7} parent=0 // pred_region
    _
  $region17: #{cont_gaussian_policy_forward.7} parent=0 // pred_fallthru
    _
  // Predicated region
  $region18: #{cont_gaussian_policy_forward.7} parent=0 // pred_check
    _
  $region19: #{cont_gaussian_policy_forward.7} parent=0 // pred_check_branch
    %21 = sbr.rel (0) target = $region21
  $region20: #{cont_gaussian_policy_forward.7} parent=0 // pred_region
    _
  $region21: #{cont_gaussian_policy_forward.7} parent=0 // pred_fallthru
    _
  // Predicated region
  $region22: #{cont_gaussian_policy_forward.7} parent=0 // pred_check
    _
  $region23: #{cont_gaussian_policy_forward.7} parent=0 // pred_check_branch
    %23 = sbr.rel (0) target = $region25
  $region24: #{cont_gaussian_policy_forward.7} parent=0 // pred_region
    _
  $region25: #{cont_gaussian_policy_forward.7} parent=0 // pred_fallthru
    _
  // Predicated region
  $region26: #{cont_gaussian_policy_forward.7} parent=0 // pred_check
    _
  $region27: #{cont_gaussian_policy_forward.7} parent=0 // pred_check_branch
    %25 = sbr.rel (0) target = $region29
  $region28: #{cont_gaussian_policy_forward.7} parent=0 // pred_region
    _
  $region29: #{cont_gaussian_policy_forward.7} parent=0 // pred_fallthru
    _
  %v27 = vld [vmem:[%s0] sm:$0xff]
  %v28 = vld [vmem:[%s0 + $0x8] sm:$0xff]
  %v29 = vld [vmem:[%s0 + $0x10] sm:$0x3]
  %v30 = vld [vmem:[%s1] sm:$0xff]
  %v31 = vld [vmem:[%s1 + $0x8] sm:$0xff]
  %v32 = vld [vmem:[%s1 + $0x10] sm:$0xff]
  %v33 = vld [vmem:[%s1 + $0x18] sm:$0xff]
  %v34 = vld [vmem:[%s1 + $0x20] sm:$0xff]
  %v35 = vld [vmem:[%s1 + $0x28] sm:$0xff]
  %v36 = vld [vmem:[%s1 + $0x30] sm:$0xff]
  %v37 = vld [vmem:[%s1 + $0x38] sm:$0xff]
  %v38 = vld [vmem:[%s1 + $0x40] sm:$0xff]
  %v39 = vld [vmem:[%s1 + $0x48] sm:$0xff]
  %v40 = vld [vmem:[%s1 + $0x50] sm:$0xff]
  %v41 = vld [vmem:[%s1 + $0x58] sm:$0xff]
  %v42 = vld [vmem:[%s1 + $0x60] sm:$0xff]
  %v43 = vld [vmem:[%s1 + $0x68] sm:$0xff]
  %v44 = vld [vmem:[%s1 + $0x70] sm:$0xff]
  %v45 = vld [vmem:[%s1 + $0x78] sm:$0xff]
  %v46 = vld [vmem:[%s1 + $0x80] sm:$0xff]
  %v47 = vld [vmem:[%s1 + $0x88] sm:$0xff]
  %v48 = vld [vmem:[%s1 + $0x90] sm:$0xff]
  %v49 = vld [vmem:[%s1 + $0x98] sm:$0xff]
  %v50 = vld [vmem:[%s1 + $0xa0] sm:$0xff]
  %v51 = vld [vmem:[%s1 + $0xa8] sm:$0xff]
  %v52 = vld [vmem:[%s1 + $0xb0] sm:$0xff]
  %v53 = vld [vmem:[%s1 + $0xb8] sm:$0xff]
  %v54 = vld [vmem:[%s1 + $0xc0] sm:$0xff]
  %v55 = vld [vmem:[%s1 + $0xc8] sm:$0xff]
  %v56 = vld [vmem:[%s1 + $0xd0] sm:$0xff]
  %v57 = vld [vmem:[%s1 + $0xd8] sm:$0xff]
  %v58 = vld [vmem:[%s1 + $0xe0] sm:$0xff]
  %v59 = vld [vmem:[%s1 + $0xe8] sm:$0xff]
  %v60 = vld [vmem:[%s1 + $0xf0] sm:$0xff]
  %v61 = vld [vmem:[%s1 + $0xf8] sm:$0xff]
  %v62 = vld [vmem:[%s1 + $0x100] sm:$0xff]
  %v63 = vld [vmem:[%s1 + $0x108] sm:$0xff]
  %v64 = vld [vmem:[%s1 + $0x110] sm:$0xff]
  %v65 = vld [vmem:[%s1 + $0x118] sm:$0xff]
  %v66 = vld [vmem:[%s1 + $0x120] sm:$0xff]
  %v67 = vld [vmem:[%s1 + $0x128] sm:$0xff]
  %v68 = vld [vmem:[%s1 + $0x130] sm:$0xff]
  %v69 = vld [vmem:[%s1 + $0x138] sm:$0xff]
  %v70 = vld [vmem:[%s1 + $0x140] sm:$0xff]
  %v71 = vld [vmem:[%s1 + $0x148] sm:$0xff]
  %v72 = vld [vmem:[%s1 + $0x150] sm:$0xff]
  %v73 = vld [vmem:[%s1 + $0x158] sm:$0xff]
  %v74 = vld [vmem:[%s1 + $0x160] sm:$0xff]
  %v75 = vld [vmem:[%s1 + $0x168] sm:$0xff]
  %v76 = vld [vmem:[%s1 + $0x170] sm:$0xff]
  %v77 = vld [vmem:[%s1 + $0x178] sm:$0xff]
  %v78 = vld [vmem:[%s1 + $0x180] sm:$0xff]
  %v79 = vld [vmem:[%s1 + $0x188] sm:$0xff]
  %v80 = vld [vmem:[%s1 + $0x190] sm:$0xff]
  %v81 = vld [vmem:[%s1 + $0x198] sm:$0xff]
  %v82 = vld [vmem:[%s1 + $0x1a0] sm:$0xff]
  %v83 = vld [vmem:[%s1 + $0x1a8] sm:$0xff]
  %v84 = vld [vmem:[%s1 + $0x1b0] sm:$0xff]
  %v85 = vld [vmem:[%s1 + $0x1b8] sm:$0xff]
  %v86 = vld [vmem:[%s1 + $0x1c0] sm:$0xff]
  %v87 = vld [vmem:[%s1 + $0x1c8] sm:$0xff]
  %v88 = vld [vmem:[%s1 + $0x1d0] sm:$0xff]
  %v89 = vld [vmem:[%s1 + $0x1d8] sm:$0xff]
  %v90 = vld [vmem:[%s1 + $0x1e0] sm:$0xff]
  %v91 = vld [vmem:[%s1 + $0x1e8] sm:$0xff]
  %v92 = vld [vmem:[%s1 + $0x1f0] sm:$0xff]
  %v93 = vld [vmem:[%s1 + $0x1f8] sm:$0xff]
  %v94 = vld [vmem:[%s1 + $0x200] sm:$0xff]
  %v95 = vld [vmem:[%s1 + $0x208] sm:$0xff]
  %v96 = vld [vmem:[%s1 + $0x210] sm:$0xff]
  %v97 = vld [vmem:[%s1 + $0x218] sm:$0xff]
  %v98 = vld [vmem:[%s1 + $0x220] sm:$0xff]
  %v99 = vld [vmem:[%s1 + $0x228] sm:$0xff]
  %v100 = vld [vmem:[%s1 + $0x230] sm:$0xff]
  %v101 = vld [vmem:[%s1 + $0x238] sm:$0xff]
  %v102 = vld [vmem:[%s1 + $0x240] sm:$0xff]
  %v103 = vld [vmem:[%s1 + $0x248] sm:$0xff]
  %v104 = vld [vmem:[%s1 + $0x250] sm:$0xff]
  %v105 = vld [vmem:[%s1 + $0x258] sm:$0xff]
  %v106 = vld [vmem:[%s1 + $0x260] sm:$0xff]
  %v107 = vld [vmem:[%s1 + $0x268] sm:$0xff]
  %v108 = vld [vmem:[%s1 + $0x270] sm:$0xff]
  %v109 = vld [vmem:[%s1 + $0x278] sm:$0xff]
  %v110 = vld [vmem:[%s1 + $0x280] sm:$0xff]
  %v111 = vld [vmem:[%s1 + $0x288] sm:$0xff]
  %v112 = vld [vmem:[%s1 + $0x290] sm:$0xff]
  %v113 = vld [vmem:[%s1 + $0x298] sm:$0xff]
  %v114 = vld [vmem:[%s1 + $0x2a0] sm:$0xff]
  %v115 = vld [vmem:[%s1 + $0x2a8] sm:$0xff]
  %v116 = vld [vmem:[%s1 + $0x2b0] sm:$0xff]
  %v117 = vld [vmem:[%s1 + $0x2b8] sm:$0xff]
  %v118 = vld [vmem:[%s1 + $0x2c0] sm:$0xff]
  %v119 = vld [vmem:[%s1 + $0x2c8] sm:$0xff]
  %v120 = vld [vmem:[%s1 + $0x2d0] sm:$0xff]
  %v121 = vld [vmem:[%s1 + $0x2d8] sm:$0xff]
  %v122 = vld [vmem:[%s1 + $0x2e0] sm:$0xff]
  %v123 = vld [vmem:[%s1 + $0x2e8] sm:$0xff]
  %v124 = vld [vmem:[%s1 + $0x2f0] sm:$0xff]
  %v125 = vld [vmem:[%s1 + $0x2f8] sm:$0xff]
  %v126 = vld [vmem:[%s1 + $0x300] sm:$0xff]
  %v127 = vld [vmem:[%s1 + $0x308] sm:$0xff]
  %v128 = vld [vmem:[%s1 + $0x310] sm:$0xff]
  %v129 = vld [vmem:[%s1 + $0x318] sm:$0xff]
  %v130 = vld [vmem:[%s1 + $0x320] sm:$0xff]
  %v131 = vld [vmem:[%s1 + $0x328] sm:$0xff]
  %v132 = vld [vmem:[%s1 + $0x330] sm:$0xff]
  %v133 = vld [vmem:[%s1 + $0x338] sm:$0xff]
  %v134 = vld [vmem:[%s1 + $0x340] sm:$0xff]
  %v135 = vld [vmem:[%s1 + $0x348] sm:$0xff]
  %v136 = vld [vmem:[%s1 + $0x350] sm:$0xff]
  %v137 = vld [vmem:[%s1 + $0x358] sm:$0xff]
  %v138 = vld [vmem:[%s1 + $0x360] sm:$0xff]
  %v139 = vld [vmem:[%s1 + $0x368] sm:$0xff]
  %v140 = vld [vmem:[%s1 + $0x370] sm:$0xff]
  %v141 = vld [vmem:[%s1 + $0x378] sm:$0xff]
  %v142 = vld [vmem:[%s1 + $0x380] sm:$0xff]
  %v143 = vld [vmem:[%s1 + $0x388] sm:$0xff]
  %v144 = vld [vmem:[%s1 + $0x390] sm:$0xff]
  %v145 = vld [vmem:[%s1 + $0x398] sm:$0xff]
  %v146 = vld [vmem:[%s1 + $0x3a0] sm:$0xff]
  %v147 = vld [vmem:[%s1 + $0x3a8] sm:$0xff]
  %v148 = vld [vmem:[%s1 + $0x3b0] sm:$0xff]
  %v149 = vld [vmem:[%s1 + $0x3b8] sm:$0xff]
  %v150 = vld [vmem:[%s1 + $0x3c0] sm:$0xff]
  %v151 = vld [vmem:[%s1 + $0x3c8] sm:$0xff]
  %v152 = vld [vmem:[%s1 + $0x3d0] sm:$0xff]
  %v153 = vld [vmem:[%s1 + $0x3d8] sm:$0xff]
  %v154 = vld [vmem:[%s1 + $0x3e0] sm:$0xff]
  %v155 = vld [vmem:[%s1 + $0x3e8] sm:$0xff]
  %v156 = vld [vmem:[%s1 + $0x3f0] sm:$0xff]
  %v157 = vld [vmem:[%s1 + $0x3f8] sm:$0xff]
  %v158 = vld [vmem:[%s1 + $0x400] sm:$0xff]
  %v159 = vld [vmem:[%s1 + $0x408] sm:$0xff]
  %v160 = vld [vmem:[%s1 + $0x410] sm:$0xff]
  %v161 = vld [vmem:[%s1 + $0x418] sm:$0xff]
  %v162 = vld [vmem:[%s1 + $0x420] sm:$0xff]
  %v163 = vld [vmem:[%s1 + $0x428] sm:$0xff]
  %v164 = vld [vmem:[%s1 + $0x430] sm:$0xff]
  %v165 = vld [vmem:[%s1 + $0x438] sm:$0xff]
  %v166 = vld [vmem:[%s1 + $0x440] sm:$0xff]
  %v167 = vld [vmem:[%s1 + $0x448] sm:$0xff]
  %v168 = vld [vmem:[%s1 + $0x450] sm:$0xff]
  %v169 = vld [vmem:[%s1 + $0x458] sm:$0xff]
  %v170 = vld [vmem:[%s1 + $0x460] sm:$0xff]
  %v171 = vld [vmem:[%s1 + $0x468] sm:$0xff]
  %v172 = vld [vmem:[%s1 + $0x470] sm:$0xff]
  %v173 = vld [vmem:[%s1 + $0x478] sm:$0xff]
  %v174 = vld [vmem:[%s1 + $0x480] sm:$0xff]
  %v175 = vld [vmem:[%s1 + $0x488] sm:$0xff]
  %v176 = vld [vmem:[%s1 + $0x490] sm:$0xff]
  %v177 = vld [vmem:[%s1 + $0x498] sm:$0xff]
  %v178 = vld [vmem:[%s1 + $0x4a0] sm:$0xff]
  %v179 = vld [vmem:[%s1 + $0x4a8] sm:$0xff]
  %v180 = vld [vmem:[%s1 + $0x4b0] sm:$0xff]
  %v181 = vld [vmem:[%s1 + $0x4b8] sm:$0xff]
  %v182 = vld [vmem:[%s1 + $0x4c0] sm:$0xff]
  %v183 = vld [vmem:[%s1 + $0x4c8] sm:$0xff]
  %v184 = vld [vmem:[%s1 + $0x4d0] sm:$0xff]
  %v185 = vld [vmem:[%s1 + $0x4d8] sm:$0xff]
  %v186 = vld [vmem:[%s1 + $0x4e0] sm:$0xff]
  %v187 = vld [vmem:[%s1 + $0x4e8] sm:$0xff]
  %v188 = vld [vmem:[%s1 + $0x4f0] sm:$0xff]
  %v189 = vld [vmem:[%s1 + $0x4f8] sm:$0xff]
  %v190 = vld [vmem:[%s1 + $0x500] sm:$0xff]
  %v191 = vld [vmem:[%s1 + $0x508] sm:$0xff]
  %v192 = vld [vmem:[%s1 + $0x510] sm:$0xff]
  %v193 = vld [vmem:[%s1 + $0x518] sm:$0xff]
  %v194 = vld [vmem:[%s1 + $0x520] sm:$0xff]
  %v195 = vld [vmem:[%s1 + $0x528] sm:$0xff]
  %v196 = vld [vmem:[%s1 + $0x530] sm:$0xff]
  %v197 = vld [vmem:[%s1 + $0x538] sm:$0xff]
  %v198 = vld [vmem:[%s1 + $0x540] sm:$0xff]
  %v199 = vld [vmem:[%s1 + $0x548] sm:$0xff]
  %v200 = vld [vmem:[%s1 + $0x550] sm:$0xff]
  %v201 = vld [vmem:[%s1 + $0x558] sm:$0xff]
  %v202 = vld [vmem:[%s1 + $0x560] sm:$0xff]
  %v203 = vld [vmem:[%s1 + $0x568] sm:$0xff]
  %v204 = vld [vmem:[%s1 + $0x570] sm:$0xff]
  %v205 = vld [vmem:[%s1 + $0x578] sm:$0xff]
  %v206 = vld [vmem:[%s1 + $0x580] sm:$0xff]
  %v207 = vld [vmem:[%s1 + $0x588] sm:$0xff]
  %v208 = vld [vmem:[%s1 + $0x590] sm:$0xff]
  %v209 = vld [vmem:[%s1 + $0x598] sm:$0xff]
  %v210 = vld [vmem:[%s1 + $0x5a0] sm:$0xff]
  %v211 = vld [vmem:[%s1 + $0x5a8] sm:$0xff]
  %v212 = vld [vmem:[%s1 + $0x5b0] sm:$0xff]
  %v213 = vld [vmem:[%s1 + $0x5b8] sm:$0xff]
  %v214 = vld [vmem:[%s1 + $0x5c0] sm:$0xff]
  %v215 = vld [vmem:[%s1 + $0x5c8] sm:$0xff]
  %v216 = vld [vmem:[%s1 + $0x5d0] sm:$0xff]
  %v217 = vld [vmem:[%s1 + $0x5d8] sm:$0xff]
  %v218 = vld [vmem:[%s1 + $0x5e0] sm:$0xff]
  %v219 = vld [vmem:[%s1 + $0x5e8] sm:$0xff]
  %v220 = vld [vmem:[%s1 + $0x5f0] sm:$0xff]
  %v221 = vld [vmem:[%s1 + $0x5f8] sm:$0xff]
  %v222 = vld [vmem:[%s1 + $0x600] sm:$0xff]
  %v223 = vld [vmem:[%s1 + $0x608] sm:$0xff]
  %v224 = vld [vmem:[%s1 + $0x610] sm:$0xff]
  %v225 = vld [vmem:[%s1 + $0x618] sm:$0xff]
  %v226 = vld [vmem:[%s1 + $0x620] sm:$0xff]
  %v227 = vld [vmem:[%s1 + $0x628] sm:$0xff]
  %v228 = vld [vmem:[%s1 + $0x630] sm:$0xff]
  %v229 = vld [vmem:[%s1 + $0x638] sm:$0xff]
  %v230 = vld [vmem:[%s1 + $0x640] sm:$0xff]
  %v231 = vld [vmem:[%s1 + $0x648] sm:$0xff]
  %v232 = vld [vmem:[%s1 + $0x650] sm:$0xff]
  %v233 = vld [vmem:[%s1 + $0x658] sm:$0xff]
  %v234 = vld [vmem:[%s1 + $0x660] sm:$0xff]
  %v235 = vld [vmem:[%s1 + $0x668] sm:$0xff]
  %v236 = vld [vmem:[%s1 + $0x670] sm:$0xff]
  %v237 = vld [vmem:[%s1 + $0x678] sm:$0xff]
  %v238 = vld [vmem:[%s1 + $0x680] sm:$0xff]
  %v239 = vld [vmem:[%s1 + $0x688] sm:$0xff]
  %v240 = vld [vmem:[%s1 + $0x690] sm:$0xff]
  %v241 = vld [vmem:[%s1 + $0x698] sm:$0xff]
  %v242 = vld [vmem:[%s1 + $0x6a0] sm:$0xff]
  %v243 = vld [vmem:[%s1 + $0x6a8] sm:$0xff]
  %v244 = vld [vmem:[%s1 + $0x6b0] sm:$0xff]
  %v245 = vld [vmem:[%s1 + $0x6b8] sm:$0xff]
  %v246 = vld [vmem:[%s1 + $0x6c0] sm:$0xff]
  %v247 = vld [vmem:[%s1 + $0x6c8] sm:$0xff]
  %v248 = vld [vmem:[%s1 + $0x6d0] sm:$0xff]
  %v249 = vld [vmem:[%s1 + $0x6d8] sm:$0xff]
  %v250 = vld [vmem:[%s1 + $0x6e0] sm:$0xff]
  %v251 = vld [vmem:[%s1 + $0x6e8] sm:$0xff]
  %v252 = vld [vmem:[%s1 + $0x6f0] sm:$0xff]
  %v253 = vld [vmem:[%s1 + $0x6f8] sm:$0xff]
  %v254 = vld [vmem:[%s1 + $0x700] sm:$0xff]
  %v255 = vld [vmem:[%s1 + $0x708] sm:$0xff]
  %v256 = vld [vmem:[%s1 + $0x710] sm:$0xff]
  %v257 = vld [vmem:[%s1 + $0x718] sm:$0xff]
  %v258 = vld [vmem:[%s1 + $0x720] sm:$0xff]
  %v259 = vld [vmem:[%s1 + $0x728] sm:$0xff]
  %v260 = vld [vmem:[%s1 + $0x730] sm:$0xff]
  %v261 = vld [vmem:[%s1 + $0x738] sm:$0xff]
  %v262 = vld [vmem:[%s1 + $0x740] sm:$0xff]
  %v263 = vld [vmem:[%s1 + $0x748] sm:$0xff]
  %v264 = vld [vmem:[%s1 + $0x750] sm:$0xff]
  %v265 = vld [vmem:[%s1 + $0x758] sm:$0xff]
  %v266 = vld [vmem:[%s1 + $0x760] sm:$0xff]
  %v267 = vld [vmem:[%s1 + $0x768] sm:$0xff]
  %v268 = vld [vmem:[%s1 + $0x770] sm:$0xff]
  %v269 = vld [vmem:[%s1 + $0x778] sm:$0xff]
  %v270 = vld [vmem:[%s1 + $0x780] sm:$0xff]
  %v271 = vld [vmem:[%s1 + $0x788] sm:$0xff]
  %v272 = vld [vmem:[%s1 + $0x790] sm:$0xff]
  %v273 = vld [vmem:[%s1 + $0x798] sm:$0xff]
  %v274 = vld [vmem:[%s1 + $0x7a0] sm:$0xff]
  %v275 = vld [vmem:[%s1 + $0x7a8] sm:$0xff]
  %v276 = vld [vmem:[%s1 + $0x7b0] sm:$0xff]
  %v277 = vld [vmem:[%s1 + $0x7b8] sm:$0xff]
  %v278 = vld [vmem:[%s1 + $0x7c0] sm:$0xff]
  %v279 = vld [vmem:[%s1 + $0x7c8] sm:$0xff]
  %v280 = vld [vmem:[%s1 + $0x7d0] sm:$0xff]
  %v281 = vld [vmem:[%s1 + $0x7d8] sm:$0xff]
  %v282 = vld [vmem:[%s1 + $0x7e0] sm:$0xff]
  %v283 = vld [vmem:[%s1 + $0x7e8] sm:$0xff]
  %v284 = vld [vmem:[%s1 + $0x7f0] sm:$0xff]
  %v285 = vld [vmem:[%s1 + $0x7f8] sm:$0xff]
  %v286 = vld [vmem:[%s1 + $0x800] sm:$0xff]
  %v287 = vld [vmem:[%s1 + $0x808] sm:$0xff]
  %v288 = vld [vmem:[%s1 + $0x810] sm:$0xff]
  %v289 = vld [vmem:[%s1 + $0x818] sm:$0xff]
  %v290 = vld [vmem:[%s1 + $0x820] sm:$0xff]
  %v291 = vld [vmem:[%s1 + $0x828] sm:$0xff]
  %v292 = vld [vmem:[%s1 + $0x830] sm:$0xff]
  %v293 = vld [vmem:[%s1 + $0x838] sm:$0xff]
  %v294 = vld [vmem:[%s1 + $0x840] sm:$0xff]
  %v295 = vld [vmem:[%s1 + $0x848] sm:$0xff]
  %v296 = vld [vmem:[%s1 + $0x850] sm:$0xff]
  %v297 = vld [vmem:[%s1 + $0x858] sm:$0xff]
  %v298 = vld [vmem:[%s1 + $0x860] sm:$0xff]
  %v299 = vld [vmem:[%s1 + $0x868] sm:$0xff]
  %v300 = vld [vmem:[%s1 + $0x870] sm:$0xff]
  %v301 = vld [vmem:[%s1 + $0x878] sm:$0xff]
  %v302 = vld [vmem:[%s1 + $0x880] sm:$0xff]
  %v303 = vld [vmem:[%s1 + $0x888] sm:$0xff]
  %v304 = vld [vmem:[%s1 + $0x890] sm:$0xff]
  %v305 = vld [vmem:[%s1 + $0x898] sm:$0xff]
  %v306 = vld [vmem:[%s1 + $0x8a0] sm:$0xff]
  %v307 = vld [vmem:[%s1 + $0x8a8] sm:$0xff]
  %v308 = vld [vmem:[%s1 + $0x8b0] sm:$0xff]
  %v309 = vld [vmem:[%s1 + $0x8b8] sm:$0xff]
  %v310 = vld [vmem:[%s1 + $0x8c0] sm:$0xff]
  %v311 = vld [vmem:[%s1 + $0x8c8] sm:$0xff]
  %v312 = vld [vmem:[%s1 + $0x8d0] sm:$0xff]
  %v313 = vld [vmem:[%s1 + $0x8d8] sm:$0xff]
  %v314 = vld [vmem:[%s1 + $0x8e0] sm:$0xff]
  %v315 = vld [vmem:[%s1 + $0x8e8] sm:$0xff]
  %v316 = vld [vmem:[%s1 + $0x8f0] sm:$0xff]
  %v317 = vld [vmem:[%s1 + $0x8f8] sm:$0xff]
  %v318 = vld [vmem:[%s1 + $0x900] sm:$0xff]
  %v319 = vld [vmem:[%s1 + $0x908] sm:$0xff]
  %v320 = vld [vmem:[%s1 + $0x910] sm:$0xff]
  %v321 = vld [vmem:[%s1 + $0x918] sm:$0xff]
  %v322 = vld [vmem:[%s1 + $0x920] sm:$0xff]
  %v323 = vld [vmem:[%s1 + $0x928] sm:$0xff]
  %v324 = vld [vmem:[%s1 + $0x930] sm:$0xff]
  %v325 = vld [vmem:[%s1 + $0x938] sm:$0xff]
  %v326 = vld [vmem:[%s1 + $0x940] sm:$0xff]
  %v327 = vld [vmem:[%s1 + $0x948] sm:$0xff]
  %v328 = vld [vmem:[%s1 + $0x950] sm:$0xff]
  %v329 = vld [vmem:[%s1 + $0x958] sm:$0xff]
  %v330 = vld [vmem:[%s1 + $0x960] sm:$0xff]
  %v331 = vld [vmem:[%s1 + $0x968] sm:$0xff]
  %v332 = vld [vmem:[%s1 + $0x970] sm:$0xff]
  %v333 = vld [vmem:[%s1 + $0x978] sm:$0xff]
  %v334 = vld [vmem:[%s1 + $0x980] sm:$0xff]
  %v335 = vld [vmem:[%s1 + $0x988] sm:$0xff]
  %v336 = vld [vmem:[%s1 + $0x990] sm:$0xff]
  %v337 = vld [vmem:[%s1 + $0x998] sm:$0xff]
  %v338 = vld [vmem:[%s1 + $0x9a0] sm:$0xff]
  %v339 = vld [vmem:[%s1 + $0x9a8] sm:$0xff]
  %v340 = vld [vmem:[%s1 + $0x9b0] sm:$0xff]
  %v341 = vld [vmem:[%s1 + $0x9b8] sm:$0xff]
  %v342 = vld [vmem:[%s1 + $0x9c0] sm:$0xff]
  %v343 = vld [vmem:[%s1 + $0x9c8] sm:$0xff]
  %v344 = vld [vmem:[%s1 + $0x9d0] sm:$0xff]
  %v345 = vld [vmem:[%s1 + $0x9d8] sm:$0xff]
  %v346 = vld [vmem:[%s1 + $0x9e0] sm:$0xff]
  %v347 = vld [vmem:[%s1 + $0x9e8] sm:$0xff]
  %v348 = vld [vmem:[%s1 + $0x9f0] sm:$0xff]
  %v349 = vld [vmem:[%s1 + $0x9f8] sm:$0xff]
  %v350 = vld [vmem:[%s1 + $0xa00] sm:$0xff]
  %v351 = vld [vmem:[%s1 + $0xa08] sm:$0xff]
  %v352 = vld [vmem:[%s1 + $0xa10] sm:$0xff]
  %v353 = vld [vmem:[%s1 + $0xa18] sm:$0xff]
  %v354 = vld [vmem:[%s1 + $0xa20] sm:$0xff]
  %v355 = vld [vmem:[%s1 + $0xa28] sm:$0xff]
  %v356 = vld [vmem:[%s1 + $0xa30] sm:$0xff]
  %v357 = vld [vmem:[%s1 + $0xa38] sm:$0xff]
  %v358 = vld [vmem:[%s1 + $0xa40] sm:$0xff]
  %v359 = vld [vmem:[%s1 + $0xa48] sm:$0xff]
  %v360 = vld [vmem:[%s1 + $0xa50] sm:$0xff]
  %v361 = vld [vmem:[%s1 + $0xa58] sm:$0xff]
  %v362 = vld [vmem:[%s1 + $0xa60] sm:$0xff]
  %v363 = vld [vmem:[%s1 + $0xa68] sm:$0xff]
  %v364 = vld [vmem:[%s1 + $0xa70] sm:$0xff]
  %v365 = vld [vmem:[%s1 + $0xa78] sm:$0xff]
  %v366 = vld [vmem:[%s1 + $0xa80] sm:$0xff]
  %v367 = vld [vmem:[%s1 + $0xa88] sm:$0xff]
  %v368 = vld [vmem:[%s1 + $0xa90] sm:$0xff]
  %v369 = vld [vmem:[%s1 + $0xa98] sm:$0xff]
  %v370 = vld [vmem:[%s1 + $0xaa0] sm:$0xff]
  %v371 = vld [vmem:[%s1 + $0xaa8] sm:$0xff]
  %v372 = vld [vmem:[%s1 + $0xab0] sm:$0xff]
  %v373 = vld [vmem:[%s1 + $0xab8] sm:$0xff]
  %v374 = vld [vmem:[%s1 + $0xac0] sm:$0xff]
  %v375 = vld [vmem:[%s1 + $0xac8] sm:$0xff]
  %v376 = vld [vmem:[%s1 + $0xad0] sm:$0xff]
  %v377 = vld [vmem:[%s1 + $0xad8] sm:$0xff]
  %v378 = vld [vmem:[%s1 + $0xae0] sm:$0xff]
  %v379 = vld [vmem:[%s1 + $0xae8] sm:$0xff]
  %v380 = vld [vmem:[%s1 + $0xaf0] sm:$0xff]
  %v381 = vld [vmem:[%s1 + $0xaf8] sm:$0xff]
  %v382 = vld [vmem:[%s1 + $0xb00] sm:$0xff]
  %v383 = vld [vmem:[%s1 + $0xb08] sm:$0xff]
  %v384 = vld [vmem:[%s1 + $0xb10] sm:$0xff]
  %v385 = vld [vmem:[%s1 + $0xb18] sm:$0xff]
  %v386 = vld [vmem:[%s1 + $0xb20] sm:$0xff]
  %v387 = vld [vmem:[%s1 + $0xb28] sm:$0xff]
  %v388 = vld [vmem:[%s1 + $0xb30] sm:$0xff]
  %v389 = vld [vmem:[%s1 + $0xb38] sm:$0xff]
  %v390 = vld [vmem:[%s1 + $0xb40] sm:$0xff]
  %v391 = vld [vmem:[%s1 + $0xb48] sm:$0xff]
  %v392 = vld [vmem:[%s1 + $0xb50] sm:$0xff]
  %v393 = vld [vmem:[%s1 + $0xb58] sm:$0xff]
  %v394 = vld [vmem:[%s1 + $0xb60] sm:$0xff]
  %v395 = vld [vmem:[%s1 + $0xb68] sm:$0xff]
  %v396 = vld [vmem:[%s1 + $0xb70] sm:$0xff]
  %v397 = vld [vmem:[%s1 + $0xb78] sm:$0xff]
  %v398 = vld [vmem:[%s1 + $0xb80] sm:$0xff]
  %v399 = vld [vmem:[%s1 + $0xb88] sm:$0xff]
  %v400 = vld [vmem:[%s1 + $0xb90] sm:$0xff]
  %v401 = vld [vmem:[%s1 + $0xb98] sm:$0xff]
  %v402 = vld [vmem:[%s1 + $0xba0] sm:$0xff]
  %v403 = vld [vmem:[%s1 + $0xba8] sm:$0xff]
  %v404 = vld [vmem:[%s1 + $0xbb0] sm:$0xff]
  %v405 = vld [vmem:[%s1 + $0xbb8] sm:$0xff]
  %v406 = vld [vmem:[%s1 + $0xbc0] sm:$0xff]
  %v407 = vld [vmem:[%s1 + $0xbc8] sm:$0xff]
  %v408 = vld [vmem:[%s1 + $0xbd0] sm:$0xff]
  %v409 = vld [vmem:[%s1 + $0xbd8] sm:$0xff]
  %v410 = vld [vmem:[%s1 + $0xbe0] sm:$0xff]
  %v411 = vld [vmem:[%s1 + $0xbe8] sm:$0xff]
  %v412 = vld [vmem:[%s1 + $0xbf0] sm:$0xff]
  %v413 = vld [vmem:[%s1 + $0xbf8] sm:$0xff]
  %v414 = vld [vmem:[%s1 + $0xc00] sm:$0xff]
  %v415 = vld [vmem:[%s1 + $0xc08] sm:$0xff]
  %v416 = vld [vmem:[%s1 + $0xc10] sm:$0xff]
  %v417 = vld [vmem:[%s1 + $0xc18] sm:$0xff]
  %v418 = vld [vmem:[%s1 + $0xc20] sm:$0xff]
  %v419 = vld [vmem:[%s1 + $0xc28] sm:$0xff]
  %v420 = vld [vmem:[%s1 + $0xc30] sm:$0xff]
  %v421 = vld [vmem:[%s1 + $0xc38] sm:$0xff]
  %v422 = vld [vmem:[%s1 + $0xc40] sm:$0xff]
  %v423 = vld [vmem:[%s1 + $0xc48] sm:$0xff]
  %v424 = vld [vmem:[%s1 + $0xc50] sm:$0xff]
  %v425 = vld [vmem:[%s1 + $0xc58] sm:$0xff]
  %v426 = vld [vmem:[%s1 + $0xc60] sm:$0xff]
  %v427 = vld [vmem:[%s1 + $0xc68] sm:$0xff]
  %v428 = vld [vmem:[%s1 + $0xc70] sm:$0xff]
  %v429 = vld [vmem:[%s1 + $0xc78] sm:$0xff]
  %v430 = vld [vmem:[%s1 + $0xc80] sm:$0xff]
  %v431 = vld [vmem:[%s1 + $0xc88] sm:$0xff]
  %v432 = vld [vmem:[%s1 + $0xc90] sm:$0xff]
  %v433 = vld [vmem:[%s1 + $0xc98] sm:$0xff]
  %v434 = vld [vmem:[%s1 + $0xca0] sm:$0xff]
  %v435 = vld [vmem:[%s1 + $0xca8] sm:$0xff]
  %v436 = vld [vmem:[%s1 + $0xcb0] sm:$0xff]
  %v437 = vld [vmem:[%s1 + $0xcb8] sm:$0xff]
  %v438 = vld [vmem:[%s1 + $0xcc0] sm:$0xff]
  %v439 = vld [vmem:[%s1 + $0xcc8] sm:$0xff]
  %v440 = vld [vmem:[%s1 + $0xcd0] sm:$0xff]
  %v441 = vld [vmem:[%s1 + $0xcd8] sm:$0xff]
  %v442 = vld [vmem:[%s1 + $0xce0] sm:$0xff]
  %v443 = vld [vmem:[%s1 + $0xce8] sm:$0xff]
  %v444 = vld [vmem:[%s1 + $0xcf0] sm:$0xff]
  %v445 = vld [vmem:[%s1 + $0xcf8] sm:$0xff]
  %v446 = vld [vmem:[%s1 + $0xd00] sm:$0xff]
  %v447 = vld [vmem:[%s1 + $0xd08] sm:$0xff]
  %v448 = vld [vmem:[%s1 + $0xd10] sm:$0xff]
  %v449 = vld [vmem:[%s1 + $0xd18] sm:$0xff]
  %v450 = vld [vmem:[%s1 + $0xd20] sm:$0xff]
  %v451 = vld [vmem:[%s1 + $0xd28] sm:$0xff]
  %v452 = vld [vmem:[%s1 + $0xd30] sm:$0xff]
  %v453 = vld [vmem:[%s1 + $0xd38] sm:$0xff]
  %v454 = vld [vmem:[%s1 + $0xd40] sm:$0xff]
  %v455 = vld [vmem:[%s1 + $0xd48] sm:$0xff]
  %v456 = vld [vmem:[%s1 + $0xd50] sm:$0xff]
  %v457 = vld [vmem:[%s1 + $0xd58] sm:$0xff]
  %v458 = vld [vmem:[%s1 + $0xd60] sm:$0xff]
  %v459 = vld [vmem:[%s1 + $0xd68] sm:$0xff]
  %v460 = vld [vmem:[%s1 + $0xd70] sm:$0xff]
  %v461 = vld [vmem:[%s1 + $0xd78] sm:$0xff]
  %v462 = vld [vmem:[%s1 + $0xd80] sm:$0xff]
  %v463 = vld [vmem:[%s1 + $0xd88] sm:$0xff]
  %v464 = vld [vmem:[%s1 + $0xd90] sm:$0xff]
  %v465 = vld [vmem:[%s1 + $0xd98] sm:$0xff]
  %v466 = vld [vmem:[%s1 + $0xda0] sm:$0xff]
  %v467 = vld [vmem:[%s1 + $0xda8] sm:$0xff]
  %v468 = vld [vmem:[%s1 + $0xdb0] sm:$0xff]
  %v469 = vld [vmem:[%s1 + $0xdb8] sm:$0xff]
  %v470 = vld [vmem:[%s1 + $0xdc0] sm:$0xff]
  %v471 = vld [vmem:[%s1 + $0xdc8] sm:$0xff]
  %v472 = vld [vmem:[%s1 + $0xdd0] sm:$0xff]
  %v473 = vld [vmem:[%s1 + $0xdd8] sm:$0xff]
  %v474 = vld [vmem:[%s1 + $0xde0] sm:$0xff]
  %v475 = vld [vmem:[%s1 + $0xde8] sm:$0xff]
  %v476 = vld [vmem:[%s1 + $0xdf0] sm:$0xff]
  %v477 = vld [vmem:[%s1 + $0xdf8] sm:$0xff]
  %v478 = vld [vmem:[%s1 + $0xe00] sm:$0xff]
  %v479 = vld [vmem:[%s1 + $0xe08] sm:$0xff]
  %v480 = vld [vmem:[%s1 + $0xe10] sm:$0xff]
  %v481 = vld [vmem:[%s1 + $0xe18] sm:$0xff]
  %v482 = vld [vmem:[%s1 + $0xe20] sm:$0xff]
  %v483 = vld [vmem:[%s1 + $0xe28] sm:$0xff]
  %v484 = vld [vmem:[%s1 + $0xe30] sm:$0xff]
  %v485 = vld [vmem:[%s1 + $0xe38] sm:$0xff]
  %v486 = vld [vmem:[%s1 + $0xe40] sm:$0xff]
  %v487 = vld [vmem:[%s1 + $0xe48] sm:$0xff]
  %v488 = vld [vmem:[%s1 + $0xe50] sm:$0xff]
  %v489 = vld [vmem:[%s1 + $0xe58] sm:$0xff]
  %v490 = vld [vmem:[%s1 + $0xe60] sm:$0xff]
  %v491 = vld [vmem:[%s1 + $0xe68] sm:$0xff]
  %v492 = vld [vmem:[%s1 + $0xe70] sm:$0xff]
  %v493 = vld [vmem:[%s1 + $0xe78] sm:$0xff]
  %v494 = vld [vmem:[%s1 + $0xe80] sm:$0xff]
  %v495 = vld [vmem:[%s1 + $0xe88] sm:$0xff]
  %v496 = vld [vmem:[%s1 + $0xe90] sm:$0xff]
  %v497 = vld [vmem:[%s1 + $0xe98] sm:$0xff]
  %v498 = vld [vmem:[%s1 + $0xea0] sm:$0xff]
  %v499 = vld [vmem:[%s1 + $0xea8] sm:$0xff]
  %v500 = vld [vmem:[%s1 + $0xeb0] sm:$0xff]
  %v501 = vld [vmem:[%s1 + $0xeb8] sm:$0xff]
  %v502 = vld [vmem:[%s1 + $0xec0] sm:$0xff]
  %v503 = vld [vmem:[%s1 + $0xec8] sm:$0xff]
  %v504 = vld [vmem:[%s1 + $0xed0] sm:$0xff]
  %v505 = vld [vmem:[%s1 + $0xed8] sm:$0xff]
  %v506 = vld [vmem:[%s1 + $0xee0] sm:$0xff]
  %v507 = vld [vmem:[%s1 + $0xee8] sm:$0xff]
  %v508 = vld [vmem:[%s1 + $0xef0] sm:$0xff]
  %v509 = vld [vmem:[%s1 + $0xef8] sm:$0xff]
  %v510 = vld [vmem:[%s1 + $0xf00] sm:$0xff]
  %v511 = vld [vmem:[%s1 + $0xf08] sm:$0xff]
  %v512 = vld [vmem:[%s1 + $0xf10] sm:$0xff]
  %v513 = vld [vmem:[%s1 + $0xf18] sm:$0xff]
  %v514 = vld [vmem:[%s1 + $0xf20] sm:$0xff]
  %v515 = vld [vmem:[%s1 + $0xf28] sm:$0xff]
  %v516 = vld [vmem:[%s1 + $0xf30] sm:$0xff]
  %v517 = vld [vmem:[%s1 + $0xf38] sm:$0xff]
  %v518 = vld [vmem:[%s1 + $0xf40] sm:$0xff]
  %v519 = vld [vmem:[%s1 + $0xf48] sm:$0xff]
  %v520 = vld [vmem:[%s1 + $0xf50] sm:$0xff]
  %v521 = vld [vmem:[%s1 + $0xf58] sm:$0xff]
  %v522 = vld [vmem:[%s1 + $0xf60] sm:$0xff]
  %v523 = vld [vmem:[%s1 + $0xf68] sm:$0xff]
  %v524 = vld [vmem:[%s1 + $0xf70] sm:$0xff]
  %v525 = vld [vmem:[%s1 + $0xf78] sm:$0xff]
  %v526 = vld [vmem:[%s1 + $0xf80] sm:$0xff]
  %v527 = vld [vmem:[%s1 + $0xf88] sm:$0xff]
  %v528 = vld [vmem:[%s1 + $0xf90] sm:$0xff]
  %v529 = vld [vmem:[%s1 + $0xf98] sm:$0xff]
  %v530 = vld [vmem:[%s1 + $0xfa0] sm:$0xff]
  %v531 = vld [vmem:[%s1 + $0xfa8] sm:$0xff]
  %v532 = vld [vmem:[%s1 + $0xfb0] sm:$0xff]
  %v533 = vld [vmem:[%s1 + $0xfb8] sm:$0xff]
  %v534 = vld [vmem:[%s1 + $0xfc0] sm:$0xff]
  %v535 = vld [vmem:[%s1 + $0xfc8] sm:$0xff]
  %v536 = vld [vmem:[%s1 + $0xfd0] sm:$0xff]
  %v537 = vld [vmem:[%s1 + $0xfd8] sm:$0xff]
  %v538 = vld [vmem:[%s1 + $0xfe0] sm:$0xff]
  %v539 = vld [vmem:[%s1 + $0xfe8] sm:$0xff]
  %v540 = vld [vmem:[%s1 + $0xff0] sm:$0xff]
  %v541 = vld [vmem:[%s1 + $0xff8] sm:$0xff]
  %v542 = vld [vmem:[%s1 + $0x1000] sm:$0xff]
  %v543 = vld [vmem:[%s1 + $0x1008] sm:$0xff]
  %v544 = vld [vmem:[%s1 + $0x1010] sm:$0xff]
  %v545 = vld [vmem:[%s1 + $0x1018] sm:$0xff]
  %v546 = vld [vmem:[%s1 + $0x1020] sm:$0xff]
  %v547 = vld [vmem:[%s1 + $0x1028] sm:$0xff]
  %v548 = vld [vmem:[%s1 + $0x1030] sm:$0xff]
  %v549 = vld [vmem:[%s1 + $0x1038] sm:$0xff]
  %v550 = vld [vmem:[%s1 + $0x1040] sm:$0xff]
  %v551 = vld [vmem:[%s1 + $0x1048] sm:$0xff]
  %v552 = vld [vmem:[%s1 + $0x1050] sm:$0xff]
  %v553 = vld [vmem:[%s1 + $0x1058] sm:$0xff]
  %v554 = vld [vmem:[%s1 + $0x1060] sm:$0xff]
  %v555 = vld [vmem:[%s1 + $0x1068] sm:$0xff]
  %v556 = vld [vmem:[%s1 + $0x1070] sm:$0xff]
  %v557 = vld [vmem:[%s1 + $0x1078] sm:$0xff]
  %v558 = vld [vmem:[%s1 + $0x1080] sm:$0xff]
  %v559 = vld [vmem:[%s1 + $0x1088] sm:$0xff]
  %v560 = vld [vmem:[%s1 + $0x1090] sm:$0xff]
  %v561 = vld [vmem:[%s1 + $0x1098] sm:$0xff]
  %v562 = vld [vmem:[%s1 + $0x10a0] sm:$0xff]
  %v563 = vld [vmem:[%s1 + $0x10a8] sm:$0xff]
  %v564 = vld [vmem:[%s1 + $0x10b0] sm:$0xff]
  %v565 = vld [vmem:[%s1 + $0x10b8] sm:$0xff]
  %v566 = vld [vmem:[%s1 + $0x10c0] sm:$0xff]
  %v567 = vld [vmem:[%s1 + $0x10c8] sm:$0xff]
  %v568 = vld [vmem:[%s1 + $0x10d0] sm:$0xff]
  %v569 = vld [vmem:[%s1 + $0x10d8] sm:$0xff]
  %v570 = vld [vmem:[%s1 + $0x10e0] sm:$0xff]
  %v571 = vld [vmem:[%s1 + $0x10e8] sm:$0xff]
  %v572 = vld [vmem:[%s1 + $0x10f0] sm:$0xff]
  %v573 = vld [vmem:[%s1 + $0x10f8] sm:$0xff]
  %v574 = vld [vmem:[%s1 + $0x1100] sm:$0xff]
  %v575 = vld [vmem:[%s1 + $0x1108] sm:$0xff]
  %v576 = vld [vmem:[%s1 + $0x1110] sm:$0xff]
  %v577 = vld [vmem:[%s1 + $0x1118] sm:$0xff]
  %v578 = vld [vmem:[%s1 + $0x1120] sm:$0xff]
  %v579 = vld [vmem:[%s1 + $0x1128] sm:$0xff]
  %v580 = vld [vmem:[%s1 + $0x1130] sm:$0xff]
  %v581 = vld [vmem:[%s1 + $0x1138] sm:$0xff]
  %v582 = vld [vmem:[%s1 + $0x1140] sm:$0xff]
  %v583 = vld [vmem:[%s1 + $0x1148] sm:$0xff]
  %v584 = vld [vmem:[%s1 + $0x1150] sm:$0xff]
  %v585 = vld [vmem:[%s1 + $0x1158] sm:$0xff]
  %v586 = vld [vmem:[%s1 + $0x1160] sm:$0xff]
  %v587 = vld [vmem:[%s1 + $0x1168] sm:$0xff]
  %v588 = vld [vmem:[%s1 + $0x1170] sm:$0xff]
  %v589 = vld [vmem:[%s1 + $0x1178] sm:$0xff]
  %v590 = vld [vmem:[%s1 + $0x1180] sm:$0xff]
  %v591 = vld [vmem:[%s1 + $0x1188] sm:$0xff]
  %v592 = vld [vmem:[%s1 + $0x1190] sm:$0xff]
  %v593 = vld [vmem:[%s1 + $0x1198] sm:$0xff]
  %v594 = vld [vmem:[%s1 + $0x11a0] sm:$0xff]
  %v595 = vld [vmem:[%s1 + $0x11a8] sm:$0xff]
  %v596 = vld [vmem:[%s1 + $0x11b0] sm:$0xff]
  %v597 = vld [vmem:[%s1 + $0x11b8] sm:$0xff]
  %v598 = vld [vmem:[%s1 + $0x11c0] sm:$0xff]
  %v599 = vld [vmem:[%s1 + $0x11c8] sm:$0xff]
  %v600 = vld [vmem:[%s1 + $0x11d0] sm:$0xff]
  %v601 = vld [vmem:[%s1 + $0x11d8] sm:$0xff]
  %v602 = vld [vmem:[%s1 + $0x11e0] sm:$0xff]
  %v603 = vld [vmem:[%s1 + $0x11e8] sm:$0xff]
  %v604 = vld [vmem:[%s1 + $0x11f0] sm:$0xff]
  %v605 = vld [vmem:[%s1 + $0x11f8] sm:$0xff]
  %v606 = vld [vmem:[%s2] sm:$0xf]
  %v608 = vlaneseq
  %v609 = vshrl.u32 %v608, 7
  %v610 = vsub.s32 0, %v609
  %v611 = vrot.slane %v606, %v610
  %v612 = vlaneseq
  %v613 = vshrl.u32 %v612, 7
  %v614 = vsub.s32 1, %v613
  %v615 = vrot.slane %v606, %v614
  %v616 = vlaneseq
  %v617 = vshrl.u32 %v616, 7
  %v618 = vsub.s32 2, %v617
  %v619 = vrot.slane %v606, %v618
  %v620 = vlaneseq
  %v621 = vshrl.u32 %v620, 7
  %v622 = vsub.s32 3, %v621
  %v623 = vrot.slane %v606, %v622
  %v631 = vcombine.high %v27, %v27
  %v633 = vunpack.c.l.s4 1966171168
  %v634 = vunpack.c.0.s8 %v633
  %v635 = vlaneseq
  %v636 = vshrl.u32 %v635, 7
  %v637 = vsub.s32 %v634, %v636
  %v638 = vrot.slane %v27, %v637
  %v640 = vunpack.c.l.s4 1966171168
  %v641 = vunpack.c.0.s8 %v640
  %v642 = vlaneseq
  %v643 = vshrl.u32 %v642, 7
  %v644 = vsub.s32 %v641, %v643
  %v645 = vrot.slane %v631, %v644
  %v646 = vcombine.high %v638, %v638
  %v647 = vcombine.high %v645, %v645
  %v649 = vunpack.c.l.s4 1966171168
  %v650 = vunpack.c.0.s8 %v649
  %v651 = vlaneseq
  %v652 = vshrl.u32 %v651, 7
  %v653 = vsub.s32 %v650, %v652
  %v654 = vrot.slane %v638, %v653
  %v656 = vunpack.c.l.s4 1966171168
  %v657 = vunpack.c.0.s8 %v656
  %v658 = vlaneseq
  %v659 = vshrl.u32 %v658, 7
  %v660 = vsub.s32 %v657, %v659
  %v661 = vrot.slane %v645, %v660
  %v663 = vunpack.c.l.s4 1966171168
  %v664 = vunpack.c.0.s8 %v663
  %v665 = vlaneseq
  %v666 = vshrl.u32 %v665, 7
  %v667 = vsub.s32 %v664, %v666
  %v668 = vrot.slane %v646, %v667
  %v670 = vunpack.c.l.s4 1966171168
  %v671 = vunpack.c.0.s8 %v670
  %v672 = vlaneseq
  %v673 = vshrl.u32 %v672, 7
  %v674 = vsub.s32 %v671, %v673
  %v675 = vrot.slane %v647, %v674
  %v676 = vcombine.high %v654, %v654
  %v677 = vcombine.high %v661, %v661
  %v678 = vcombine.high %v668, %v668
  %v679 = vcombine.high %v675, %v675
  %v680 = vcombine.high %v28, %v28
  %v682 = vunpack.c.l.s4 1966171168
  %v683 = vunpack.c.0.s8 %v682
  %v684 = vlaneseq
  %v685 = vshrl.u32 %v684, 7
  %v686 = vsub.s32 %v683, %v685
  %v687 = vrot.slane %v28, %v686
  %v689 = vunpack.c.l.s4 1966171168
  %v690 = vunpack.c.0.s8 %v689
  %v691 = vlaneseq
  %v692 = vshrl.u32 %v691, 7
  %v693 = vsub.s32 %v690, %v692
  %v694 = vrot.slane %v680, %v693
  %v695 = vcombine.high %v687, %v687
  %v696 = vcombine.high %v694, %v694
  %v698 = vunpack.c.l.s4 1966171168
  %v699 = vunpack.c.0.s8 %v698
  %v700 = vlaneseq
  %v701 = vshrl.u32 %v700, 7
  %v702 = vsub.s32 %v699, %v701
  %v703 = vrot.slane %v687, %v702
  %v705 = vunpack.c.l.s4 1966171168
  %v706 = vunpack.c.0.s8 %v705
  %v707 = vlaneseq
  %v708 = vshrl.u32 %v707, 7
  %v709 = vsub.s32 %v706, %v708
  %v710 = vrot.slane %v694, %v709
  %v712 = vunpack.c.l.s4 1966171168
  %v713 = vunpack.c.0.s8 %v712
  %v714 = vlaneseq
  %v715 = vshrl.u32 %v714, 7
  %v716 = vsub.s32 %v713, %v715
  %v717 = vrot.slane %v695, %v716
  %v719 = vunpack.c.l.s4 1966171168
  %v720 = vunpack.c.0.s8 %v719
  %v721 = vlaneseq
  %v722 = vshrl.u32 %v721, 7
  %v723 = vsub.s32 %v720, %v722
  %v724 = vrot.slane %v696, %v723
  %v725 = vcombine.high %v703, %v703
  %v726 = vcombine.high %v710, %v710
  %v727 = vcombine.high %v717, %v717
  %v728 = vcombine.high %v724, %v724
  %v730 = vunpack.c.l.s4 1966171168
  %v731 = vunpack.c.0.s8 %v730
  %v732 = vlaneseq
  %v733 = vshrl.u32 %v732, 7
  %v734 = vsub.s32 %v731, %v733
  %v735 = vrot.slane %v29, %v734
  %v736 = vcombine.high %v735, %v735
  %v738 = vunpack.c.l.s4 1966171168
  %v739 = vunpack.c.0.s8 %v738
  %v740 = vlaneseq
  %v741 = vshrl.u32 %v740, 7
  %v742 = vsub.s32 %v739, %v741
  %v743 = vrot.slane %v735, %v742
  %v745 = vunpack.c.l.s4 1966171168
  %v746 = vunpack.c.0.s8 %v745
  %v747 = vlaneseq
  %v748 = vshrl.u32 %v747, 7
  %v749 = vsub.s32 %v746, %v748
  %v750 = vrot.slane %v736, %v749
  %v1345 = vunpack.c.l.b16 %v30
  %v1346 = vunpack.c.h.b16 %v30
  %v1347 = vunpack.c.l.b16 %v31
  %v1348 = vunpack.c.h.b16 %v31
  %v1349 = vunpack.c.l.b16 %v32
  %v1350 = vunpack.c.h.b16 %v32
  %v1351 = vunpack.c.l.b16 %v33
  %v1352 = vunpack.c.h.b16 %v33
  %v1353 = vunpack.c.l.b16 %v34
  %v1354 = vunpack.c.h.b16 %v34
  %v1355 = vunpack.c.l.b16 %v35
  %v1356 = vunpack.c.h.b16 %v35
  %v1357 = vunpack.c.l.b16 %v36
  %v1358 = vunpack.c.h.b16 %v36
  %v1359 = vunpack.c.l.b16 %v37
  %v1360 = vunpack.c.h.b16 %v37
  %v1361 = vunpack.c.l.b16 %v38
  %v1362 = vunpack.c.h.b16 %v38
  %v1363 = vunpack.c.l.b16 %v39
  %v1364 = vunpack.c.h.b16 %v39
  %v1365 = vunpack.c.l.b16 %v40
  %v1366 = vunpack.c.h.b16 %v40
  %v1367 = vunpack.c.l.b16 %v41
  %v1368 = vunpack.c.h.b16 %v41
  %v1369 = vunpack.c.l.b16 %v42
  %v1370 = vunpack.c.h.b16 %v42
  %v1371 = vunpack.c.l.b16 %v43
  %v1372 = vunpack.c.h.b16 %v43
  %v1373 = vunpack.c.l.b16 %v44
  %v1374 = vunpack.c.h.b16 %v44
  %v1375 = vunpack.c.l.b16 %v45
  %v1376 = vunpack.c.h.b16 %v45
  %v1377 = vunpack.c.l.b16 %v46
  %v1378 = vunpack.c.h.b16 %v46
  %v1379 = vunpack.c.l.b16 %v47
  %v1380 = vunpack.c.h.b16 %v47
  %v1381 = vunpack.c.l.b16 %v48
  %v1382 = vunpack.c.h.b16 %v48
  %v1383 = vunpack.c.l.b16 %v49
  %v1384 = vunpack.c.h.b16 %v49
  %v1385 = vunpack.c.l.b16 %v50
  %v1386 = vunpack.c.h.b16 %v50
  %v1387 = vunpack.c.l.b16 %v51
  %v1388 = vunpack.c.h.b16 %v51
  %v1389 = vunpack.c.l.b16 %v52
  %v1390 = vunpack.c.h.b16 %v52
  %v1391 = vunpack.c.l.b16 %v53
  %v1392 = vunpack.c.h.b16 %v53
  %v1393 = vunpack.c.l.b16 %v54
  %v1394 = vunpack.c.h.b16 %v54
  %v1395 = vunpack.c.l.b16 %v55
  %v1396 = vunpack.c.h.b16 %v55
  %v1397 = vunpack.c.l.b16 %v56
  %v1398 = vunpack.c.h.b16 %v56
  %v1399 = vunpack.c.l.b16 %v57
  %v1400 = vunpack.c.h.b16 %v57
  %v1401 = vunpack.c.l.b16 %v58
  %v1402 = vunpack.c.h.b16 %v58
  %v1403 = vunpack.c.l.b16 %v59
  %v1404 = vunpack.c.h.b16 %v59
  %v1405 = vunpack.c.l.b16 %v60
  %v1406 = vunpack.c.h.b16 %v60
  %v1407 = vunpack.c.l.b16 %v61
  %v1408 = vunpack.c.h.b16 %v61
  %v1409 = vunpack.c.l.b16 %v62
  %v1410 = vunpack.c.h.b16 %v62
  %v1411 = vunpack.c.l.b16 %v63
  %v1412 = vunpack.c.h.b16 %v63
  %v1413 = vunpack.c.l.b16 %v64
  %v1414 = vunpack.c.h.b16 %v64
  %v1415 = vunpack.c.l.b16 %v65
  %v1416 = vunpack.c.h.b16 %v65
  %v1417 = vunpack.c.l.b16 %v66
  %v1418 = vunpack.c.h.b16 %v66
  %v1419 = vunpack.c.l.b16 %v67
  %v1420 = vunpack.c.h.b16 %v67
  %v1421 = vunpack.c.l.b16 %v68
  %v1422 = vunpack.c.h.b16 %v68
  %v1423 = vunpack.c.l.b16 %v69
  %v1424 = vunpack.c.h.b16 %v69
  %v1425 = vunpack.c.l.b16 %v70
  %v1426 = vunpack.c.h.b16 %v70
  %v1427 = vunpack.c.l.b16 %v71
  %v1428 = vunpack.c.h.b16 %v71
  %v1429 = vunpack.c.l.b16 %v72
  %v1430 = vunpack.c.h.b16 %v72
  %v1431 = vunpack.c.l.b16 %v73
  %v1432 = vunpack.c.h.b16 %v73
  %v1433 = vunpack.c.l.b16 %v74
  %v1434 = vunpack.c.h.b16 %v74
  %v1435 = vunpack.c.l.b16 %v75
  %v1436 = vunpack.c.h.b16 %v75
  %v1437 = vunpack.c.l.b16 %v76
  %v1438 = vunpack.c.h.b16 %v76
  %v1439 = vunpack.c.l.b16 %v77
  %v1440 = vunpack.c.h.b16 %v77
  %v1441 = vunpack.c.l.b16 %v78
  %v1442 = vunpack.c.h.b16 %v78
  %v1443 = vunpack.c.l.b16 %v79
  %v1444 = vunpack.c.h.b16 %v79
  %v1445 = vunpack.c.l.b16 %v80
  %v1446 = vunpack.c.h.b16 %v80
  %v1447 = vunpack.c.l.b16 %v81
  %v1448 = vunpack.c.h.b16 %v81
  %v1449 = vunpack.c.l.b16 %v82
  %v1450 = vunpack.c.h.b16 %v82
  %v1451 = vunpack.c.l.b16 %v83
  %v1452 = vunpack.c.h.b16 %v83
  %v1453 = vunpack.c.l.b16 %v84
  %v1454 = vunpack.c.h.b16 %v84
  %v1455 = vunpack.c.l.b16 %v85
  %v1456 = vunpack.c.h.b16 %v85
  %v1457 = vunpack.c.l.b16 %v86
  %v1458 = vunpack.c.h.b16 %v86
  %v1459 = vunpack.c.l.b16 %v87
  %v1460 = vunpack.c.h.b16 %v87
  %v1461 = vunpack.c.l.b16 %v88
  %v1462 = vunpack.c.h.b16 %v88
  %v1463 = vunpack.c.l.b16 %v89
  %v1464 = vunpack.c.h.b16 %v89
  %v1465 = vunpack.c.l.b16 %v90
  %v1466 = vunpack.c.h.b16 %v90
  %v1467 = vunpack.c.l.b16 %v91
  %v1468 = vunpack.c.h.b16 %v91
  %v1469 = vunpack.c.l.b16 %v92
  %v1470 = vunpack.c.h.b16 %v92
  %v1471 = vunpack.c.l.b16 %v93
  %v1472 = vunpack.c.h.b16 %v93
  %v1473 = vunpack.c.l.b16 %v94
  %v1474 = vunpack.c.h.b16 %v94
  %v1475 = vunpack.c.l.b16 %v95
  %v1476 = vunpack.c.h.b16 %v95
  %v1477 = vunpack.c.l.b16 %v96
  %v1478 = vunpack.c.h.b16 %v96
  %v1479 = vunpack.c.l.b16 %v97
  %v1480 = vunpack.c.h.b16 %v97
  %v1481 = vunpack.c.l.b16 %v98
  %v1482 = vunpack.c.h.b16 %v98
  %v1483 = vunpack.c.l.b16 %v99
  %v1484 = vunpack.c.h.b16 %v99
  %v1485 = vunpack.c.l.b16 %v100
  %v1486 = vunpack.c.h.b16 %v100
  %v1487 = vunpack.c.l.b16 %v101
  %v1488 = vunpack.c.h.b16 %v101
  %v1489 = vunpack.c.l.b16 %v102
  %v1490 = vunpack.c.h.b16 %v102
  %v1491 = vunpack.c.l.b16 %v103
  %v1492 = vunpack.c.h.b16 %v103
  %v1493 = vunpack.c.l.b16 %v104
  %v1494 = vunpack.c.h.b16 %v104
  %v1495 = vunpack.c.l.b16 %v105
  %v1496 = vunpack.c.h.b16 %v105
  %v1497 = vunpack.c.l.b16 %v106
  %v1498 = vunpack.c.h.b16 %v106
  %v1499 = vunpack.c.l.b16 %v107
  %v1500 = vunpack.c.h.b16 %v107
  %v1501 = vunpack.c.l.b16 %v108
  %v1502 = vunpack.c.h.b16 %v108
  %v1503 = vunpack.c.l.b16 %v109
  %v1504 = vunpack.c.h.b16 %v109
  %v1505 = vunpack.c.l.b16 %v110
  %v1506 = vunpack.c.h.b16 %v110
  %v1507 = vunpack.c.l.b16 %v111
  %v1508 = vunpack.c.h.b16 %v111
  %v1509 = vunpack.c.l.b16 %v112
  %v1510 = vunpack.c.h.b16 %v112
  %v1511 = vunpack.c.l.b16 %v113
  %v1512 = vunpack.c.h.b16 %v113
  %v1513 = vunpack.c.l.b16 %v114
  %v1514 = vunpack.c.h.b16 %v114
  %v1515 = vunpack.c.l.b16 %v115
  %v1516 = vunpack.c.h.b16 %v115
  %v1517 = vunpack.c.l.b16 %v116
  %v1518 = vunpack.c.h.b16 %v116
  %v1519 = vunpack.c.l.b16 %v117
  %v1520 = vunpack.c.h.b16 %v117
  %v1521 = vunpack.c.l.b16 %v118
  %v1522 = vunpack.c.h.b16 %v118
  %v1523 = vunpack.c.l.b16 %v119
  %v1524 = vunpack.c.h.b16 %v119
  %v1525 = vunpack.c.l.b16 %v120
  %v1526 = vunpack.c.h.b16 %v120
  %v1527 = vunpack.c.l.b16 %v121
  %v1528 = vunpack.c.h.b16 %v121
  %v1529 = vunpack.c.l.b16 %v122
  %v1530 = vunpack.c.h.b16 %v122
  %v1531 = vunpack.c.l.b16 %v123
  %v1532 = vunpack.c.h.b16 %v123
  %v1533 = vunpack.c.l.b16 %v124
  %v1534 = vunpack.c.h.b16 %v124
  %v1535 = vunpack.c.l.b16 %v125
  %v1536 = vunpack.c.h.b16 %v125
  %v1537 = vunpack.c.l.b16 %v126
  %v1538 = vunpack.c.h.b16 %v126
  %v1539 = vunpack.c.l.b16 %v127
  %v1540 = vunpack.c.h.b16 %v127
  %v1541 = vunpack.c.l.b16 %v128
  %v1542 = vunpack.c.h.b16 %v128
  %v1543 = vunpack.c.l.b16 %v129
  %v1544 = vunpack.c.h.b16 %v129
  %v1545 = vunpack.c.l.b16 %v130
  %v1546 = vunpack.c.h.b16 %v130
  %v1547 = vunpack.c.l.b16 %v131
  %v1548 = vunpack.c.h.b16 %v131
  %v1549 = vunpack.c.l.b16 %v132
  %v1550 = vunpack.c.h.b16 %v132
  %v1551 = vunpack.c.l.b16 %v133
  %v1552 = vunpack.c.h.b16 %v133
  %v1553 = vunpack.c.l.b16 %v134
  %v1554 = vunpack.c.h.b16 %v134
  %v1555 = vunpack.c.l.b16 %v135
  %v1556 = vunpack.c.h.b16 %v135
  %v1557 = vunpack.c.l.b16 %v136
  %v1558 = vunpack.c.h.b16 %v136
  %v1559 = vunpack.c.l.b16 %v137
  %v1560 = vunpack.c.h.b16 %v137
  %v1561 = vunpack.c.l.b16 %v138
  %v1562 = vunpack.c.h.b16 %v138
  %v1563 = vunpack.c.l.b16 %v139
  %v1564 = vunpack.c.h.b16 %v139
  %v1565 = vunpack.c.l.b16 %v140
  %v1566 = vunpack.c.h.b16 %v140
  %v1567 = vunpack.c.l.b16 %v141
  %v1568 = vunpack.c.h.b16 %v141
  %v1569 = vunpack.c.l.b16 %v142
  %v1570 = vunpack.c.h.b16 %v142
  %v1571 = vunpack.c.l.b16 %v143
  %v1572 = vunpack.c.h.b16 %v143
  %v1573 = vunpack.c.l.b16 %v144
  %v1574 = vunpack.c.h.b16 %v144
  %v1575 = vunpack.c.l.b16 %v145
  %v1576 = vunpack.c.h.b16 %v145
  %v1577 = vunpack.c.l.b16 %v146
  %v1578 = vunpack.c.h.b16 %v146
  %v1579 = vunpack.c.l.b16 %v147
  %v1580 = vunpack.c.h.b16 %v147
  %v1581 = vunpack.c.l.b16 %v148
  %v1582 = vunpack.c.h.b16 %v148
  %v1583 = vunpack.c.l.b16 %v149
  %v1584 = vunpack.c.h.b16 %v149
  %v1585 = vunpack.c.l.b16 %v150
  %v1586 = vunpack.c.h.b16 %v150
  %v1587 = vunpack.c.l.b16 %v151
  %v1588 = vunpack.c.h.b16 %v151
  %v1589 = vunpack.c.l.b16 %v152
  %v1590 = vunpack.c.h.b16 %v152
  %v1591 = vunpack.c.l.b16 %v153
  %v1592 = vunpack.c.h.b16 %v153
  %v1593 = vunpack.c.l.b16 %v154
  %v1594 = vunpack.c.h.b16 %v154
  %v1595 = vunpack.c.l.b16 %v155
  %v1596 = vunpack.c.h.b16 %v155
  %v1597 = vunpack.c.l.b16 %v156
  %v1598 = vunpack.c.h.b16 %v156
  %v1599 = vunpack.c.l.b16 %v157
  %v1600 = vunpack.c.h.b16 %v157
  %v1601 = vunpack.c.l.b16 %v158
  %v1602 = vunpack.c.h.b16 %v158
  %v1603 = vunpack.c.l.b16 %v159
  %v1604 = vunpack.c.h.b16 %v159
  %v1605 = vunpack.c.l.b16 %v160
  %v1606 = vunpack.c.h.b16 %v160
  %v1607 = vunpack.c.l.b16 %v161
  %v1608 = vunpack.c.h.b16 %v161
  %v1609 = vunpack.c.l.b16 %v162
  %v1610 = vunpack.c.h.b16 %v162
  %v1611 = vunpack.c.l.b16 %v163
  %v1612 = vunpack.c.h.b16 %v163
  %v1613 = vunpack.c.l.b16 %v164
  %v1614 = vunpack.c.h.b16 %v164
  %v1615 = vunpack.c.l.b16 %v165
  %v1616 = vunpack.c.h.b16 %v165
  %v1617 = vunpack.c.l.b16 %v166
  %v1618 = vunpack.c.h.b16 %v166
  %v1619 = vunpack.c.l.b16 %v167
  %v1620 = vunpack.c.h.b16 %v167
  %v1621 = vunpack.c.l.b16 %v168
  %v1622 = vunpack.c.h.b16 %v168
  %v1623 = vunpack.c.l.b16 %v169
  %v1624 = vunpack.c.h.b16 %v169
  %v1625 = vunpack.c.l.b16 %v170
  %v1626 = vunpack.c.h.b16 %v170
  %v1627 = vunpack.c.l.b16 %v171
  %v1628 = vunpack.c.h.b16 %v171
  %v1629 = vunpack.c.l.b16 %v172
  %v1630 = vunpack.c.h.b16 %v172
  %v1631 = vunpack.c.l.b16 %v173
  %v1632 = vunpack.c.h.b16 %v173
  %v1633 = vunpack.c.l.b16 %v174
  %v1634 = vunpack.c.h.b16 %v174
  %v1635 = vunpack.c.l.b16 %v175
  %v1636 = vunpack.c.h.b16 %v175
  %v1637 = vunpack.c.l.b16 %v176
  %v1638 = vunpack.c.h.b16 %v176
  %v1639 = vunpack.c.l.b16 %v177
  %v1640 = vunpack.c.h.b16 %v177
  %v1641 = vunpack.c.l.b16 %v178
  %v1642 = vunpack.c.h.b16 %v178
  %v1643 = vunpack.c.l.b16 %v179
  %v1644 = vunpack.c.h.b16 %v179
  %v1645 = vunpack.c.l.b16 %v180
  %v1646 = vunpack.c.h.b16 %v180
  %v1647 = vunpack.c.l.b16 %v181
  %v1648 = vunpack.c.h.b16 %v181
  %v1649 = vunpack.c.l.b16 %v182
  %v1650 = vunpack.c.h.b16 %v182
  %v1651 = vunpack.c.l.b16 %v183
  %v1652 = vunpack.c.h.b16 %v183
  %v1653 = vunpack.c.l.b16 %v184
  %v1654 = vunpack.c.h.b16 %v184
  %v1655 = vunpack.c.l.b16 %v185
  %v1656 = vunpack.c.h.b16 %v185
  %v1657 = vunpack.c.l.b16 %v186
  %v1658 = vunpack.c.h.b16 %v186
  %v1659 = vunpack.c.l.b16 %v187
  %v1660 = vunpack.c.h.b16 %v187
  %v1661 = vunpack.c.l.b16 %v188
  %v1662 = vunpack.c.h.b16 %v188
  %v1663 = vunpack.c.l.b16 %v189
  %v1664 = vunpack.c.h.b16 %v189
  %v1665 = vunpack.c.l.b16 %v190
  %v1666 = vunpack.c.h.b16 %v190
  %v1667 = vunpack.c.l.b16 %v191
  %v1668 = vunpack.c.h.b16 %v191
  %v1669 = vunpack.c.l.b16 %v192
  %v1670 = vunpack.c.h.b16 %v192
  %v1671 = vunpack.c.l.b16 %v193
  %v1672 = vunpack.c.h.b16 %v193
  %v1673 = vunpack.c.l.b16 %v194
  %v1674 = vunpack.c.h.b16 %v194
  %v1675 = vunpack.c.l.b16 %v195
  %v1676 = vunpack.c.h.b16 %v195
  %v1677 = vunpack.c.l.b16 %v196
  %v1678 = vunpack.c.h.b16 %v196
  %v1679 = vunpack.c.l.b16 %v197
  %v1680 = vunpack.c.h.b16 %v197
  %v1681 = vunpack.c.l.b16 %v198
  %v1682 = vunpack.c.h.b16 %v198
  %v1683 = vunpack.c.l.b16 %v199
  %v1684 = vunpack.c.h.b16 %v199
  %v1685 = vunpack.c.l.b16 %v200
  %v1686 = vunpack.c.h.b16 %v200
  %v1687 = vunpack.c.l.b16 %v201
  %v1688 = vunpack.c.h.b16 %v201
  %v1689 = vunpack.c.l.b16 %v202
  %v1690 = vunpack.c.h.b16 %v202
  %v1691 = vunpack.c.l.b16 %v203
  %v1692 = vunpack.c.h.b16 %v203
  %v1693 = vunpack.c.l.b16 %v204
  %v1694 = vunpack.c.h.b16 %v204
  %v1695 = vunpack.c.l.b16 %v205
  %v1696 = vunpack.c.h.b16 %v205
  %v1697 = vunpack.c.l.b16 %v206
  %v1698 = vunpack.c.h.b16 %v206
  %v1699 = vunpack.c.l.b16 %v207
  %v1700 = vunpack.c.h.b16 %v207
  %v1701 = vunpack.c.l.b16 %v208
  %v1702 = vunpack.c.h.b16 %v208
  %v1703 = vunpack.c.l.b16 %v209
  %v1704 = vunpack.c.h.b16 %v209
  %v1705 = vunpack.c.l.b16 %v210
  %v1706 = vunpack.c.h.b16 %v210
  %v1707 = vunpack.c.l.b16 %v211
  %v1708 = vunpack.c.h.b16 %v211
  %v1709 = vunpack.c.l.b16 %v212
  %v1710 = vunpack.c.h.b16 %v212
  %v1711 = vunpack.c.l.b16 %v213
  %v1712 = vunpack.c.h.b16 %v213
  %v1713 = vunpack.c.l.b16 %v214
  %v1714 = vunpack.c.h.b16 %v214
  %v1715 = vunpack.c.l.b16 %v215
  %v1716 = vunpack.c.h.b16 %v215
  %v1717 = vunpack.c.l.b16 %v216
  %v1718 = vunpack.c.h.b16 %v216
  %v1719 = vunpack.c.l.b16 %v217
  %v1720 = vunpack.c.h.b16 %v217
  %v1721 = vunpack.c.l.b16 %v218
  %v1722 = vunpack.c.h.b16 %v218
  %v1723 = vunpack.c.l.b16 %v219
  %v1724 = vunpack.c.h.b16 %v219
  %v1725 = vunpack.c.l.b16 %v220
  %v1726 = vunpack.c.h.b16 %v220
  %v1727 = vunpack.c.l.b16 %v221
  %v1728 = vunpack.c.h.b16 %v221
  %v1729 = vunpack.c.l.b16 %v222
  %v1730 = vunpack.c.h.b16 %v222
  %v1731 = vunpack.c.l.b16 %v223
  %v1732 = vunpack.c.h.b16 %v223
  %v1733 = vunpack.c.l.b16 %v224
  %v1734 = vunpack.c.h.b16 %v224
  %v1735 = vunpack.c.l.b16 %v225
  %v1736 = vunpack.c.h.b16 %v225
  %v1737 = vunpack.c.l.b16 %v226
  %v1738 = vunpack.c.h.b16 %v226
  %v1739 = vunpack.c.l.b16 %v227
  %v1740 = vunpack.c.h.b16 %v227
  %v1741 = vunpack.c.l.b16 %v228
  %v1742 = vunpack.c.h.b16 %v228
  %v1743 = vunpack.c.l.b16 %v229
  %v1744 = vunpack.c.h.b16 %v229
  %v1745 = vunpack.c.l.b16 %v230
  %v1746 = vunpack.c.h.b16 %v230
  %v1747 = vunpack.c.l.b16 %v231
  %v1748 = vunpack.c.h.b16 %v231
  %v1749 = vunpack.c.l.b16 %v232
  %v1750 = vunpack.c.h.b16 %v232
  %v1751 = vunpack.c.l.b16 %v233
  %v1752 = vunpack.c.h.b16 %v233
  %v1753 = vunpack.c.l.b16 %v234
  %v1754 = vunpack.c.h.b16 %v234
  %v1755 = vunpack.c.l.b16 %v235
  %v1756 = vunpack.c.h.b16 %v235
  %v1757 = vunpack.c.l.b16 %v236
  %v1758 = vunpack.c.h.b16 %v236
  %v1759 = vunpack.c.l.b16 %v237
  %v1760 = vunpack.c.h.b16 %v237
  %v1761 = vunpack.c.l.b16 %v238
  %v1762 = vunpack.c.h.b16 %v238
  %v1763 = vunpack.c.l.b16 %v239
  %v1764 = vunpack.c.h.b16 %v239
  %v1765 = vunpack.c.l.b16 %v240
  %v1766 = vunpack.c.h.b16 %v240
  %v1767 = vunpack.c.l.b16 %v241
  %v1768 = vunpack.c.h.b16 %v241
  %v1769 = vunpack.c.l.b16 %v242
  %v1770 = vunpack.c.h.b16 %v242
  %v1771 = vunpack.c.l.b16 %v243
  %v1772 = vunpack.c.h.b16 %v243
  %v1773 = vunpack.c.l.b16 %v244
  %v1774 = vunpack.c.h.b16 %v244
  %v1775 = vunpack.c.l.b16 %v245
  %v1776 = vunpack.c.h.b16 %v245
  %v1777 = vunpack.c.l.b16 %v246
  %v1778 = vunpack.c.h.b16 %v246
  %v1779 = vunpack.c.l.b16 %v247
  %v1780 = vunpack.c.h.b16 %v247
  %v1781 = vunpack.c.l.b16 %v248
  %v1782 = vunpack.c.h.b16 %v248
  %v1783 = vunpack.c.l.b16 %v249
  %v1784 = vunpack.c.h.b16 %v249
  %v1785 = vunpack.c.l.b16 %v250
  %v1786 = vunpack.c.h.b16 %v250
  %v1787 = vunpack.c.l.b16 %v251
  %v1788 = vunpack.c.h.b16 %v251
  %v1789 = vunpack.c.l.b16 %v252
  %v1790 = vunpack.c.h.b16 %v252
  %v1791 = vunpack.c.l.b16 %v253
  %v1792 = vunpack.c.h.b16 %v253
  %v1793 = vunpack.c.l.b16 %v254
  %v1794 = vunpack.c.h.b16 %v254
  %v1795 = vunpack.c.l.b16 %v255
  %v1796 = vunpack.c.h.b16 %v255
  %v1797 = vunpack.c.l.b16 %v256
  %v1798 = vunpack.c.h.b16 %v256
  %v1799 = vunpack.c.l.b16 %v257
  %v1800 = vunpack.c.h.b16 %v257
  %v1801 = vunpack.c.l.b16 %v258
  %v1802 = vunpack.c.h.b16 %v258
  %v1803 = vunpack.c.l.b16 %v259
  %v1804 = vunpack.c.h.b16 %v259
  %v1805 = vunpack.c.l.b16 %v260
  %v1806 = vunpack.c.h.b16 %v260
  %v1807 = vunpack.c.l.b16 %v261
  %v1808 = vunpack.c.h.b16 %v261
  %v1809 = vunpack.c.l.b16 %v262
  %v1810 = vunpack.c.h.b16 %v262
  %v1811 = vunpack.c.l.b16 %v263
  %v1812 = vunpack.c.h.b16 %v263
  %v1813 = vunpack.c.l.b16 %v264
  %v1814 = vunpack.c.h.b16 %v264
  %v1815 = vunpack.c.l.b16 %v265
  %v1816 = vunpack.c.h.b16 %v265
  %v1817 = vunpack.c.l.b16 %v266
  %v1818 = vunpack.c.h.b16 %v266
  %v1819 = vunpack.c.l.b16 %v267
  %v1820 = vunpack.c.h.b16 %v267
  %v1821 = vunpack.c.l.b16 %v268
  %v1822 = vunpack.c.h.b16 %v268
  %v1823 = vunpack.c.l.b16 %v269
  %v1824 = vunpack.c.h.b16 %v269
  %v1825 = vunpack.c.l.b16 %v270
  %v1826 = vunpack.c.h.b16 %v270
  %v1827 = vunpack.c.l.b16 %v271
  %v1828 = vunpack.c.h.b16 %v271
  %v1829 = vunpack.c.l.b16 %v272
  %v1830 = vunpack.c.h.b16 %v272
  %v1831 = vunpack.c.l.b16 %v273
  %v1832 = vunpack.c.h.b16 %v273
  %v1833 = vunpack.c.l.b16 %v274
  %v1834 = vunpack.c.h.b16 %v274
  %v1835 = vunpack.c.l.b16 %v275
  %v1836 = vunpack.c.h.b16 %v275
  %v1837 = vunpack.c.l.b16 %v276
  %v1838 = vunpack.c.h.b16 %v276
  %v1839 = vunpack.c.l.b16 %v277
  %v1840 = vunpack.c.h.b16 %v277
  %v1841 = vunpack.c.l.b16 %v278
  %v1842 = vunpack.c.h.b16 %v278
  %v1843 = vunpack.c.l.b16 %v279
  %v1844 = vunpack.c.h.b16 %v279
  %v1845 = vunpack.c.l.b16 %v280
  %v1846 = vunpack.c.h.b16 %v280
  %v1847 = vunpack.c.l.b16 %v281
  %v1848 = vunpack.c.h.b16 %v281
  %v1849 = vunpack.c.l.b16 %v282
  %v1850 = vunpack.c.h.b16 %v282
  %v1851 = vunpack.c.l.b16 %v283
  %v1852 = vunpack.c.h.b16 %v283
  %v1853 = vunpack.c.l.b16 %v284
  %v1854 = vunpack.c.h.b16 %v284
  %v1855 = vunpack.c.l.b16 %v285
  %v1856 = vunpack.c.h.b16 %v285
  %v1857 = vunpack.c.l.b16 %v286
  %v1858 = vunpack.c.h.b16 %v286
  %v1859 = vunpack.c.l.b16 %v287
  %v1860 = vunpack.c.h.b16 %v287
  %v1861 = vunpack.c.l.b16 %v288
  %v1862 = vunpack.c.h.b16 %v288
  %v1863 = vunpack.c.l.b16 %v289
  %v1864 = vunpack.c.h.b16 %v289
  %v1865 = vunpack.c.l.b16 %v290
  %v1866 = vunpack.c.h.b16 %v290
  %v1867 = vunpack.c.l.b16 %v291
  %v1868 = vunpack.c.h.b16 %v291
  %v1869 = vunpack.c.l.b16 %v292
  %v1870 = vunpack.c.h.b16 %v292
  %v1871 = vunpack.c.l.b16 %v293
  %v1872 = vunpack.c.h.b16 %v293
  %v1873 = vunpack.c.l.b16 %v294
  %v1874 = vunpack.c.h.b16 %v294
  %v1875 = vunpack.c.l.b16 %v295
  %v1876 = vunpack.c.h.b16 %v295
  %v1877 = vunpack.c.l.b16 %v296
  %v1878 = vunpack.c.h.b16 %v296
  %v1879 = vunpack.c.l.b16 %v297
  %v1880 = vunpack.c.h.b16 %v297
  %v1881 = vunpack.c.l.b16 %v298
  %v1882 = vunpack.c.h.b16 %v298
  %v1883 = vunpack.c.l.b16 %v299
  %v1884 = vunpack.c.h.b16 %v299
  %v1885 = vunpack.c.l.b16 %v300
  %v1886 = vunpack.c.h.b16 %v300
  %v1887 = vunpack.c.l.b16 %v301
  %v1888 = vunpack.c.h.b16 %v301
  %v1889 = vunpack.c.l.b16 %v302
  %v1890 = vunpack.c.h.b16 %v302
  %v1891 = vunpack.c.l.b16 %v303
  %v1892 = vunpack.c.h.b16 %v303
  %v1893 = vunpack.c.l.b16 %v304
  %v1894 = vunpack.c.h.b16 %v304
  %v1895 = vunpack.c.l.b16 %v305
  %v1896 = vunpack.c.h.b16 %v305
  %v1897 = vunpack.c.l.b16 %v306
  %v1898 = vunpack.c.h.b16 %v306
  %v1899 = vunpack.c.l.b16 %v307
  %v1900 = vunpack.c.h.b16 %v307
  %v1901 = vunpack.c.l.b16 %v308
  %v1902 = vunpack.c.h.b16 %v308
  %v1903 = vunpack.c.l.b16 %v309
  %v1904 = vunpack.c.h.b16 %v309
  %v1905 = vunpack.c.l.b16 %v310
  %v1906 = vunpack.c.h.b16 %v310
  %v1907 = vunpack.c.l.b16 %v311
  %v1908 = vunpack.c.h.b16 %v311
  %v1909 = vunpack.c.l.b16 %v312
  %v1910 = vunpack.c.h.b16 %v312
  %v1911 = vunpack.c.l.b16 %v313
  %v1912 = vunpack.c.h.b16 %v313
  %v1913 = vunpack.c.l.b16 %v314
  %v1914 = vunpack.c.h.b16 %v314
  %v1915 = vunpack.c.l.b16 %v315
  %v1916 = vunpack.c.h.b16 %v315
  %v1917 = vunpack.c.l.b16 %v316
  %v1918 = vunpack.c.h.b16 %v316
  %v1919 = vunpack.c.l.b16 %v317
  %v1920 = vunpack.c.h.b16 %v317
  %v1921 = vunpack.c.l.b16 %v318
  %v1922 = vunpack.c.h.b16 %v318
  %v1923 = vunpack.c.l.b16 %v319
  %v1924 = vunpack.c.h.b16 %v319
  %v1925 = vunpack.c.l.b16 %v320
  %v1926 = vunpack.c.h.b16 %v320
  %v1927 = vunpack.c.l.b16 %v321
  %v1928 = vunpack.c.h.b16 %v321
  %v1929 = vunpack.c.l.b16 %v322
  %v1930 = vunpack.c.h.b16 %v322
  %v1931 = vunpack.c.l.b16 %v323
  %v1932 = vunpack.c.h.b16 %v323
  %v1933 = vunpack.c.l.b16 %v324
  %v1934 = vunpack.c.h.b16 %v324
  %v1935 = vunpack.c.l.b16 %v325
  %v1936 = vunpack.c.h.b16 %v325
  %v1937 = vunpack.c.l.b16 %v326
  %v1938 = vunpack.c.h.b16 %v326
  %v1939 = vunpack.c.l.b16 %v327
  %v1940 = vunpack.c.h.b16 %v327
  %v1941 = vunpack.c.l.b16 %v328
  %v1942 = vunpack.c.h.b16 %v328
  %v1943 = vunpack.c.l.b16 %v329
  %v1944 = vunpack.c.h.b16 %v329
  %v1945 = vunpack.c.l.b16 %v330
  %v1946 = vunpack.c.h.b16 %v330
  %v1947 = vunpack.c.l.b16 %v331
  %v1948 = vunpack.c.h.b16 %v331
  %v1949 = vunpack.c.l.b16 %v332
  %v1950 = vunpack.c.h.b16 %v332
  %v1951 = vunpack.c.l.b16 %v333
  %v1952 = vunpack.c.h.b16 %v333
  %v1953 = vunpack.c.l.b16 %v334
  %v1954 = vunpack.c.h.b16 %v334
  %v1955 = vunpack.c.l.b16 %v335
  %v1956 = vunpack.c.h.b16 %v335
  %v1957 = vunpack.c.l.b16 %v336
  %v1958 = vunpack.c.h.b16 %v336
  %v1959 = vunpack.c.l.b16 %v337
  %v1960 = vunpack.c.h.b16 %v337
  %v1961 = vunpack.c.l.b16 %v338
  %v1962 = vunpack.c.h.b16 %v338
  %v1963 = vunpack.c.l.b16 %v339
  %v1964 = vunpack.c.h.b16 %v339
  %v1965 = vunpack.c.l.b16 %v340
  %v1966 = vunpack.c.h.b16 %v340
  %v1967 = vunpack.c.l.b16 %v341
  %v1968 = vunpack.c.h.b16 %v341
  %v1969 = vunpack.c.l.b16 %v342
  %v1970 = vunpack.c.h.b16 %v342
  %v1971 = vunpack.c.l.b16 %v343
  %v1972 = vunpack.c.h.b16 %v343
  %v1973 = vunpack.c.l.b16 %v344
  %v1974 = vunpack.c.h.b16 %v344
  %v1975 = vunpack.c.l.b16 %v345
  %v1976 = vunpack.c.h.b16 %v345
  %v1977 = vunpack.c.l.b16 %v346
  %v1978 = vunpack.c.h.b16 %v346
  %v1979 = vunpack.c.l.b16 %v347
  %v1980 = vunpack.c.h.b16 %v347
  %v1981 = vunpack.c.l.b16 %v348
  %v1982 = vunpack.c.h.b16 %v348
  %v1983 = vunpack.c.l.b16 %v349
  %v1984 = vunpack.c.h.b16 %v349
  %v1985 = vunpack.c.l.b16 %v350
  %v1986 = vunpack.c.h.b16 %v350
  %v1987 = vunpack.c.l.b16 %v351
  %v1988 = vunpack.c.h.b16 %v351
  %v1989 = vunpack.c.l.b16 %v352
  %v1990 = vunpack.c.h.b16 %v352
  %v1991 = vunpack.c.l.b16 %v353
  %v1992 = vunpack.c.h.b16 %v353
  %v1993 = vunpack.c.l.b16 %v354
  %v1994 = vunpack.c.h.b16 %v354
  %v1995 = vunpack.c.l.b16 %v355
  %v1996 = vunpack.c.h.b16 %v355
  %v1997 = vunpack.c.l.b16 %v356
  %v1998 = vunpack.c.h.b16 %v356
  %v1999 = vunpack.c.l.b16 %v357
  %v2000 = vunpack.c.h.b16 %v357
  %v2001 = vunpack.c.l.b16 %v358
  %v2002 = vunpack.c.h.b16 %v358
  %v2003 = vunpack.c.l.b16 %v359
  %v2004 = vunpack.c.h.b16 %v359
  %v2005 = vunpack.c.l.b16 %v360
  %v2006 = vunpack.c.h.b16 %v360
  %v2007 = vunpack.c.l.b16 %v361
  %v2008 = vunpack.c.h.b16 %v361
  %v2009 = vunpack.c.l.b16 %v362
  %v2010 = vunpack.c.h.b16 %v362
  %v2011 = vunpack.c.l.b16 %v363
  %v2012 = vunpack.c.h.b16 %v363
  %v2013 = vunpack.c.l.b16 %v364
  %v2014 = vunpack.c.h.b16 %v364
  %v2015 = vunpack.c.l.b16 %v365
  %v2016 = vunpack.c.h.b16 %v365
  %v2017 = vunpack.c.l.b16 %v366
  %v2018 = vunpack.c.h.b16 %v366
  %v2019 = vunpack.c.l.b16 %v367
  %v2020 = vunpack.c.h.b16 %v367
  %v2021 = vunpack.c.l.b16 %v368
  %v2022 = vunpack.c.h.b16 %v368
  %v2023 = vunpack.c.l.b16 %v369
  %v2024 = vunpack.c.h.b16 %v369
  %v2025 = vunpack.c.l.b16 %v370
  %v2026 = vunpack.c.h.b16 %v370
  %v2027 = vunpack.c.l.b16 %v371
  %v2028 = vunpack.c.h.b16 %v371
  %v2029 = vunpack.c.l.b16 %v372
  %v2030 = vunpack.c.h.b16 %v372
  %v2031 = vunpack.c.l.b16 %v373
  %v2032 = vunpack.c.h.b16 %v373
  %v2033 = vunpack.c.l.b16 %v374
  %v2034 = vunpack.c.h.b16 %v374
  %v2035 = vunpack.c.l.b16 %v375
  %v2036 = vunpack.c.h.b16 %v375
  %v2037 = vunpack.c.l.b16 %v376
  %v2038 = vunpack.c.h.b16 %v376
  %v2039 = vunpack.c.l.b16 %v377
  %v2040 = vunpack.c.h.b16 %v377
  %v2041 = vunpack.c.l.b16 %v378
  %v2042 = vunpack.c.h.b16 %v378
  %v2043 = vunpack.c.l.b16 %v379
  %v2044 = vunpack.c.h.b16 %v379
  %v2045 = vunpack.c.l.b16 %v380
  %v2046 = vunpack.c.h.b16 %v380
  %v2047 = vunpack.c.l.b16 %v381
  %v2048 = vunpack.c.h.b16 %v381
  %v2049 = vunpack.c.l.b16 %v382
  %v2050 = vunpack.c.h.b16 %v382
  %v2051 = vunpack.c.l.b16 %v383
  %v2052 = vunpack.c.h.b16 %v383
  %v2053 = vunpack.c.l.b16 %v384
  %v2054 = vunpack.c.h.b16 %v384
  %v2055 = vunpack.c.l.b16 %v385
  %v2056 = vunpack.c.h.b16 %v385
  %v2057 = vunpack.c.l.b16 %v386
  %v2058 = vunpack.c.h.b16 %v386
  %v2059 = vunpack.c.l.b16 %v387
  %v2060 = vunpack.c.h.b16 %v387
  %v2061 = vunpack.c.l.b16 %v388
  %v2062 = vunpack.c.h.b16 %v388
  %v2063 = vunpack.c.l.b16 %v389
  %v2064 = vunpack.c.h.b16 %v389
  %v2065 = vunpack.c.l.b16 %v390
  %v2066 = vunpack.c.h.b16 %v390
  %v2067 = vunpack.c.l.b16 %v391
  %v2068 = vunpack.c.h.b16 %v391
  %v2069 = vunpack.c.l.b16 %v392
  %v2070 = vunpack.c.h.b16 %v392
  %v2071 = vunpack.c.l.b16 %v393
  %v2072 = vunpack.c.h.b16 %v393
  %v2073 = vunpack.c.l.b16 %v394
  %v2074 = vunpack.c.h.b16 %v394
  %v2075 = vunpack.c.l.b16 %v395
  %v2076 = vunpack.c.h.b16 %v395
  %v2077 = vunpack.c.l.b16 %v396
  %v2078 = vunpack.c.h.b16 %v396
  %v2079 = vunpack.c.l.b16 %v397
  %v2080 = vunpack.c.h.b16 %v397
  %v2081 = vunpack.c.l.b16 %v398
  %v2082 = vunpack.c.h.b16 %v398
  %v2083 = vunpack.c.l.b16 %v399
  %v2084 = vunpack.c.h.b16 %v399
  %v2085 = vunpack.c.l.b16 %v400
  %v2086 = vunpack.c.h.b16 %v400
  %v2087 = vunpack.c.l.b16 %v401
  %v2088 = vunpack.c.h.b16 %v401
  %v2089 = vunpack.c.l.b16 %v402
  %v2090 = vunpack.c.h.b16 %v402
  %v2091 = vunpack.c.l.b16 %v403
  %v2092 = vunpack.c.h.b16 %v403
  %v2093 = vunpack.c.l.b16 %v404
  %v2094 = vunpack.c.h.b16 %v404
  %v2095 = vunpack.c.l.b16 %v405
  %v2096 = vunpack.c.h.b16 %v405
  %v2097 = vunpack.c.l.b16 %v406
  %v2098 = vunpack.c.h.b16 %v406
  %v2099 = vunpack.c.l.b16 %v407
  %v2100 = vunpack.c.h.b16 %v407
  %v2101 = vunpack.c.l.b16 %v408
  %v2102 = vunpack.c.h.b16 %v408
  %v2103 = vunpack.c.l.b16 %v409
  %v2104 = vunpack.c.h.b16 %v409
  %v2105 = vunpack.c.l.b16 %v410
  %v2106 = vunpack.c.h.b16 %v410
  %v2107 = vunpack.c.l.b16 %v411
  %v2108 = vunpack.c.h.b16 %v411
  %v2109 = vunpack.c.l.b16 %v412
  %v2110 = vunpack.c.h.b16 %v412
  %v2111 = vunpack.c.l.b16 %v413
  %v2112 = vunpack.c.h.b16 %v413
  %v2113 = vunpack.c.l.b16 %v414
  %v2114 = vunpack.c.h.b16 %v414
  %v2115 = vunpack.c.l.b16 %v415
  %v2116 = vunpack.c.h.b16 %v415
  %v2117 = vunpack.c.l.b16 %v416
  %v2118 = vunpack.c.h.b16 %v416
  %v2119 = vunpack.c.l.b16 %v417
  %v2120 = vunpack.c.h.b16 %v417
  %v2121 = vunpack.c.l.b16 %v418
  %v2122 = vunpack.c.h.b16 %v418
  %v2123 = vunpack.c.l.b16 %v419
  %v2124 = vunpack.c.h.b16 %v419
  %v2125 = vunpack.c.l.b16 %v420
  %v2126 = vunpack.c.h.b16 %v420
  %v2127 = vunpack.c.l.b16 %v421
  %v2128 = vunpack.c.h.b16 %v421
  %v2129 = vunpack.c.l.b16 %v422
  %v2130 = vunpack.c.h.b16 %v422
  %v2131 = vunpack.c.l.b16 %v423
  %v2132 = vunpack.c.h.b16 %v423
  %v2133 = vunpack.c.l.b16 %v424
  %v2134 = vunpack.c.h.b16 %v424
  %v2135 = vunpack.c.l.b16 %v425
  %v2136 = vunpack.c.h.b16 %v425
  %v2137 = vunpack.c.l.b16 %v426
  %v2138 = vunpack.c.h.b16 %v426
  %v2139 = vunpack.c.l.b16 %v427
  %v2140 = vunpack.c.h.b16 %v427
  %v2141 = vunpack.c.l.b16 %v428
  %v2142 = vunpack.c.h.b16 %v428
  %v2143 = vunpack.c.l.b16 %v429
  %v2144 = vunpack.c.h.b16 %v429
  %v2145 = vunpack.c.l.b16 %v430
  %v2146 = vunpack.c.h.b16 %v430
  %v2147 = vunpack.c.l.b16 %v431
  %v2148 = vunpack.c.h.b16 %v431
  %v2149 = vunpack.c.l.b16 %v432
  %v2150 = vunpack.c.h.b16 %v432
  %v2151 = vunpack.c.l.b16 %v433
  %v2152 = vunpack.c.h.b16 %v433
  %v2153 = vunpack.c.l.b16 %v434
  %v2154 = vunpack.c.h.b16 %v434
  %v2155 = vunpack.c.l.b16 %v435
  %v2156 = vunpack.c.h.b16 %v435
  %v2157 = vunpack.c.l.b16 %v436
  %v2158 = vunpack.c.h.b16 %v436
  %v2159 = vunpack.c.l.b16 %v437
  %v2160 = vunpack.c.h.b16 %v437
  %v2161 = vunpack.c.l.b16 %v438
  %v2162 = vunpack.c.h.b16 %v438
  %v2163 = vunpack.c.l.b16 %v439
  %v2164 = vunpack.c.h.b16 %v439
  %v2165 = vunpack.c.l.b16 %v440
  %v2166 = vunpack.c.h.b16 %v440
  %v2167 = vunpack.c.l.b16 %v441
  %v2168 = vunpack.c.h.b16 %v441
  %v2169 = vunpack.c.l.b16 %v442
  %v2170 = vunpack.c.h.b16 %v442
  %v2171 = vunpack.c.l.b16 %v443
  %v2172 = vunpack.c.h.b16 %v443
  %v2173 = vunpack.c.l.b16 %v444
  %v2174 = vunpack.c.h.b16 %v444
  %v2175 = vunpack.c.l.b16 %v445
  %v2176 = vunpack.c.h.b16 %v445
  %v2177 = vunpack.c.l.b16 %v446
  %v2178 = vunpack.c.h.b16 %v446
  %v2179 = vunpack.c.l.b16 %v447
  %v2180 = vunpack.c.h.b16 %v447
  %v2181 = vunpack.c.l.b16 %v448
  %v2182 = vunpack.c.h.b16 %v448
  %v2183 = vunpack.c.l.b16 %v449
  %v2184 = vunpack.c.h.b16 %v449
  %v2185 = vunpack.c.l.b16 %v450
  %v2186 = vunpack.c.h.b16 %v450
  %v2187 = vunpack.c.l.b16 %v451
  %v2188 = vunpack.c.h.b16 %v451
  %v2189 = vunpack.c.l.b16 %v452
  %v2190 = vunpack.c.h.b16 %v452
  %v2191 = vunpack.c.l.b16 %v453
  %v2192 = vunpack.c.h.b16 %v453
  %v2193 = vunpack.c.l.b16 %v454
  %v2194 = vunpack.c.h.b16 %v454
  %v2195 = vunpack.c.l.b16 %v455
  %v2196 = vunpack.c.h.b16 %v455
  %v2197 = vunpack.c.l.b16 %v456
  %v2198 = vunpack.c.h.b16 %v456
  %v2199 = vunpack.c.l.b16 %v457
  %v2200 = vunpack.c.h.b16 %v457
  %v2201 = vunpack.c.l.b16 %v458
  %v2202 = vunpack.c.h.b16 %v458
  %v2203 = vunpack.c.l.b16 %v459
  %v2204 = vunpack.c.h.b16 %v459
  %v2205 = vunpack.c.l.b16 %v460
  %v2206 = vunpack.c.h.b16 %v460
  %v2207 = vunpack.c.l.b16 %v461
  %v2208 = vunpack.c.h.b16 %v461
  %v2209 = vunpack.c.l.b16 %v462
  %v2210 = vunpack.c.h.b16 %v462
  %v2211 = vunpack.c.l.b16 %v463
  %v2212 = vunpack.c.h.b16 %v463
  %v2213 = vunpack.c.l.b16 %v464
  %v2214 = vunpack.c.h.b16 %v464
  %v2215 = vunpack.c.l.b16 %v465
  %v2216 = vunpack.c.h.b16 %v465
  %v2217 = vunpack.c.l.b16 %v466
  %v2218 = vunpack.c.h.b16 %v466
  %v2219 = vunpack.c.l.b16 %v467
  %v2220 = vunpack.c.h.b16 %v467
  %v2221 = vunpack.c.l.b16 %v468
  %v2222 = vunpack.c.h.b16 %v468
  %v2223 = vunpack.c.l.b16 %v469
  %v2224 = vunpack.c.h.b16 %v469
  %v2225 = vunpack.c.l.b16 %v470
  %v2226 = vunpack.c.h.b16 %v470
  %v2227 = vunpack.c.l.b16 %v471
  %v2228 = vunpack.c.h.b16 %v471
  %v2229 = vunpack.c.l.b16 %v472
  %v2230 = vunpack.c.h.b16 %v472
  %v2231 = vunpack.c.l.b16 %v473
  %v2232 = vunpack.c.h.b16 %v473
  %v2233 = vunpack.c.l.b16 %v474
  %v2234 = vunpack.c.h.b16 %v474
  %v2235 = vunpack.c.l.b16 %v475
  %v2236 = vunpack.c.h.b16 %v475
  %v2237 = vunpack.c.l.b16 %v476
  %v2238 = vunpack.c.h.b16 %v476
  %v2239 = vunpack.c.l.b16 %v477
  %v2240 = vunpack.c.h.b16 %v477
  %v2241 = vunpack.c.l.b16 %v478
  %v2242 = vunpack.c.h.b16 %v478
  %v2243 = vunpack.c.l.b16 %v479
  %v2244 = vunpack.c.h.b16 %v479
  %v2245 = vunpack.c.l.b16 %v480
  %v2246 = vunpack.c.h.b16 %v480
  %v2247 = vunpack.c.l.b16 %v481
  %v2248 = vunpack.c.h.b16 %v481
  %v2249 = vunpack.c.l.b16 %v482
  %v2250 = vunpack.c.h.b16 %v482
  %v2251 = vunpack.c.l.b16 %v483
  %v2252 = vunpack.c.h.b16 %v483
  %v2253 = vunpack.c.l.b16 %v484
  %v2254 = vunpack.c.h.b16 %v484
  %v2255 = vunpack.c.l.b16 %v485
  %v2256 = vunpack.c.h.b16 %v485
  %v2257 = vunpack.c.l.b16 %v486
  %v2258 = vunpack.c.h.b16 %v486
  %v2259 = vunpack.c.l.b16 %v487
  %v2260 = vunpack.c.h.b16 %v487
  %v2261 = vunpack.c.l.b16 %v488
  %v2262 = vunpack.c.h.b16 %v488
  %v2263 = vunpack.c.l.b16 %v489
  %v2264 = vunpack.c.h.b16 %v489
  %v2265 = vunpack.c.l.b16 %v490
  %v2266 = vunpack.c.h.b16 %v490
  %v2267 = vunpack.c.l.b16 %v491
  %v2268 = vunpack.c.h.b16 %v491
  %v2269 = vunpack.c.l.b16 %v492
  %v2270 = vunpack.c.h.b16 %v492
  %v2271 = vunpack.c.l.b16 %v493
  %v2272 = vunpack.c.h.b16 %v493
  %v2273 = vunpack.c.l.b16 %v494
  %v2274 = vunpack.c.h.b16 %v494
  %v2275 = vunpack.c.l.b16 %v495
  %v2276 = vunpack.c.h.b16 %v495
  %v2277 = vunpack.c.l.b16 %v496
  %v2278 = vunpack.c.h.b16 %v496
  %v2279 = vunpack.c.l.b16 %v497
  %v2280 = vunpack.c.h.b16 %v497
  %v2281 = vunpack.c.l.b16 %v498
  %v2282 = vunpack.c.h.b16 %v498
  %v2283 = vunpack.c.l.b16 %v499
  %v2284 = vunpack.c.h.b16 %v499
  %v2285 = vunpack.c.l.b16 %v500
  %v2286 = vunpack.c.h.b16 %v500
  %v2287 = vunpack.c.l.b16 %v501
  %v2288 = vunpack.c.h.b16 %v501
  %v2289 = vunpack.c.l.b16 %v502
  %v2290 = vunpack.c.h.b16 %v502
  %v2291 = vunpack.c.l.b16 %v503
  %v2292 = vunpack.c.h.b16 %v503
  %v2293 = vunpack.c.l.b16 %v504
  %v2294 = vunpack.c.h.b16 %v504
  %v2295 = vunpack.c.l.b16 %v505
  %v2296 = vunpack.c.h.b16 %v505
  %v2297 = vunpack.c.l.b16 %v506
  %v2298 = vunpack.c.h.b16 %v506
  %v2299 = vunpack.c.l.b16 %v507
  %v2300 = vunpack.c.h.b16 %v507
  %v2301 = vunpack.c.l.b16 %v508
  %v2302 = vunpack.c.h.b16 %v508
  %v2303 = vunpack.c.l.b16 %v509
  %v2304 = vunpack.c.h.b16 %v509
  %v2305 = vunpack.c.l.b16 %v510
  %v2306 = vunpack.c.h.b16 %v510
  %v2307 = vunpack.c.l.b16 %v511
  %v2308 = vunpack.c.h.b16 %v511
  %v2309 = vunpack.c.l.b16 %v512
  %v2310 = vunpack.c.h.b16 %v512
  %v2311 = vunpack.c.l.b16 %v513
  %v2312 = vunpack.c.h.b16 %v513
  %v2313 = vunpack.c.l.b16 %v514
  %v2314 = vunpack.c.h.b16 %v514
  %v2315 = vunpack.c.l.b16 %v515
  %v2316 = vunpack.c.h.b16 %v515
  %v2317 = vunpack.c.l.b16 %v516
  %v2318 = vunpack.c.h.b16 %v516
  %v2319 = vunpack.c.l.b16 %v517
  %v2320 = vunpack.c.h.b16 %v517
  %v2321 = vunpack.c.l.b16 %v518
  %v2322 = vunpack.c.h.b16 %v518
  %v2323 = vunpack.c.l.b16 %v519
  %v2324 = vunpack.c.h.b16 %v519
  %v2325 = vunpack.c.l.b16 %v520
  %v2326 = vunpack.c.h.b16 %v520
  %v2327 = vunpack.c.l.b16 %v521
  %v2328 = vunpack.c.h.b16 %v521
  %v2329 = vunpack.c.l.b16 %v522
  %v2330 = vunpack.c.h.b16 %v522
  %v2331 = vunpack.c.l.b16 %v523
  %v2332 = vunpack.c.h.b16 %v523
  %v2333 = vunpack.c.l.b16 %v524
  %v2334 = vunpack.c.h.b16 %v524
  %v2335 = vunpack.c.l.b16 %v525
  %v2336 = vunpack.c.h.b16 %v525
  %v2337 = vunpack.c.l.b16 %v526
  %v2338 = vunpack.c.h.b16 %v526
  %v2339 = vunpack.c.l.b16 %v527
  %v2340 = vunpack.c.h.b16 %v527
  %v2341 = vunpack.c.l.b16 %v528
  %v2342 = vunpack.c.h.b16 %v528
  %v2343 = vunpack.c.l.b16 %v529
  %v2344 = vunpack.c.h.b16 %v529
  %v2345 = vunpack.c.l.b16 %v530
  %v2346 = vunpack.c.h.b16 %v530
  %v2347 = vunpack.c.l.b16 %v531
  %v2348 = vunpack.c.h.b16 %v531
  %v2349 = vunpack.c.l.b16 %v532
  %v2350 = vunpack.c.h.b16 %v532
  %v2351 = vunpack.c.l.b16 %v533
  %v2352 = vunpack.c.h.b16 %v533
  %v2353 = vunpack.c.l.b16 %v534
  %v2354 = vunpack.c.h.b16 %v534
  %v2355 = vunpack.c.l.b16 %v535
  %v2356 = vunpack.c.h.b16 %v535
  %v2357 = vunpack.c.l.b16 %v536
  %v2358 = vunpack.c.h.b16 %v536
  %v2359 = vunpack.c.l.b16 %v537
  %v2360 = vunpack.c.h.b16 %v537
  %v2361 = vunpack.c.l.b16 %v538
  %v2362 = vunpack.c.h.b16 %v538
  %v2363 = vunpack.c.l.b16 %v539
  %v2364 = vunpack.c.h.b16 %v539
  %v2365 = vunpack.c.l.b16 %v540
  %v2366 = vunpack.c.h.b16 %v540
  %v2367 = vunpack.c.l.b16 %v541
  %v2368 = vunpack.c.h.b16 %v541
  %v2369 = vunpack.c.l.b16 %v542
  %v2370 = vunpack.c.h.b16 %v542
  %v2371 = vunpack.c.l.b16 %v543
  %v2372 = vunpack.c.h.b16 %v543
  %v2373 = vunpack.c.l.b16 %v544
  %v2374 = vunpack.c.h.b16 %v544
  %v2375 = vunpack.c.l.b16 %v545
  %v2376 = vunpack.c.h.b16 %v545
  %v2377 = vunpack.c.l.b16 %v546
  %v2378 = vunpack.c.h.b16 %v546
  %v2379 = vunpack.c.l.b16 %v547
  %v2380 = vunpack.c.h.b16 %v547
  %v2381 = vunpack.c.l.b16 %v548
  %v2382 = vunpack.c.h.b16 %v548
  %v2383 = vunpack.c.l.b16 %v549
  %v2384 = vunpack.c.h.b16 %v549
  %v2385 = vunpack.c.l.b16 %v550
  %v2386 = vunpack.c.h.b16 %v550
  %v2387 = vunpack.c.l.b16 %v551
  %v2388 = vunpack.c.h.b16 %v551
  %v2389 = vunpack.c.l.b16 %v552
  %v2390 = vunpack.c.h.b16 %v552
  %v2391 = vunpack.c.l.b16 %v553
  %v2392 = vunpack.c.h.b16 %v553
  %v2393 = vunpack.c.l.b16 %v554
  %v2394 = vunpack.c.h.b16 %v554
  %v2395 = vunpack.c.l.b16 %v555
  %v2396 = vunpack.c.h.b16 %v555
  %v2397 = vunpack.c.l.b16 %v556
  %v2398 = vunpack.c.h.b16 %v556
  %v2399 = vunpack.c.l.b16 %v557
  %v2400 = vunpack.c.h.b16 %v557
  %v2401 = vunpack.c.l.b16 %v558
  %v2402 = vunpack.c.h.b16 %v558
  %v2403 = vunpack.c.l.b16 %v559
  %v2404 = vunpack.c.h.b16 %v559
  %v2405 = vunpack.c.l.b16 %v560
  %v2406 = vunpack.c.h.b16 %v560
  %v2407 = vunpack.c.l.b16 %v561
  %v2408 = vunpack.c.h.b16 %v561
  %v2409 = vunpack.c.l.b16 %v562
  %v2410 = vunpack.c.h.b16 %v562
  %v2411 = vunpack.c.l.b16 %v563
  %v2412 = vunpack.c.h.b16 %v563
  %v2413 = vunpack.c.l.b16 %v564
  %v2414 = vunpack.c.h.b16 %v564
  %v2415 = vunpack.c.l.b16 %v565
  %v2416 = vunpack.c.h.b16 %v565
  %v2417 = vunpack.c.l.b16 %v566
  %v2418 = vunpack.c.h.b16 %v566
  %v2419 = vunpack.c.l.b16 %v567
  %v2420 = vunpack.c.h.b16 %v567
  %v2421 = vunpack.c.l.b16 %v568
  %v2422 = vunpack.c.h.b16 %v568
  %v2423 = vunpack.c.l.b16 %v569
  %v2424 = vunpack.c.h.b16 %v569
  %v2425 = vunpack.c.l.b16 %v570
  %v2426 = vunpack.c.h.b16 %v570
  %v2427 = vunpack.c.l.b16 %v571
  %v2428 = vunpack.c.h.b16 %v571
  %v2429 = vunpack.c.l.b16 %v572
  %v2430 = vunpack.c.h.b16 %v572
  %v2431 = vunpack.c.l.b16 %v573
  %v2432 = vunpack.c.h.b16 %v573
  %v2433 = vunpack.c.l.b16 %v574
  %v2434 = vunpack.c.h.b16 %v574
  %v2435 = vunpack.c.l.b16 %v575
  %v2436 = vunpack.c.h.b16 %v575
  %v2437 = vunpack.c.l.b16 %v576
  %v2438 = vunpack.c.h.b16 %v576
  %v2439 = vunpack.c.l.b16 %v577
  %v2440 = vunpack.c.h.b16 %v577
  %v2441 = vunpack.c.l.b16 %v578
  %v2442 = vunpack.c.h.b16 %v578
  %v2443 = vunpack.c.l.b16 %v579
  %v2444 = vunpack.c.h.b16 %v579
  %v2445 = vunpack.c.l.b16 %v580
  %v2446 = vunpack.c.h.b16 %v580
  %v2447 = vunpack.c.l.b16 %v581
  %v2448 = vunpack.c.h.b16 %v581
  %v2449 = vunpack.c.l.b16 %v582
  %v2450 = vunpack.c.h.b16 %v582
  %v2451 = vunpack.c.l.b16 %v583
  %v2452 = vunpack.c.h.b16 %v583
  %v2453 = vunpack.c.l.b16 %v584
  %v2454 = vunpack.c.h.b16 %v584
  %v2455 = vunpack.c.l.b16 %v585
  %v2456 = vunpack.c.h.b16 %v585
  %v2457 = vunpack.c.l.b16 %v586
  %v2458 = vunpack.c.h.b16 %v586
  %v2459 = vunpack.c.l.b16 %v587
  %v2460 = vunpack.c.h.b16 %v587
  %v2461 = vunpack.c.l.b16 %v588
  %v2462 = vunpack.c.h.b16 %v588
  %v2463 = vunpack.c.l.b16 %v589
  %v2464 = vunpack.c.h.b16 %v589
  %v2465 = vunpack.c.l.b16 %v590
  %v2466 = vunpack.c.h.b16 %v590
  %v2467 = vunpack.c.l.b16 %v591
  %v2468 = vunpack.c.h.b16 %v591
  %v2469 = vunpack.c.l.b16 %v592
  %v2470 = vunpack.c.h.b16 %v592
  %v2471 = vunpack.c.l.b16 %v593
  %v2472 = vunpack.c.h.b16 %v593
  %v2473 = vunpack.c.l.b16 %v594
  %v2474 = vunpack.c.h.b16 %v594
  %v2475 = vunpack.c.l.b16 %v595
  %v2476 = vunpack.c.h.b16 %v595
  %v2477 = vunpack.c.l.b16 %v596
  %v2478 = vunpack.c.h.b16 %v596
  %v2479 = vunpack.c.l.b16 %v597
  %v2480 = vunpack.c.h.b16 %v597
  %v2481 = vunpack.c.l.b16 %v598
  %v2482 = vunpack.c.h.b16 %v598
  %v2483 = vunpack.c.l.b16 %v599
  %v2484 = vunpack.c.h.b16 %v599
  %v2485 = vunpack.c.l.b16 %v600
  %v2486 = vunpack.c.h.b16 %v600
  %v2487 = vunpack.c.l.b16 %v601
  %v2488 = vunpack.c.h.b16 %v601
  %v2489 = vunpack.c.l.b16 %v602
  %v2490 = vunpack.c.h.b16 %v602
  %v2491 = vunpack.c.l.b16 %v603
  %v2492 = vunpack.c.h.b16 %v603
  %v2493 = vunpack.c.l.b16 %v604
  %v2494 = vunpack.c.h.b16 %v604
  %v2495 = vunpack.c.l.b16 %v605
  %v2496 = vunpack.c.h.b16 %v605
  %v2497 = vpack.c.b16 %v1349, %v1345
  %v2498 = vpack.c.b16 %v1350, %v1346
  %v2499 = vpack.c.b16 %v1351, %v1347
  %v2500 = vpack.c.b16 %v1352, %v1348
  %v2501 = vpack.c.b16 %v1357, %v1353
  %v2502 = vpack.c.b16 %v1358, %v1354
  %v2503 = vpack.c.b16 %v1359, %v1355
  %v2504 = vpack.c.b16 %v1360, %v1356
  %v2505 = vpack.c.b16 %v1365, %v1361
  %v2506 = vpack.c.b16 %v1366, %v1362
  %v2507 = vpack.c.b16 %v1367, %v1363
  %v2508 = vpack.c.b16 %v1368, %v1364
  %v2509 = vpack.c.b16 %v1373, %v1369
  %v2510 = vpack.c.b16 %v1374, %v1370
  %v2511 = vpack.c.b16 %v1375, %v1371
  %v2512 = vpack.c.b16 %v1376, %v1372
  %v2513 = vpack.c.b16 %v1381, %v1377
  %v2514 = vpack.c.b16 %v1382, %v1378
  %v2515 = vpack.c.b16 %v1383, %v1379
  %v2516 = vpack.c.b16 %v1384, %v1380
  %v2517 = vpack.c.b16 %v1389, %v1385
  %v2518 = vpack.c.b16 %v1390, %v1386
  %v2519 = vpack.c.b16 %v1391, %v1387
  %v2520 = vpack.c.b16 %v1392, %v1388
  %v2521 = vpack.c.b16 %v1397, %v1393
  %v2522 = vpack.c.b16 %v1398, %v1394
  %v2523 = vpack.c.b16 %v1399, %v1395
  %v2524 = vpack.c.b16 %v1400, %v1396
  %v2525 = vpack.c.b16 %v1405, %v1401
  %v2526 = vpack.c.b16 %v1406, %v1402
  %v2527 = vpack.c.b16 %v1407, %v1403
  %v2528 = vpack.c.b16 %v1408, %v1404
  %v2529 = vpack.c.b16 %v1413, %v1409
  %v2530 = vpack.c.b16 %v1414, %v1410
  %v2531 = vpack.c.b16 %v1415, %v1411
  %v2532 = vpack.c.b16 %v1416, %v1412
  %v2533 = vpack.c.b16 %v1421, %v1417
  %v2534 = vpack.c.b16 %v1422, %v1418
  %v2535 = vpack.c.b16 %v1423, %v1419
  %v2536 = vpack.c.b16 %v1424, %v1420
  %v2537 = vpack.c.b16 %v1429, %v1425
  %v2538 = vpack.c.b16 %v1430, %v1426
  %v2539 = vpack.c.b16 %v1431, %v1427
  %v2540 = vpack.c.b16 %v1432, %v1428
  %v2541 = vpack.c.b16 %v1437, %v1433
  %v2542 = vpack.c.b16 %v1438, %v1434
  %v2543 = vpack.c.b16 %v1439, %v1435
  %v2544 = vpack.c.b16 %v1440, %v1436
  %v2545 = vpack.c.b16 %v1445, %v1441
  %v2546 = vpack.c.b16 %v1446, %v1442
  %v2547 = vpack.c.b16 %v1447, %v1443
  %v2548 = vpack.c.b16 %v1448, %v1444
  %v2549 = vpack.c.b16 %v1453, %v1449
  %v2550 = vpack.c.b16 %v1454, %v1450
  %v2551 = vpack.c.b16 %v1455, %v1451
  %v2552 = vpack.c.b16 %v1456, %v1452
  %v2553 = vpack.c.b16 %v1461, %v1457
  %v2554 = vpack.c.b16 %v1462, %v1458
  %v2555 = vpack.c.b16 %v1463, %v1459
  %v2556 = vpack.c.b16 %v1464, %v1460
  %v2557 = vpack.c.b16 %v1469, %v1465
  %v2558 = vpack.c.b16 %v1470, %v1466
  %v2559 = vpack.c.b16 %v1471, %v1467
  %v2560 = vpack.c.b16 %v1472, %v1468
  %v2561 = vpack.c.b16 %v1477, %v1473
  %v2562 = vpack.c.b16 %v1478, %v1474
  %v2563 = vpack.c.b16 %v1479, %v1475
  %v2564 = vpack.c.b16 %v1480, %v1476
  %v2565 = vpack.c.b16 %v1485, %v1481
  %v2566 = vpack.c.b16 %v1486, %v1482
  %v2567 = vpack.c.b16 %v1487, %v1483
  %v2568 = vpack.c.b16 %v1488, %v1484
  %v2569 = vpack.c.b16 %v1493, %v1489
  %v2570 = vpack.c.b16 %v1494, %v1490
  %v2571 = vpack.c.b16 %v1495, %v1491
  %v2572 = vpack.c.b16 %v1496, %v1492
  %v2573 = vpack.c.b16 %v1501, %v1497
  %v2574 = vpack.c.b16 %v1502, %v1498
  %v2575 = vpack.c.b16 %v1503, %v1499
  %v2576 = vpack.c.b16 %v1504, %v1500
  %v2577 = vpack.c.b16 %v1509, %v1505
  %v2578 = vpack.c.b16 %v1510, %v1506
  %v2579 = vpack.c.b16 %v1511, %v1507
  %v2580 = vpack.c.b16 %v1512, %v1508
  %v2581 = vpack.c.b16 %v1517, %v1513
  %v2582 = vpack.c.b16 %v1518, %v1514
  %v2583 = vpack.c.b16 %v1519, %v1515
  %v2584 = vpack.c.b16 %v1520, %v1516
  %v2585 = vpack.c.b16 %v1525, %v1521
  %v2586 = vpack.c.b16 %v1526, %v1522
  %v2587 = vpack.c.b16 %v1527, %v1523
  %v2588 = vpack.c.b16 %v1528, %v1524
  %v2589 = vpack.c.b16 %v1533, %v1529
  %v2590 = vpack.c.b16 %v1534, %v1530
  %v2591 = vpack.c.b16 %v1535, %v1531
  %v2592 = vpack.c.b16 %v1536, %v1532
  %v2593 = vpack.c.b16 %v1541, %v1537
  %v2594 = vpack.c.b16 %v1542, %v1538
  %v2595 = vpack.c.b16 %v1543, %v1539
  %v2596 = vpack.c.b16 %v1544, %v1540
  %v2597 = vpack.c.b16 %v1549, %v1545
  %v2598 = vpack.c.b16 %v1550, %v1546
  %v2599 = vpack.c.b16 %v1551, %v1547
  %v2600 = vpack.c.b16 %v1552, %v1548
  %v2601 = vpack.c.b16 %v1557, %v1553
  %v2602 = vpack.c.b16 %v1558, %v1554
  %v2603 = vpack.c.b16 %v1559, %v1555
  %v2604 = vpack.c.b16 %v1560, %v1556
  %v2605 = vpack.c.b16 %v1565, %v1561
  %v2606 = vpack.c.b16 %v1566, %v1562
  %v2607 = vpack.c.b16 %v1567, %v1563
  %v2608 = vpack.c.b16 %v1568, %v1564
  %v2609 = vpack.c.b16 %v1573, %v1569
  %v2610 = vpack.c.b16 %v1574, %v1570
  %v2611 = vpack.c.b16 %v1575, %v1571
  %v2612 = vpack.c.b16 %v1576, %v1572
  %v2613 = vpack.c.b16 %v1581, %v1577
  %v2614 = vpack.c.b16 %v1582, %v1578
  %v2615 = vpack.c.b16 %v1583, %v1579
  %v2616 = vpack.c.b16 %v1584, %v1580
  %v2617 = vpack.c.b16 %v1589, %v1585
  %v2618 = vpack.c.b16 %v1590, %v1586
  %v2619 = vpack.c.b16 %v1591, %v1587
  %v2620 = vpack.c.b16 %v1592, %v1588
  %v2621 = vpack.c.b16 %v1597, %v1593
  %v2622 = vpack.c.b16 %v1598, %v1594
  %v2623 = vpack.c.b16 %v1599, %v1595
  %v2624 = vpack.c.b16 %v1600, %v1596
  %v2625 = vpack.c.b16 %v1605, %v1601
  %v2626 = vpack.c.b16 %v1606, %v1602
  %v2627 = vpack.c.b16 %v1607, %v1603
  %v2628 = vpack.c.b16 %v1608, %v1604
  %v2629 = vpack.c.b16 %v1613, %v1609
  %v2630 = vpack.c.b16 %v1614, %v1610
  %v2631 = vpack.c.b16 %v1615, %v1611
  %v2632 = vpack.c.b16 %v1616, %v1612
  %v2633 = vpack.c.b16 %v1621, %v1617
  %v2634 = vpack.c.b16 %v1622, %v1618
  %v2635 = vpack.c.b16 %v1623, %v1619
  %v2636 = vpack.c.b16 %v1624, %v1620
  %v2637 = vpack.c.b16 %v1629, %v1625
  %v2638 = vpack.c.b16 %v1630, %v1626
  %v2639 = vpack.c.b16 %v1631, %v1627
  %v2640 = vpack.c.b16 %v1632, %v1628
  %v2641 = vpack.c.b16 %v1637, %v1633
  %v2642 = vpack.c.b16 %v1638, %v1634
  %v2643 = vpack.c.b16 %v1639, %v1635
  %v2644 = vpack.c.b16 %v1640, %v1636
  %v2645 = vpack.c.b16 %v1645, %v1641
  %v2646 = vpack.c.b16 %v1646, %v1642
  %v2647 = vpack.c.b16 %v1647, %v1643
  %v2648 = vpack.c.b16 %v1648, %v1644
  %v2649 = vpack.c.b16 %v1653, %v1649
  %v2650 = vpack.c.b16 %v1654, %v1650
  %v2651 = vpack.c.b16 %v1655, %v1651
  %v2652 = vpack.c.b16 %v1656, %v1652
  %v2653 = vpack.c.b16 %v1661, %v1657
  %v2654 = vpack.c.b16 %v1662, %v1658
  %v2655 = vpack.c.b16 %v1663, %v1659
  %v2656 = vpack.c.b16 %v1664, %v1660
  %v2657 = vpack.c.b16 %v1669, %v1665
  %v2658 = vpack.c.b16 %v1670, %v1666
  %v2659 = vpack.c.b16 %v1671, %v1667
  %v2660 = vpack.c.b16 %v1672, %v1668
  %v2661 = vpack.c.b16 %v1677, %v1673
  %v2662 = vpack.c.b16 %v1678, %v1674
  %v2663 = vpack.c.b16 %v1679, %v1675
  %v2664 = vpack.c.b16 %v1680, %v1676
  %v2665 = vpack.c.b16 %v1685, %v1681
  %v2666 = vpack.c.b16 %v1686, %v1682
  %v2667 = vpack.c.b16 %v1687, %v1683
  %v2668 = vpack.c.b16 %v1688, %v1684
  %v2669 = vpack.c.b16 %v1693, %v1689
  %v2670 = vpack.c.b16 %v1694, %v1690
  %v2671 = vpack.c.b16 %v1695, %v1691
  %v2672 = vpack.c.b16 %v1696, %v1692
  %v2673 = vpack.c.b16 %v1701, %v1697
  %v2674 = vpack.c.b16 %v1702, %v1698
  %v2675 = vpack.c.b16 %v1703, %v1699
  %v2676 = vpack.c.b16 %v1704, %v1700
  %v2677 = vpack.c.b16 %v1709, %v1705
  %v2678 = vpack.c.b16 %v1710, %v1706
  %v2679 = vpack.c.b16 %v1711, %v1707
  %v2680 = vpack.c.b16 %v1712, %v1708
  %v2681 = vpack.c.b16 %v1717, %v1713
  %v2682 = vpack.c.b16 %v1718, %v1714
  %v2683 = vpack.c.b16 %v1719, %v1715
  %v2684 = vpack.c.b16 %v1720, %v1716
  %v2685 = vpack.c.b16 %v1725, %v1721
  %v2686 = vpack.c.b16 %v1726, %v1722
  %v2687 = vpack.c.b16 %v1727, %v1723
  %v2688 = vpack.c.b16 %v1728, %v1724
  %v2689 = vpack.c.b16 %v1733, %v1729
  %v2690 = vpack.c.b16 %v1734, %v1730
  %v2691 = vpack.c.b16 %v1735, %v1731
  %v2692 = vpack.c.b16 %v1736, %v1732
  %v2693 = vpack.c.b16 %v1741, %v1737
  %v2694 = vpack.c.b16 %v1742, %v1738
  %v2695 = vpack.c.b16 %v1743, %v1739
  %v2696 = vpack.c.b16 %v1744, %v1740
  %v2697 = vpack.c.b16 %v1749, %v1745
  %v2698 = vpack.c.b16 %v1750, %v1746
  %v2699 = vpack.c.b16 %v1751, %v1747
  %v2700 = vpack.c.b16 %v1752, %v1748
  %v2701 = vpack.c.b16 %v1757, %v1753
  %v2702 = vpack.c.b16 %v1758, %v1754
  %v2703 = vpack.c.b16 %v1759, %v1755
  %v2704 = vpack.c.b16 %v1760, %v1756
  %v2705 = vpack.c.b16 %v1765, %v1761
  %v2706 = vpack.c.b16 %v1766, %v1762
  %v2707 = vpack.c.b16 %v1767, %v1763
  %v2708 = vpack.c.b16 %v1768, %v1764
  %v2709 = vpack.c.b16 %v1773, %v1769
  %v2710 = vpack.c.b16 %v1774, %v1770
  %v2711 = vpack.c.b16 %v1775, %v1771
  %v2712 = vpack.c.b16 %v1776, %v1772
  %v2713 = vpack.c.b16 %v1781, %v1777
  %v2714 = vpack.c.b16 %v1782, %v1778
  %v2715 = vpack.c.b16 %v1783, %v1779
  %v2716 = vpack.c.b16 %v1784, %v1780
  %v2717 = vpack.c.b16 %v1789, %v1785
  %v2718 = vpack.c.b16 %v1790, %v1786
  %v2719 = vpack.c.b16 %v1791, %v1787
  %v2720 = vpack.c.b16 %v1792, %v1788
  %v2721 = vpack.c.b16 %v1797, %v1793
  %v2722 = vpack.c.b16 %v1798, %v1794
  %v2723 = vpack.c.b16 %v1799, %v1795
  %v2724 = vpack.c.b16 %v1800, %v1796
  %v2725 = vpack.c.b16 %v1805, %v1801
  %v2726 = vpack.c.b16 %v1806, %v1802
  %v2727 = vpack.c.b16 %v1807, %v1803
  %v2728 = vpack.c.b16 %v1808, %v1804
  %v2729 = vpack.c.b16 %v1813, %v1809
  %v2730 = vpack.c.b16 %v1814, %v1810
  %v2731 = vpack.c.b16 %v1815, %v1811
  %v2732 = vpack.c.b16 %v1816, %v1812
  %v2733 = vpack.c.b16 %v1821, %v1817
  %v2734 = vpack.c.b16 %v1822, %v1818
  %v2735 = vpack.c.b16 %v1823, %v1819
  %v2736 = vpack.c.b16 %v1824, %v1820
  %v2737 = vpack.c.b16 %v1829, %v1825
  %v2738 = vpack.c.b16 %v1830, %v1826
  %v2739 = vpack.c.b16 %v1831, %v1827
  %v2740 = vpack.c.b16 %v1832, %v1828
  %v2741 = vpack.c.b16 %v1837, %v1833
  %v2742 = vpack.c.b16 %v1838, %v1834
  %v2743 = vpack.c.b16 %v1839, %v1835
  %v2744 = vpack.c.b16 %v1840, %v1836
  %v2745 = vpack.c.b16 %v1845, %v1841
  %v2746 = vpack.c.b16 %v1846, %v1842
  %v2747 = vpack.c.b16 %v1847, %v1843
  %v2748 = vpack.c.b16 %v1848, %v1844
  %v2749 = vpack.c.b16 %v1853, %v1849
  %v2750 = vpack.c.b16 %v1854, %v1850
  %v2751 = vpack.c.b16 %v1855, %v1851
  %v2752 = vpack.c.b16 %v1856, %v1852
  %v2753 = vpack.c.b16 %v1861, %v1857
  %v2754 = vpack.c.b16 %v1862, %v1858
  %v2755 = vpack.c.b16 %v1863, %v1859
  %v2756 = vpack.c.b16 %v1864, %v1860
  %v2757 = vpack.c.b16 %v1869, %v1865
  %v2758 = vpack.c.b16 %v1870, %v1866
  %v2759 = vpack.c.b16 %v1871, %v1867
  %v2760 = vpack.c.b16 %v1872, %v1868
  %v2761 = vpack.c.b16 %v1877, %v1873
  %v2762 = vpack.c.b16 %v1878, %v1874
  %v2763 = vpack.c.b16 %v1879, %v1875
  %v2764 = vpack.c.b16 %v1880, %v1876
  %v2765 = vpack.c.b16 %v1885, %v1881
  %v2766 = vpack.c.b16 %v1886, %v1882
  %v2767 = vpack.c.b16 %v1887, %v1883
  %v2768 = vpack.c.b16 %v1888, %v1884
  %v2769 = vpack.c.b16 %v1893, %v1889
  %v2770 = vpack.c.b16 %v1894, %v1890
  %v2771 = vpack.c.b16 %v1895, %v1891
  %v2772 = vpack.c.b16 %v1896, %v1892
  %v2773 = vpack.c.b16 %v1901, %v1897
  %v2774 = vpack.c.b16 %v1902, %v1898
  %v2775 = vpack.c.b16 %v1903, %v1899
  %v2776 = vpack.c.b16 %v1904, %v1900
  %v2777 = vpack.c.b16 %v1909, %v1905
  %v2778 = vpack.c.b16 %v1910, %v1906
  %v2779 = vpack.c.b16 %v1911, %v1907
  %v2780 = vpack.c.b16 %v1912, %v1908
  %v2781 = vpack.c.b16 %v1917, %v1913
  %v2782 = vpack.c.b16 %v1918, %v1914
  %v2783 = vpack.c.b16 %v1919, %v1915
  %v2784 = vpack.c.b16 %v1920, %v1916
  %v2785 = vpack.c.b16 %v1925, %v1921
  %v2786 = vpack.c.b16 %v1926, %v1922
  %v2787 = vpack.c.b16 %v1927, %v1923
  %v2788 = vpack.c.b16 %v1928, %v1924
  %v2789 = vpack.c.b16 %v1933, %v1929
  %v2790 = vpack.c.b16 %v1934, %v1930
  %v2791 = vpack.c.b16 %v1935, %v1931
  %v2792 = vpack.c.b16 %v1936, %v1932
  %v2793 = vpack.c.b16 %v1941, %v1937
  %v2794 = vpack.c.b16 %v1942, %v1938
  %v2795 = vpack.c.b16 %v1943, %v1939
  %v2796 = vpack.c.b16 %v1944, %v1940
  %v2797 = vpack.c.b16 %v1949, %v1945
  %v2798 = vpack.c.b16 %v1950, %v1946
  %v2799 = vpack.c.b16 %v1951, %v1947
  %v2800 = vpack.c.b16 %v1952, %v1948
  %v2801 = vpack.c.b16 %v1957, %v1953
  %v2802 = vpack.c.b16 %v1958, %v1954
  %v2803 = vpack.c.b16 %v1959, %v1955
  %v2804 = vpack.c.b16 %v1960, %v1956
  %v2805 = vpack.c.b16 %v1965, %v1961
  %v2806 = vpack.c.b16 %v1966, %v1962
  %v2807 = vpack.c.b16 %v1967, %v1963
  %v2808 = vpack.c.b16 %v1968, %v1964
  %v2809 = vpack.c.b16 %v1973, %v1969
  %v2810 = vpack.c.b16 %v1974, %v1970
  %v2811 = vpack.c.b16 %v1975, %v1971
  %v2812 = vpack.c.b16 %v1976, %v1972
  %v2813 = vpack.c.b16 %v1981, %v1977
  %v2814 = vpack.c.b16 %v1982, %v1978
  %v2815 = vpack.c.b16 %v1983, %v1979
  %v2816 = vpack.c.b16 %v1984, %v1980
  %v2817 = vpack.c.b16 %v1989, %v1985
  %v2818 = vpack.c.b16 %v1990, %v1986
  %v2819 = vpack.c.b16 %v1991, %v1987
  %v2820 = vpack.c.b16 %v1992, %v1988
  %v2821 = vpack.c.b16 %v1997, %v1993
  %v2822 = vpack.c.b16 %v1998, %v1994
  %v2823 = vpack.c.b16 %v1999, %v1995
  %v2824 = vpack.c.b16 %v2000, %v1996
  %v2825 = vpack.c.b16 %v2005, %v2001
  %v2826 = vpack.c.b16 %v2006, %v2002
  %v2827 = vpack.c.b16 %v2007, %v2003
  %v2828 = vpack.c.b16 %v2008, %v2004
  %v2829 = vpack.c.b16 %v2013, %v2009
  %v2830 = vpack.c.b16 %v2014, %v2010
  %v2831 = vpack.c.b16 %v2015, %v2011
  %v2832 = vpack.c.b16 %v2016, %v2012
  %v2833 = vpack.c.b16 %v2021, %v2017
  %v2834 = vpack.c.b16 %v2022, %v2018
  %v2835 = vpack.c.b16 %v2023, %v2019
  %v2836 = vpack.c.b16 %v2024, %v2020
  %v2837 = vpack.c.b16 %v2029, %v2025
  %v2838 = vpack.c.b16 %v2030, %v2026
  %v2839 = vpack.c.b16 %v2031, %v2027
  %v2840 = vpack.c.b16 %v2032, %v2028
  %v2841 = vpack.c.b16 %v2037, %v2033
  %v2842 = vpack.c.b16 %v2038, %v2034
  %v2843 = vpack.c.b16 %v2039, %v2035
  %v2844 = vpack.c.b16 %v2040, %v2036
  %v2845 = vpack.c.b16 %v2045, %v2041
  %v2846 = vpack.c.b16 %v2046, %v2042
  %v2847 = vpack.c.b16 %v2047, %v2043
  %v2848 = vpack.c.b16 %v2048, %v2044
  %v2849 = vpack.c.b16 %v2053, %v2049
  %v2850 = vpack.c.b16 %v2054, %v2050
  %v2851 = vpack.c.b16 %v2055, %v2051
  %v2852 = vpack.c.b16 %v2056, %v2052
  %v2853 = vpack.c.b16 %v2061, %v2057
  %v2854 = vpack.c.b16 %v2062, %v2058
  %v2855 = vpack.c.b16 %v2063, %v2059
  %v2856 = vpack.c.b16 %v2064, %v2060
  %v2857 = vpack.c.b16 %v2069, %v2065
  %v2858 = vpack.c.b16 %v2070, %v2066
  %v2859 = vpack.c.b16 %v2071, %v2067
  %v2860 = vpack.c.b16 %v2072, %v2068
  %v2861 = vpack.c.b16 %v2077, %v2073
  %v2862 = vpack.c.b16 %v2078, %v2074
  %v2863 = vpack.c.b16 %v2079, %v2075
  %v2864 = vpack.c.b16 %v2080, %v2076
  %v2865 = vpack.c.b16 %v2085, %v2081
  %v2866 = vpack.c.b16 %v2086, %v2082
  %v2867 = vpack.c.b16 %v2087, %v2083
  %v2868 = vpack.c.b16 %v2088, %v2084
  %v2869 = vpack.c.b16 %v2093, %v2089
  %v2870 = vpack.c.b16 %v2094, %v2090
  %v2871 = vpack.c.b16 %v2095, %v2091
  %v2872 = vpack.c.b16 %v2096, %v2092
  %v2873 = vpack.c.b16 %v2101, %v2097
  %v2874 = vpack.c.b16 %v2102, %v2098
  %v2875 = vpack.c.b16 %v2103, %v2099
  %v2876 = vpack.c.b16 %v2104, %v2100
  %v2877 = vpack.c.b16 %v2109, %v2105
  %v2878 = vpack.c.b16 %v2110, %v2106
  %v2879 = vpack.c.b16 %v2111, %v2107
  %v2880 = vpack.c.b16 %v2112, %v2108
  %v2881 = vpack.c.b16 %v2117, %v2113
  %v2882 = vpack.c.b16 %v2118, %v2114
  %v2883 = vpack.c.b16 %v2119, %v2115
  %v2884 = vpack.c.b16 %v2120, %v2116
  %v2885 = vpack.c.b16 %v2125, %v2121
  %v2886 = vpack.c.b16 %v2126, %v2122
  %v2887 = vpack.c.b16 %v2127, %v2123
  %v2888 = vpack.c.b16 %v2128, %v2124
  %v2889 = vpack.c.b16 %v2133, %v2129
  %v2890 = vpack.c.b16 %v2134, %v2130
  %v2891 = vpack.c.b16 %v2135, %v2131
  %v2892 = vpack.c.b16 %v2136, %v2132
  %v2893 = vpack.c.b16 %v2141, %v2137
  %v2894 = vpack.c.b16 %v2142, %v2138
  %v2895 = vpack.c.b16 %v2143, %v2139
  %v2896 = vpack.c.b16 %v2144, %v2140
  %v2897 = vpack.c.b16 %v2149, %v2145
  %v2898 = vpack.c.b16 %v2150, %v2146
  %v2899 = vpack.c.b16 %v2151, %v2147
  %v2900 = vpack.c.b16 %v2152, %v2148
  %v2901 = vpack.c.b16 %v2157, %v2153
  %v2902 = vpack.c.b16 %v2158, %v2154
  %v2903 = vpack.c.b16 %v2159, %v2155
  %v2904 = vpack.c.b16 %v2160, %v2156
  %v2905 = vpack.c.b16 %v2165, %v2161
  %v2906 = vpack.c.b16 %v2166, %v2162
  %v2907 = vpack.c.b16 %v2167, %v2163
  %v2908 = vpack.c.b16 %v2168, %v2164
  %v2909 = vpack.c.b16 %v2173, %v2169
  %v2910 = vpack.c.b16 %v2174, %v2170
  %v2911 = vpack.c.b16 %v2175, %v2171
  %v2912 = vpack.c.b16 %v2176, %v2172
  %v2913 = vpack.c.b16 %v2181, %v2177
  %v2914 = vpack.c.b16 %v2182, %v2178
  %v2915 = vpack.c.b16 %v2183, %v2179
  %v2916 = vpack.c.b16 %v2184, %v2180
  %v2917 = vpack.c.b16 %v2189, %v2185
  %v2918 = vpack.c.b16 %v2190, %v2186
  %v2919 = vpack.c.b16 %v2191, %v2187
  %v2920 = vpack.c.b16 %v2192, %v2188
  %v2921 = vpack.c.b16 %v2197, %v2193
  %v2922 = vpack.c.b16 %v2198, %v2194
  %v2923 = vpack.c.b16 %v2199, %v2195
  %v2924 = vpack.c.b16 %v2200, %v2196
  %v2925 = vpack.c.b16 %v2205, %v2201
  %v2926 = vpack.c.b16 %v2206, %v2202
  %v2927 = vpack.c.b16 %v2207, %v2203
  %v2928 = vpack.c.b16 %v2208, %v2204
  %v2929 = vpack.c.b16 %v2213, %v2209
  %v2930 = vpack.c.b16 %v2214, %v2210
  %v2931 = vpack.c.b16 %v2215, %v2211
  %v2932 = vpack.c.b16 %v2216, %v2212
  %v2933 = vpack.c.b16 %v2221, %v2217
  %v2934 = vpack.c.b16 %v2222, %v2218
  %v2935 = vpack.c.b16 %v2223, %v2219
  %v2936 = vpack.c.b16 %v2224, %v2220
  %v2937 = vpack.c.b16 %v2229, %v2225
  %v2938 = vpack.c.b16 %v2230, %v2226
  %v2939 = vpack.c.b16 %v2231, %v2227
  %v2940 = vpack.c.b16 %v2232, %v2228
  %v2941 = vpack.c.b16 %v2237, %v2233
  %v2942 = vpack.c.b16 %v2238, %v2234
  %v2943 = vpack.c.b16 %v2239, %v2235
  %v2944 = vpack.c.b16 %v2240, %v2236
  %v2945 = vpack.c.b16 %v2245, %v2241
  %v2946 = vpack.c.b16 %v2246, %v2242
  %v2947 = vpack.c.b16 %v2247, %v2243
  %v2948 = vpack.c.b16 %v2248, %v2244
  %v2949 = vpack.c.b16 %v2253, %v2249
  %v2950 = vpack.c.b16 %v2254, %v2250
  %v2951 = vpack.c.b16 %v2255, %v2251
  %v2952 = vpack.c.b16 %v2256, %v2252
  %v2953 = vpack.c.b16 %v2261, %v2257
  %v2954 = vpack.c.b16 %v2262, %v2258
  %v2955 = vpack.c.b16 %v2263, %v2259
  %v2956 = vpack.c.b16 %v2264, %v2260
  %v2957 = vpack.c.b16 %v2269, %v2265
  %v2958 = vpack.c.b16 %v2270, %v2266
  %v2959 = vpack.c.b16 %v2271, %v2267
  %v2960 = vpack.c.b16 %v2272, %v2268
  %v2961 = vpack.c.b16 %v2277, %v2273
  %v2962 = vpack.c.b16 %v2278, %v2274
  %v2963 = vpack.c.b16 %v2279, %v2275
  %v2964 = vpack.c.b16 %v2280, %v2276
  %v2965 = vpack.c.b16 %v2285, %v2281
  %v2966 = vpack.c.b16 %v2286, %v2282
  %v2967 = vpack.c.b16 %v2287, %v2283
  %v2968 = vpack.c.b16 %v2288, %v2284
  %v2969 = vpack.c.b16 %v2293, %v2289
  %v2970 = vpack.c.b16 %v2294, %v2290
  %v2971 = vpack.c.b16 %v2295, %v2291
  %v2972 = vpack.c.b16 %v2296, %v2292
  %v2973 = vpack.c.b16 %v2301, %v2297
  %v2974 = vpack.c.b16 %v2302, %v2298
  %v2975 = vpack.c.b16 %v2303, %v2299
  %v2976 = vpack.c.b16 %v2304, %v2300
  %v2977 = vpack.c.b16 %v2309, %v2305
  %v2978 = vpack.c.b16 %v2310, %v2306
  %v2979 = vpack.c.b16 %v2311, %v2307
  %v2980 = vpack.c.b16 %v2312, %v2308
  %v2981 = vpack.c.b16 %v2317, %v2313
  %v2982 = vpack.c.b16 %v2318, %v2314
  %v2983 = vpack.c.b16 %v2319, %v2315
  %v2984 = vpack.c.b16 %v2320, %v2316
  %v2985 = vpack.c.b16 %v2325, %v2321
  %v2986 = vpack.c.b16 %v2326, %v2322
  %v2987 = vpack.c.b16 %v2327, %v2323
  %v2988 = vpack.c.b16 %v2328, %v2324
  %v2989 = vpack.c.b16 %v2333, %v2329
  %v2990 = vpack.c.b16 %v2334, %v2330
  %v2991 = vpack.c.b16 %v2335, %v2331
  %v2992 = vpack.c.b16 %v2336, %v2332
  %v2993 = vpack.c.b16 %v2341, %v2337
  %v2994 = vpack.c.b16 %v2342, %v2338
  %v2995 = vpack.c.b16 %v2343, %v2339
  %v2996 = vpack.c.b16 %v2344, %v2340
  %v2997 = vpack.c.b16 %v2349, %v2345
  %v2998 = vpack.c.b16 %v2350, %v2346
  %v2999 = vpack.c.b16 %v2351, %v2347
  %v3000 = vpack.c.b16 %v2352, %v2348
  %v3001 = vpack.c.b16 %v2357, %v2353
  %v3002 = vpack.c.b16 %v2358, %v2354
  %v3003 = vpack.c.b16 %v2359, %v2355
  %v3004 = vpack.c.b16 %v2360, %v2356
  %v3005 = vpack.c.b16 %v2365, %v2361
  %v3006 = vpack.c.b16 %v2366, %v2362
  %v3007 = vpack.c.b16 %v2367, %v2363
  %v3008 = vpack.c.b16 %v2368, %v2364
  %v3009 = vpack.c.b16 %v2373, %v2369
  %v3010 = vpack.c.b16 %v2374, %v2370
  %v3011 = vpack.c.b16 %v2375, %v2371
  %v3012 = vpack.c.b16 %v2376, %v2372
  %v3013 = vpack.c.b16 %v2381, %v2377
  %v3014 = vpack.c.b16 %v2382, %v2378
  %v3015 = vpack.c.b16 %v2383, %v2379
  %v3016 = vpack.c.b16 %v2384, %v2380
  %v3017 = vpack.c.b16 %v2389, %v2385
  %v3018 = vpack.c.b16 %v2390, %v2386
  %v3019 = vpack.c.b16 %v2391, %v2387
  %v3020 = vpack.c.b16 %v2392, %v2388
  %v3021 = vpack.c.b16 %v2397, %v2393
  %v3022 = vpack.c.b16 %v2398, %v2394
  %v3023 = vpack.c.b16 %v2399, %v2395
  %v3024 = vpack.c.b16 %v2400, %v2396
  %v3025 = vpack.c.b16 %v2405, %v2401
  %v3026 = vpack.c.b16 %v2406, %v2402
  %v3027 = vpack.c.b16 %v2407, %v2403
  %v3028 = vpack.c.b16 %v2408, %v2404
  %v3029 = vpack.c.b16 %v2413, %v2409
  %v3030 = vpack.c.b16 %v2414, %v2410
  %v3031 = vpack.c.b16 %v2415, %v2411
  %v3032 = vpack.c.b16 %v2416, %v2412
  %v3033 = vpack.c.b16 %v2421, %v2417
  %v3034 = vpack.c.b16 %v2422, %v2418
  %v3035 = vpack.c.b16 %v2423, %v2419
  %v3036 = vpack.c.b16 %v2424, %v2420
  %v3037 = vpack.c.b16 %v2429, %v2425
  %v3038 = vpack.c.b16 %v2430, %v2426
  %v3039 = vpack.c.b16 %v2431, %v2427
  %v3040 = vpack.c.b16 %v2432, %v2428
  %v3041 = vpack.c.b16 %v2437, %v2433
  %v3042 = vpack.c.b16 %v2438, %v2434
  %v3043 = vpack.c.b16 %v2439, %v2435
  %v3044 = vpack.c.b16 %v2440, %v2436
  %v3045 = vpack.c.b16 %v2445, %v2441
  %v3046 = vpack.c.b16 %v2446, %v2442
  %v3047 = vpack.c.b16 %v2447, %v2443
  %v3048 = vpack.c.b16 %v2448, %v2444
  %v3049 = vpack.c.b16 %v2453, %v2449
  %v3050 = vpack.c.b16 %v2454, %v2450
  %v3051 = vpack.c.b16 %v2455, %v2451
  %v3052 = vpack.c.b16 %v2456, %v2452
  %v3053 = vpack.c.b16 %v2461, %v2457
  %v3054 = vpack.c.b16 %v2462, %v2458
  %v3055 = vpack.c.b16 %v2463, %v2459
  %v3056 = vpack.c.b16 %v2464, %v2460
  %v3057 = vpack.c.b16 %v2469, %v2465
  %v3058 = vpack.c.b16 %v2470, %v2466
  %v3059 = vpack.c.b16 %v2471, %v2467
  %v3060 = vpack.c.b16 %v2472, %v2468
  %v3061 = vpack.c.b16 %v2477, %v2473
  %v3062 = vpack.c.b16 %v2478, %v2474
  %v3063 = vpack.c.b16 %v2479, %v2475
  %v3064 = vpack.c.b16 %v2480, %v2476
  %v3065 = vpack.c.b16 %v2485, %v2481
  %v3066 = vpack.c.b16 %v2486, %v2482
  %v3067 = vpack.c.b16 %v2487, %v2483
  %v3068 = vpack.c.b16 %v2488, %v2484
  %v3069 = vpack.c.b16 %v2493, %v2489
  %v3070 = vpack.c.b16 %v2494, %v2490
  %v3071 = vpack.c.b16 %v2495, %v2491
  %v3072 = vpack.c.b16 %v2496, %v2492
  %3649 = vmatprep.subr.bf16.mxu0 %v2526
  %3650 = vmatpush1.bf16.msra.mxu0 %v2525
  %3651 = vmatprep.subr.bf16.mxu0 %v2522
  %3652 = vmatpush1.bf16.msra.mxu0 %v2521
  %3653 = vmatprep.subr.bf16.mxu0 %v2518
  %3654 = vmatpush1.bf16.msra.mxu0 %v2517
  %3655 = vmatprep.subr.bf16.mxu0 %v2514
  %3656 = vmatpush1.bf16.msra.mxu0 %v2513
  %3657 = vmatprep.subr.bf16.mxu0 %v2510
  %3658 = vmatpush1.bf16.msra.mxu0 %v2509
  %3659 = vmatprep.subr.bf16.mxu0 %v2506
  %3660 = vmatpush1.bf16.msra.mxu0 %v2505
  %3661 = vmatprep.subr.bf16.mxu0 %v2502
  %3662 = vmatpush1.bf16.msra.mxu0 %v2501
  %3663 = vmatprep.subr.bf16.mxu0 %v2498
  %3664 = vmatpush1.bf16.msra.mxu0 %v2497
  %3665 = vmatprep.subr.bf16.mxu0 %v2558
  %3666 = vmatpush2.bf16.msra.mxu0 %v2557
  %3667 = vmatprep.subr.bf16.mxu0 %v2554
  %3668 = vmatpush2.bf16.msra.mxu0 %v2553
  %3669 = vmatprep.subr.bf16.mxu0 %v2550
  %3670 = vmatpush2.bf16.msra.mxu0 %v2549
  %3671 = vmatprep.subr.bf16.mxu0 %v2546
  %3672 = vmatpush2.bf16.msra.mxu0 %v2545
  %3673 = vmatprep.subr.bf16.mxu0 %v2542
  %3674 = vmatpush2.bf16.msra.mxu0 %v2541
  %3675 = vmatprep.subr.bf16.mxu0 %v2538
  %3676 = vmatpush2.bf16.msra.mxu0 %v2537
  %3677 = vmatprep.subr.bf16.mxu0 %v2534
  %3678 = vmatpush2.bf16.msra.mxu0 %v2533
  %3679 = vmatprep.subr.bf16.mxu0 %v2530
  %3680 = vmatpush2.bf16.msra.mxu0 %v2529
  %3681 = vmatprep.mubr.bf16.mxu0 %v668
  %3682 = vmatmul.mubr.bf16.gmra.mxu0 %v654
  %v3683 = vpop.f32.mrf.mxu0
  %v3684 = vadd.f32 %v611, %v3683
  %v3685 = vpop.f32.mrf.mxu0
  %v3686 = vadd.f32 %v615, %v3685
  %v3687 = vpop.f32.mrf.mxu0
  %v3688 = vpop.f32.mrf.mxu0
  %3689 = vdwg.mxu0
  %3690 = vmatprep.subr.bf16.mxu0 %v2590
  %3691 = vmatpush1.bf16.msra.mxu0 %v2589
  %3692 = vmatprep.subr.bf16.mxu0 %v2586
  %3693 = vmatpush1.bf16.msra.mxu0 %v2585
  %3694 = vmatprep.subr.bf16.mxu0 %v2582
  %3695 = vmatpush1.bf16.msra.mxu0 %v2581
  %3696 = vmatprep.subr.bf16.mxu0 %v2578
  %3697 = vmatpush1.bf16.msra.mxu0 %v2577
  %3698 = vmatprep.subr.bf16.mxu0 %v2574
  %3699 = vmatpush1.bf16.msra.mxu0 %v2573
  %3700 = vmatprep.subr.bf16.mxu0 %v2570
  %3701 = vmatpush1.bf16.msra.mxu0 %v2569
  %3702 = vmatprep.subr.bf16.mxu0 %v2566
  %3703 = vmatpush1.bf16.msra.mxu0 %v2565
  %3704 = vmatprep.subr.bf16.mxu0 %v2562
  %3705 = vmatpush1.bf16.msra.mxu0 %v2561
  %3706 = vmatprep.subr.bf16.mxu0 %v2622
  %3707 = vmatpush2.bf16.msra.mxu0 %v2621
  %3708 = vmatprep.subr.bf16.mxu0 %v2618
  %3709 = vmatpush2.bf16.msra.mxu0 %v2617
  %3710 = vmatprep.subr.bf16.mxu0 %v2614
  %3711 = vmatpush2.bf16.msra.mxu0 %v2613
  %3712 = vmatprep.subr.bf16.mxu0 %v2610
  %3713 = vmatpush2.bf16.msra.mxu0 %v2609
  %3714 = vmatprep.subr.bf16.mxu0 %v2606
  %3715 = vmatpush2.bf16.msra.mxu0 %v2605
  %3716 = vmatprep.subr.bf16.mxu0 %v2602
  %3717 = vmatpush2.bf16.msra.mxu0 %v2601
  %3718 = vmatprep.subr.bf16.mxu0 %v2598
  %3719 = vmatpush2.bf16.msra.mxu0 %v2597
  %3720 = vmatprep.subr.bf16.mxu0 %v2594
  %3721 = vmatpush2.bf16.msra.mxu0 %v2593
  %3722 = vmatprep.mubr.bf16.mxu0 %v678
  %3723 = vmatmul.mubr.bf16.gmra.mxu0 %v676
  %v3724 = vpop.f32.mrf.mxu0
  %v3725 = vadd.f32 %v3684, %v3724
  %v3726 = vpop.f32.mrf.mxu0
  %v3727 = vadd.f32 %v3686, %v3726
  %v3728 = vpop.f32.mrf.mxu0
  %v3729 = vpop.f32.mrf.mxu0
  %3730 = vdwg.mxu0
  %3731 = vmatprep.subr.bf16.mxu0 %v2654
  %3732 = vmatpush1.bf16.msra.mxu0 %v2653
  %3733 = vmatprep.subr.bf16.mxu0 %v2650
  %3734 = vmatpush1.bf16.msra.mxu0 %v2649
  %3735 = vmatprep.subr.bf16.mxu0 %v2646
  %3736 = vmatpush1.bf16.msra.mxu0 %v2645
  %3737 = vmatprep.subr.bf16.mxu0 %v2642
  %3738 = vmatpush1.bf16.msra.mxu0 %v2641
  %3739 = vmatprep.subr.bf16.mxu0 %v2638
  %3740 = vmatpush1.bf16.msra.mxu0 %v2637
  %3741 = vmatprep.subr.bf16.mxu0 %v2634
  %3742 = vmatpush1.bf16.msra.mxu0 %v2633
  %3743 = vmatprep.subr.bf16.mxu0 %v2630
  %3744 = vmatpush1.bf16.msra.mxu0 %v2629
  %3745 = vmatprep.subr.bf16.mxu0 %v2626
  %3746 = vmatpush1.bf16.msra.mxu0 %v2625
  %3747 = vmatprep.subr.bf16.mxu0 %v2686
  %3748 = vmatpush2.bf16.msra.mxu0 %v2685
  %3749 = vmatprep.subr.bf16.mxu0 %v2682
  %3750 = vmatpush2.bf16.msra.mxu0 %v2681
  %3751 = vmatprep.subr.bf16.mxu0 %v2678
  %3752 = vmatpush2.bf16.msra.mxu0 %v2677
  %3753 = vmatprep.subr.bf16.mxu0 %v2674
  %3754 = vmatpush2.bf16.msra.mxu0 %v2673
  %3755 = vmatprep.subr.bf16.mxu0 %v2670
  %3756 = vmatpush2.bf16.msra.mxu0 %v2669
  %3757 = vmatprep.subr.bf16.mxu0 %v2666
  %3758 = vmatpush2.bf16.msra.mxu0 %v2665
  %3759 = vmatprep.subr.bf16.mxu0 %v2662
  %3760 = vmatpush2.bf16.msra.mxu0 %v2661
  %3761 = vmatprep.subr.bf16.mxu0 %v2658
  %3762 = vmatpush2.bf16.msra.mxu0 %v2657
  %3763 = vmatprep.mubr.bf16.mxu0 %v675
  %3764 = vmatmul.mubr.bf16.gmra.mxu0 %v661
  %v3765 = vpop.f32.mrf.mxu0
  %v3766 = vadd.f32 %v3725, %v3765
  %v3767 = vpop.f32.mrf.mxu0
  %v3768 = vadd.f32 %v3727, %v3767
  %v3769 = vpop.f32.mrf.mxu0
  %v3770 = vpop.f32.mrf.mxu0
  %3771 = vdwg.mxu0
  %3772 = vmatprep.subr.bf16.mxu0 %v2718
  %3773 = vmatpush1.bf16.msra.mxu0 %v2717
  %3774 = vmatprep.subr.bf16.mxu0 %v2714
  %3775 = vmatpush1.bf16.msra.mxu0 %v2713
  %3776 = vmatprep.subr.bf16.mxu0 %v2710
  %3777 = vmatpush1.bf16.msra.mxu0 %v2709
  %3778 = vmatprep.subr.bf16.mxu0 %v2706
  %3779 = vmatpush1.bf16.msra.mxu0 %v2705
  %3780 = vmatprep.subr.bf16.mxu0 %v2702
  %3781 = vmatpush1.bf16.msra.mxu0 %v2701
  %3782 = vmatprep.subr.bf16.mxu0 %v2698
  %3783 = vmatpush1.bf16.msra.mxu0 %v2697
  %3784 = vmatprep.subr.bf16.mxu0 %v2694
  %3785 = vmatpush1.bf16.msra.mxu0 %v2693
  %3786 = vmatprep.subr.bf16.mxu0 %v2690
  %3787 = vmatpush1.bf16.msra.mxu0 %v2689
  %3788 = vmatprep.subr.bf16.mxu0 %v2750
  %3789 = vmatpush2.bf16.msra.mxu0 %v2749
  %3790 = vmatprep.subr.bf16.mxu0 %v2746
  %3791 = vmatpush2.bf16.msra.mxu0 %v2745
  %3792 = vmatprep.subr.bf16.mxu0 %v2742
  %3793 = vmatpush2.bf16.msra.mxu0 %v2741
  %3794 = vmatprep.subr.bf16.mxu0 %v2738
  %3795 = vmatpush2.bf16.msra.mxu0 %v2737
  %3796 = vmatprep.subr.bf16.mxu0 %v2734
  %3797 = vmatpush2.bf16.msra.mxu0 %v2733
  %3798 = vmatprep.subr.bf16.mxu0 %v2730
  %3799 = vmatpush2.bf16.msra.mxu0 %v2729
  %3800 = vmatprep.subr.bf16.mxu0 %v2726
  %3801 = vmatpush2.bf16.msra.mxu0 %v2725
  %3802 = vmatprep.subr.bf16.mxu0 %v2722
  %3803 = vmatpush2.bf16.msra.mxu0 %v2721
  %3804 = vmatprep.mubr.bf16.mxu0 %v679
  %3805 = vmatmul.mubr.bf16.gmra.mxu0 %v677
  %v3806 = vpop.f32.mrf.mxu0
  %v3807 = vadd.f32 %v3766, %v3806
  %v3808 = vpop.f32.mrf.mxu0
  %v3809 = vadd.f32 %v3768, %v3808
  %v3810 = vpop.f32.mrf.mxu0
  %v3811 = vpop.f32.mrf.mxu0
  %3812 = vdwg.mxu0
  %3813 = vmatprep.subr.bf16.mxu0 %v2782
  %3814 = vmatpush1.bf16.msra.mxu0 %v2781
  %3815 = vmatprep.subr.bf16.mxu0 %v2778
  %3816 = vmatpush1.bf16.msra.mxu0 %v2777
  %3817 = vmatprep.subr.bf16.mxu0 %v2774
  %3818 = vmatpush1.bf16.msra.mxu0 %v2773
  %3819 = vmatprep.subr.bf16.mxu0 %v2770
  %3820 = vmatpush1.bf16.msra.mxu0 %v2769
  %3821 = vmatprep.subr.bf16.mxu0 %v2766
  %3822 = vmatpush1.bf16.msra.mxu0 %v2765
  %3823 = vmatprep.subr.bf16.mxu0 %v2762
  %3824 = vmatpush1.bf16.msra.mxu0 %v2761
  %3825 = vmatprep.subr.bf16.mxu0 %v2758
  %3826 = vmatpush1.bf16.msra.mxu0 %v2757
  %3827 = vmatprep.subr.bf16.mxu0 %v2754
  %3828 = vmatpush1.bf16.msra.mxu0 %v2753
  %3829 = vmatprep.subr.bf16.mxu0 %v2814
  %3830 = vmatpush2.bf16.msra.mxu0 %v2813
  %3831 = vmatprep.subr.bf16.mxu0 %v2810
  %3832 = vmatpush2.bf16.msra.mxu0 %v2809
  %3833 = vmatprep.subr.bf16.mxu0 %v2806
  %3834 = vmatpush2.bf16.msra.mxu0 %v2805
  %3835 = vmatprep.subr.bf16.mxu0 %v2802
  %3836 = vmatpush2.bf16.msra.mxu0 %v2801
  %3837 = vmatprep.subr.bf16.mxu0 %v2798
  %3838 = vmatpush2.bf16.msra.mxu0 %v2797
  %3839 = vmatprep.subr.bf16.mxu0 %v2794
  %3840 = vmatpush2.bf16.msra.mxu0 %v2793
  %3841 = vmatprep.subr.bf16.mxu0 %v2790
  %3842 = vmatpush2.bf16.msra.mxu0 %v2789
  %3843 = vmatprep.subr.bf16.mxu0 %v2786
  %3844 = vmatpush2.bf16.msra.mxu0 %v2785
  %3845 = vmatprep.mubr.bf16.mxu0 %v717
  %3846 = vmatmul.mubr.bf16.gmra.mxu0 %v703
  %v3847 = vpop.f32.mrf.mxu0
  %v3848 = vadd.f32 %v3807, %v3847
  %v3849 = vpop.f32.mrf.mxu0
  %v3850 = vadd.f32 %v3809, %v3849
  %v3851 = vpop.f32.mrf.mxu0
  %v3852 = vpop.f32.mrf.mxu0
  %3853 = vdwg.mxu0
  %3854 = vmatprep.subr.bf16.mxu0 %v2846
  %3855 = vmatpush1.bf16.msra.mxu0 %v2845
  %3856 = vmatprep.subr.bf16.mxu0 %v2842
  %3857 = vmatpush1.bf16.msra.mxu0 %v2841
  %3858 = vmatprep.subr.bf16.mxu0 %v2838
  %3859 = vmatpush1.bf16.msra.mxu0 %v2837
  %3860 = vmatprep.subr.bf16.mxu0 %v2834
  %3861 = vmatpush1.bf16.msra.mxu0 %v2833
  %3862 = vmatprep.subr.bf16.mxu0 %v2830
  %3863 = vmatpush1.bf16.msra.mxu0 %v2829
  %3864 = vmatprep.subr.bf16.mxu0 %v2826
  %3865 = vmatpush1.bf16.msra.mxu0 %v2825
  %3866 = vmatprep.subr.bf16.mxu0 %v2822
  %3867 = vmatpush1.bf16.msra.mxu0 %v2821
  %3868 = vmatprep.subr.bf16.mxu0 %v2818
  %3869 = vmatpush1.bf16.msra.mxu0 %v2817
  %3870 = vmatprep.subr.bf16.mxu0 %v2878
  %3871 = vmatpush2.bf16.msra.mxu0 %v2877
  %3872 = vmatprep.subr.bf16.mxu0 %v2874
  %3873 = vmatpush2.bf16.msra.mxu0 %v2873
  %3874 = vmatprep.subr.bf16.mxu0 %v2870
  %3875 = vmatpush2.bf16.msra.mxu0 %v2869
  %3876 = vmatprep.subr.bf16.mxu0 %v2866
  %3877 = vmatpush2.bf16.msra.mxu0 %v2865
  %3878 = vmatprep.subr.bf16.mxu0 %v2862
  %3879 = vmatpush2.bf16.msra.mxu0 %v2861
  %3880 = vmatprep.subr.bf16.mxu0 %v2858
  %3881 = vmatpush2.bf16.msra.mxu0 %v2857
  %3882 = vmatprep.subr.bf16.mxu0 %v2854
  %3883 = vmatpush2.bf16.msra.mxu0 %v2853
  %3884 = vmatprep.subr.bf16.mxu0 %v2850
  %3885 = vmatpush2.bf16.msra.mxu0 %v2849
  %3886 = vmatprep.mubr.bf16.mxu0 %v727
  %3887 = vmatmul.mubr.bf16.gmra.mxu0 %v725
  %v3888 = vpop.f32.mrf.mxu0
  %v3889 = vadd.f32 %v3848, %v3888
  %v3890 = vpop.f32.mrf.mxu0
  %v3891 = vadd.f32 %v3850, %v3890
  %v3892 = vpop.f32.mrf.mxu0
  %v3893 = vpop.f32.mrf.mxu0
  %3894 = vdwg.mxu0
  %3895 = vmatprep.subr.bf16.mxu0 %v2910
  %3896 = vmatpush1.bf16.msra.mxu0 %v2909
  %3897 = vmatprep.subr.bf16.mxu0 %v2906
  %3898 = vmatpush1.bf16.msra.mxu0 %v2905
  %3899 = vmatprep.subr.bf16.mxu0 %v2902
  %3900 = vmatpush1.bf16.msra.mxu0 %v2901
  %3901 = vmatprep.subr.bf16.mxu0 %v2898
  %3902 = vmatpush1.bf16.msra.mxu0 %v2897
  %3903 = vmatprep.subr.bf16.mxu0 %v2894
  %3904 = vmatpush1.bf16.msra.mxu0 %v2893
  %3905 = vmatprep.subr.bf16.mxu0 %v2890
  %3906 = vmatpush1.bf16.msra.mxu0 %v2889
  %3907 = vmatprep.subr.bf16.mxu0 %v2886
  %3908 = vmatpush1.bf16.msra.mxu0 %v2885
  %3909 = vmatprep.subr.bf16.mxu0 %v2882
  %3910 = vmatpush1.bf16.msra.mxu0 %v2881
  %3911 = vmatprep.subr.bf16.mxu0 %v2942
  %3912 = vmatpush2.bf16.msra.mxu0 %v2941
  %3913 = vmatprep.subr.bf16.mxu0 %v2938
  %3914 = vmatpush2.bf16.msra.mxu0 %v2937
  %3915 = vmatprep.subr.bf16.mxu0 %v2934
  %3916 = vmatpush2.bf16.msra.mxu0 %v2933
  %3917 = vmatprep.subr.bf16.mxu0 %v2930
  %3918 = vmatpush2.bf16.msra.mxu0 %v2929
  %3919 = vmatprep.subr.bf16.mxu0 %v2926
  %3920 = vmatpush2.bf16.msra.mxu0 %v2925
  %3921 = vmatprep.subr.bf16.mxu0 %v2922
  %3922 = vmatpush2.bf16.msra.mxu0 %v2921
  %3923 = vmatprep.subr.bf16.mxu0 %v2918
  %3924 = vmatpush2.bf16.msra.mxu0 %v2917
  %3925 = vmatprep.subr.bf16.mxu0 %v2914
  %3926 = vmatpush2.bf16.msra.mxu0 %v2913
  %3927 = vmatprep.mubr.bf16.mxu0 %v724
  %3928 = vmatmul.mubr.bf16.gmra.mxu0 %v710
  %v3929 = vpop.f32.mrf.mxu0
  %v3930 = vadd.f32 %v3889, %v3929
  %v3931 = vpop.f32.mrf.mxu0
  %v3932 = vadd.f32 %v3891, %v3931
  %v3933 = vpop.f32.mrf.mxu0
  %v3934 = vpop.f32.mrf.mxu0
  %3935 = vdwg.mxu0
  %3936 = vmatprep.subr.bf16.mxu0 %v2974
  %3937 = vmatpush1.bf16.msra.mxu0 %v2973
  %3938 = vmatprep.subr.bf16.mxu0 %v2970
  %3939 = vmatpush1.bf16.msra.mxu0 %v2969
  %3940 = vmatprep.subr.bf16.mxu0 %v2966
  %3941 = vmatpush1.bf16.msra.mxu0 %v2965
  %3942 = vmatprep.subr.bf16.mxu0 %v2962
  %3943 = vmatpush1.bf16.msra.mxu0 %v2961
  %3944 = vmatprep.subr.bf16.mxu0 %v2958
  %3945 = vmatpush1.bf16.msra.mxu0 %v2957
  %3946 = vmatprep.subr.bf16.mxu0 %v2954
  %3947 = vmatpush1.bf16.msra.mxu0 %v2953
  %3948 = vmatprep.subr.bf16.mxu0 %v2950
  %3949 = vmatpush1.bf16.msra.mxu0 %v2949
  %3950 = vmatprep.subr.bf16.mxu0 %v2946
  %3951 = vmatpush1.bf16.msra.mxu0 %v2945
  %3952 = vmatprep.subr.bf16.mxu0 %v3006
  %3953 = vmatpush2.bf16.msra.mxu0 %v3005
  %3954 = vmatprep.subr.bf16.mxu0 %v3002
  %3955 = vmatpush2.bf16.msra.mxu0 %v3001
  %3956 = vmatprep.subr.bf16.mxu0 %v2998
  %3957 = vmatpush2.bf16.msra.mxu0 %v2997
  %3958 = vmatprep.subr.bf16.mxu0 %v2994
  %3959 = vmatpush2.bf16.msra.mxu0 %v2993
  %3960 = vmatprep.subr.bf16.mxu0 %v2990
  %3961 = vmatpush2.bf16.msra.mxu0 %v2989
  %3962 = vmatprep.subr.bf16.mxu0 %v2986
  %3963 = vmatpush2.bf16.msra.mxu0 %v2985
  %3964 = vmatprep.subr.bf16.mxu0 %v2982
  %3965 = vmatpush2.bf16.msra.mxu0 %v2981
  %3966 = vmatprep.subr.bf16.mxu0 %v2978
  %3967 = vmatpush2.bf16.msra.mxu0 %v2977
  %3968 = vmatprep.mubr.bf16.mxu0 %v728
  %3969 = vmatmul.mubr.bf16.gmra.mxu0 %v726
  %v3970 = vpop.f32.mrf.mxu0
  %v3971 = vadd.f32 %v3930, %v3970
  %v3972 = vpop.f32.mrf.mxu0
  %v3973 = vadd.f32 %v3932, %v3972
  %v3974 = vpop.f32.mrf.mxu0
  %v3975 = vpop.f32.mrf.mxu0
  %3976 = vdwg.mxu0
  %3977 = vmatprep.subr.bf16.mxu0 %v3038
  %3978 = vmatpush1.bf16.msra.mxu0 %v3037
  %3979 = vmatprep.subr.bf16.mxu0 %v3034
  %3980 = vmatpush1.bf16.msra.mxu0 %v3033
  %3981 = vmatprep.subr.bf16.mxu0 %v3030
  %3982 = vmatpush1.bf16.msra.mxu0 %v3029
  %3983 = vmatprep.subr.bf16.mxu0 %v3026
  %3984 = vmatpush1.bf16.msra.mxu0 %v3025
  %3985 = vmatprep.subr.bf16.mxu0 %v3022
  %3986 = vmatpush1.bf16.msra.mxu0 %v3021
  %3987 = vmatprep.subr.bf16.mxu0 %v3018
  %3988 = vmatpush1.bf16.msra.mxu0 %v3017
  %3989 = vmatprep.subr.bf16.mxu0 %v3014
  %3990 = vmatpush1.bf16.msra.mxu0 %v3013
  %3991 = vmatprep.subr.bf16.mxu0 %v3010
  %3992 = vmatpush1.bf16.msra.mxu0 %v3009
  %3993 = vmatprep.subr.bf16.mxu0 %v3070
  %3994 = vmatpush2.bf16.msra.mxu0 %v3069
  %3995 = vmatprep.subr.bf16.mxu0 %v3066
  %3996 = vmatpush2.bf16.msra.mxu0 %v3065
  %3997 = vmatprep.subr.bf16.mxu0 %v3062
  %3998 = vmatpush2.bf16.msra.mxu0 %v3061
  %3999 = vmatprep.subr.bf16.mxu0 %v3058
  %4000 = vmatpush2.bf16.msra.mxu0 %v3057
  %4001 = vmatprep.subr.bf16.mxu0 %v3054
  %4002 = vmatpush2.bf16.msra.mxu0 %v3053
  %4003 = vmatprep.subr.bf16.mxu0 %v3050
  %4004 = vmatpush2.bf16.msra.mxu0 %v3049
  %4005 = vmatprep.subr.bf16.mxu0 %v3046
  %4006 = vmatpush2.bf16.msra.mxu0 %v3045
  %4007 = vmatprep.subr.bf16.mxu0 %v3042
  %4008 = vmatpush2.bf16.msra.mxu0 %v3041
  %4009 = vmatprep.mubr.bf16.mxu0 %v750
  %4010 = vmatmul.mubr.bf16.gmra.mxu0 %v743
  %v4011 = vpop.f32.mrf.mxu0
  %v4012 = vadd.f32 %v3971, %v4011
  %v4013 = vpop.f32.mrf.mxu0
  %v4014 = vadd.f32 %v3973, %v4013
  %v4015 = vpop.f32.mrf.mxu0
  %v4016 = vpop.f32.mrf.mxu0
  %4017 = vdwg.mxu0
  %4018 = vmatprep.subr.bf16.mxu0 %v2528
  %4019 = vmatpush1.bf16.msra.mxu0 %v2527
  %4020 = vmatprep.subr.bf16.mxu0 %v2524
  %4021 = vmatpush1.bf16.msra.mxu0 %v2523
  %4022 = vmatprep.subr.bf16.mxu0 %v2520
  %4023 = vmatpush1.bf16.msra.mxu0 %v2519
  %4024 = vmatprep.subr.bf16.mxu0 %v2516
  %4025 = vmatpush1.bf16.msra.mxu0 %v2515
  %4026 = vmatprep.subr.bf16.mxu0 %v2512
  %4027 = vmatpush1.bf16.msra.mxu0 %v2511
  %4028 = vmatprep.subr.bf16.mxu0 %v2508
  %4029 = vmatpush1.bf16.msra.mxu0 %v2507
  %4030 = vmatprep.subr.bf16.mxu0 %v2504
  %4031 = vmatpush1.bf16.msra.mxu0 %v2503
  %4032 = vmatprep.subr.bf16.mxu0 %v2500
  %4033 = vmatpush1.bf16.msra.mxu0 %v2499
  %4034 = vmatprep.subr.bf16.mxu0 %v2560
  %4035 = vmatpush2.bf16.msra.mxu0 %v2559
  %4036 = vmatprep.subr.bf16.mxu0 %v2556
  %4037 = vmatpush2.bf16.msra.mxu0 %v2555
  %4038 = vmatprep.subr.bf16.mxu0 %v2552
  %4039 = vmatpush2.bf16.msra.mxu0 %v2551
  %4040 = vmatprep.subr.bf16.mxu0 %v2548
  %4041 = vmatpush2.bf16.msra.mxu0 %v2547
  %4042 = vmatprep.subr.bf16.mxu0 %v2544
  %4043 = vmatpush2.bf16.msra.mxu0 %v2543
  %4044 = vmatprep.subr.bf16.mxu0 %v2540
  %4045 = vmatpush2.bf16.msra.mxu0 %v2539
  %4046 = vmatprep.subr.bf16.mxu0 %v2536
  %4047 = vmatpush2.bf16.msra.mxu0 %v2535
  %4048 = vmatprep.subr.bf16.mxu0 %v2532
  %4049 = vmatpush2.bf16.msra.mxu0 %v2531
  %4050 = vmatprep.mubr.bf16.mxu0 %v668
  %4051 = vmatmul.mubr.bf16.gmra.mxu0 %v654
  %v4052 = vpop.f32.mrf.mxu0
  %v4053 = vadd.f32 %v619, %v4052
  %v4054 = vpop.f32.mrf.mxu0
  %v4055 = vadd.f32 %v623, %v4054
  %v4056 = vpop.f32.mrf.mxu0
  %v4057 = vpop.f32.mrf.mxu0
  %4058 = vdwg.mxu0
  %4059 = vmatprep.subr.bf16.mxu0 %v2592
  %4060 = vmatpush1.bf16.msra.mxu0 %v2591
  %4061 = vmatprep.subr.bf16.mxu0 %v2588
  %4062 = vmatpush1.bf16.msra.mxu0 %v2587
  %4063 = vmatprep.subr.bf16.mxu0 %v2584
  %4064 = vmatpush1.bf16.msra.mxu0 %v2583
  %4065 = vmatprep.subr.bf16.mxu0 %v2580
  %4066 = vmatpush1.bf16.msra.mxu0 %v2579
  %4067 = vmatprep.subr.bf16.mxu0 %v2576
  %4068 = vmatpush1.bf16.msra.mxu0 %v2575
  %4069 = vmatprep.subr.bf16.mxu0 %v2572
  %4070 = vmatpush1.bf16.msra.mxu0 %v2571
  %4071 = vmatprep.subr.bf16.mxu0 %v2568
  %4072 = vmatpush1.bf16.msra.mxu0 %v2567
  %4073 = vmatprep.subr.bf16.mxu0 %v2564
  %4074 = vmatpush1.bf16.msra.mxu0 %v2563
  %4075 = vmatprep.subr.bf16.mxu0 %v2624
  %4076 = vmatpush2.bf16.msra.mxu0 %v2623
  %4077 = vmatprep.subr.bf16.mxu0 %v2620
  %4078 = vmatpush2.bf16.msra.mxu0 %v2619
  %4079 = vmatprep.subr.bf16.mxu0 %v2616
  %4080 = vmatpush2.bf16.msra.mxu0 %v2615
  %4081 = vmatprep.subr.bf16.mxu0 %v2612
  %4082 = vmatpush2.bf16.msra.mxu0 %v2611
  %4083 = vmatprep.subr.bf16.mxu0 %v2608
  %4084 = vmatpush2.bf16.msra.mxu0 %v2607
  %4085 = vmatprep.subr.bf16.mxu0 %v2604
  %4086 = vmatpush2.bf16.msra.mxu0 %v2603
  %4087 = vmatprep.subr.bf16.mxu0 %v2600
  %4088 = vmatpush2.bf16.msra.mxu0 %v2599
  %4089 = vmatprep.subr.bf16.mxu0 %v2596
  %4090 = vmatpush2.bf16.msra.mxu0 %v2595
  %4091 = vmatprep.mubr.bf16.mxu0 %v678
  %4092 = vmatmul.mubr.bf16.gmra.mxu0 %v676
  %v4093 = vpop.f32.mrf.mxu0
  %v4094 = vadd.f32 %v4053, %v4093
  %v4095 = vpop.f32.mrf.mxu0
  %v4096 = vadd.f32 %v4055, %v4095
  %v4097 = vpop.f32.mrf.mxu0
  %v4098 = vpop.f32.mrf.mxu0
  %4099 = vdwg.mxu0
  %4100 = vmatprep.subr.bf16.mxu0 %v2656
  %4101 = vmatpush1.bf16.msra.mxu0 %v2655
  %4102 = vmatprep.subr.bf16.mxu0 %v2652
  %4103 = vmatpush1.bf16.msra.mxu0 %v2651
  %4104 = vmatprep.subr.bf16.mxu0 %v2648
  %4105 = vmatpush1.bf16.msra.mxu0 %v2647
  %4106 = vmatprep.subr.bf16.mxu0 %v2644
  %4107 = vmatpush1.bf16.msra.mxu0 %v2643
  %4108 = vmatprep.subr.bf16.mxu0 %v2640
  %4109 = vmatpush1.bf16.msra.mxu0 %v2639
  %4110 = vmatprep.subr.bf16.mxu0 %v2636
  %4111 = vmatpush1.bf16.msra.mxu0 %v2635
  %4112 = vmatprep.subr.bf16.mxu0 %v2632
  %4113 = vmatpush1.bf16.msra.mxu0 %v2631
  %4114 = vmatprep.subr.bf16.mxu0 %v2628
  %4115 = vmatpush1.bf16.msra.mxu0 %v2627
  %4116 = vmatprep.subr.bf16.mxu0 %v2688
  %4117 = vmatpush2.bf16.msra.mxu0 %v2687
  %4118 = vmatprep.subr.bf16.mxu0 %v2684
  %4119 = vmatpush2.bf16.msra.mxu0 %v2683
  %4120 = vmatprep.subr.bf16.mxu0 %v2680
  %4121 = vmatpush2.bf16.msra.mxu0 %v2679
  %4122 = vmatprep.subr.bf16.mxu0 %v2676
  %4123 = vmatpush2.bf16.msra.mxu0 %v2675
  %4124 = vmatprep.subr.bf16.mxu0 %v2672
  %4125 = vmatpush2.bf16.msra.mxu0 %v2671
  %4126 = vmatprep.subr.bf16.mxu0 %v2668
  %4127 = vmatpush2.bf16.msra.mxu0 %v2667
  %4128 = vmatprep.subr.bf16.mxu0 %v2664
  %4129 = vmatpush2.bf16.msra.mxu0 %v2663
  %4130 = vmatprep.subr.bf16.mxu0 %v2660
  %4131 = vmatpush2.bf16.msra.mxu0 %v2659
  %4132 = vmatprep.mubr.bf16.mxu0 %v675
  %4133 = vmatmul.mubr.bf16.gmra.mxu0 %v661
  %v4134 = vpop.f32.mrf.mxu0
  %v4135 = vadd.f32 %v4094, %v4134
  %v4136 = vpop.f32.mrf.mxu0
  %v4137 = vadd.f32 %v4096, %v4136
  %v4138 = vpop.f32.mrf.mxu0
  %v4139 = vpop.f32.mrf.mxu0
  %4140 = vdwg.mxu0
  %4141 = vmatprep.subr.bf16.mxu0 %v2720
  %4142 = vmatpush1.bf16.msra.mxu0 %v2719
  %4143 = vmatprep.subr.bf16.mxu0 %v2716
  %4144 = vmatpush1.bf16.msra.mxu0 %v2715
  %4145 = vmatprep.subr.bf16.mxu0 %v2712
  %4146 = vmatpush1.bf16.msra.mxu0 %v2711
  %4147 = vmatprep.subr.bf16.mxu0 %v2708
  %4148 = vmatpush1.bf16.msra.mxu0 %v2707
  %4149 = vmatprep.subr.bf16.mxu0 %v2704
  %4150 = vmatpush1.bf16.msra.mxu0 %v2703
  %4151 = vmatprep.subr.bf16.mxu0 %v2700
  %4152 = vmatpush1.bf16.msra.mxu0 %v2699
  %4153 = vmatprep.subr.bf16.mxu0 %v2696
  %4154 = vmatpush1.bf16.msra.mxu0 %v2695
  %4155 = vmatprep.subr.bf16.mxu0 %v2692
  %4156 = vmatpush1.bf16.msra.mxu0 %v2691
  %4157 = vmatprep.subr.bf16.mxu0 %v2752
  %4158 = vmatpush2.bf16.msra.mxu0 %v2751
  %4159 = vmatprep.subr.bf16.mxu0 %v2748
  %4160 = vmatpush2.bf16.msra.mxu0 %v2747
  %4161 = vmatprep.subr.bf16.mxu0 %v2744
  %4162 = vmatpush2.bf16.msra.mxu0 %v2743
  %4163 = vmatprep.subr.bf16.mxu0 %v2740
  %4164 = vmatpush2.bf16.msra.mxu0 %v2739
  %4165 = vmatprep.subr.bf16.mxu0 %v2736
  %4166 = vmatpush2.bf16.msra.mxu0 %v2735
  %4167 = vmatprep.subr.bf16.mxu0 %v2732
  %4168 = vmatpush2.bf16.msra.mxu0 %v2731
  %4169 = vmatprep.subr.bf16.mxu0 %v2728
  %4170 = vmatpush2.bf16.msra.mxu0 %v2727
  %4171 = vmatprep.subr.bf16.mxu0 %v2724
  %4172 = vmatpush2.bf16.msra.mxu0 %v2723
  %4173 = vmatprep.mubr.bf16.mxu0 %v679
  %4174 = vmatmul.mubr.bf16.gmra.mxu0 %v677
  %v4175 = vpop.f32.mrf.mxu0
  %v4176 = vadd.f32 %v4135, %v4175
  %v4177 = vpop.f32.mrf.mxu0
  %v4178 = vadd.f32 %v4137, %v4177
  %v4179 = vpop.f32.mrf.mxu0
  %v4180 = vpop.f32.mrf.mxu0
  %4181 = vdwg.mxu0
  %4182 = vmatprep.subr.bf16.mxu0 %v2784
  %4183 = vmatpush1.bf16.msra.mxu0 %v2783
  %4184 = vmatprep.subr.bf16.mxu0 %v2780
  %4185 = vmatpush1.bf16.msra.mxu0 %v2779
  %4186 = vmatprep.subr.bf16.mxu0 %v2776
  %4187 = vmatpush1.bf16.msra.mxu0 %v2775
  %4188 = vmatprep.subr.bf16.mxu0 %v2772
  %4189 = vmatpush1.bf16.msra.mxu0 %v2771
  %4190 = vmatprep.subr.bf16.mxu0 %v2768
  %4191 = vmatpush1.bf16.msra.mxu0 %v2767
  %4192 = vmatprep.subr.bf16.mxu0 %v2764
  %4193 = vmatpush1.bf16.msra.mxu0 %v2763
  %4194 = vmatprep.subr.bf16.mxu0 %v2760
  %4195 = vmatpush1.bf16.msra.mxu0 %v2759
  %4196 = vmatprep.subr.bf16.mxu0 %v2756
  %4197 = vmatpush1.bf16.msra.mxu0 %v2755
  %4198 = vmatprep.subr.bf16.mxu0 %v2816
  %4199 = vmatpush2.bf16.msra.mxu0 %v2815
  %4200 = vmatprep.subr.bf16.mxu0 %v2812
  %4201 = vmatpush2.bf16.msra.mxu0 %v2811
  %4202 = vmatprep.subr.bf16.mxu0 %v2808
  %4203 = vmatpush2.bf16.msra.mxu0 %v2807
  %4204 = vmatprep.subr.bf16.mxu0 %v2804
  %4205 = vmatpush2.bf16.msra.mxu0 %v2803
  %4206 = vmatprep.subr.bf16.mxu0 %v2800
  %4207 = vmatpush2.bf16.msra.mxu0 %v2799
  %4208 = vmatprep.subr.bf16.mxu0 %v2796
  %4209 = vmatpush2.bf16.msra.mxu0 %v2795
  %4210 = vmatprep.subr.bf16.mxu0 %v2792
  %4211 = vmatpush2.bf16.msra.mxu0 %v2791
  %4212 = vmatprep.subr.bf16.mxu0 %v2788
  %4213 = vmatpush2.bf16.msra.mxu0 %v2787
  %4214 = vmatprep.mubr.bf16.mxu0 %v717
  %4215 = vmatmul.mubr.bf16.gmra.mxu0 %v703
  %v4216 = vpop.f32.mrf.mxu0
  %v4217 = vadd.f32 %v4176, %v4216
  %v4218 = vpop.f32.mrf.mxu0
  %v4219 = vadd.f32 %v4178, %v4218
  %v4220 = vpop.f32.mrf.mxu0
  %v4221 = vpop.f32.mrf.mxu0
  %4222 = vdwg.mxu0
  %4223 = vmatprep.subr.bf16.mxu0 %v2848
  %4224 = vmatpush1.bf16.msra.mxu0 %v2847
  %4225 = vmatprep.subr.bf16.mxu0 %v2844
  %4226 = vmatpush1.bf16.msra.mxu0 %v2843
  %4227 = vmatprep.subr.bf16.mxu0 %v2840
  %4228 = vmatpush1.bf16.msra.mxu0 %v2839
  %4229 = vmatprep.subr.bf16.mxu0 %v2836
  %4230 = vmatpush1.bf16.msra.mxu0 %v2835
  %4231 = vmatprep.subr.bf16.mxu0 %v2832
  %4232 = vmatpush1.bf16.msra.mxu0 %v2831
  %4233 = vmatprep.subr.bf16.mxu0 %v2828
  %4234 = vmatpush1.bf16.msra.mxu0 %v2827
  %4235 = vmatprep.subr.bf16.mxu0 %v2824
  %4236 = vmatpush1.bf16.msra.mxu0 %v2823
  %4237 = vmatprep.subr.bf16.mxu0 %v2820
  %4238 = vmatpush1.bf16.msra.mxu0 %v2819
  %4239 = vmatprep.subr.bf16.mxu0 %v2880
  %4240 = vmatpush2.bf16.msra.mxu0 %v2879
  %4241 = vmatprep.subr.bf16.mxu0 %v2876
  %4242 = vmatpush2.bf16.msra.mxu0 %v2875
  %4243 = vmatprep.subr.bf16.mxu0 %v2872
  %4244 = vmatpush2.bf16.msra.mxu0 %v2871
  %4245 = vmatprep.subr.bf16.mxu0 %v2868
  %4246 = vmatpush2.bf16.msra.mxu0 %v2867
  %4247 = vmatprep.subr.bf16.mxu0 %v2864
  %4248 = vmatpush2.bf16.msra.mxu0 %v2863
  %4249 = vmatprep.subr.bf16.mxu0 %v2860
  %4250 = vmatpush2.bf16.msra.mxu0 %v2859
  %4251 = vmatprep.subr.bf16.mxu0 %v2856
  %4252 = vmatpush2.bf16.msra.mxu0 %v2855
  %4253 = vmatprep.subr.bf16.mxu0 %v2852
  %4254 = vmatpush2.bf16.msra.mxu0 %v2851
  %4255 = vmatprep.mubr.bf16.mxu0 %v727
  %4256 = vmatmul.mubr.bf16.gmra.mxu0 %v725
  %v4257 = vpop.f32.mrf.mxu0
  %v4258 = vadd.f32 %v4217, %v4257
  %v4259 = vpop.f32.mrf.mxu0
  %v4260 = vadd.f32 %v4219, %v4259
  %v4261 = vpop.f32.mrf.mxu0
  %v4262 = vpop.f32.mrf.mxu0
  %4263 = vdwg.mxu0
  %4264 = vmatprep.subr.bf16.mxu0 %v2912
  %4265 = vmatpush1.bf16.msra.mxu0 %v2911
  %4266 = vmatprep.subr.bf16.mxu0 %v2908
  %4267 = vmatpush1.bf16.msra.mxu0 %v2907
  %4268 = vmatprep.subr.bf16.mxu0 %v2904
  %4269 = vmatpush1.bf16.msra.mxu0 %v2903
  %4270 = vmatprep.subr.bf16.mxu0 %v2900
  %4271 = vmatpush1.bf16.msra.mxu0 %v2899
  %4272 = vmatprep.subr.bf16.mxu0 %v2896
  %4273 = vmatpush1.bf16.msra.mxu0 %v2895
  %4274 = vmatprep.subr.bf16.mxu0 %v2892
  %4275 = vmatpush1.bf16.msra.mxu0 %v2891
  %4276 = vmatprep.subr.bf16.mxu0 %v2888
  %4277 = vmatpush1.bf16.msra.mxu0 %v2887
  %4278 = vmatprep.subr.bf16.mxu0 %v2884
  %4279 = vmatpush1.bf16.msra.mxu0 %v2883
  %4280 = vmatprep.subr.bf16.mxu0 %v2944
  %4281 = vmatpush2.bf16.msra.mxu0 %v2943
  %4282 = vmatprep.subr.bf16.mxu0 %v2940
  %4283 = vmatpush2.bf16.msra.mxu0 %v2939
  %4284 = vmatprep.subr.bf16.mxu0 %v2936
  %4285 = vmatpush2.bf16.msra.mxu0 %v2935
  %4286 = vmatprep.subr.bf16.mxu0 %v2932
  %4287 = vmatpush2.bf16.msra.mxu0 %v2931
  %4288 = vmatprep.subr.bf16.mxu0 %v2928
  %4289 = vmatpush2.bf16.msra.mxu0 %v2927
  %4290 = vmatprep.subr.bf16.mxu0 %v2924
  %4291 = vmatpush2.bf16.msra.mxu0 %v2923
  %4292 = vmatprep.subr.bf16.mxu0 %v2920
  %4293 = vmatpush2.bf16.msra.mxu0 %v2919
  %4294 = vmatprep.subr.bf16.mxu0 %v2916
  %4295 = vmatpush2.bf16.msra.mxu0 %v2915
  %4296 = vmatprep.mubr.bf16.mxu0 %v724
  %4297 = vmatmul.mubr.bf16.gmra.mxu0 %v710
  %v4298 = vpop.f32.mrf.mxu0
  %v4299 = vadd.f32 %v4258, %v4298
  %v4300 = vpop.f32.mrf.mxu0
  %v4301 = vadd.f32 %v4260, %v4300
  %v4302 = vpop.f32.mrf.mxu0
  %v4303 = vpop.f32.mrf.mxu0
  %4304 = vdwg.mxu0
  %4305 = vmatprep.subr.bf16.mxu0 %v2976
  %4306 = vmatpush1.bf16.msra.mxu0 %v2975
  %4307 = vmatprep.subr.bf16.mxu0 %v2972
  %4308 = vmatpush1.bf16.msra.mxu0 %v2971
  %4309 = vmatprep.subr.bf16.mxu0 %v2968
  %4310 = vmatpush1.bf16.msra.mxu0 %v2967
  %4311 = vmatprep.subr.bf16.mxu0 %v2964
  %4312 = vmatpush1.bf16.msra.mxu0 %v2963
  %4313 = vmatprep.subr.bf16.mxu0 %v2960
  %4314 = vmatpush1.bf16.msra.mxu0 %v2959
  %4315 = vmatprep.subr.bf16.mxu0 %v2956
  %4316 = vmatpush1.bf16.msra.mxu0 %v2955
  %4317 = vmatprep.subr.bf16.mxu0 %v2952
  %4318 = vmatpush1.bf16.msra.mxu0 %v2951
  %4319 = vmatprep.subr.bf16.mxu0 %v2948
  %4320 = vmatpush1.bf16.msra.mxu0 %v2947
  %4321 = vmatprep.subr.bf16.mxu0 %v3008
  %4322 = vmatpush2.bf16.msra.mxu0 %v3007
  %4323 = vmatprep.subr.bf16.mxu0 %v3004
  %4324 = vmatpush2.bf16.msra.mxu0 %v3003
  %4325 = vmatprep.subr.bf16.mxu0 %v3000
  %4326 = vmatpush2.bf16.msra.mxu0 %v2999
  %4327 = vmatprep.subr.bf16.mxu0 %v2996
  %4328 = vmatpush2.bf16.msra.mxu0 %v2995
  %4329 = vmatprep.subr.bf16.mxu0 %v2992
  %4330 = vmatpush2.bf16.msra.mxu0 %v2991
  %4331 = vmatprep.subr.bf16.mxu0 %v2988
  %4332 = vmatpush2.bf16.msra.mxu0 %v2987
  %4333 = vmatprep.subr.bf16.mxu0 %v2984
  %4334 = vmatpush2.bf16.msra.mxu0 %v2983
  %4335 = vmatprep.subr.bf16.mxu0 %v2980
  %4336 = vmatpush2.bf16.msra.mxu0 %v2979
  %4337 = vmatprep.mubr.bf16.mxu0 %v728
  %4338 = vmatmul.mubr.bf16.gmra.mxu0 %v726
  %v4339 = vpop.f32.mrf.mxu0
  %v4340 = vadd.f32 %v4299, %v4339
  %v4341 = vpop.f32.mrf.mxu0
  %v4342 = vadd.f32 %v4301, %v4341
  %v4343 = vpop.f32.mrf.mxu0
  %v4344 = vpop.f32.mrf.mxu0
  %4345 = vdwg.mxu0
  %4346 = vmatprep.subr.bf16.mxu0 %v3040
  %4347 = vmatpush1.bf16.msra.mxu0 %v3039
  %4348 = vmatprep.subr.bf16.mxu0 %v3036
  %4349 = vmatpush1.bf16.msra.mxu0 %v3035
  %4350 = vmatprep.subr.bf16.mxu0 %v3032
  %4351 = vmatpush1.bf16.msra.mxu0 %v3031
  %4352 = vmatprep.subr.bf16.mxu0 %v3028
  %4353 = vmatpush1.bf16.msra.mxu0 %v3027
  %4354 = vmatprep.subr.bf16.mxu0 %v3024
  %4355 = vmatpush1.bf16.msra.mxu0 %v3023
  %4356 = vmatprep.subr.bf16.mxu0 %v3020
  %4357 = vmatpush1.bf16.msra.mxu0 %v3019
  %4358 = vmatprep.subr.bf16.mxu0 %v3016
  %4359 = vmatpush1.bf16.msra.mxu0 %v3015
  %4360 = vmatprep.subr.bf16.mxu0 %v3012
  %4361 = vmatpush1.bf16.msra.mxu0 %v3011
  %4362 = vmatprep.subr.bf16.mxu0 %v3072
  %4363 = vmatpush2.bf16.msra.mxu0 %v3071
  %4364 = vmatprep.subr.bf16.mxu0 %v3068
  %4365 = vmatpush2.bf16.msra.mxu0 %v3067
  %4366 = vmatprep.subr.bf16.mxu0 %v3064
  %4367 = vmatpush2.bf16.msra.mxu0 %v3063
  %4368 = vmatprep.subr.bf16.mxu0 %v3060
  %4369 = vmatpush2.bf16.msra.mxu0 %v3059
  %4370 = vmatprep.subr.bf16.mxu0 %v3056
  %4371 = vmatpush2.bf16.msra.mxu0 %v3055
  %4372 = vmatprep.subr.bf16.mxu0 %v3052
  %4373 = vmatpush2.bf16.msra.mxu0 %v3051
  %4374 = vmatprep.subr.bf16.mxu0 %v3048
  %4375 = vmatpush2.bf16.msra.mxu0 %v3047
  %4376 = vmatprep.subr.bf16.mxu0 %v3044
  %4377 = vmatpush2.bf16.msra.mxu0 %v3043
  %4378 = vmatprep.mubr.bf16.mxu0 %v750
  %4379 = vmatmul.mubr.bf16.gmra.mxu0 %v743
  %v4380 = vpop.f32.mrf.mxu0
  %v4381 = vadd.f32 %v4340, %v4380
  %v4382 = vpop.f32.mrf.mxu0
  %v4383 = vadd.f32 %v4342, %v4382
  %v4384 = vpop.f32.mrf.mxu0
  %v4385 = vpop.f32.mrf.mxu0
  %4386 = vdwg.mxu0
  %vm4387 = vcmp.ge.f32.partialorder %v4012, 0.0
  %vm4388 = vcmp.ge.f32.partialorder %v4014, 0.0
  %vm4389 = vcmp.ge.f32.partialorder %v4381, 0.0
  %vm4390 = vcmp.ge.f32.partialorder %v4383, 0.0
  %v4391 = vmul.f32 %v4012, 0.01
  %v4392 = vmul.f32 %v4014, 0.01
  %v4393 = vmul.f32 %v4381, 0.01
  %v4394 = vmul.f32 %v4383, 0.01
  %v4395 = vsel %vm4387, %v4012, %v4391
  %v4396 = vsel %vm4388, %v4014, %v4392
  %v4397 = vsel %vm4389, %v4381, %v4393
  %v4398 = vsel %vm4390, %v4383, %v4394
  %v4399 = vpack.c.bf16 %v4395, %v4395
  %v4400 = vpack.c.bf16 %v4396, %v4396
  %v4401 = vpack.c.bf16 %v4397, %v4397
  %v4402 = vpack.c.bf16 %v4398, %v4398
  %v4403 = vld [vmem:[%s3] sm:$0xff]
  %v4404 = vld [vmem:[%s3 + $0x8] sm:$0xff]
  %v4405 = vld [vmem:[%s3 + $0x10] sm:$0xff]
  %v4406 = vld [vmem:[%s3 + $0x18] sm:$0xff]
  %v4407 = vld [vmem:[%s3 + $0x20] sm:$0xff]
  %v4408 = vld [vmem:[%s3 + $0x28] sm:$0xff]
  %v4409 = vld [vmem:[%s3 + $0x30] sm:$0xff]
  %v4410 = vld [vmem:[%s3 + $0x38] sm:$0xff]
  %v4411 = vld [vmem:[%s3 + $0x40] sm:$0xff]
  %v4412 = vld [vmem:[%s3 + $0x48] sm:$0xff]
  %v4413 = vld [vmem:[%s3 + $0x50] sm:$0xff]
  %v4414 = vld [vmem:[%s3 + $0x58] sm:$0xff]
  %v4415 = vld [vmem:[%s3 + $0x60] sm:$0xff]
  %v4416 = vld [vmem:[%s3 + $0x68] sm:$0xff]
  %v4417 = vld [vmem:[%s3 + $0x70] sm:$0xff]
  %v4418 = vld [vmem:[%s3 + $0x78] sm:$0xff]
  %v4419 = vld [vmem:[%s3 + $0x80] sm:$0xff]
  %v4420 = vld [vmem:[%s3 + $0x88] sm:$0xff]
  %v4421 = vld [vmem:[%s3 + $0x90] sm:$0xff]
  %v4422 = vld [vmem:[%s3 + $0x98] sm:$0xff]
  %v4423 = vld [vmem:[%s3 + $0xa0] sm:$0xff]
  %v4424 = vld [vmem:[%s3 + $0xa8] sm:$0xff]
  %v4425 = vld [vmem:[%s3 + $0xb0] sm:$0xff]
  %v4426 = vld [vmem:[%s3 + $0xb8] sm:$0xff]
  %v4427 = vld [vmem:[%s3 + $0xc0] sm:$0xff]
  %v4428 = vld [vmem:[%s3 + $0xc8] sm:$0xff]
  %v4429 = vld [vmem:[%s3 + $0xd0] sm:$0xff]
  %v4430 = vld [vmem:[%s3 + $0xd8] sm:$0xff]
  %v4431 = vld [vmem:[%s3 + $0xe0] sm:$0xff]
  %v4432 = vld [vmem:[%s3 + $0xe8] sm:$0xff]
  %v4433 = vld [vmem:[%s3 + $0xf0] sm:$0xff]
  %v4434 = vld [vmem:[%s3 + $0xf8] sm:$0xff]
  %v4435 = vld [vmem:[%s3 + $0x100] sm:$0xff]
  %v4436 = vld [vmem:[%s3 + $0x108] sm:$0xff]
  %v4437 = vld [vmem:[%s3 + $0x110] sm:$0xff]
  %v4438 = vld [vmem:[%s3 + $0x118] sm:$0xff]
  %v4439 = vld [vmem:[%s3 + $0x120] sm:$0xff]
  %v4440 = vld [vmem:[%s3 + $0x128] sm:$0xff]
  %v4441 = vld [vmem:[%s3 + $0x130] sm:$0xff]
  %v4442 = vld [vmem:[%s3 + $0x138] sm:$0xff]
  %v4443 = vld [vmem:[%s3 + $0x140] sm:$0xff]
  %v4444 = vld [vmem:[%s3 + $0x148] sm:$0xff]
  %v4445 = vld [vmem:[%s3 + $0x150] sm:$0xff]
  %v4446 = vld [vmem:[%s3 + $0x158] sm:$0xff]
  %v4447 = vld [vmem:[%s3 + $0x160] sm:$0xff]
  %v4448 = vld [vmem:[%s3 + $0x168] sm:$0xff]
  %v4449 = vld [vmem:[%s3 + $0x170] sm:$0xff]
  %v4450 = vld [vmem:[%s3 + $0x178] sm:$0xff]
  %v4451 = vld [vmem:[%s3 + $0x180] sm:$0xff]
  %v4452 = vld [vmem:[%s3 + $0x188] sm:$0xff]
  %v4453 = vld [vmem:[%s3 + $0x190] sm:$0xff]
  %v4454 = vld [vmem:[%s3 + $0x198] sm:$0xff]
  %v4455 = vld [vmem:[%s3 + $0x1a0] sm:$0xff]
  %v4456 = vld [vmem:[%s3 + $0x1a8] sm:$0xff]
  %v4457 = vld [vmem:[%s3 + $0x1b0] sm:$0xff]
  %v4458 = vld [vmem:[%s3 + $0x1b8] sm:$0xff]
  %v4459 = vld [vmem:[%s3 + $0x1c0] sm:$0xff]
  %v4460 = vld [vmem:[%s3 + $0x1c8] sm:$0xff]
  %v4461 = vld [vmem:[%s3 + $0x1d0] sm:$0xff]
  %v4462 = vld [vmem:[%s3 + $0x1d8] sm:$0xff]
  %v4463 = vld [vmem:[%s3 + $0x1e0] sm:$0xff]
  %v4464 = vld [vmem:[%s3 + $0x1e8] sm:$0xff]
  %v4465 = vld [vmem:[%s3 + $0x1f0] sm:$0xff]
  %v4466 = vld [vmem:[%s3 + $0x1f8] sm:$0xff]
  %v4467 = vld [vmem:[%s4] sm:$0x3]
  %v4469 = vlaneseq
  %v4470 = vshrl.u32 %v4469, 7
  %v4471 = vsub.s32 0, %v4470
  %v4472 = vrot.slane %v4467, %v4471
  %v4473 = vlaneseq
  %v4474 = vshrl.u32 %v4473, 7
  %v4475 = vsub.s32 1, %v4474
  %v4476 = vrot.slane %v4467, %v4475
  %v4543 = vunpack.c.l.b16 %v4403
  %v4544 = vunpack.c.h.b16 %v4403
  %v4545 = vunpack.c.l.b16 %v4404
  %v4546 = vunpack.c.h.b16 %v4404
  %v4547 = vunpack.c.l.b16 %v4405
  %v4548 = vunpack.c.h.b16 %v4405
  %v4549 = vunpack.c.l.b16 %v4406
  %v4550 = vunpack.c.h.b16 %v4406
  %v4551 = vunpack.c.l.b16 %v4407
  %v4552 = vunpack.c.h.b16 %v4407
  %v4553 = vunpack.c.l.b16 %v4408
  %v4554 = vunpack.c.h.b16 %v4408
  %v4555 = vunpack.c.l.b16 %v4409
  %v4556 = vunpack.c.h.b16 %v4409
  %v4557 = vunpack.c.l.b16 %v4410
  %v4558 = vunpack.c.h.b16 %v4410
  %v4559 = vunpack.c.l.b16 %v4411
  %v4560 = vunpack.c.h.b16 %v4411
  %v4561 = vunpack.c.l.b16 %v4412
  %v4562 = vunpack.c.h.b16 %v4412
  %v4563 = vunpack.c.l.b16 %v4413
  %v4564 = vunpack.c.h.b16 %v4413
  %v4565 = vunpack.c.l.b16 %v4414
  %v4566 = vunpack.c.h.b16 %v4414
  %v4567 = vunpack.c.l.b16 %v4415
  %v4568 = vunpack.c.h.b16 %v4415
  %v4569 = vunpack.c.l.b16 %v4416
  %v4570 = vunpack.c.h.b16 %v4416
  %v4571 = vunpack.c.l.b16 %v4417
  %v4572 = vunpack.c.h.b16 %v4417
  %v4573 = vunpack.c.l.b16 %v4418
  %v4574 = vunpack.c.h.b16 %v4418
  %v4575 = vunpack.c.l.b16 %v4419
  %v4576 = vunpack.c.h.b16 %v4419
  %v4577 = vunpack.c.l.b16 %v4420
  %v4578 = vunpack.c.h.b16 %v4420
  %v4579 = vunpack.c.l.b16 %v4421
  %v4580 = vunpack.c.h.b16 %v4421
  %v4581 = vunpack.c.l.b16 %v4422
  %v4582 = vunpack.c.h.b16 %v4422
  %v4583 = vunpack.c.l.b16 %v4423
  %v4584 = vunpack.c.h.b16 %v4423
  %v4585 = vunpack.c.l.b16 %v4424
  %v4586 = vunpack.c.h.b16 %v4424
  %v4587 = vunpack.c.l.b16 %v4425
  %v4588 = vunpack.c.h.b16 %v4425
  %v4589 = vunpack.c.l.b16 %v4426
  %v4590 = vunpack.c.h.b16 %v4426
  %v4591 = vunpack.c.l.b16 %v4427
  %v4592 = vunpack.c.h.b16 %v4427
  %v4593 = vunpack.c.l.b16 %v4428
  %v4594 = vunpack.c.h.b16 %v4428
  %v4595 = vunpack.c.l.b16 %v4429
  %v4596 = vunpack.c.h.b16 %v4429
  %v4597 = vunpack.c.l.b16 %v4430
  %v4598 = vunpack.c.h.b16 %v4430
  %v4599 = vunpack.c.l.b16 %v4431
  %v4600 = vunpack.c.h.b16 %v4431
  %v4601 = vunpack.c.l.b16 %v4432
  %v4602 = vunpack.c.h.b16 %v4432
  %v4603 = vunpack.c.l.b16 %v4433
  %v4604 = vunpack.c.h.b16 %v4433
  %v4605 = vunpack.c.l.b16 %v4434
  %v4606 = vunpack.c.h.b16 %v4434
  %v4607 = vunpack.c.l.b16 %v4435
  %v4608 = vunpack.c.h.b16 %v4435
  %v4609 = vunpack.c.l.b16 %v4436
  %v4610 = vunpack.c.h.b16 %v4436
  %v4611 = vunpack.c.l.b16 %v4437
  %v4612 = vunpack.c.h.b16 %v4437
  %v4613 = vunpack.c.l.b16 %v4438
  %v4614 = vunpack.c.h.b16 %v4438
  %v4615 = vunpack.c.l.b16 %v4439
  %v4616 = vunpack.c.h.b16 %v4439
  %v4617 = vunpack.c.l.b16 %v4440
  %v4618 = vunpack.c.h.b16 %v4440
  %v4619 = vunpack.c.l.b16 %v4441
  %v4620 = vunpack.c.h.b16 %v4441
  %v4621 = vunpack.c.l.b16 %v4442
  %v4622 = vunpack.c.h.b16 %v4442
  %v4623 = vunpack.c.l.b16 %v4443
  %v4624 = vunpack.c.h.b16 %v4443
  %v4625 = vunpack.c.l.b16 %v4444
  %v4626 = vunpack.c.h.b16 %v4444
  %v4627 = vunpack.c.l.b16 %v4445
  %v4628 = vunpack.c.h.b16 %v4445
  %v4629 = vunpack.c.l.b16 %v4446
  %v4630 = vunpack.c.h.b16 %v4446
  %v4631 = vunpack.c.l.b16 %v4447
  %v4632 = vunpack.c.h.b16 %v4447
  %v4633 = vunpack.c.l.b16 %v4448
  %v4634 = vunpack.c.h.b16 %v4448
  %v4635 = vunpack.c.l.b16 %v4449
  %v4636 = vunpack.c.h.b16 %v4449
  %v4637 = vunpack.c.l.b16 %v4450
  %v4638 = vunpack.c.h.b16 %v4450
  %v4639 = vunpack.c.l.b16 %v4451
  %v4640 = vunpack.c.h.b16 %v4451
  %v4641 = vunpack.c.l.b16 %v4452
  %v4642 = vunpack.c.h.b16 %v4452
  %v4643 = vunpack.c.l.b16 %v4453
  %v4644 = vunpack.c.h.b16 %v4453
  %v4645 = vunpack.c.l.b16 %v4454
  %v4646 = vunpack.c.h.b16 %v4454
  %v4647 = vunpack.c.l.b16 %v4455
  %v4648 = vunpack.c.h.b16 %v4455
  %v4649 = vunpack.c.l.b16 %v4456
  %v4650 = vunpack.c.h.b16 %v4456
  %v4651 = vunpack.c.l.b16 %v4457
  %v4652 = vunpack.c.h.b16 %v4457
  %v4653 = vunpack.c.l.b16 %v4458
  %v4654 = vunpack.c.h.b16 %v4458
  %v4655 = vunpack.c.l.b16 %v4459
  %v4656 = vunpack.c.h.b16 %v4459
  %v4657 = vunpack.c.l.b16 %v4460
  %v4658 = vunpack.c.h.b16 %v4460
  %v4659 = vunpack.c.l.b16 %v4461
  %v4660 = vunpack.c.h.b16 %v4461
  %v4661 = vunpack.c.l.b16 %v4462
  %v4662 = vunpack.c.h.b16 %v4462
  %v4663 = vunpack.c.l.b16 %v4463
  %v4664 = vunpack.c.h.b16 %v4463
  %v4665 = vunpack.c.l.b16 %v4464
  %v4666 = vunpack.c.h.b16 %v4464
  %v4667 = vunpack.c.l.b16 %v4465
  %v4668 = vunpack.c.h.b16 %v4465
  %v4669 = vunpack.c.l.b16 %v4466
  %v4670 = vunpack.c.h.b16 %v4466
  %v4671 = vpack.c.b16 %v4545, %v4543
  %v4672 = vpack.c.b16 %v4546, %v4544
  %v4673 = vpack.c.b16 %v4549, %v4547
  %v4674 = vpack.c.b16 %v4550, %v4548
  %v4675 = vpack.c.b16 %v4553, %v4551
  %v4676 = vpack.c.b16 %v4554, %v4552
  %v4677 = vpack.c.b16 %v4557, %v4555
  %v4678 = vpack.c.b16 %v4558, %v4556
  %v4679 = vpack.c.b16 %v4561, %v4559
  %v4680 = vpack.c.b16 %v4562, %v4560
  %v4681 = vpack.c.b16 %v4565, %v4563
  %v4682 = vpack.c.b16 %v4566, %v4564
  %v4683 = vpack.c.b16 %v4569, %v4567
  %v4684 = vpack.c.b16 %v4570, %v4568
  %v4685 = vpack.c.b16 %v4573, %v4571
  %v4686 = vpack.c.b16 %v4574, %v4572
  %v4687 = vpack.c.b16 %v4577, %v4575
  %v4688 = vpack.c.b16 %v4578, %v4576
  %v4689 = vpack.c.b16 %v4581, %v4579
  %v4690 = vpack.c.b16 %v4582, %v4580
  %v4691 = vpack.c.b16 %v4585, %v4583
  %v4692 = vpack.c.b16 %v4586, %v4584
  %v4693 = vpack.c.b16 %v4589, %v4587
  %v4694 = vpack.c.b16 %v4590, %v4588
  %v4695 = vpack.c.b16 %v4593, %v4591
  %v4696 = vpack.c.b16 %v4594, %v4592
  %v4697 = vpack.c.b16 %v4597, %v4595
  %v4698 = vpack.c.b16 %v4598, %v4596
  %v4699 = vpack.c.b16 %v4601, %v4599
  %v4700 = vpack.c.b16 %v4602, %v4600
  %v4701 = vpack.c.b16 %v4605, %v4603
  %v4702 = vpack.c.b16 %v4606, %v4604
  %v4703 = vpack.c.b16 %v4609, %v4607
  %v4704 = vpack.c.b16 %v4610, %v4608
  %v4705 = vpack.c.b16 %v4613, %v4611
  %v4706 = vpack.c.b16 %v4614, %v4612
  %v4707 = vpack.c.b16 %v4617, %v4615
  %v4708 = vpack.c.b16 %v4618, %v4616
  %v4709 = vpack.c.b16 %v4621, %v4619
  %v4710 = vpack.c.b16 %v4622, %v4620
  %v4711 = vpack.c.b16 %v4625, %v4623
  %v4712 = vpack.c.b16 %v4626, %v4624
  %v4713 = vpack.c.b16 %v4629, %v4627
  %v4714 = vpack.c.b16 %v4630, %v4628
  %v4715 = vpack.c.b16 %v4633, %v4631
  %v4716 = vpack.c.b16 %v4634, %v4632
  %v4717 = vpack.c.b16 %v4637, %v4635
  %v4718 = vpack.c.b16 %v4638, %v4636
  %v4719 = vpack.c.b16 %v4641, %v4639
  %v4720 = vpack.c.b16 %v4642, %v4640
  %v4721 = vpack.c.b16 %v4645, %v4643
  %v4722 = vpack.c.b16 %v4646, %v4644
  %v4723 = vpack.c.b16 %v4649, %v4647
  %v4724 = vpack.c.b16 %v4650, %v4648
  %v4725 = vpack.c.b16 %v4653, %v4651
  %v4726 = vpack.c.b16 %v4654, %v4652
  %v4727 = vpack.c.b16 %v4657, %v4655
  %v4728 = vpack.c.b16 %v4658, %v4656
  %v4729 = vpack.c.b16 %v4661, %v4659
  %v4730 = vpack.c.b16 %v4662, %v4660
  %v4731 = vpack.c.b16 %v4665, %v4663
  %v4732 = vpack.c.b16 %v4666, %v4664
  %v4733 = vpack.c.b16 %v4669, %v4667
  %v4734 = vpack.c.b16 %v4670, %v4668
  %4799 = vmatprep.subr.bf16.mxu0 %v4686
  %4800 = vmatpush1.bf16.msra.mxu0 %v4685
  %4801 = vmatprep.subr.bf16.mxu0 %v4684
  %4802 = vmatpush1.bf16.msra.mxu0 %v4683
  %4803 = vmatprep.subr.bf16.mxu0 %v4682
  %4804 = vmatpush1.bf16.msra.mxu0 %v4681
  %4805 = vmatprep.subr.bf16.mxu0 %v4680
  %4806 = vmatpush1.bf16.msra.mxu0 %v4679
  %4807 = vmatprep.subr.bf16.mxu0 %v4678
  %4808 = vmatpush1.bf16.msra.mxu0 %v4677
  %4809 = vmatprep.subr.bf16.mxu0 %v4676
  %4810 = vmatpush1.bf16.msra.mxu0 %v4675
  %4811 = vmatprep.subr.bf16.mxu0 %v4674
  %4812 = vmatpush1.bf16.msra.mxu0 %v4673
  %4813 = vmatprep.subr.bf16.mxu0 %v4672
  %4814 = vmatpush1.bf16.msra.mxu0 %v4671
  %4815 = vmatprep.subr.bf16.mxu0 %v4702
  %4816 = vmatpush2.bf16.msra.mxu0 %v4701
  %4817 = vmatprep.subr.bf16.mxu0 %v4700
  %4818 = vmatpush2.bf16.msra.mxu0 %v4699
  %4819 = vmatprep.subr.bf16.mxu0 %v4698
  %4820 = vmatpush2.bf16.msra.mxu0 %v4697
  %4821 = vmatprep.subr.bf16.mxu0 %v4696
  %4822 = vmatpush2.bf16.msra.mxu0 %v4695
  %4823 = vmatprep.subr.bf16.mxu0 %v4694
  %4824 = vmatpush2.bf16.msra.mxu0 %v4693
  %4825 = vmatprep.subr.bf16.mxu0 %v4692
  %4826 = vmatpush2.bf16.msra.mxu0 %v4691
  %4827 = vmatprep.subr.bf16.mxu0 %v4690
  %4828 = vmatpush2.bf16.msra.mxu0 %v4689
  %4829 = vmatprep.subr.bf16.mxu0 %v4688
  %4830 = vmatpush2.bf16.msra.mxu0 %v4687
  %4831 = vmatprep.mubr.bf16.mxu0 %v4400
  %4832 = vmatmul.mubr.bf16.gmra.mxu0 %v4399
  %v4833 = vpop.f32.mrf.mxu0
  %v4834 = vadd.f32 %v4472, %v4833
  %v4835 = vpop.f32.mrf.mxu0
  %v4836 = vadd.f32 %v4476, %v4835
  %v4837 = vpop.f32.mrf.mxu0
  %v4838 = vpop.f32.mrf.mxu0
  %4839 = vdwg.mxu0
  %4840 = vmatprep.subr.bf16.mxu0 %v4718
  %4841 = vmatpush1.bf16.msra.mxu0 %v4717
  %4842 = vmatprep.subr.bf16.mxu0 %v4716
  %4843 = vmatpush1.bf16.msra.mxu0 %v4715
  %4844 = vmatprep.subr.bf16.mxu0 %v4714
  %4845 = vmatpush1.bf16.msra.mxu0 %v4713
  %4846 = vmatprep.subr.bf16.mxu0 %v4712
  %4847 = vmatpush1.bf16.msra.mxu0 %v4711
  %4848 = vmatprep.subr.bf16.mxu0 %v4710
  %4849 = vmatpush1.bf16.msra.mxu0 %v4709
  %4850 = vmatprep.subr.bf16.mxu0 %v4708
  %4851 = vmatpush1.bf16.msra.mxu0 %v4707
  %4852 = vmatprep.subr.bf16.mxu0 %v4706
  %4853 = vmatpush1.bf16.msra.mxu0 %v4705
  %4854 = vmatprep.subr.bf16.mxu0 %v4704
  %4855 = vmatpush1.bf16.msra.mxu0 %v4703
  %4856 = vmatprep.subr.bf16.mxu0 %v4734
  %4857 = vmatpush2.bf16.msra.mxu0 %v4733
  %4858 = vmatprep.subr.bf16.mxu0 %v4732
  %4859 = vmatpush2.bf16.msra.mxu0 %v4731
  %4860 = vmatprep.subr.bf16.mxu0 %v4730
  %4861 = vmatpush2.bf16.msra.mxu0 %v4729
  %4862 = vmatprep.subr.bf16.mxu0 %v4728
  %4863 = vmatpush2.bf16.msra.mxu0 %v4727
  %4864 = vmatprep.subr.bf16.mxu0 %v4726
  %4865 = vmatpush2.bf16.msra.mxu0 %v4725
  %4866 = vmatprep.subr.bf16.mxu0 %v4724
  %4867 = vmatpush2.bf16.msra.mxu0 %v4723
  %4868 = vmatprep.subr.bf16.mxu0 %v4722
  %4869 = vmatpush2.bf16.msra.mxu0 %v4721
  %4870 = vmatprep.subr.bf16.mxu0 %v4720
  %4871 = vmatpush2.bf16.msra.mxu0 %v4719
  %4872 = vmatprep.mubr.bf16.mxu0 %v4402
  %4873 = vmatmul.mubr.bf16.gmra.mxu0 %v4401
  %v4874 = vpop.f32.mrf.mxu0
  %v4875 = vadd.f32 %v4834, %v4874
  %v4876 = vpop.f32.mrf.mxu0
  %v4877 = vadd.f32 %v4836, %v4876
  %v4878 = vpop.f32.mrf.mxu0
  %v4879 = vpop.f32.mrf.mxu0
  %4880 = vdwg.mxu0
  %vm4881 = vcmp.ge.f32.partialorder %v4875, 0.0
  %vm4882 = vcmp.ge.f32.partialorder %v4877, 0.0
  %v4883 = vmul.f32 %v4875, 0.01
  %v4884 = vmul.f32 %v4877, 0.01
  %v4885 = vsel %vm4881, %v4875, %v4883
  %v4886 = vsel %vm4882, %v4877, %v4884
  %v4887 = vpack.c.bf16 %v4885, %v4885
  %v4888 = vpack.c.bf16 %v4886, %v4886
  %v4889 = vld [vmem:[%s5] sm:$0xf]
  %v4890 = vld [vmem:[%s5 + $0x4] sm:$0xf]
  %v4891 = vld [vmem:[%s5 + $0x8] sm:$0xf]
  %v4892 = vld [vmem:[%s5 + $0xc] sm:$0xf]
  %v4893 = vld [vmem:[%s5 + $0x10] sm:$0xf]
  %v4894 = vld [vmem:[%s5 + $0x14] sm:$0xf]
  %v4895 = vld [vmem:[%s5 + $0x18] sm:$0xf]
  %v4896 = vld [vmem:[%s5 + $0x1c] sm:$0xf]
  %v4897 = vld [vmem:[%s5 + $0x20] sm:$0xf]
  %v4898 = vld [vmem:[%s5 + $0x24] sm:$0xf]
  %v4899 = vld [vmem:[%s5 + $0x28] sm:$0xf]
  %v4900 = vld [vmem:[%s5 + $0x2c] sm:$0xf]
  %v4901 = vld [vmem:[%s5 + $0x30] sm:$0xf]
  %v4902 = vld [vmem:[%s5 + $0x34] sm:$0xf]
  %v4903 = vld [vmem:[%s5 + $0x38] sm:$0xf]
  %v4904 = vld [vmem:[%s5 + $0x3c] sm:$0xf]
  %v4905 = vld [vmem:[%s5 + $0x40] sm:$0xf]
  %v4906 = vld [vmem:[%s5 + $0x44] sm:$0xf]
  %v4907 = vld [vmem:[%s5 + $0x48] sm:$0xf]
  %v4908 = vld [vmem:[%s5 + $0x4c] sm:$0xf]
  %v4909 = vld [vmem:[%s5 + $0x50] sm:$0xf]
  %v4910 = vld [vmem:[%s5 + $0x54] sm:$0xf]
  %v4911 = vld [vmem:[%s5 + $0x58] sm:$0xf]
  %v4912 = vld [vmem:[%s5 + $0x5c] sm:$0xf]
  %v4913 = vld [vmem:[%s5 + $0x60] sm:$0xf]
  %v4914 = vld [vmem:[%s5 + $0x64] sm:$0xf]
  %v4915 = vld [vmem:[%s5 + $0x68] sm:$0xf]
  %v4916 = vld [vmem:[%s5 + $0x6c] sm:$0xf]
  %v4917 = vld [vmem:[%s5 + $0x70] sm:$0xf]
  %v4918 = vld [vmem:[%s5 + $0x74] sm:$0xf]
  %v4919 = vld [vmem:[%s5 + $0x78] sm:$0xf]
  %v4920 = vld [vmem:[%s5 + $0x7c] sm:$0xf]
  %v4921 = vld [vmem:[%s6] sm:$0x1]
  %v4923 = vlaneseq
  %v4924 = vshrl.u32 %v4923, 7
  %v4925 = vsub.s32 0, %v4924
  %v4926 = vrot.slane %v4921, %v4925
  %v4960 = vunpack.c.l.b16 %v4889
  %v4961 = vunpack.c.l.b16 %v4890
  %v4962 = vunpack.c.l.b16 %v4891
  %v4963 = vunpack.c.l.b16 %v4892
  %v4964 = vunpack.c.l.b16 %v4893
  %v4965 = vunpack.c.l.b16 %v4894
  %v4966 = vunpack.c.l.b16 %v4895
  %v4967 = vunpack.c.l.b16 %v4896
  %v4968 = vunpack.c.l.b16 %v4897
  %v4969 = vunpack.c.l.b16 %v4898
  %v4970 = vunpack.c.l.b16 %v4899
  %v4971 = vunpack.c.l.b16 %v4900
  %v4972 = vunpack.c.l.b16 %v4901
  %v4973 = vunpack.c.l.b16 %v4902
  %v4974 = vunpack.c.l.b16 %v4903
  %v4975 = vunpack.c.l.b16 %v4904
  %v4976 = vunpack.c.l.b16 %v4905
  %v4977 = vunpack.c.l.b16 %v4906
  %v4978 = vunpack.c.l.b16 %v4907
  %v4979 = vunpack.c.l.b16 %v4908
  %v4980 = vunpack.c.l.b16 %v4909
  %v4981 = vunpack.c.l.b16 %v4910
  %v4982 = vunpack.c.l.b16 %v4911
  %v4983 = vunpack.c.l.b16 %v4912
  %v4984 = vunpack.c.l.b16 %v4913
  %v4985 = vunpack.c.l.b16 %v4914
  %v4986 = vunpack.c.l.b16 %v4915
  %v4987 = vunpack.c.l.b16 %v4916
  %v4988 = vunpack.c.l.b16 %v4917
  %v4989 = vunpack.c.l.b16 %v4918
  %v4990 = vunpack.c.l.b16 %v4919
  %v4991 = vunpack.c.l.b16 %v4920
  %v4992 = vpack.c.b16 %v4961, %v4960
  %v4993 = vpack.c.b16 %v4963, %v4962
  %v4994 = vpack.c.b16 %v4965, %v4964
  %v4995 = vpack.c.b16 %v4967, %v4966
  %v4996 = vpack.c.b16 %v4969, %v4968
  %v4997 = vpack.c.b16 %v4971, %v4970
  %v4998 = vpack.c.b16 %v4973, %v4972
  %v4999 = vpack.c.b16 %v4975, %v4974
  %v5000 = vpack.c.b16 %v4977, %v4976
  %v5001 = vpack.c.b16 %v4979, %v4978
  %v5002 = vpack.c.b16 %v4981, %v4980
  %v5003 = vpack.c.b16 %v4983, %v4982
  %v5004 = vpack.c.b16 %v4985, %v4984
  %v5005 = vpack.c.b16 %v4987, %v4986
  %v5006 = vpack.c.b16 %v4989, %v4988
  %v5007 = vpack.c.b16 %v4991, %v4990
  %5024 = vmatprep.subr.bf16.mxu0 0
  %5025 = vmatpush1.bf16.msra.mxu0 %v4999
  %5026 = vmatprep.subr.bf16.mxu0 0
  %5027 = vmatpush1.bf16.msra.mxu0 %v4998
  %5028 = vmatprep.subr.bf16.mxu0 0
  %5029 = vmatpush1.bf16.msra.mxu0 %v4997
  %5030 = vmatprep.subr.bf16.mxu0 0
  %5031 = vmatpush1.bf16.msra.mxu0 %v4996
  %5032 = vmatprep.subr.bf16.mxu0 0
  %5033 = vmatpush1.bf16.msra.mxu0 %v4995
  %5034 = vmatprep.subr.bf16.mxu0 0
  %5035 = vmatpush1.bf16.msra.mxu0 %v4994
  %5036 = vmatprep.subr.bf16.mxu0 0
  %5037 = vmatpush1.bf16.msra.mxu0 %v4993
  %5038 = vmatprep.subr.bf16.mxu0 0
  %5039 = vmatpush1.bf16.msra.mxu0 %v4992
  %5040 = vmatprep.subr.bf16.mxu0 0
  %5041 = vmatpush2.bf16.msra.mxu0 %v5007
  %5042 = vmatprep.subr.bf16.mxu0 0
  %5043 = vmatpush2.bf16.msra.mxu0 %v5006
  %5044 = vmatprep.subr.bf16.mxu0 0
  %5045 = vmatpush2.bf16.msra.mxu0 %v5005
  %5046 = vmatprep.subr.bf16.mxu0 0
  %5047 = vmatpush2.bf16.msra.mxu0 %v5004
  %5048 = vmatprep.subr.bf16.mxu0 0
  %5049 = vmatpush2.bf16.msra.mxu0 %v5003
  %5050 = vmatprep.subr.bf16.mxu0 0
  %5051 = vmatpush2.bf16.msra.mxu0 %v5002
  %5052 = vmatprep.subr.bf16.mxu0 0
  %5053 = vmatpush2.bf16.msra.mxu0 %v5001
  %5054 = vmatprep.subr.bf16.mxu0 0
  %5055 = vmatpush2.bf16.msra.mxu0 %v5000
  %5056 = vmatprep.mubr.bf16.mxu0 %v4888
  %5057 = vmatmul.mubr.bf16.gmra.mxu0 %v4887
  %v5058 = vpop.f32.mrf.mxu0
  %v5059 = vadd.f32 %v4926, %v5058
  %v5060 = vpop.f32.mrf.mxu0
  %v5061 = vpop.f32.mrf.mxu0
  %v5062 = vpop.f32.mrf.mxu0
  %5063 = vdwg.mxu0
  %v5064 = vlaneseq
  %v5065 = vand.u32 %v5064, 127
  %vm5066 = vcmp.ge.s32.totalorder %v5065, 4
  %v5067 = vmax.f32 %v5059, -20.0
  %v5068 = vmin.f32 %v5067, 2.0
  %v5069 = vsel %vm5066, %v5068, %v5059
  %5070 = vst [vmem:[%s7] sm:$0x3] %v5069
  // Predicated region
  $region30: #{cont_gaussian_policy_forward.7} parent=0 // pred_check
    _
  $region31: #{cont_gaussian_policy_forward.7} parent=0 // pred_check_branch
    %5072 = sbr.rel (0) target = $region33
  $region32: #{cont_gaussian_policy_forward.7} parent=0 // pred_region
    _
  $region33: #{cont_gaussian_policy_forward.7} parent=0 // pred_fallthru
    _
  // Predicated region
  $region34: #{cont_gaussian_policy_forward.7} parent=0 // pred_check
    _
  $region35: #{cont_gaussian_policy_forward.7} parent=0 // pred_check_branch
    %5074 = sbr.rel (0) target = $region37
  $region36: #{cont_gaussian_policy_forward.7} parent=0 // pred_region
    _
  $region37: #{cont_gaussian_policy_forward.7} parent=0 // pred_fallthru
    _

</llo_original>
